<compile_context>
chip_gen: v6e
topology: v6e:2x2x1
jax: 0.10.0
libtpu: 0.0.40
codegen_flags: <defaults>
</compile_context>

<pallas_src>
import functools

import jax
import jax.numpy as jnp
from jax import lax
from jax.experimental import pallas as pl
from jax.experimental.pallas import tpu as pltpu

EPS_BN = 1e-5


# --------------------------------------------------------------------------
# Fused forward kernel factory.
# --------------------------------------------------------------------------
def _make_fused_kernel(H, LH, T, num_layers, out_c):
    f32 = jnp.float32
    L = num_layers
    G = 4 * LH                      # gate width per layer
    steps = T + L - 1               # wavefront steps
    unroll = True if steps <= 64 else 8   # bounded unroll at larger T

    def kernel(*refs):
        it = iter(refs)
        nxt = lambda: next(it)
        a_ref = nxt(); x_ref = nxt()
        w1_ref = nxt(); b1_ref = nxt(); w2_ref = nxt(); b2_ref = nxt()
        ssrc_ref = nxt(); sdst_ref = nxt(); attr_ref = nxt()
        wih_s_ref = nxt(); wih_r_ref = nxt(); wih_a_ref = nxt(); bl0_ref = nxt()
        wave_ref = nxt()
        ub_ref = nxt() if L > 1 else None
        lw1_ref = nxt(); lb1_ref = nxt(); lw2_ref = nxt(); lb2_ref = nxt()
        o_ref = nxt()
        gx_scr = nxt(); seq_scr = nxt()

        # ---- GCN layer 1: relu(A @ (x outer w1') + b1')  (BN folded) -------
        # conv1 has in_channels == 1 -> rank-1 outer product on the VPU.
        xw1 = x_ref[...] * w1_ref[...]                      # (N,1)*(1,H)->(N,H)
        h1 = jnp.maximum(
            jnp.dot(a_ref[...], xw1, preferred_element_type=f32)
            + b1_ref[...], 0.0)
        # TODO(synk): F.dropout is identity in eval mode; training dropout not implemented.

        # ---- GCN layer 2: relu(A @ (h1 @ w2') + b2')  (BN folded) ----------
        xw2 = jnp.dot(h1, w2_ref[...], preferred_element_type=f32)
        h2 = jnp.maximum(
            jnp.dot(a_ref[...], xw2, preferred_element_type=f32)
            + b2_ref[...], 0.0)
        # TODO(synk): for large N, tile the dense A@ aggregations (grid/emit_pipeline)
        # instead of keeping the full NxN adjacency VMEM-resident.

        # ---- edge gather folded into LSTM layer-0 input projection ---------
        # sender/receiver rows gathered with one-hot matmuls (MXU), no serial loop.
        node_s = jnp.dot(h2, wih_s_ref[...], preferred_element_type=f32)  # (N,4LH)
        node_r = jnp.dot(h2, wih_r_ref[...], preferred_element_type=f32)  # (N,4LH)
        gx = (jnp.dot(ssrc_ref[...], node_s, preferred_element_type=f32)
              + jnp.dot(sdst_ref[...], node_r, preferred_element_type=f32)
              + jnp.dot(attr_ref[...], wih_a_ref[...], preferred_element_type=f32)
              + bl0_ref[...])                               # (T, 4LH), incl. b_l0
        gx_scr[:, 0:G] = gx
        if L > 1:
            # constant upper-layer biases occupy the remaining gate lanes
            gx_scr[:, G:] = jnp.broadcast_to(ub_ref[...], (T, (L - 1) * G))

        # lane mask selecting the "g" (tanh) block inside each layer's 4LH gates
        lane = lax.broadcasted_iota(jnp.int32, (1, L * G), 1)
        g_mask = (lane >= 2 * LH) & (lane < 3 * LH)
        for l in range(1, L):
            g_mask = g_mask | ((lane >= l * G + 2 * LH) & (lane < l * G + 3 * LH))

        # ---- wavefront-skewed multi-layer LSTM ------------------------------
        # At wavefront step s, layer l processes timestep t = s - l.  All active
        # layers only depend on the previous wavefront step, so the recurrence
        # is a single block-structured matmul per step.
        def step(s, carry):
            hs = carry[:L]
            cs = carry[L:]
            u = hs[0] if L == 1 else jnp.concatenate(hs, axis=1)   # (1, L*LH)
            t0 = jnp.minimum(s, T - 1)                             # clamp epilogue
            g_full = gx_scr[pl.ds(t0, 1), :] + jnp.dot(
                u, wave_ref[...], preferred_element_type=f32)      # (1, L*4LH)

            # full-width activations: one sigmoid + one tanh + one select
            sig = jax.nn.sigmoid(g_full)
            tnh = jnp.tanh(g_full)
            act = jnp.where(g_mask, tnh, sig)

            new_hs = []
            new_cs = []
            for l in range(L):
                b = l * G
                i_g = act[:, b:b + LH]
                f_g = act[:, b + LH:b + 2 * LH]
                g_g = act[:, b + 2 * LH:b + 3 * LH]
                o_g = act[:, b + 3 * LH:b + 4 * LH]
                c_new = f_g * cs[l] + i_g * g_g
                h_new = o_g * jnp.tanh(c_new)
                if l > 0:
                    # layer l only becomes active at wavefront step s == l
                    valid = s >= l
                    c_new = jnp.where(valid, c_new, cs[l])
                    h_new = jnp.where(valid, h_new, hs[l])
                new_hs.append(h_new)
                new_cs.append(c_new)
                # TODO(synk): nn.LSTM inter-layer dropout is identity in eval mode.

            # last layer's output at timestep s-(L-1); prologue writes land on
            # row 0 and are overwritten by the first valid write.
            t_out = jnp.maximum(s - (L - 1), 0)
            seq_scr[pl.ds(t_out, 1), :] = new_hs[-1]
            return tuple(new_hs) + tuple(new_cs)

        zero = jnp.zeros((1, LH), f32)
        lax.fori_loop(0, steps, step, (zero,) * (2 * L), unroll=unroll)

        # ---- MLP head: lin2(relu(lin1(.))) over all timesteps at once ------
        hid = jnp.maximum(
            jnp.dot(seq_scr[...], lw1_ref[...], preferred_element_type=f32)
            + lb1_ref[...], 0.0)
        if out_c == 1:
            # degenerate N=1 MXU matmul replaced by VPU multiply + lane reduce
            o_ref[...] = (jnp.sum(hid * lw2_ref[...], axis=-1, keepdims=True)
                          + lb2_ref[...])
        else:
            o_ref[...] = jnp.dot(hid, lw2_ref[...],
                                 preferred_element_type=f32) + lb2_ref[...]

    return kernel


# --------------------------------------------------------------------------
# Glue: symmetric-normalized adjacency (PyG GCNConv semantics, multigraph-aware:
#       A_hat[dst, src] += 1 per edge, plus self loops;
#       A_norm[i,j] = A_hat[i,j] * d_i^{-1/2} * d_j^{-1/2})
# --------------------------------------------------------------------------
def build_gcn_norm_adjacency(edge_index, num_nodes):
    src = edge_index[0]
    dst = edge_index[1]
    a = jnp.zeros((num_nodes, num_nodes), jnp.float32)
    a = a.at[dst, src].add(1.0)          # .add keeps parallel-edge multiplicity
    a = a + jnp.eye(num_nodes, dtype=jnp.float32)
    deg = jnp.sum(a, axis=1)
    d_inv_sqrt = jnp.where(deg > 0, lax.rsqrt(deg), 0.0)
    return a * d_inv_sqrt[:, None] * d_inv_sqrt[None, :]


# --------------------------------------------------------------------------
# Host-side parameter prep: fold BN into GCN weights, build merged LSTM
# wavefront weight, split/pad layer-0 input weights.
# --------------------------------------------------------------------------
def _fold_bn(w, b, gamma, beta, mean, var):
    scale = gamma * lax.rsqrt(var + EPS_BN)
    return w * scale[None, :], (b - mean) * scale + beta


def prepare_params(params):
    H = params["gcn2_w"].shape[0]
    w1f, b1f = _fold_bn(params["gcn1_w"], params["gcn1_b"],
                        params["bn1_gamma"], params["bn1_beta"],
                        params["bn1_mean"], params["bn1_var"])
    w2f, b2f = _fold_bn(params["gcn2_w"], params["gcn2_b"],
                        params["bn2_gamma"], params["bn2_beta"],
                        params["bn2_mean"], params["bn2_var"])

    lstm = params["lstm"]
    L = len(lstm)
    LH = lstm[0]["w_hh"].shape[0]
    G = 4 * LH

    w_ih0 = lstm[0]["w_ih"]                       # (2H + n_attr, 4*LH)
    n_attr = w_ih0.shape[0] - 2 * H
    attr_cols = -(-n_attr // 8) * 8               # sublane-aligned attr block
    wih_attr = jnp.pad(w_ih0[2 * H:], ((0, attr_cols - n_attr), (0, 0)))

    # Block-structured wavefront weight (L*LH, L*4LH):
    #   rows l*LH:(l+1)*LH hold layer-l recurrence (cols l*G:(l+1)*G) and
    #   rows (l-1)*LH:l*LH hold layer-l input weights (from layer l-1 output).
    wave = jnp.zeros((L * LH, L * G), jnp.float32)
    wave = wave.at[0:LH, 0:G].set(lstm[0]["w_hh"])
    for l in range(1, L):
        wave = wave.at[(l - 1) * LH:l * LH, l * G:(l + 1) * G].set(lstm[l]["w_ih"])
        wave = wave.at[l * LH:(l + 1) * LH, l * G:(l + 1) * G].set(lstm[l]["w_hh"])

    upper_bias = None
    if L > 1:
        upper_bias = jnp.concatenate(
            [lstm[l]["b"].reshape(1, -1) for l in range(1, L)], axis=1)

    out_c = params["lin2_w"].shape[1]
    lw2 = params["lin2_w"].reshape(1, -1) if out_c == 1 else params["lin2_w"]

    return {
        "H": H, "LH": LH, "L": L, "out_c": out_c,
        "n_attr": n_attr, "attr_cols": attr_cols,
        "w1f": w1f, "b1f": b1f.reshape(1, -1),
        "w2f": w2f, "b2f": b2f.reshape(1, -1),
        "wih_snd": w_ih0[0:H],
        "wih_rcv": w_ih0[H:2 * H],
        "wih_attr": wih_attr,
        "bl0": lstm[0]["b"].reshape(1, -1),
        "wave": wave,
        "upper_bias": upper_bias,
        "lin1_w": params["lin1_w"], "lin1_b": params["lin1_b"].reshape(1, -1),
        "lin2_w": lw2, "lin2_b": params["lin2_b"].reshape(1, -1),
    }


# --------------------------------------------------------------------------
# Full forward (eval mode) — one fused pallas_call, grid=() on one TensorCore.
# TODO(synk): when batching multiple graphs/edge-sequences, add a leading
# "parallel" grid axis so v7x's second TensorCore is used.
# --------------------------------------------------------------------------
def edge_gcn_lstm_forward(prep, x, edge_index, edge_attr):
    num_nodes = x.shape[0]
    T = edge_index.shape[1]
    H, LH, L, out_c = prep["H"], prep["LH"], prep["L"], prep["out_c"]

    a_norm = build_gcn_norm_adjacency(edge_index, num_nodes)
    # one-hot gather matrices (wrapper-side); gather becomes MXU work in-kernel
    s_src = jax.nn.one_hot(edge_index[0], num_nodes, dtype=jnp.float32)  # (T,N)
    s_dst = jax.nn.one_hot(edge_index[1], num_nodes, dtype=jnp.float32)  # (T,N)
    attr_pad = jnp.pad(edge_attr.astype(jnp.float32),
                       ((0, 0), (0, prep["attr_cols"] - prep["n_attr"])))

    args = [a_norm, x.astype(jnp.float32),
            prep["w1f"], prep["b1f"], prep["w2f"], prep["b2f"],
            s_src, s_dst, attr_pad,
            prep["wih_snd"], prep["wih_rcv"], prep["wih_attr"], prep["bl0"],
            prep["wave"]]
    if L > 1:
        args.append(prep["upper_bias"])
    args += [prep["lin1_w"], prep["lin1_b"], prep["lin2_w"], prep["lin2_b"]]

    out = pl.pallas_call(
        _make_fused_kernel(H, LH, T, L, out_c),
        out_shape=jax.ShapeDtypeStruct((T, out_c), jnp.float32),
        in_specs=[pl.BlockSpec(memory_space=pltpu.MemorySpace.VMEM)] * len(args),
        out_specs=pl.BlockSpec(memory_space=pltpu.MemorySpace.VMEM),
        scratch_shapes=[
            pltpu.VMEM((T, L * 4 * LH), jnp.float32),  # LSTM input proj + biases
            pltpu.VMEM((T, LH), jnp.float32),          # last-layer hidden seq
        ],
    )(*args)
    return out.reshape(-1)


# --------------------------------------------------------------------------
# Deterministic parameter construction (torch-style semantics).
# --------------------------------------------------------------------------
def init_params(key, hidden_channels, lstm_hidden, out_channels, num_layers):
    keys = jax.random.split(key, 32)
    ki = iter(range(32))

    def nrm(shape, scale=0.1):
        return scale * jax.random.normal(keys[next(ki)], shape, jnp.float32)

    H = hidden_channels
    LH = lstm_hidden
    params = {
        "gcn1_w": nrm((1, H)),
        "gcn1_b": nrm((H,)),
        "gcn2_w": nrm((H, H)),
        "gcn2_b": nrm((H,)),
        "bn1_gamma": 1.0 + nrm((H,)),
        "bn1_beta": nrm((H,)),
        "bn1_mean": nrm((H,)),
        "bn1_var": 0.5 + jnp.abs(nrm((H,))),
        "bn2_gamma": 1.0 + nrm((H,)),
        "bn2_beta": nrm((H,)),
        "bn2_mean": nrm((H,)),
        "bn2_var": 0.5 + jnp.abs(nrm((H,))),
        "lin1_w": nrm((LH, LH // 2)),
        "lin1_b": nrm((LH // 2,)),
        "lin2_w": nrm((LH // 2, out_channels)),
        "lin2_b": nrm((out_channels,)),
    }
    lstm_layers = []
    in_size = 2 * H + 3
    for _ in range(num_layers):
        lstm_layers.append({
            "w_ih": nrm((in_size, 4 * LH)),   # transposed torch weight_ih
            "w_hh": nrm((LH, 4 * LH)),        # transposed torch weight_hh
            "b": nrm((4 * LH,)),              # b_ih + b_hh combined
        })
        in_size = LH
    params["lstm"] = lstm_layers
    return params


if __name__ == "__main__":
    # Small, deterministic problem sizes.
    num_nodes = 16
    num_edges = 24
    hidden_channels = 8
    lstm_hidden = 32
    out_channels = 1
    num_layers = 2

    key = jax.random.PRNGKey(0)
    k_x, k_src, k_off, k_attr, k_par = jax.random.split(key, 5)

    x = jax.random.normal(k_x, (num_nodes, 1), jnp.float32)
    src = jax.random.randint(k_src, (num_edges,), 0, num_nodes, jnp.int32)
    off = jax.random.randint(k_off, (num_edges,), 1, num_nodes, jnp.int32)
    dst = (src + off) % num_nodes  # no self-loops by construction
    edge_index = jnp.stack([src, dst], axis=0)
    edge_attr = jax.random.normal(k_attr, (num_edges, 3), jnp.float32)

    params = init_params(k_par, hidden_channels, lstm_hidden,
                         out_channels, num_layers)
    prep = prepare_params(params)

    fwd = jax.jit(functools.partial(edge_gcn_lstm_forward, prep))
    out = fwd(x, edge_index, edge_attr)
    jax.block_until_ready(out)
    assert out.shape == (num_edges * out_channels,)
    print("KERNEL_OK")
</pallas_src>

<mosaic_0001>
module attributes {stable_mosaic.version = 11 : i64} {
  func.func private @main(%arg0: i32) attributes {dimension_semantics = [#tpu.dimension_semantics<core_parallel>], iteration_bounds = array<i64: 2>, tpu.core_type = #tpu.core_type<sc_scalar_subcore>, window_params = []} {
    return
  }
}

module attributes {stable_mosaic.version = 11 : i64} {
  func.func private @main(%arg0: i32) attributes {dimension_semantics = [#tpu.dimension_semantics<core_parallel>], iteration_bounds = array<i64: 2>, tpu.core_type = #tpu.core_type<sc_scalar_subcore>, window_params = []} {
    return
  }
}

module attributes {stable_mosaic.version = 11 : i64} {
  func.func @kernel(%arg0: memref<16x16xf32, #tpu.memory_space<vmem>>, %arg1: memref<16x1xf32, #tpu.memory_space<vmem>>, %arg2: memref<1x8xf32, #tpu.memory_space<vmem>>, %arg3: memref<1x8xf32, #tpu.memory_space<vmem>>, %arg4: memref<8x8xf32, #tpu.memory_space<vmem>>, %arg5: memref<1x8xf32, #tpu.memory_space<vmem>>, %arg6: memref<24x16xf32, #tpu.memory_space<vmem>>, %arg7: memref<24x16xf32, #tpu.memory_space<vmem>>, %arg8: memref<24x8xf32, #tpu.memory_space<vmem>>, %arg9: memref<8x128xf32, #tpu.memory_space<vmem>>, %arg10: memref<8x128xf32, #tpu.memory_space<vmem>>, %arg11: memref<8x128xf32, #tpu.memory_space<vmem>>, %arg12: memref<1x128xf32, #tpu.memory_space<vmem>>, %arg13: memref<64x256xf32, #tpu.memory_space<vmem>>, %arg14: memref<1x128xf32, #tpu.memory_space<vmem>>, %arg15: memref<32x16xf32, #tpu.memory_space<vmem>>, %arg16: memref<1x16xf32, #tpu.memory_space<vmem>>, %arg17: memref<1x16xf32, #tpu.memory_space<vmem>>, %arg18: memref<1x1xf32, #tpu.memory_space<vmem>>, %arg19: memref<24x1xf32, #tpu.memory_space<vmem>>, %arg20: memref<24x256xf32, #tpu.memory_space<vmem>>, %arg21: memref<24x32xf32, #tpu.memory_space<vmem>>) attributes {dimension_semantics = [], scalar_prefetch = 0 : i64, scratch_operands = 2 : i64, tpu.core_type = #tpu.core_type<tc>} {
    %c0 = arith.constant 0 : index
    %c0_0 = arith.constant 0 : index
    %0 = vector.load %arg1[%c0, %c0_0] : memref<16x1xf32, #tpu.memory_space<vmem>>, vector<16x1xf32>
    %c0_1 = arith.constant 0 : index
    %c0_2 = arith.constant 0 : index
    %1 = vector.load %arg2[%c0_1, %c0_2] : memref<1x8xf32, #tpu.memory_space<vmem>>, vector<1x8xf32>
    %2 = vector.broadcast %0 : vector<16x1xf32> to vector<16x8xf32>
    %3 = vector.broadcast %1 : vector<1x8xf32> to vector<16x8xf32>
    %4 = arith.mulf %2, %3 : vector<16x8xf32>
    %c0_3 = arith.constant 0 : index
    %c0_4 = arith.constant 0 : index
    %5 = vector.load %arg0[%c0_3, %c0_4] : memref<16x16xf32, #tpu.memory_space<vmem>>, vector<16x16xf32>
    %cst = arith.constant dense<0.000000e+00> : vector<16x8xf32>
    %6 = tpu.matmul %5, %4, %cst {dimension_numbers = #tpu.dot_dimension_numbers<[1], [0], [0], [1], [0, 0, 1, 1], [], []>} : vector<16x16xf32>, vector<16x8xf32>, vector<16x8xf32> -> vector<16x8xf32>
    %c0_5 = arith.constant 0 : index
    %c0_6 = arith.constant 0 : index
    %7 = vector.load %arg3[%c0_5, %c0_6] : memref<1x8xf32, #tpu.memory_space<vmem>>, vector<1x8xf32>
    %8 = vector.broadcast %7 : vector<1x8xf32> to vector<16x8xf32>
    %9 = arith.addf %6, %8 : vector<16x8xf32>
    %cst_7 = arith.constant 0.000000e+00 : f32
    %10 = vector.broadcast %cst_7 : f32 to vector<16x8xf32>
    %11 = arith.maximumf %9, %10 : vector<16x8xf32>
    %c0_8 = arith.constant 0 : index
    %c0_9 = arith.constant 0 : index
    %12 = vector.load %arg4[%c0_8, %c0_9] : memref<8x8xf32, #tpu.memory_space<vmem>>, vector<8x8xf32>
    %cst_10 = arith.constant dense<0.000000e+00> : vector<16x8xf32>
    %13 = tpu.matmul %11, %12, %cst_10 {dimension_numbers = #tpu.dot_dimension_numbers<[1], [0], [0], [1], [0, 0, 1, 1], [], []>} : vector<16x8xf32>, vector<8x8xf32>, vector<16x8xf32> -> vector<16x8xf32>
    %c0_11 = arith.constant 0 : index
    %c0_12 = arith.constant 0 : index
    %14 = vector.load %arg0[%c0_11, %c0_12] : memref<16x16xf32, #tpu.memory_space<vmem>>, vector<16x16xf32>
    %cst_13 = arith.constant dense<0.000000e+00> : vector<16x8xf32>
    %15 = tpu.matmul %14, %13, %cst_13 {dimension_numbers = #tpu.dot_dimension_numbers<[1], [0], [0], [1], [0, 0, 1, 1], [], []>} : vector<16x16xf32>, vector<16x8xf32>, vector<16x8xf32> -> vector<16x8xf32>
    %c0_14 = arith.constant 0 : index
    %c0_15 = arith.constant 0 : index
    %16 = vector.load %arg5[%c0_14, %c0_15] : memref<1x8xf32, #tpu.memory_space<vmem>>, vector<1x8xf32>
    %17 = vector.broadcast %16 : vector<1x8xf32> to vector<16x8xf32>
    %18 = arith.addf %15, %17 : vector<16x8xf32>
    %cst_16 = arith.constant 0.000000e+00 : f32
    %19 = vector.broadcast %cst_16 : f32 to vector<16x8xf32>
    %20 = arith.maximumf %18, %19 : vector<16x8xf32>
    %c0_17 = arith.constant 0 : index
    %c0_18 = arith.constant 0 : index
    %21 = vector.load %arg9[%c0_17, %c0_18] : memref<8x128xf32, #tpu.memory_space<vmem>>, vector<8x128xf32>
    %cst_19 = arith.constant dense<0.000000e+00> : vector<16x128xf32>
    %22 = tpu.matmul %20, %21, %cst_19 {dimension_numbers = #tpu.dot_dimension_numbers<[1], [0], [0], [1], [0, 0, 1, 1], [], []>} : vector<16x8xf32>, vector<8x128xf32>, vector<16x128xf32> -> vector<16x128xf32>
    %c0_20 = arith.constant 0 : index
    %c0_21 = arith.constant 0 : index
    %23 = vector.load %arg10[%c0_20, %c0_21] : memref<8x128xf32, #tpu.memory_space<vmem>>, vector<8x128xf32>
    %cst_22 = arith.constant dense<0.000000e+00> : vector<16x128xf32>
    %24 = tpu.matmul %20, %23, %cst_22 {dimension_numbers = #tpu.dot_dimension_numbers<[1], [0], [0], [1], [0, 0, 1, 1], [], []>} : vector<16x8xf32>, vector<8x128xf32>, vector<16x128xf32> -> vector<16x128xf32>
    %c0_23 = arith.constant 0 : index
    %c0_24 = arith.constant 0 : index
    %25 = vector.load %arg6[%c0_23, %c0_24] : memref<24x16xf32, #tpu.memory_space<vmem>>, vector<24x16xf32>
    %cst_25 = arith.constant dense<0.000000e+00> : vector<24x128xf32>
    %26 = tpu.matmul %25, %22, %cst_25 {dimension_numbers = #tpu.dot_dimension_numbers<[1], [0], [0], [1], [0, 0, 1, 1], [], []>} : vector<24x16xf32>, vector<16x128xf32>, vector<24x128xf32> -> vector<24x128xf32>
    %c0_26 = arith.constant 0 : index
    %c0_27 = arith.constant 0 : index
    %27 = vector.load %arg7[%c0_26, %c0_27] : memref<24x16xf32, #tpu.memory_space<vmem>>, vector<24x16xf32>
    %cst_28 = arith.constant dense<0.000000e+00> : vector<24x128xf32>
    %28 = tpu.matmul %27, %24, %cst_28 {dimension_numbers = #tpu.dot_dimension_numbers<[1], [0], [0], [1], [0, 0, 1, 1], [], []>} : vector<24x16xf32>, vector<16x128xf32>, vector<24x128xf32> -> vector<24x128xf32>
    %29 = arith.addf %26, %28 : vector<24x128xf32>
    %c0_29 = arith.constant 0 : index
    %c0_30 = arith.constant 0 : index
    %30 = vector.load %arg8[%c0_29, %c0_30] : memref<24x8xf32, #tpu.memory_space<vmem>>, vector<24x8xf32>
    %c0_31 = arith.constant 0 : index
    %c0_32 = arith.constant 0 : index
    %31 = vector.load %arg11[%c0_31, %c0_32] : memref<8x128xf32, #tpu.memory_space<vmem>>, vector<8x128xf32>
    %cst_33 = arith.constant dense<0.000000e+00> : vector<24x128xf32>
    %32 = tpu.matmul %30, %31, %cst_33 {dimension_numbers = #tpu.dot_dimension_numbers<[1], [0], [0], [1], [0, 0, 1, 1], [], []>} : vector<24x8xf32>, vector<8x128xf32>, vector<24x128xf32> -> vector<24x128xf32>
    %33 = arith.addf %29, %32 : vector<24x128xf32>
    %c0_34 = arith.constant 0 : index
    %c0_35 = arith.constant 0 : index
    %34 = vector.load %arg12[%c0_34, %c0_35] : memref<1x128xf32, #tpu.memory_space<vmem>>, vector<1x128xf32>
    %35 = vector.broadcast %34 : vector<1x128xf32> to vector<24x128xf32>
    %36 = arith.addf %33, %35 : vector<24x128xf32>
    %c0_36 = arith.constant 0 : index
    %c0_37 = arith.constant 0 : index
    %37 = vector.load %arg20[%c0_36, %c0_37] : memref<24x256xf32, #tpu.memory_space<vmem>>, vector<24x128xf32>
    tpu.vector_store %arg20[%c0_36, %c0_37], %36 {strides = array<i32>} : memref<24x256xf32, #tpu.memory_space<vmem>>, vector<24x128xf32>,
    %c0_38 = arith.constant 0 : index
    %c0_39 = arith.constant 0 : index
    %38 = vector.load %arg14[%c0_38, %c0_39] : memref<1x128xf32, #tpu.memory_space<vmem>>, vector<1x128xf32>
    %39 = vector.shape_cast %38 : vector<1x128xf32> to vector<1x128xf32>
    %40 = vector.broadcast %39 : vector<1x128xf32> to vector<24x128xf32>
    %c0_40 = arith.constant 0 : index
    %c128 = arith.constant 128 : index
    %41 = vector.load %arg20[%c0_40, %c128] : memref<24x256xf32, #tpu.memory_space<vmem>>, vector<24x128xf32>
    tpu.vector_store %arg20[%c0_40, %c128], %40 {strides = array<i32>} : memref<24x256xf32, #tpu.memory_space<vmem>>, vector<24x128xf32>,
    %42 = tpu.iota {dimensions = array<i32: 1>} : vector<1x256xi32>
    %c64_i32 = arith.constant 64 : i32
    %43 = vector.broadcast %c64_i32 : i32 to vector<1x256xi32>
    %44 = arith.cmpi sge, %42, %43 : vector<1x256xi32>
    %c96_i32 = arith.constant 96 : i32
    %45 = vector.broadcast %c96_i32 : i32 to vector<1x256xi32>
    %46 = arith.cmpi slt, %42, %45 : vector<1x256xi32>
    %47 = arith.andi %44, %46 : vector<1x256xi1>
    %c192_i32 = arith.constant 192 : i32
    %48 = vector.broadcast %c192_i32 : i32 to vector<1x256xi32>
    %49 = arith.cmpi sge, %42, %48 : vector<1x256xi32>
    %c224_i32 = arith.constant 224 : i32
    %50 = vector.broadcast %c224_i32 : i32 to vector<1x256xi32>
    %51 = arith.cmpi slt, %42, %50 : vector<1x256xi32>
    %52 = arith.andi %49, %51 : vector<1x256xi1>
    %53 = arith.ori %47, %52 : vector<1x256xi1>
    %cst_41 = arith.constant 0.000000e+00 : f32
    %54 = vector.broadcast %cst_41 : f32 to vector<1x32xf32>
    %c0_i32 = arith.constant 0 : i32
    %55 = tpu.concatenate %54, %54 in 1 : vector<1x32xf32>, vector<1x32xf32> -> vector<1x64xf32>
    %c23_i32 = arith.constant 23 : i32
    %56 = arith.minsi %c0_i32, %c23_i32 : i32
    %57 = arith.index_cast %56 : i32 to index
    %c0_42 = arith.constant 0 : index
    %58 = vector.load %arg20[%57, %c0_42] : memref<24x256xf32, #tpu.memory_space<vmem>>, vector<1x256xf32>
    %c0_43 = arith.constant 0 : index
    %c0_44 = arith.constant 0 : index
    %59 = vector.load %arg13[%c0_43, %c0_44] : memref<64x256xf32, #tpu.memory_space<vmem>>, vector<64x256xf32>
    %cst_45 = arith.constant dense<0.000000e+00> : vector<1x256xf32>
    %60 = tpu.matmul %55, %59, %cst_45 {dimension_numbers = #tpu.dot_dimension_numbers<[1], [0], [0], [1], [0, 0, 1, 1], [], []>} : vector<1x64xf32>, vector<64x256xf32>, vector<1x256xf32> -> vector<1x256xf32>
    %61 = arith.addf %58, %60 : vector<1x256xf32>
    %62 = arith.negf %61 : vector<1x256xf32>
    %63 = math.exp %62 : vector<1x256xf32>
    %cst_46 = arith.constant 1.000000e+00 : f32
    %64 = vector.broadcast %cst_46 : f32 to vector<1x256xf32>
    %65 = arith.addf %64, %63 : vector<1x256xf32>
    %66 = arith.divf %64, %65 : vector<1x256xf32>
    %67 = math.tanh %61 : vector<1x256xf32>
    %68 = arith.select %53, %67, %66 : vector<1x256xi1>, vector<1x256xf32>
    %69 = vector.extract_strided_slice %68 {offsets = [0, 0], sizes = [1, 32], strides = [1, 1]} : vector<1x256xf32> to vector<1x32xf32>
    %70 = vector.extract_strided_slice %68 {offsets = [0, 32], sizes = [1, 32], strides = [1, 1]} : vector<1x256xf32> to vector<1x32xf32>
    %71 = vector.extract_strided_slice %68 {offsets = [0, 64], sizes = [1, 32], strides = [1, 1]} : vector<1x256xf32> to vector<1x32xf32>
    %72 = vector.extract_strided_slice %68 {offsets = [0, 96], sizes = [1, 32], strides = [1, 1]} : vector<1x256xf32> to vector<1x32xf32>
    %73 = arith.mulf %70, %54 : vector<1x32xf32>
    %74 = arith.mulf %69, %71 : vector<1x32xf32>
    %75 = arith.addf %73, %74 : vector<1x32xf32>
    %76 = math.tanh %75 : vector<1x32xf32>
    %77 = arith.mulf %72, %76 : vector<1x32xf32>
    %78 = vector.extract_strided_slice %68 {offsets = [0, 128], sizes = [1, 32], strides = [1, 1]} : vector<1x256xf32> to vector<1x32xf32>
    %79 = vector.extract_strided_slice %68 {offsets = [0, 160], sizes = [1, 32], strides = [1, 1]} : vector<1x256xf32> to vector<1x32xf32>
    %80 = vector.extract_strided_slice %68 {offsets = [0, 192], sizes = [1, 32], strides = [1, 1]} : vector<1x256xf32> to vector<1x32xf32>
    %81 = vector.extract_strided_slice %68 {offsets = [0, 224], sizes = [1, 32], strides = [1, 1]} : vector<1x256xf32> to vector<1x32xf32>
    %82 = arith.mulf %79, %54 : vector<1x32xf32>
    %83 = arith.mulf %78, %80 : vector<1x32xf32>
    %84 = arith.addf %82, %83 : vector<1x32xf32>
    %85 = math.tanh %84 : vector<1x32xf32>
    %86 = arith.mulf %81, %85 : vector<1x32xf32>
    %c1_i32 = arith.constant 1 : i32
    %87 = arith.cmpi sge, %c0_i32, %c1_i32 : i32
    %88 = arith.select %87, %84, %54 : vector<1x32xf32>
    %89 = arith.select %87, %86, %54 : vector<1x32xf32>
    %c1_i32_47 = arith.constant 1 : i32
    %90 = arith.subi %c0_i32, %c1_i32_47 : i32
    %c0_i32_48 = arith.constant 0 : i32
    %91 = arith.maxsi %90, %c0_i32_48 : i32
    %92 = arith.index_cast %91 : i32 to index
    %c0_49 = arith.constant 0 : index
    %93 = vector.load %arg21[%92, %c0_49] : memref<24x32xf32, #tpu.memory_space<vmem>>, vector<1x32xf32>
    tpu.vector_store %arg21[%92, %c0_49], %89 {strides = array<i32>} : memref<24x32xf32, #tpu.memory_space<vmem>>, vector<1x32xf32>,
    %c1_i32_50 = arith.constant 1 : i32
    %94 = tpu.concatenate %77, %89 in 1 : vector<1x32xf32>, vector<1x32xf32> -> vector<1x64xf32>
    %c23_i32_51 = arith.constant 23 : i32
    %95 = arith.minsi %c1_i32_50, %c23_i32_51 : i32
    %96 = arith.index_cast %95 : i32 to index
    %c0_52 = arith.constant 0 : index
    %97 = vector.load %arg20[%96, %c0_52] : memref<24x256xf32, #tpu.memory_space<vmem>>, vector<1x256xf32>
    %c0_53 = arith.constant 0 : index
    %c0_54 = arith.constant 0 : index
    %98 = vector.load %arg13[%c0_53, %c0_54] : memref<64x256xf32, #tpu.memory_space<vmem>>, vector<64x256xf32>
    %cst_55 = arith.constant dense<0.000000e+00> : vector<1x256xf32>
    %99 = tpu.matmul %94, %98, %cst_55 {dimension_numbers = #tpu.dot_dimension_numbers<[1], [0], [0], [1], [0, 0, 1, 1], [], []>} : vector<1x64xf32>, vector<64x256xf32>, vector<1x256xf32> -> vector<1x256xf32>
    %100 = arith.addf %97, %99 : vector<1x256xf32>
    %101 = arith.negf %100 : vector<1x256xf32>
    %102 = math.exp %101 : vector<1x256xf32>
    %cst_56 = arith.constant 1.000000e+00 : f32
    %103 = vector.broadcast %cst_56 : f32 to vector<1x256xf32>
    %104 = arith.addf %103, %102 : vector<1x256xf32>
    %105 = arith.divf %103, %104 : vector<1x256xf32>
    %106 = math.tanh %100 : vector<1x256xf32>
    %107 = arith.select %53, %106, %105 : vector<1x256xi1>, vector<1x256xf32>
    %108 = vector.extract_strided_slice %107 {offsets = [0, 0], sizes = [1, 32], strides = [1, 1]} : vector<1x256xf32> to vector<1x32xf32>
    %109 = vector.extract_strided_slice %107 {offsets = [0, 32], sizes = [1, 32], strides = [1, 1]} : vector<1x256xf32> to vector<1x32xf32>
    %110 = vector.extract_strided_slice %107 {offsets = [0, 64], sizes = [1, 32], strides = [1, 1]} : vector<1x256xf32> to vector<1x32xf32>
    %111 = vector.extract_strided_slice %107 {offsets = [0, 96], sizes = [1, 32], strides = [1, 1]} : vector<1x256xf32> to vector<1x32xf32>
    %112 = arith.mulf %109, %75 : vector<1x32xf32>
    %113 = arith.mulf %108, %110 : vector<1x32xf32>
    %114 = arith.addf %112, %113 : vector<1x32xf32>
    %115 = math.tanh %114 : vector<1x32xf32>
    %116 = arith.mulf %111, %115 : vector<1x32xf32>
    %117 = vector.extract_strided_slice %107 {offsets = [0, 128], sizes = [1, 32], strides = [1, 1]} : vector<1x256xf32> to vector<1x32xf32>
    %118 = vector.extract_strided_slice %107 {offsets = [0, 160], sizes = [1, 32], strides = [1, 1]} : vector<1x256xf32> to vector<1x32xf32>
    %119 = vector.extract_strided_slice %107 {offsets = [0, 192], sizes = [1, 32], strides = [1, 1]} : vector<1x256xf32> to vector<1x32xf32>
    %120 = vector.extract_strided_slice %107 {offsets = [0, 224], sizes = [1, 32], strides = [1, 1]} : vector<1x256xf32> to vector<1x32xf32>
    %121 = arith.mulf %118, %88 : vector<1x32xf32>
    %122 = arith.mulf %117, %119 : vector<1x32xf32>
    %123 = arith.addf %121, %122 : vector<1x32xf32>
    %124 = math.tanh %123 : vector<1x32xf32>
    %125 = arith.mulf %120, %124 : vector<1x32xf32>
    %c1_i32_57 = arith.constant 1 : i32
    %126 = arith.cmpi sge, %c1_i32_50, %c1_i32_57 : i32
    %127 = arith.select %126, %123, %88 : vector<1x32xf32>
    %128 = arith.select %126, %125, %89 : vector<1x32xf32>
    %c1_i32_58 = arith.constant 1 : i32
    %129 = arith.subi %c1_i32_50, %c1_i32_58 : i32
    %c0_i32_59 = arith.constant 0 : i32
    %130 = arith.maxsi %129, %c0_i32_59 : i32
    %131 = arith.index_cast %130 : i32 to index
    %c0_60 = arith.constant 0 : index
    %132 = vector.load %arg21[%131, %c0_60] : memref<24x32xf32, #tpu.memory_space<vmem>>, vector<1x32xf32>
    tpu.vector_store %arg21[%131, %c0_60], %128 {strides = array<i32>} : memref<24x32xf32, #tpu.memory_space<vmem>>, vector<1x32xf32>,
    %c2_i32 = arith.constant 2 : i32
    %133 = tpu.concatenate %116, %128 in 1 : vector<1x32xf32>, vector<1x32xf32> -> vector<1x64xf32>
    %c23_i32_61 = arith.constant 23 : i32
    %134 = arith.minsi %c2_i32, %c23_i32_61 : i32
    %135 = arith.index_cast %134 : i32 to index
    %c0_62 = arith.constant 0 : index
    %136 = vector.load %arg20[%135, %c0_62] : memref<24x256xf32, #tpu.memory_space<vmem>>, vector<1x256xf32>
    %c0_63 = arith.constant 0 : index
    %c0_64 = arith.constant 0 : index
    %137 = vector.load %arg13[%c0_63, %c0_64] : memref<64x256xf32, #tpu.memory_space<vmem>>, vector<64x256xf32>
    %cst_65 = arith.constant dense<0.000000e+00> : vector<1x256xf32>
    %138 = tpu.matmul %133, %137, %cst_65 {dimension_numbers = #tpu.dot_dimension_numbers<[1], [0], [0], [1], [0, 0, 1, 1], [], []>} : vector<1x64xf32>, vector<64x256xf32>, vector<1x256xf32> -> vector<1x256xf32>
    %139 = arith.addf %136, %138 : vector<1x256xf32>
    %140 = arith.negf %139 : vector<1x256xf32>
    %141 = math.exp %140 : vector<1x256xf32>
    %cst_66 = arith.constant 1.000000e+00 : f32
    %142 = vector.broadcast %cst_66 : f32 to vector<1x256xf32>
    %143 = arith.addf %142, %141 : vector<1x256xf32>
    %144 = arith.divf %142, %143 : vector<1x256xf32>
    %145 = math.tanh %139 : vector<1x256xf32>
    %146 = arith.select %53, %145, %144 : vector<1x256xi1>, vector<1x256xf32>
    %147 = vector.extract_strided_slice %146 {offsets = [0, 0], sizes = [1, 32], strides = [1, 1]} : vector<1x256xf32> to vector<1x32xf32>
    %148 = vector.extract_strided_slice %146 {offsets = [0, 32], sizes = [1, 32], strides = [1, 1]} : vector<1x256xf32> to vector<1x32xf32>
    %149 = vector.extract_strided_slice %146 {offsets = [0, 64], sizes = [1, 32], strides = [1, 1]} : vector<1x256xf32> to vector<1x32xf32>
    %150 = vector.extract_strided_slice %146 {offsets = [0, 96], sizes = [1, 32], strides = [1, 1]} : vector<1x256xf32> to vector<1x32xf32>
    %151 = arith.mulf %148, %114 : vector<1x32xf32>
    %152 = arith.mulf %147, %149 : vector<1x32xf32>
    %153 = arith.addf %151, %152 : vector<1x32xf32>
    %154 = math.tanh %153 : vector<1x32xf32>
    %155 = arith.mulf %150, %154 : vector<1x32xf32>
    %156 = vector.extract_strided_slice %146 {offsets = [0, 128], sizes = [1, 32], strides = [1, 1]} : vector<1x256xf32> to vector<1x32xf32>
    %157 = vector.extract_strided_slice %146 {offsets = [0, 160], sizes = [1, 32], strides = [1, 1]} : vector<1x256xf32> to vector<1x32xf32>
    %158 = vector.extract_strided_slice %146 {offsets = [0, 192], sizes = [1, 32], strides = [1, 1]} : vector<1x256xf32> to vector<1x32xf32>
    %159 = vector.extract_strided_slice %146 {offsets = [0, 224], sizes = [1, 32], strides = [1, 1]} : vector<1x256xf32> to vector<1x32xf32>
    %160 = arith.mulf %157, %127 : vector<1x32xf32>
    %161 = arith.mulf %156, %158 : vector<1x32xf32>
    %162 = arith.addf %160, %161 : vector<1x32xf32>
    %163 = math.tanh %162 : vector<1x32xf32>
    %164 = arith.mulf %159, %163 : vector<1x32xf32>
    %c1_i32_67 = arith.constant 1 : i32
    %165 = arith.cmpi sge, %c2_i32, %c1_i32_67 : i32
    %166 = arith.select %165, %162, %127 : vector<1x32xf32>
    %167 = arith.select %165, %164, %128 : vector<1x32xf32>
    %c1_i32_68 = arith.constant 1 : i32
    %168 = arith.subi %c2_i32, %c1_i32_68 : i32
    %c0_i32_69 = arith.constant 0 : i32
    %169 = arith.maxsi %168, %c0_i32_69 : i32
    %170 = arith.index_cast %169 : i32 to index
    %c0_70 = arith.constant 0 : index
    %171 = vector.load %arg21[%170, %c0_70] : memref<24x32xf32, #tpu.memory_space<vmem>>, vector<1x32xf32>
    tpu.vector_store %arg21[%170, %c0_70], %167 {strides = array<i32>} : memref<24x32xf32, #tpu.memory_space<vmem>>, vector<1x32xf32>,
    %c3_i32 = arith.constant 3 : i32
    %172 = tpu.concatenate %155, %167 in 1 : vector<1x32xf32>, vector<1x32xf32> -> vector<1x64xf32>
    %c23_i32_71 = arith.constant 23 : i32
    %173 = arith.minsi %c3_i32, %c23_i32_71 : i32
    %174 = arith.index_cast %173 : i32 to index
    %c0_72 = arith.constant 0 : index
    %175 = vector.load %arg20[%174, %c0_72] : memref<24x256xf32, #tpu.memory_space<vmem>>, vector<1x256xf32>
    %c0_73 = arith.constant 0 : index
    %c0_74 = arith.constant 0 : index
    %176 = vector.load %arg13[%c0_73, %c0_74] : memref<64x256xf32, #tpu.memory_space<vmem>>, vector<64x256xf32>
    %cst_75 = arith.constant dense<0.000000e+00> : vector<1x256xf32>
    %177 = tpu.matmul %172, %176, %cst_75 {dimension_numbers = #tpu.dot_dimension_numbers<[1], [0], [0], [1], [0, 0, 1, 1], [], []>} : vector<1x64xf32>, vector<64x256xf32>, vector<1x256xf32> -> vector<1x256xf32>
    %178 = arith.addf %175, %177 : vector<1x256xf32>
    %179 = arith.negf %178 : vector<1x256xf32>
    %180 = math.exp %179 : vector<1x256xf32>
    %cst_76 = arith.constant 1.000000e+00 : f32
    %181 = vector.broadcast %cst_76 : f32 to vector<1x256xf32>
    %182 = arith.addf %181, %180 : vector<1x256xf32>
    %183 = arith.divf %181, %182 : vector<1x256xf32>
    %184 = math.tanh %178 : vector<1x256xf32>
    %185 = arith.select %53, %184, %183 : vector<1x256xi1>, vector<1x256xf32>
    %186 = vector.extract_strided_slice %185 {offsets = [0, 0], sizes = [1, 32], strides = [1, 1]} : vector<1x256xf32> to vector<1x32xf32>
    %187 = vector.extract_strided_slice %185 {offsets = [0, 32], sizes = [1, 32], strides = [1, 1]} : vector<1x256xf32> to vector<1x32xf32>
    %188 = vector.extract_strided_slice %185 {offsets = [0, 64], sizes = [1, 32], strides = [1, 1]} : vector<1x256xf32> to vector<1x32xf32>
    %189 = vector.extract_strided_slice %185 {offsets = [0, 96], sizes = [1, 32], strides = [1, 1]} : vector<1x256xf32> to vector<1x32xf32>
    %190 = arith.mulf %187, %153 : vector<1x32xf32>
    %191 = arith.mulf %186, %188 : vector<1x32xf32>
    %192 = arith.addf %190, %191 : vector<1x32xf32>
    %193 = math.tanh %192 : vector<1x32xf32>
    %194 = arith.mulf %189, %193 : vector<1x32xf32>
    %195 = vector.extract_strided_slice %185 {offsets = [0, 128], sizes = [1, 32], strides = [1, 1]} : vector<1x256xf32> to vector<1x32xf32>
    %196 = vector.extract_strided_slice %185 {offsets = [0, 160], sizes = [1, 32], strides = [1, 1]} : vector<1x256xf32> to vector<1x32xf32>
    %197 = vector.extract_strided_slice %185 {offsets = [0, 192], sizes = [1, 32], strides = [1, 1]} : vector<1x256xf32> to vector<1x32xf32>
    %198 = vector.extract_strided_slice %185 {offsets = [0, 224], sizes = [1, 32], strides = [1, 1]} : vector<1x256xf32> to vector<1x32xf32>
    %199 = arith.mulf %196, %166 : vector<1x32xf32>
    %200 = arith.mulf %195, %197 : vector<1x32xf32>
    %201 = arith.addf %199, %200 : vector<1x32xf32>
    %202 = math.tanh %201 : vector<1x32xf32>
    %203 = arith.mulf %198, %202 : vector<1x32xf32>
    %c1_i32_77 = arith.constant 1 : i32
    %204 = arith.cmpi sge, %c3_i32, %c1_i32_77 : i32
    %205 = arith.select %204, %201, %166 : vector<1x32xf32>
    %206 = arith.select %204, %203, %167 : vector<1x32xf32>
    %c1_i32_78 = arith.constant 1 : i32
    %207 = arith.subi %c3_i32, %c1_i32_78 : i32
    %c0_i32_79 = arith.constant 0 : i32
    %208 = arith.maxsi %207, %c0_i32_79 : i32
    %209 = arith.index_cast %208 : i32 to index
    %c0_80 = arith.constant 0 : index
    %210 = vector.load %arg21[%209, %c0_80] : memref<24x32xf32, #tpu.memory_space<vmem>>, vector<1x32xf32>
    tpu.vector_store %arg21[%209, %c0_80], %206 {strides = array<i32>} : memref<24x32xf32, #tpu.memory_space<vmem>>, vector<1x32xf32>,
    %c4_i32 = arith.constant 4 : i32
    %211 = tpu.concatenate %194, %206 in 1 : vector<1x32xf32>, vector<1x32xf32> -> vector<1x64xf32>
    %c23_i32_81 = arith.constant 23 : i32
    %212 = arith.minsi %c4_i32, %c23_i32_81 : i32
    %213 = arith.index_cast %212 : i32 to index
    %c0_82 = arith.constant 0 : index
    %214 = vector.load %arg20[%213, %c0_82] : memref<24x256xf32, #tpu.memory_space<vmem>>, vector<1x256xf32>
    %c0_83 = arith.constant 0 : index
    %c0_84 = arith.constant 0 : index
    %215 = vector.load %arg13[%c0_83, %c0_84] : memref<64x256xf32, #tpu.memory_space<vmem>>, vector<64x256xf32>
    %cst_85 = arith.constant dense<0.000000e+00> : vector<1x256xf32>
    %216 = tpu.matmul %211, %215, %cst_85 {dimension_numbers = #tpu.dot_dimension_numbers<[1], [0], [0], [1], [0, 0, 1, 1], [], []>} : vector<1x64xf32>, vector<64x256xf32>, vector<1x256xf32> -> vector<1x256xf32>
    %217 = arith.addf %214, %216 : vector<1x256xf32>
    %218 = arith.negf %217 : vector<1x256xf32>
    %219 = math.exp %218 : vector<1x256xf32>
    %cst_86 = arith.constant 1.000000e+00 : f32
    %220 = vector.broadcast %cst_86 : f32 to vector<1x256xf32>
    %221 = arith.addf %220, %219 : vector<1x256xf32>
    %222 = arith.divf %220, %221 : vector<1x256xf32>
    %223 = math.tanh %217 : vector<1x256xf32>
    %224 = arith.select %53, %223, %222 : vector<1x256xi1>, vector<1x256xf32>
    %225 = vector.extract_strided_slice %224 {offsets = [0, 0], sizes = [1, 32], strides = [1, 1]} : vector<1x256xf32> to vector<1x32xf32>
    %226 = vector.extract_strided_slice %224 {offsets = [0, 32], sizes = [1, 32], strides = [1, 1]} : vector<1x256xf32> to vector<1x32xf32>
    %227 = vector.extract_strided_slice %224 {offsets = [0, 64], sizes = [1, 32], strides = [1, 1]} : vector<1x256xf32> to vector<1x32xf32>
    %228 = vector.extract_strided_slice %224 {offsets = [0, 96], sizes = [1, 32], strides = [1, 1]} : vector<1x256xf32> to vector<1x32xf32>
    %229 = arith.mulf %226, %192 : vector<1x32xf32>
    %230 = arith.mulf %225, %227 : vector<1x32xf32>
    %231 = arith.addf %229, %230 : vector<1x32xf32>
    %232 = math.tanh %231 : vector<1x32xf32>
    %233 = arith.mulf %228, %232 : vector<1x32xf32>
    %234 = vector.extract_strided_slice %224 {offsets = [0, 128], sizes = [1, 32], strides = [1, 1]} : vector<1x256xf32> to vector<1x32xf32>
    %235 = vector.extract_strided_slice %224 {offsets = [0, 160], sizes = [1, 32], strides = [1, 1]} : vector<1x256xf32> to vector<1x32xf32>
    %236 = vector.extract_strided_slice %224 {offsets = [0, 192], sizes = [1, 32], strides = [1, 1]} : vector<1x256xf32> to vector<1x32xf32>
    %237 = vector.extract_strided_slice %224 {offsets = [0, 224], sizes = [1, 32], strides = [1, 1]} : vector<1x256xf32> to vector<1x32xf32>
    %238 = arith.mulf %235, %205 : vector<1x32xf32>
    %239 = arith.mulf %234, %236 : vector<1x32xf32>
    %240 = arith.addf %238, %239 : vector<1x32xf32>
    %241 = math.tanh %240 : vector<1x32xf32>
    %242 = arith.mulf %237, %241 : vector<1x32xf32>
    %c1_i32_87 = arith.constant 1 : i32
    %243 = arith.cmpi sge, %c4_i32, %c1_i32_87 : i32
    %244 = arith.select %243, %240, %205 : vector<1x32xf32>
    %245 = arith.select %243, %242, %206 : vector<1x32xf32>
    %c1_i32_88 = arith.constant 1 : i32
    %246 = arith.subi %c4_i32, %c1_i32_88 : i32
    %c0_i32_89 = arith.constant 0 : i32
    %247 = arith.maxsi %246, %c0_i32_89 : i32
    %248 = arith.index_cast %247 : i32 to index
    %c0_90 = arith.constant 0 : index
    %249 = vector.load %arg21[%248, %c0_90] : memref<24x32xf32, #tpu.memory_space<vmem>>, vector<1x32xf32>
    tpu.vector_store %arg21[%248, %c0_90], %245 {strides = array<i32>} : memref<24x32xf32, #tpu.memory_space<vmem>>, vector<1x32xf32>,
    %c5_i32 = arith.constant 5 : i32
    %250 = tpu.concatenate %233, %245 in 1 : vector<1x32xf32>, vector<1x32xf32> -> vector<1x64xf32>
    %c23_i32_91 = arith.constant 23 : i32
    %251 = arith.minsi %c5_i32, %c23_i32_91 : i32
    %252 = arith.index_cast %251 : i32 to index
    %c0_92 = arith.constant 0 : index
    %253 = vector.load %arg20[%252, %c0_92] : memref<24x256xf32, #tpu.memory_space<vmem>>, vector<1x256xf32>
    %c0_93 = arith.constant 0 : index
    %c0_94 = arith.constant 0 : index
    %254 = vector.load %arg13[%c0_93, %c0_94] : memref<64x256xf32, #tpu.memory_space<vmem>>, vector<64x256xf32>
    %cst_95 = arith.constant dense<0.000000e+00> : vector<1x256xf32>
    %255 = tpu.matmul %250, %254, %cst_95 {dimension_numbers = #tpu.dot_dimension_numbers<[1], [0], [0], [1], [0, 0, 1, 1], [], []>} : vector<1x64xf32>, vector<64x256xf32>, vector<1x256xf32> -> vector<1x256xf32>
    %256 = arith.addf %253, %255 : vector<1x256xf32>
    %257 = arith.negf %256 : vector<1x256xf32>
    %258 = math.exp %257 : vector<1x256xf32>
    %cst_96 = arith.constant 1.000000e+00 : f32
    %259 = vector.broadcast %cst_96 : f32 to vector<1x256xf32>
    %260 = arith.addf %259, %258 : vector<1x256xf32>
    %261 = arith.divf %259, %260 : vector<1x256xf32>
    %262 = math.tanh %256 : vector<1x256xf32>
    %263 = arith.select %53, %262, %261 : vector<1x256xi1>, vector<1x256xf32>
    %264 = vector.extract_strided_slice %263 {offsets = [0, 0], sizes = [1, 32], strides = [1, 1]} : vector<1x256xf32> to vector<1x32xf32>
    %265 = vector.extract_strided_slice %263 {offsets = [0, 32], sizes = [1, 32], strides = [1, 1]} : vector<1x256xf32> to vector<1x32xf32>
    %266 = vector.extract_strided_slice %263 {offsets = [0, 64], sizes = [1, 32], strides = [1, 1]} : vector<1x256xf32> to vector<1x32xf32>
    %267 = vector.extract_strided_slice %263 {offsets = [0, 96], sizes = [1, 32], strides = [1, 1]} : vector<1x256xf32> to vector<1x32xf32>
    %268 = arith.mulf %265, %231 : vector<1x32xf32>
    %269 = arith.mulf %264, %266 : vector<1x32xf32>
    %270 = arith.addf %268, %269 : vector<1x32xf32>
    %271 = math.tanh %270 : vector<1x32xf32>
    %272 = arith.mulf %267, %271 : vector<1x32xf32>
    %273 = vector.extract_strided_slice %263 {offsets = [0, 128], sizes = [1, 32], strides = [1, 1]} : vector<1x256xf32> to vector<1x32xf32>
    %274 = vector.extract_strided_slice %263 {offsets = [0, 160], sizes = [1, 32], strides = [1, 1]} : vector<1x256xf32> to vector<1x32xf32>
    %275 = vector.extract_strided_slice %263 {offsets = [0, 192], sizes = [1, 32], strides = [1, 1]} : vector<1x256xf32> to vector<1x32xf32>
    %276 = vector.extract_strided_slice %263 {offsets = [0, 224], sizes = [1, 32], strides = [1, 1]} : vector<1x256xf32> to vector<1x32xf32>
    %277 = arith.mulf %274, %244 : vector<1x32xf32>
    %278 = arith.mulf %273, %275 : vector<1x32xf32>
    %279 = arith.addf %277, %278 : vector<1x32xf32>
    %280 = math.tanh %279 : vector<1x32xf32>
    %281 = arith.mulf %276, %280 : vector<1x32xf32>
    %c1_i32_97 = arith.constant 1 : i32
    %282 = arith.cmpi sge, %c5_i32, %c1_i32_97 : i32
    %283 = arith.select %282, %279, %244 : vector<1x32xf32>
    %284 = arith.select %282, %281, %245 : vector<1x32xf32>
    %c1_i32_98 = arith.constant 1 : i32
    %285 = arith.subi %c5_i32, %c1_i32_98 : i32
    %c0_i32_99 = arith.constant 0 : i32
    %286 = arith.maxsi %285, %c0_i32_99 : i32
    %287 = arith.index_cast %286 : i32 to index
    %c0_100 = arith.constant 0 : index
    %288 = vector.load %arg21[%287, %c0_100] : memref<24x32xf32, #tpu.memory_space<vmem>>, vector<1x32xf32>
    tpu.vector_store %arg21[%287, %c0_100], %284 {strides = array<i32>} : memref<24x32xf32, #tpu.memory_space<vmem>>, vector<1x32xf32>,
    %c6_i32 = arith.constant 6 : i32
    %289 = tpu.concatenate %272, %284 in 1 : vector<1x32xf32>, vector<1x32xf32> -> vector<1x64xf32>
    %c23_i32_101 = arith.constant 23 : i32
    %290 = arith.minsi %c6_i32, %c23_i32_101 : i32
    %291 = arith.index_cast %290 : i32 to index
    %c0_102 = arith.constant 0 : index
    %292 = vector.load %arg20[%291, %c0_102] : memref<24x256xf32, #tpu.memory_space<vmem>>, vector<1x256xf32>
    %c0_103 = arith.constant 0 : index
    %c0_104 = arith.constant 0 : index
    %293 = vector.load %arg13[%c0_103, %c0_104] : memref<64x256xf32, #tpu.memory_space<vmem>>, vector<64x256xf32>
    %cst_105 = arith.constant dense<0.000000e+00> : vector<1x256xf32>
    %294 = tpu.matmul %289, %293, %cst_105 {dimension_numbers = #tpu.dot_dimension_numbers<[1], [0], [0], [1], [0, 0, 1, 1], [], []>} : vector<1x64xf32>, vector<64x256xf32>, vector<1x256xf32> -> vector<1x256xf32>
    %295 = arith.addf %292, %294 : vector<1x256xf32>
    %296 = arith.negf %295 : vector<1x256xf32>
    %297 = math.exp %296 : vector<1x256xf32>
    %cst_106 = arith.constant 1.000000e+00 : f32
    %298 = vector.broadcast %cst_106 : f32 to vector<1x256xf32>
    %299 = arith.addf %298, %297 : vector<1x256xf32>
    %300 = arith.divf %298, %299 : vector<1x256xf32>
    %301 = math.tanh %295 : vector<1x256xf32>
    %302 = arith.select %53, %301, %300 : vector<1x256xi1>, vector<1x256xf32>
    %303 = vector.extract_strided_slice %302 {offsets = [0, 0], sizes = [1, 32], strides = [1, 1]} : vector<1x256xf32> to vector<1x32xf32>
    %304 = vector.extract_strided_slice %302 {offsets = [0, 32], sizes = [1, 32], strides = [1, 1]} : vector<1x256xf32> to vector<1x32xf32>
    %305 = vector.extract_strided_slice %302 {offsets = [0, 64], sizes = [1, 32], strides = [1, 1]} : vector<1x256xf32> to vector<1x32xf32>
    %306 = vector.extract_strided_slice %302 {offsets = [0, 96], sizes = [1, 32], strides = [1, 1]} : vector<1x256xf32> to vector<1x32xf32>
    %307 = arith.mulf %304, %270 : vector<1x32xf32>
    %308 = arith.mulf %303, %305 : vector<1x32xf32>
    %309 = arith.addf %307, %308 : vector<1x32xf32>
    %310 = math.tanh %309 : vector<1x32xf32>
    %311 = arith.mulf %306, %310 : vector<1x32xf32>
    %312 = vector.extract_strided_slice %302 {offsets = [0, 128], sizes = [1, 32], strides = [1, 1]} : vector<1x256xf32> to vector<1x32xf32>
    %313 = vector.extract_strided_slice %302 {offsets = [0, 160], sizes = [1, 32], strides = [1, 1]} : vector<1x256xf32> to vector<1x32xf32>
    %314 = vector.extract_strided_slice %302 {offsets = [0, 192], sizes = [1, 32], strides = [1, 1]} : vector<1x256xf32> to vector<1x32xf32>
    %315 = vector.extract_strided_slice %302 {offsets = [0, 224], sizes = [1, 32], strides = [1, 1]} : vector<1x256xf32> to vector<1x32xf32>
    %316 = arith.mulf %313, %283 : vector<1x32xf32>
    %317 = arith.mulf %312, %314 : vector<1x32xf32>
    %318 = arith.addf %316, %317 : vector<1x32xf32>
    %319 = math.tanh %318 : vector<1x32xf32>
    %320 = arith.mulf %315, %319 : vector<1x32xf32>
    %c1_i32_107 = arith.constant 1 : i32
    %321 = arith.cmpi sge, %c6_i32, %c1_i32_107 : i32
    %322 = arith.select %321, %318, %283 : vector<1x32xf32>
    %323 = arith.select %321, %320, %284 : vector<1x32xf32>
    %c1_i32_108 = arith.constant 1 : i32
    %324 = arith.subi %c6_i32, %c1_i32_108 : i32
    %c0_i32_109 = arith.constant 0 : i32
    %325 = arith.maxsi %324, %c0_i32_109 : i32
    %326 = arith.index_cast %325 : i32 to index
    %c0_110 = arith.constant 0 : index
    %327 = vector.load %arg21[%326, %c0_110] : memref<24x32xf32, #tpu.memory_space<vmem>>, vector<1x32xf32>
    tpu.vector_store %arg21[%326, %c0_110], %323 {strides = array<i32>} : memref<24x32xf32, #tpu.memory_space<vmem>>, vector<1x32xf32>,
    %c7_i32 = arith.constant 7 : i32
    %328 = tpu.concatenate %311, %323 in 1 : vector<1x32xf32>, vector<1x32xf32> -> vector<1x64xf32>
    %c23_i32_111 = arith.constant 23 : i32
    %329 = arith.minsi %c7_i32, %c23_i32_111 : i32
    %330 = arith.index_cast %329 : i32 to index
    %c0_112 = arith.constant 0 : index
    %331 = vector.load %arg20[%330, %c0_112] : memref<24x256xf32, #tpu.memory_space<vmem>>, vector<1x256xf32>
    %c0_113 = arith.constant 0 : index
    %c0_114 = arith.constant 0 : index
    %332 = vector.load %arg13[%c0_113, %c0_114] : memref<64x256xf32, #tpu.memory_space<vmem>>, vector<64x256xf32>
    %cst_115 = arith.constant dense<0.000000e+00> : vector<1x256xf32>
    %333 = tpu.matmul %328, %332, %cst_115 {dimension_numbers = #tpu.dot_dimension_numbers<[1], [0], [0], [1], [0, 0, 1, 1], [], []>} : vector<1x64xf32>, vector<64x256xf32>, vector<1x256xf32> -> vector<1x256xf32>
    %334 = arith.addf %331, %333 : vector<1x256xf32>
    %335 = arith.negf %334 : vector<1x256xf32>
    %336 = math.exp %335 : vector<1x256xf32>
    %cst_116 = arith.constant 1.000000e+00 : f32
    %337 = vector.broadcast %cst_116 : f32 to vector<1x256xf32>
    %338 = arith.addf %337, %336 : vector<1x256xf32>
    %339 = arith.divf %337, %338 : vector<1x256xf32>
    %340 = math.tanh %334 : vector<1x256xf32>
    %341 = arith.select %53, %340, %339 : vector<1x256xi1>, vector<1x256xf32>
    %342 = vector.extract_strided_slice %341 {offsets = [0, 0], sizes = [1, 32], strides = [1, 1]} : vector<1x256xf32> to vector<1x32xf32>
    %343 = vector.extract_strided_slice %341 {offsets = [0, 32], sizes = [1, 32], strides = [1, 1]} : vector<1x256xf32> to vector<1x32xf32>
    %344 = vector.extract_strided_slice %341 {offsets = [0, 64], sizes = [1, 32], strides = [1, 1]} : vector<1x256xf32> to vector<1x32xf32>
    %345 = vector.extract_strided_slice %341 {offsets = [0, 96], sizes = [1, 32], strides = [1, 1]} : vector<1x256xf32> to vector<1x32xf32>
    %346 = arith.mulf %343, %309 : vector<1x32xf32>
    %347 = arith.mulf %342, %344 : vector<1x32xf32>
    %348 = arith.addf %346, %347 : vector<1x32xf32>
    %349 = math.tanh %348 : vector<1x32xf32>
    %350 = arith.mulf %345, %349 : vector<1x32xf32>
    %351 = vector.extract_strided_slice %341 {offsets = [0, 128], sizes = [1, 32], strides = [1, 1]} : vector<1x256xf32> to vector<1x32xf32>
    %352 = vector.extract_strided_slice %341 {offsets = [0, 160], sizes = [1, 32], strides = [1, 1]} : vector<1x256xf32> to vector<1x32xf32>
    %353 = vector.extract_strided_slice %341 {offsets = [0, 192], sizes = [1, 32], strides = [1, 1]} : vector<1x256xf32> to vector<1x32xf32>
    %354 = vector.extract_strided_slice %341 {offsets = [0, 224], sizes = [1, 32], strides = [1, 1]} : vector<1x256xf32> to vector<1x32xf32>
    %355 = arith.mulf %352, %322 : vector<1x32xf32>
    %356 = arith.mulf %351, %353 : vector<1x32xf32>
    %357 = arith.addf %355, %356 : vector<1x32xf32>
    %358 = math.tanh %357 : vector<1x32xf32>
    %359 = arith.mulf %354, %358 : vector<1x32xf32>
    %c1_i32_117 = arith.constant 1 : i32
    %360 = arith.cmpi sge, %c7_i32, %c1_i32_117 : i32
    %361 = arith.select %360, %357, %322 : vector<1x32xf32>
    %362 = arith.select %360, %359, %323 : vector<1x32xf32>
    %c1_i32_118 = arith.constant 1 : i32
    %363 = arith.subi %c7_i32, %c1_i32_118 : i32
    %c0_i32_119 = arith.constant 0 : i32
    %364 = arith.maxsi %363, %c0_i32_119 : i32
    %365 = arith.index_cast %364 : i32 to index
    %c0_120 = arith.constant 0 : index
    %366 = vector.load %arg21[%365, %c0_120] : memref<24x32xf32, #tpu.memory_space<vmem>>, vector<1x32xf32>
    tpu.vector_store %arg21[%365, %c0_120], %362 {strides = array<i32>} : memref<24x32xf32, #tpu.memory_space<vmem>>, vector<1x32xf32>,
    %c8_i32 = arith.constant 8 : i32
    %367 = tpu.concatenate %350, %362 in 1 : vector<1x32xf32>, vector<1x32xf32> -> vector<1x64xf32>
    %c23_i32_121 = arith.constant 23 : i32
    %368 = arith.minsi %c8_i32, %c23_i32_121 : i32
    %369 = arith.index_cast %368 : i32 to index
    %c0_122 = arith.constant 0 : index
    %370 = vector.load %arg20[%369, %c0_122] : memref<24x256xf32, #tpu.memory_space<vmem>>, vector<1x256xf32>
    %c0_123 = arith.constant 0 : index
    %c0_124 = arith.constant 0 : index
    %371 = vector.load %arg13[%c0_123, %c0_124] : memref<64x256xf32, #tpu.memory_space<vmem>>, vector<64x256xf32>
    %cst_125 = arith.constant dense<0.000000e+00> : vector<1x256xf32>
    %372 = tpu.matmul %367, %371, %cst_125 {dimension_numbers = #tpu.dot_dimension_numbers<[1], [0], [0], [1], [0, 0, 1, 1], [], []>} : vector<1x64xf32>, vector<64x256xf32>, vector<1x256xf32> -> vector<1x256xf32>
    %373 = arith.addf %370, %372 : vector<1x256xf32>
    %374 = arith.negf %373 : vector<1x256xf32>
    %375 = math.exp %374 : vector<1x256xf32>
    %cst_126 = arith.constant 1.000000e+00 : f32
    %376 = vector.broadcast %cst_126 : f32 to vector<1x256xf32>
    %377 = arith.addf %376, %375 : vector<1x256xf32>
    %378 = arith.divf %376, %377 : vector<1x256xf32>
    %379 = math.tanh %373 : vector<1x256xf32>
    %380 = arith.select %53, %379, %378 : vector<1x256xi1>, vector<1x256xf32>
    %381 = vector.extract_strided_slice %380 {offsets = [0, 0], sizes = [1, 32], strides = [1, 1]} : vector<1x256xf32> to vector<1x32xf32>
    %382 = vector.extract_strided_slice %380 {offsets = [0, 32], sizes = [1, 32], strides = [1, 1]} : vector<1x256xf32> to vector<1x32xf32>
    %383 = vector.extract_strided_slice %380 {offsets = [0, 64], sizes = [1, 32], strides = [1, 1]} : vector<1x256xf32> to vector<1x32xf32>
    %384 = vector.extract_strided_slice %380 {offsets = [0, 96], sizes = [1, 32], strides = [1, 1]} : vector<1x256xf32> to vector<1x32xf32>
    %385 = arith.mulf %382, %348 : vector<1x32xf32>
    %386 = arith.mulf %381, %383 : vector<1x32xf32>
    %387 = arith.addf %385, %386 : vector<1x32xf32>
    %388 = math.tanh %387 : vector<1x32xf32>
    %389 = arith.mulf %384, %388 : vector<1x32xf32>
    %390 = vector.extract_strided_slice %380 {offsets = [0, 128], sizes = [1, 32], strides = [1, 1]} : vector<1x256xf32> to vector<1x32xf32>
    %391 = vector.extract_strided_slice %380 {offsets = [0, 160], sizes = [1, 32], strides = [1, 1]} : vector<1x256xf32> to vector<1x32xf32>
    %392 = vector.extract_strided_slice %380 {offsets = [0, 192], sizes = [1, 32], strides = [1, 1]} : vector<1x256xf32> to vector<1x32xf32>
    %393 = vector.extract_strided_slice %380 {offsets = [0, 224], sizes = [1, 32], strides = [1, 1]} : vector<1x256xf32> to vector<1x32xf32>
    %394 = arith.mulf %391, %361 : vector<1x32xf32>
    %395 = arith.mulf %390, %392 : vector<1x32xf32>
    %396 = arith.addf %394, %395 : vector<1x32xf32>
    %397 = math.tanh %396 : vector<1x32xf32>
    %398 = arith.mulf %393, %397 : vector<1x32xf32>
    %c1_i32_127 = arith.constant 1 : i32
    %399 = arith.cmpi sge, %c8_i32, %c1_i32_127 : i32
    %400 = arith.select %399, %396, %361 : vector<1x32xf32>
    %401 = arith.select %399, %398, %362 : vector<1x32xf32>
    %c1_i32_128 = arith.constant 1 : i32
    %402 = arith.subi %c8_i32, %c1_i32_128 : i32
    %c0_i32_129 = arith.constant 0 : i32
    %403 = arith.maxsi %402, %c0_i32_129 : i32
    %404 = arith.index_cast %403 : i32 to index
    %c0_130 = arith.constant 0 : index
    %405 = vector.load %arg21[%404, %c0_130] : memref<24x32xf32, #tpu.memory_space<vmem>>, vector<1x32xf32>
    tpu.vector_store %arg21[%404, %c0_130], %401 {strides = array<i32>} : memref<24x32xf32, #tpu.memory_space<vmem>>, vector<1x32xf32>,
    %c9_i32 = arith.constant 9 : i32
    %406 = tpu.concatenate %389, %401 in 1 : vector<1x32xf32>, vector<1x32xf32> -> vector<1x64xf32>
    %c23_i32_131 = arith.constant 23 : i32
    %407 = arith.minsi %c9_i32, %c23_i32_131 : i32
    %408 = arith.index_cast %407 : i32 to index
    %c0_132 = arith.constant 0 : index
    %409 = vector.load %arg20[%408, %c0_132] : memref<24x256xf32, #tpu.memory_space<vmem>>, vector<1x256xf32>
    %c0_133 = arith.constant 0 : index
    %c0_134 = arith.constant 0 : index
    %410 = vector.load %arg13[%c0_133, %c0_134] : memref<64x256xf32, #tpu.memory_space<vmem>>, vector<64x256xf32>
    %cst_135 = arith.constant dense<0.000000e+00> : vector<1x256xf32>
    %411 = tpu.matmul %406, %410, %cst_135 {dimension_numbers = #tpu.dot_dimension_numbers<[1], [0], [0], [1], [0, 0, 1, 1], [], []>} : vector<1x64xf32>, vector<64x256xf32>, vector<1x256xf32> -> vector<1x256xf32>
    %412 = arith.addf %409, %411 : vector<1x256xf32>
    %413 = arith.negf %412 : vector<1x256xf32>
    %414 = math.exp %413 : vector<1x256xf32>
    %cst_136 = arith.constant 1.000000e+00 : f32
    %415 = vector.broadcast %cst_136 : f32 to vector<1x256xf32>
    %416 = arith.addf %415, %414 : vector<1x256xf32>
    %417 = arith.divf %415, %416 : vector<1x256xf32>
    %418 = math.tanh %412 : vector<1x256xf32>
    %419 = arith.select %53, %418, %417 : vector<1x256xi1>, vector<1x256xf32>
    %420 = vector.extract_strided_slice %419 {offsets = [0, 0], sizes = [1, 32], strides = [1, 1]} : vector<1x256xf32> to vector<1x32xf32>
    %421 = vector.extract_strided_slice %419 {offsets = [0, 32], sizes = [1, 32], strides = [1, 1]} : vector<1x256xf32> to vector<1x32xf32>
    %422 = vector.extract_strided_slice %419 {offsets = [0, 64], sizes = [1, 32], strides = [1, 1]} : vector<1x256xf32> to vector<1x32xf32>
    %423 = vector.extract_strided_slice %419 {offsets = [0, 96], sizes = [1, 32], strides = [1, 1]} : vector<1x256xf32> to vector<1x32xf32>
    %424 = arith.mulf %421, %387 : vector<1x32xf32>
    %425 = arith.mulf %420, %422 : vector<1x32xf32>
    %426 = arith.addf %424, %425 : vector<1x32xf32>
    %427 = math.tanh %426 : vector<1x32xf32>
    %428 = arith.mulf %423, %427 : vector<1x32xf32>
    %429 = vector.extract_strided_slice %419 {offsets = [0, 128], sizes = [1, 32], strides = [1, 1]} : vector<1x256xf32> to vector<1x32xf32>
    %430 = vector.extract_strided_slice %419 {offsets = [0, 160], sizes = [1, 32], strides = [1, 1]} : vector<1x256xf32> to vector<1x32xf32>
    %431 = vector.extract_strided_slice %419 {offsets = [0, 192], sizes = [1, 32], strides = [1, 1]} : vector<1x256xf32> to vector<1x32xf32>
    %432 = vector.extract_strided_slice %419 {offsets = [0, 224], sizes = [1, 32], strides = [1, 1]} : vector<1x256xf32> to vector<1x32xf32>
    %433 = arith.mulf %430, %400 : vector<1x32xf32>
    %434 = arith.mulf %429, %431 : vector<1x32xf32>
    %435 = arith.addf %433, %434 : vector<1x32xf32>
    %436 = math.tanh %435 : vector<1x32xf32>
    %437 = arith.mulf %432, %436 : vector<1x32xf32>
    %c1_i32_137 = arith.constant 1 : i32
    %438 = arith.cmpi sge, %c9_i32, %c1_i32_137 : i32
    %439 = arith.select %438, %435, %400 : vector<1x32xf32>
    %440 = arith.select %438, %437, %401 : vector<1x32xf32>
    %c1_i32_138 = arith.constant 1 : i32
    %441 = arith.subi %c9_i32, %c1_i32_138 : i32
    %c0_i32_139 = arith.constant 0 : i32
    %442 = arith.maxsi %441, %c0_i32_139 : i32
    %443 = arith.index_cast %442 : i32 to index
    %c0_140 = arith.constant 0 : index
    %444 = vector.load %arg21[%443, %c0_140] : memref<24x32xf32, #tpu.memory_space<vmem>>, vector<1x32xf32>
    tpu.vector_store %arg21[%443, %c0_140], %440 {strides = array<i32>} : memref<24x32xf32, #tpu.memory_space<vmem>>, vector<1x32xf32>,
    %c10_i32 = arith.constant 10 : i32
    %445 = tpu.concatenate %428, %440 in 1 : vector<1x32xf32>, vector<1x32xf32> -> vector<1x64xf32>
    %c23_i32_141 = arith.constant 23 : i32
    %446 = arith.minsi %c10_i32, %c23_i32_141 : i32
    %447 = arith.index_cast %446 : i32 to index
    %c0_142 = arith.constant 0 : index
    %448 = vector.load %arg20[%447, %c0_142] : memref<24x256xf32, #tpu.memory_space<vmem>>, vector<1x256xf32>
    %c0_143 = arith.constant 0 : index
    %c0_144 = arith.constant 0 : index
    %449 = vector.load %arg13[%c0_143, %c0_144] : memref<64x256xf32, #tpu.memory_space<vmem>>, vector<64x256xf32>
    %cst_145 = arith.constant dense<0.000000e+00> : vector<1x256xf32>
    %450 = tpu.matmul %445, %449, %cst_145 {dimension_numbers = #tpu.dot_dimension_numbers<[1], [0], [0], [1], [0, 0, 1, 1], [], []>} : vector<1x64xf32>, vector<64x256xf32>, vector<1x256xf32> -> vector<1x256xf32>
    %451 = arith.addf %448, %450 : vector<1x256xf32>
    %452 = arith.negf %451 : vector<1x256xf32>
    %453 = math.exp %452 : vector<1x256xf32>
    %cst_146 = arith.constant 1.000000e+00 : f32
    %454 = vector.broadcast %cst_146 : f32 to vector<1x256xf32>
    %455 = arith.addf %454, %453 : vector<1x256xf32>
    %456 = arith.divf %454, %455 : vector<1x256xf32>
    %457 = math.tanh %451 : vector<1x256xf32>
    %458 = arith.select %53, %457, %456 : vector<1x256xi1>, vector<1x256xf32>
    %459 = vector.extract_strided_slice %458 {offsets = [0, 0], sizes = [1, 32], strides = [1, 1]} : vector<1x256xf32> to vector<1x32xf32>
    %460 = vector.extract_strided_slice %458 {offsets = [0, 32], sizes = [1, 32], strides = [1, 1]} : vector<1x256xf32> to vector<1x32xf32>
    %461 = vector.extract_strided_slice %458 {offsets = [0, 64], sizes = [1, 32], strides = [1, 1]} : vector<1x256xf32> to vector<1x32xf32>
    %462 = vector.extract_strided_slice %458 {offsets = [0, 96], sizes = [1, 32], strides = [1, 1]} : vector<1x256xf32> to vector<1x32xf32>
    %463 = arith.mulf %460, %426 : vector<1x32xf32>
    %464 = arith.mulf %459, %461 : vector<1x32xf32>
    %465 = arith.addf %463, %464 : vector<1x32xf32>
    %466 = math.tanh %465 : vector<1x32xf32>
    %467 = arith.mulf %462, %466 : vector<1x32xf32>
    %468 = vector.extract_strided_slice %458 {offsets = [0, 128], sizes = [1, 32], strides = [1, 1]} : vector<1x256xf32> to vector<1x32xf32>
    %469 = vector.extract_strided_slice %458 {offsets = [0, 160], sizes = [1, 32], strides = [1, 1]} : vector<1x256xf32> to vector<1x32xf32>
    %470 = vector.extract_strided_slice %458 {offsets = [0, 192], sizes = [1, 32], strides = [1, 1]} : vector<1x256xf32> to vector<1x32xf32>
    %471 = vector.extract_strided_slice %458 {offsets = [0, 224], sizes = [1, 32], strides = [1, 1]} : vector<1x256xf32> to vector<1x32xf32>
    %472 = arith.mulf %469, %439 : vector<1x32xf32>
    %473 = arith.mulf %468, %470 : vector<1x32xf32>
    %474 = arith.addf %472, %473 : vector<1x32xf32>
    %475 = math.tanh %474 : vector<1x32xf32>
    %476 = arith.mulf %471, %475 : vector<1x32xf32>
    %c1_i32_147 = arith.constant 1 : i32
    %477 = arith.cmpi sge, %c10_i32, %c1_i32_147 : i32
    %478 = arith.select %477, %474, %439 : vector<1x32xf32>
    %479 = arith.select %477, %476, %440 : vector<1x32xf32>
    %c1_i32_148 = arith.constant 1 : i32
    %480 = arith.subi %c10_i32, %c1_i32_148 : i32
    %c0_i32_149 = arith.constant 0 : i32
    %481 = arith.maxsi %480, %c0_i32_149 : i32
    %482 = arith.index_cast %481 : i32 to index
    %c0_150 = arith.constant 0 : index
    %483 = vector.load %arg21[%482, %c0_150] : memref<24x32xf32, #tpu.memory_space<vmem>>, vector<1x32xf32>
    tpu.vector_store %arg21[%482, %c0_150], %479 {strides = array<i32>} : memref<24x32xf32, #tpu.memory_space<vmem>>, vector<1x32xf32>,
    %c11_i32 = arith.constant 11 : i32
    %484 = tpu.concatenate %467, %479 in 1 : vector<1x32xf32>, vector<1x32xf32> -> vector<1x64xf32>
    %c23_i32_151 = arith.constant 23 : i32
    %485 = arith.minsi %c11_i32, %c23_i32_151 : i32
    %486 = arith.index_cast %485 : i32 to index
    %c0_152 = arith.constant 0 : index
    %487 = vector.load %arg20[%486, %c0_152] : memref<24x256xf32, #tpu.memory_space<vmem>>, vector<1x256xf32>
    %c0_153 = arith.constant 0 : index
    %c0_154 = arith.constant 0 : index
    %488 = vector.load %arg13[%c0_153, %c0_154] : memref<64x256xf32, #tpu.memory_space<vmem>>, vector<64x256xf32>
    %cst_155 = arith.constant dense<0.000000e+00> : vector<1x256xf32>
    %489 = tpu.matmul %484, %488, %cst_155 {dimension_numbers = #tpu.dot_dimension_numbers<[1], [0], [0], [1], [0, 0, 1, 1], [], []>} : vector<1x64xf32>, vector<64x256xf32>, vector<1x256xf32> -> vector<1x256xf32>
    %490 = arith.addf %487, %489 : vector<1x256xf32>
    %491 = arith.negf %490 : vector<1x256xf32>
    %492 = math.exp %491 : vector<1x256xf32>
    %cst_156 = arith.constant 1.000000e+00 : f32
    %493 = vector.broadcast %cst_156 : f32 to vector<1x256xf32>
    %494 = arith.addf %493, %492 : vector<1x256xf32>
    %495 = arith.divf %493, %494 : vector<1x256xf32>
    %496 = math.tanh %490 : vector<1x256xf32>
    %497 = arith.select %53, %496, %495 : vector<1x256xi1>, vector<1x256xf32>
    %498 = vector.extract_strided_slice %497 {offsets = [0, 0], sizes = [1, 32], strides = [1, 1]} : vector<1x256xf32> to vector<1x32xf32>
    %499 = vector.extract_strided_slice %497 {offsets = [0, 32], sizes = [1, 32], strides = [1, 1]} : vector<1x256xf32> to vector<1x32xf32>
    %500 = vector.extract_strided_slice %497 {offsets = [0, 64], sizes = [1, 32], strides = [1, 1]} : vector<1x256xf32> to vector<1x32xf32>
    %501 = vector.extract_strided_slice %497 {offsets = [0, 96], sizes = [1, 32], strides = [1, 1]} : vector<1x256xf32> to vector<1x32xf32>
    %502 = arith.mulf %499, %465 : vector<1x32xf32>
    %503 = arith.mulf %498, %500 : vector<1x32xf32>
    %504 = arith.addf %502, %503 : vector<1x32xf32>
    %505 = math.tanh %504 : vector<1x32xf32>
    %506 = arith.mulf %501, %505 : vector<1x32xf32>
    %507 = vector.extract_strided_slice %497 {offsets = [0, 128], sizes = [1, 32], strides = [1, 1]} : vector<1x256xf32> to vector<1x32xf32>
    %508 = vector.extract_strided_slice %497 {offsets = [0, 160], sizes = [1, 32], strides = [1, 1]} : vector<1x256xf32> to vector<1x32xf32>
    %509 = vector.extract_strided_slice %497 {offsets = [0, 192], sizes = [1, 32], strides = [1, 1]} : vector<1x256xf32> to vector<1x32xf32>
    %510 = vector.extract_strided_slice %497 {offsets = [0, 224], sizes = [1, 32], strides = [1, 1]} : vector<1x256xf32> to vector<1x32xf32>
    %511 = arith.mulf %508, %478 : vector<1x32xf32>
    %512 = arith.mulf %507, %509 : vector<1x32xf32>
    %513 = arith.addf %511, %512 : vector<1x32xf32>
    %514 = math.tanh %513 : vector<1x32xf32>
    %515 = arith.mulf %510, %514 : vector<1x32xf32>
    %c1_i32_157 = arith.constant 1 : i32
    %516 = arith.cmpi sge, %c11_i32, %c1_i32_157 : i32
    %517 = arith.select %516, %513, %478 : vector<1x32xf32>
    %518 = arith.select %516, %515, %479 : vector<1x32xf32>
    %c1_i32_158 = arith.constant 1 : i32
    %519 = arith.subi %c11_i32, %c1_i32_158 : i32
    %c0_i32_159 = arith.constant 0 : i32
    %520 = arith.maxsi %519, %c0_i32_159 : i32
    %521 = arith.index_cast %520 : i32 to index
    %c0_160 = arith.constant 0 : index
    %522 = vector.load %arg21[%521, %c0_160] : memref<24x32xf32, #tpu.memory_space<vmem>>, vector<1x32xf32>
    tpu.vector_store %arg21[%521, %c0_160], %518 {strides = array<i32>} : memref<24x32xf32, #tpu.memory_space<vmem>>, vector<1x32xf32>,
    %c12_i32 = arith.constant 12 : i32
    %523 = tpu.concatenate %506, %518 in 1 : vector<1x32xf32>, vector<1x32xf32> -> vector<1x64xf32>
    %c23_i32_161 = arith.constant 23 : i32
    %524 = arith.minsi %c12_i32, %c23_i32_161 : i32
    %525 = arith.index_cast %524 : i32 to index
    %c0_162 = arith.constant 0 : index
    %526 = vector.load %arg20[%525, %c0_162] : memref<24x256xf32, #tpu.memory_space<vmem>>, vector<1x256xf32>
    %c0_163 = arith.constant 0 : index
    %c0_164 = arith.constant 0 : index
    %527 = vector.load %arg13[%c0_163, %c0_164] : memref<64x256xf32, #tpu.memory_space<vmem>>, vector<64x256xf32>
    %cst_165 = arith.constant dense<0.000000e+00> : vector<1x256xf32>
    %528 = tpu.matmul %523, %527, %cst_165 {dimension_numbers = #tpu.dot_dimension_numbers<[1], [0], [0], [1], [0, 0, 1, 1], [], []>} : vector<1x64xf32>, vector<64x256xf32>, vector<1x256xf32> -> vector<1x256xf32>
    %529 = arith.addf %526, %528 : vector<1x256xf32>
    %530 = arith.negf %529 : vector<1x256xf32>
    %531 = math.exp %530 : vector<1x256xf32>
    %cst_166 = arith.constant 1.000000e+00 : f32
    %532 = vector.broadcast %cst_166 : f32 to vector<1x256xf32>
    %533 = arith.addf %532, %531 : vector<1x256xf32>
    %534 = arith.divf %532, %533 : vector<1x256xf32>
    %535 = math.tanh %529 : vector<1x256xf32>
    %536 = arith.select %53, %535, %534 : vector<1x256xi1>, vector<1x256xf32>
    %537 = vector.extract_strided_slice %536 {offsets = [0, 0], sizes = [1, 32], strides = [1, 1]} : vector<1x256xf32> to vector<1x32xf32>
    %538 = vector.extract_strided_slice %536 {offsets = [0, 32], sizes = [1, 32], strides = [1, 1]} : vector<1x256xf32> to vector<1x32xf32>
    %539 = vector.extract_strided_slice %536 {offsets = [0, 64], sizes = [1, 32], strides = [1, 1]} : vector<1x256xf32> to vector<1x32xf32>
    %540 = vector.extract_strided_slice %536 {offsets = [0, 96], sizes = [1, 32], strides = [1, 1]} : vector<1x256xf32> to vector<1x32xf32>
    %541 = arith.mulf %538, %504 : vector<1x32xf32>
    %542 = arith.mulf %537, %539 : vector<1x32xf32>
    %543 = arith.addf %541, %542 : vector<1x32xf32>
    %544 = math.tanh %543 : vector<1x32xf32>
    %545 = arith.mulf %540, %544 : vector<1x32xf32>
    %546 = vector.extract_strided_slice %536 {offsets = [0, 128], sizes = [1, 32], strides = [1, 1]} : vector<1x256xf32> to vector<1x32xf32>
    %547 = vector.extract_strided_slice %536 {offsets = [0, 160], sizes = [1, 32], strides = [1, 1]} : vector<1x256xf32> to vector<1x32xf32>
    %548 = vector.extract_strided_slice %536 {offsets = [0, 192], sizes = [1, 32], strides = [1, 1]} : vector<1x256xf32> to vector<1x32xf32>
    %549 = vector.extract_strided_slice %536 {offsets = [0, 224], sizes = [1, 32], strides = [1, 1]} : vector<1x256xf32> to vector<1x32xf32>
    %550 = arith.mulf %547, %517 : vector<1x32xf32>
    %551 = arith.mulf %546, %548 : vector<1x32xf32>
    %552 = arith.addf %550, %551 : vector<1x32xf32>
    %553 = math.tanh %552 : vector<1x32xf32>
    %554 = arith.mulf %549, %553 : vector<1x32xf32>
    %c1_i32_167 = arith.constant 1 : i32
    %555 = arith.cmpi sge, %c12_i32, %c1_i32_167 : i32
    %556 = arith.select %555, %552, %517 : vector<1x32xf32>
    %557 = arith.select %555, %554, %518 : vector<1x32xf32>
    %c1_i32_168 = arith.constant 1 : i32
    %558 = arith.subi %c12_i32, %c1_i32_168 : i32
    %c0_i32_169 = arith.constant 0 : i32
    %559 = arith.maxsi %558, %c0_i32_169 : i32
    %560 = arith.index_cast %559 : i32 to index
    %c0_170 = arith.constant 0 : index
    %561 = vector.load %arg21[%560, %c0_170] : memref<24x32xf32, #tpu.memory_space<vmem>>, vector<1x32xf32>
    tpu.vector_store %arg21[%560, %c0_170], %557 {strides = array<i32>} : memref<24x32xf32, #tpu.memory_space<vmem>>, vector<1x32xf32>,
    %c13_i32 = arith.constant 13 : i32
    %562 = tpu.concatenate %545, %557 in 1 : vector<1x32xf32>, vector<1x32xf32> -> vector<1x64xf32>
    %c23_i32_171 = arith.constant 23 : i32
    %563 = arith.minsi %c13_i32, %c23_i32_171 : i32
    %564 = arith.index_cast %563 : i32 to index
    %c0_172 = arith.constant 0 : index
    %565 = vector.load %arg20[%564, %c0_172] : memref<24x256xf32, #tpu.memory_space<vmem>>, vector<1x256xf32>
    %c0_173 = arith.constant 0 : index
    %c0_174 = arith.constant 0 : index
    %566 = vector.load %arg13[%c0_173, %c0_174] : memref<64x256xf32, #tpu.memory_space<vmem>>, vector<64x256xf32>
    %cst_175 = arith.constant dense<0.000000e+00> : vector<1x256xf32>
    %567 = tpu.matmul %562, %566, %cst_175 {dimension_numbers = #tpu.dot_dimension_numbers<[1], [0], [0], [1], [0, 0, 1, 1], [], []>} : vector<1x64xf32>, vector<64x256xf32>, vector<1x256xf32> -> vector<1x256xf32>
    %568 = arith.addf %565, %567 : vector<1x256xf32>
    %569 = arith.negf %568 : vector<1x256xf32>
    %570 = math.exp %569 : vector<1x256xf32>
    %cst_176 = arith.constant 1.000000e+00 : f32
    %571 = vector.broadcast %cst_176 : f32 to vector<1x256xf32>
    %572 = arith.addf %571, %570 : vector<1x256xf32>
    %573 = arith.divf %571, %572 : vector<1x256xf32>
    %574 = math.tanh %568 : vector<1x256xf32>
    %575 = arith.select %53, %574, %573 : vector<1x256xi1>, vector<1x256xf32>
    %576 = vector.extract_strided_slice %575 {offsets = [0, 0], sizes = [1, 32], strides = [1, 1]} : vector<1x256xf32> to vector<1x32xf32>
    %577 = vector.extract_strided_slice %575 {offsets = [0, 32], sizes = [1, 32], strides = [1, 1]} : vector<1x256xf32> to vector<1x32xf32>
    %578 = vector.extract_strided_slice %575 {offsets = [0, 64], sizes = [1, 32], strides = [1, 1]} : vector<1x256xf32> to vector<1x32xf32>
    %579 = vector.extract_strided_slice %575 {offsets = [0, 96], sizes = [1, 32], strides = [1, 1]} : vector<1x256xf32> to vector<1x32xf32>
    %580 = arith.mulf %577, %543 : vector<1x32xf32>
    %581 = arith.mulf %576, %578 : vector<1x32xf32>
    %582 = arith.addf %580, %581 : vector<1x32xf32>
    %583 = math.tanh %582 : vector<1x32xf32>
    %584 = arith.mulf %579, %583 : vector<1x32xf32>
    %585 = vector.extract_strided_slice %575 {offsets = [0, 128], sizes = [1, 32], strides = [1, 1]} : vector<1x256xf32> to vector<1x32xf32>
    %586 = vector.extract_strided_slice %575 {offsets = [0, 160], sizes = [1, 32], strides = [1, 1]} : vector<1x256xf32> to vector<1x32xf32>
    %587 = vector.extract_strided_slice %575 {offsets = [0, 192], sizes = [1, 32], strides = [1, 1]} : vector<1x256xf32> to vector<1x32xf32>
    %588 = vector.extract_strided_slice %575 {offsets = [0, 224], sizes = [1, 32], strides = [1, 1]} : vector<1x256xf32> to vector<1x32xf32>
    %589 = arith.mulf %586, %556 : vector<1x32xf32>
    %590 = arith.mulf %585, %587 : vector<1x32xf32>
    %591 = arith.addf %589, %590 : vector<1x32xf32>
    %592 = math.tanh %591 : vector<1x32xf32>
    %593 = arith.mulf %588, %592 : vector<1x32xf32>
    %c1_i32_177 = arith.constant 1 : i32
    %594 = arith.cmpi sge, %c13_i32, %c1_i32_177 : i32
    %595 = arith.select %594, %591, %556 : vector<1x32xf32>
    %596 = arith.select %594, %593, %557 : vector<1x32xf32>
    %c1_i32_178 = arith.constant 1 : i32
    %597 = arith.subi %c13_i32, %c1_i32_178 : i32
    %c0_i32_179 = arith.constant 0 : i32
    %598 = arith.maxsi %597, %c0_i32_179 : i32
    %599 = arith.index_cast %598 : i32 to index
    %c0_180 = arith.constant 0 : index
    %600 = vector.load %arg21[%599, %c0_180] : memref<24x32xf32, #tpu.memory_space<vmem>>, vector<1x32xf32>
    tpu.vector_store %arg21[%599, %c0_180], %596 {strides = array<i32>} : memref<24x32xf32, #tpu.memory_space<vmem>>, vector<1x32xf32>,
    %c14_i32 = arith.constant 14 : i32
    %601 = tpu.concatenate %584, %596 in 1 : vector<1x32xf32>, vector<1x32xf32> -> vector<1x64xf32>
    %c23_i32_181 = arith.constant 23 : i32
    %602 = arith.minsi %c14_i32, %c23_i32_181 : i32
    %603 = arith.index_cast %602 : i32 to index
    %c0_182 = arith.constant 0 : index
    %604 = vector.load %arg20[%603, %c0_182] : memref<24x256xf32, #tpu.memory_space<vmem>>, vector<1x256xf32>
    %c0_183 = arith.constant 0 : index
    %c0_184 = arith.constant 0 : index
    %605 = vector.load %arg13[%c0_183, %c0_184] : memref<64x256xf32, #tpu.memory_space<vmem>>, vector<64x256xf32>
    %cst_185 = arith.constant dense<0.000000e+00> : vector<1x256xf32>
    %606 = tpu.matmul %601, %605, %cst_185 {dimension_numbers = #tpu.dot_dimension_numbers<[1], [0], [0], [1], [0, 0, 1, 1], [], []>} : vector<1x64xf32>, vector<64x256xf32>, vector<1x256xf32> -> vector<1x256xf32>
    %607 = arith.addf %604, %606 : vector<1x256xf32>
    %608 = arith.negf %607 : vector<1x256xf32>
    %609 = math.exp %608 : vector<1x256xf32>
    %cst_186 = arith.constant 1.000000e+00 : f32
    %610 = vector.broadcast %cst_186 : f32 to vector<1x256xf32>
    %611 = arith.addf %610, %609 : vector<1x256xf32>
    %612 = arith.divf %610, %611 : vector<1x256xf32>
    %613 = math.tanh %607 : vector<1x256xf32>
    %614 = arith.select %53, %613, %612 : vector<1x256xi1>, vector<1x256xf32>
    %615 = vector.extract_strided_slice %614 {offsets = [0, 0], sizes = [1, 32], strides = [1, 1]} : vector<1x256xf32> to vector<1x32xf32>
    %616 = vector.extract_strided_slice %614 {offsets = [0, 32], sizes = [1, 32], strides = [1, 1]} : vector<1x256xf32> to vector<1x32xf32>
    %617 = vector.extract_strided_slice %614 {offsets = [0, 64], sizes = [1, 32], strides = [1, 1]} : vector<1x256xf32> to vector<1x32xf32>
    %618 = vector.extract_strided_slice %614 {offsets = [0, 96], sizes = [1, 32], strides = [1, 1]} : vector<1x256xf32> to vector<1x32xf32>
    %619 = arith.mulf %616, %582 : vector<1x32xf32>
    %620 = arith.mulf %615, %617 : vector<1x32xf32>
    %621 = arith.addf %619, %620 : vector<1x32xf32>
    %622 = math.tanh %621 : vector<1x32xf32>
    %623 = arith.mulf %618, %622 : vector<1x32xf32>
    %624 = vector.extract_strided_slice %614 {offsets = [0, 128], sizes = [1, 32], strides = [1, 1]} : vector<1x256xf32> to vector<1x32xf32>
    %625 = vector.extract_strided_slice %614 {offsets = [0, 160], sizes = [1, 32], strides = [1, 1]} : vector<1x256xf32> to vector<1x32xf32>
    %626 = vector.extract_strided_slice %614 {offsets = [0, 192], sizes = [1, 32], strides = [1, 1]} : vector<1x256xf32> to vector<1x32xf32>
    %627 = vector.extract_strided_slice %614 {offsets = [0, 224], sizes = [1, 32], strides = [1, 1]} : vector<1x256xf32> to vector<1x32xf32>
    %628 = arith.mulf %625, %595 : vector<1x32xf32>
    %629 = arith.mulf %624, %626 : vector<1x32xf32>
    %630 = arith.addf %628, %629 : vector<1x32xf32>
    %631 = math.tanh %630 : vector<1x32xf32>
    %632 = arith.mulf %627, %631 : vector<1x32xf32>
    %c1_i32_187 = arith.constant 1 : i32
    %633 = arith.cmpi sge, %c14_i32, %c1_i32_187 : i32
    %634 = arith.select %633, %630, %595 : vector<1x32xf32>
    %635 = arith.select %633, %632, %596 : vector<1x32xf32>
    %c1_i32_188 = arith.constant 1 : i32
    %636 = arith.subi %c14_i32, %c1_i32_188 : i32
    %c0_i32_189 = arith.constant 0 : i32
    %637 = arith.maxsi %636, %c0_i32_189 : i32
    %638 = arith.index_cast %637 : i32 to index
    %c0_190 = arith.constant 0 : index
    %639 = vector.load %arg21[%638, %c0_190] : memref<24x32xf32, #tpu.memory_space<vmem>>, vector<1x32xf32>
    tpu.vector_store %arg21[%638, %c0_190], %635 {strides = array<i32>} : memref<24x32xf32, #tpu.memory_space<vmem>>, vector<1x32xf32>,
    %c15_i32 = arith.constant 15 : i32
    %640 = tpu.concatenate %623, %635 in 1 : vector<1x32xf32>, vector<1x32xf32> -> vector<1x64xf32>
    %c23_i32_191 = arith.constant 23 : i32
    %641 = arith.minsi %c15_i32, %c23_i32_191 : i32
    %642 = arith.index_cast %641 : i32 to index
    %c0_192 = arith.constant 0 : index
    %643 = vector.load %arg20[%642, %c0_192] : memref<24x256xf32, #tpu.memory_space<vmem>>, vector<1x256xf32>
    %c0_193 = arith.constant 0 : index
    %c0_194 = arith.constant 0 : index
    %644 = vector.load %arg13[%c0_193, %c0_194] : memref<64x256xf32, #tpu.memory_space<vmem>>, vector<64x256xf32>
    %cst_195 = arith.constant dense<0.000000e+00> : vector<1x256xf32>
    %645 = tpu.matmul %640, %644, %cst_195 {dimension_numbers = #tpu.dot_dimension_numbers<[1], [0], [0], [1], [0, 0, 1, 1], [], []>} : vector<1x64xf32>, vector<64x256xf32>, vector<1x256xf32> -> vector<1x256xf32>
    %646 = arith.addf %643, %645 : vector<1x256xf32>
    %647 = arith.negf %646 : vector<1x256xf32>
    %648 = math.exp %647 : vector<1x256xf32>
    %cst_196 = arith.constant 1.000000e+00 : f32
    %649 = vector.broadcast %cst_196 : f32 to vector<1x256xf32>
    %650 = arith.addf %649, %648 : vector<1x256xf32>
    %651 = arith.divf %649, %650 : vector<1x256xf32>
    %652 = math.tanh %646 : vector<1x256xf32>
    %653 = arith.select %53, %652, %651 : vector<1x256xi1>, vector<1x256xf32>
    %654 = vector.extract_strided_slice %653 {offsets = [0, 0], sizes = [1, 32], strides = [1, 1]} : vector<1x256xf32> to vector<1x32xf32>
    %655 = vector.extract_strided_slice %653 {offsets = [0, 32], sizes = [1, 32], strides = [1, 1]} : vector<1x256xf32> to vector<1x32xf32>
    %656 = vector.extract_strided_slice %653 {offsets = [0, 64], sizes = [1, 32], strides = [1, 1]} : vector<1x256xf32> to vector<1x32xf32>
    %657 = vector.extract_strided_slice %653 {offsets = [0, 96], sizes = [1, 32], strides = [1, 1]} : vector<1x256xf32> to vector<1x32xf32>
    %658 = arith.mulf %655, %621 : vector<1x32xf32>
    %659 = arith.mulf %654, %656 : vector<1x32xf32>
    %660 = arith.addf %658, %659 : vector<1x32xf32>
    %661 = math.tanh %660 : vector<1x32xf32>
    %662 = arith.mulf %657, %661 : vector<1x32xf32>
    %663 = vector.extract_strided_slice %653 {offsets = [0, 128], sizes = [1, 32], strides = [1, 1]} : vector<1x256xf32> to vector<1x32xf32>
    %664 = vector.extract_strided_slice %653 {offsets = [0, 160], sizes = [1, 32], strides = [1, 1]} : vector<1x256xf32> to vector<1x32xf32>
    %665 = vector.extract_strided_slice %653 {offsets = [0, 192], sizes = [1, 32], strides = [1, 1]} : vector<1x256xf32> to vector<1x32xf32>
    %666 = vector.extract_strided_slice %653 {offsets = [0, 224], sizes = [1, 32], strides = [1, 1]} : vector<1x256xf32> to vector<1x32xf32>
    %667 = arith.mulf %664, %634 : vector<1x32xf32>
    %668 = arith.mulf %663, %665 : vector<1x32xf32>
    %669 = arith.addf %667, %668 : vector<1x32xf32>
    %670 = math.tanh %669 : vector<1x32xf32>
    %671 = arith.mulf %666, %670 : vector<1x32xf32>
    %c1_i32_197 = arith.constant 1 : i32
    %672 = arith.cmpi sge, %c15_i32, %c1_i32_197 : i32
    %673 = arith.select %672, %669, %634 : vector<1x32xf32>
    %674 = arith.select %672, %671, %635 : vector<1x32xf32>
    %c1_i32_198 = arith.constant 1 : i32
    %675 = arith.subi %c15_i32, %c1_i32_198 : i32
    %c0_i32_199 = arith.constant 0 : i32
    %676 = arith.maxsi %675, %c0_i32_199 : i32
    %677 = arith.index_cast %676 : i32 to index
    %c0_200 = arith.constant 0 : index
    %678 = vector.load %arg21[%677, %c0_200] : memref<24x32xf32, #tpu.memory_space<vmem>>, vector<1x32xf32>
    tpu.vector_store %arg21[%677, %c0_200], %674 {strides = array<i32>} : memref<24x32xf32, #tpu.memory_space<vmem>>, vector<1x32xf32>,
    %c16_i32 = arith.constant 16 : i32
    %679 = tpu.concatenate %662, %674 in 1 : vector<1x32xf32>, vector<1x32xf32> -> vector<1x64xf32>
    %c23_i32_201 = arith.constant 23 : i32
    %680 = arith.minsi %c16_i32, %c23_i32_201 : i32
    %681 = arith.index_cast %680 : i32 to index
    %c0_202 = arith.constant 0 : index
    %682 = vector.load %arg20[%681, %c0_202] : memref<24x256xf32, #tpu.memory_space<vmem>>, vector<1x256xf32>
    %c0_203 = arith.constant 0 : index
    %c0_204 = arith.constant 0 : index
    %683 = vector.load %arg13[%c0_203, %c0_204] : memref<64x256xf32, #tpu.memory_space<vmem>>, vector<64x256xf32>
    %cst_205 = arith.constant dense<0.000000e+00> : vector<1x256xf32>
    %684 = tpu.matmul %679, %683, %cst_205 {dimension_numbers = #tpu.dot_dimension_numbers<[1], [0], [0], [1], [0, 0, 1, 1], [], []>} : vector<1x64xf32>, vector<64x256xf32>, vector<1x256xf32> -> vector<1x256xf32>
    %685 = arith.addf %682, %684 : vector<1x256xf32>
    %686 = arith.negf %685 : vector<1x256xf32>
    %687 = math.exp %686 : vector<1x256xf32>
    %cst_206 = arith.constant 1.000000e+00 : f32
    %688 = vector.broadcast %cst_206 : f32 to vector<1x256xf32>
    %689 = arith.addf %688, %687 : vector<1x256xf32>
    %690 = arith.divf %688, %689 : vector<1x256xf32>
    %691 = math.tanh %685 : vector<1x256xf32>
    %692 = arith.select %53, %691, %690 : vector<1x256xi1>, vector<1x256xf32>
    %693 = vector.extract_strided_slice %692 {offsets = [0, 0], sizes = [1, 32], strides = [1, 1]} : vector<1x256xf32> to vector<1x32xf32>
    %694 = vector.extract_strided_slice %692 {offsets = [0, 32], sizes = [1, 32], strides = [1, 1]} : vector<1x256xf32> to vector<1x32xf32>
    %695 = vector.extract_strided_slice %692 {offsets = [0, 64], sizes = [1, 32], strides = [1, 1]} : vector<1x256xf32> to vector<1x32xf32>
    %696 = vector.extract_strided_slice %692 {offsets = [0, 96], sizes = [1, 32], strides = [1, 1]} : vector<1x256xf32> to vector<1x32xf32>
    %697 = arith.mulf %694, %660 : vector<1x32xf32>
    %698 = arith.mulf %693, %695 : vector<1x32xf32>
    %699 = arith.addf %697, %698 : vector<1x32xf32>
    %700 = math.tanh %699 : vector<1x32xf32>
    %701 = arith.mulf %696, %700 : vector<1x32xf32>
    %702 = vector.extract_strided_slice %692 {offsets = [0, 128], sizes = [1, 32], strides = [1, 1]} : vector<1x256xf32> to vector<1x32xf32>
    %703 = vector.extract_strided_slice %692 {offsets = [0, 160], sizes = [1, 32], strides = [1, 1]} : vector<1x256xf32> to vector<1x32xf32>
    %704 = vector.extract_strided_slice %692 {offsets = [0, 192], sizes = [1, 32], strides = [1, 1]} : vector<1x256xf32> to vector<1x32xf32>
    %705 = vector.extract_strided_slice %692 {offsets = [0, 224], sizes = [1, 32], strides = [1, 1]} : vector<1x256xf32> to vector<1x32xf32>
    %706 = arith.mulf %703, %673 : vector<1x32xf32>
    %707 = arith.mulf %702, %704 : vector<1x32xf32>
    %708 = arith.addf %706, %707 : vector<1x32xf32>
    %709 = math.tanh %708 : vector<1x32xf32>
    %710 = arith.mulf %705, %709 : vector<1x32xf32>
    %c1_i32_207 = arith.constant 1 : i32
    %711 = arith.cmpi sge, %c16_i32, %c1_i32_207 : i32
    %712 = arith.select %711, %708, %673 : vector<1x32xf32>
    %713 = arith.select %711, %710, %674 : vector<1x32xf32>
    %c1_i32_208 = arith.constant 1 : i32
    %714 = arith.subi %c16_i32, %c1_i32_208 : i32
    %c0_i32_209 = arith.constant 0 : i32
    %715 = arith.maxsi %714, %c0_i32_209 : i32
    %716 = arith.index_cast %715 : i32 to index
    %c0_210 = arith.constant 0 : index
    %717 = vector.load %arg21[%716, %c0_210] : memref<24x32xf32, #tpu.memory_space<vmem>>, vector<1x32xf32>
    tpu.vector_store %arg21[%716, %c0_210], %713 {strides = array<i32>} : memref<24x32xf32, #tpu.memory_space<vmem>>, vector<1x32xf32>,
    %c17_i32 = arith.constant 17 : i32
    %718 = tpu.concatenate %701, %713 in 1 : vector<1x32xf32>, vector<1x32xf32> -> vector<1x64xf32>
    %c23_i32_211 = arith.constant 23 : i32
    %719 = arith.minsi %c17_i32, %c23_i32_211 : i32
    %720 = arith.index_cast %719 : i32 to index
    %c0_212 = arith.constant 0 : index
    %721 = vector.load %arg20[%720, %c0_212] : memref<24x256xf32, #tpu.memory_space<vmem>>, vector<1x256xf32>
    %c0_213 = arith.constant 0 : index
    %c0_214 = arith.constant 0 : index
    %722 = vector.load %arg13[%c0_213, %c0_214] : memref<64x256xf32, #tpu.memory_space<vmem>>, vector<64x256xf32>
    %cst_215 = arith.constant dense<0.000000e+00> : vector<1x256xf32>
    %723 = tpu.matmul %718, %722, %cst_215 {dimension_numbers = #tpu.dot_dimension_numbers<[1], [0], [0], [1], [0, 0, 1, 1], [], []>} : vector<1x64xf32>, vector<64x256xf32>, vector<1x256xf32> -> vector<1x256xf32>
    %724 = arith.addf %721, %723 : vector<1x256xf32>
    %725 = arith.negf %724 : vector<1x256xf32>
    %726 = math.exp %725 : vector<1x256xf32>
    %cst_216 = arith.constant 1.000000e+00 : f32
    %727 = vector.broadcast %cst_216 : f32 to vector<1x256xf32>
    %728 = arith.addf %727, %726 : vector<1x256xf32>
    %729 = arith.divf %727, %728 : vector<1x256xf32>
    %730 = math.tanh %724 : vector<1x256xf32>
    %731 = arith.select %53, %730, %729 : vector<1x256xi1>, vector<1x256xf32>
    %732 = vector.extract_strided_slice %731 {offsets = [0, 0], sizes = [1, 32], strides = [1, 1]} : vector<1x256xf32> to vector<1x32xf32>
    %733 = vector.extract_strided_slice %731 {offsets = [0, 32], sizes = [1, 32], strides = [1, 1]} : vector<1x256xf32> to vector<1x32xf32>
    %734 = vector.extract_strided_slice %731 {offsets = [0, 64], sizes = [1, 32], strides = [1, 1]} : vector<1x256xf32> to vector<1x32xf32>
    %735 = vector.extract_strided_slice %731 {offsets = [0, 96], sizes = [1, 32], strides = [1, 1]} : vector<1x256xf32> to vector<1x32xf32>
    %736 = arith.mulf %733, %699 : vector<1x32xf32>
    %737 = arith.mulf %732, %734 : vector<1x32xf32>
    %738 = arith.addf %736, %737 : vector<1x32xf32>
    %739 = math.tanh %738 : vector<1x32xf32>
    %740 = arith.mulf %735, %739 : vector<1x32xf32>
    %741 = vector.extract_strided_slice %731 {offsets = [0, 128], sizes = [1, 32], strides = [1, 1]} : vector<1x256xf32> to vector<1x32xf32>
    %742 = vector.extract_strided_slice %731 {offsets = [0, 160], sizes = [1, 32], strides = [1, 1]} : vector<1x256xf32> to vector<1x32xf32>
    %743 = vector.extract_strided_slice %731 {offsets = [0, 192], sizes = [1, 32], strides = [1, 1]} : vector<1x256xf32> to vector<1x32xf32>
    %744 = vector.extract_strided_slice %731 {offsets = [0, 224], sizes = [1, 32], strides = [1, 1]} : vector<1x256xf32> to vector<1x32xf32>
    %745 = arith.mulf %742, %712 : vector<1x32xf32>
    %746 = arith.mulf %741, %743 : vector<1x32xf32>
    %747 = arith.addf %745, %746 : vector<1x32xf32>
    %748 = math.tanh %747 : vector<1x32xf32>
    %749 = arith.mulf %744, %748 : vector<1x32xf32>
    %c1_i32_217 = arith.constant 1 : i32
    %750 = arith.cmpi sge, %c17_i32, %c1_i32_217 : i32
    %751 = arith.select %750, %747, %712 : vector<1x32xf32>
    %752 = arith.select %750, %749, %713 : vector<1x32xf32>
    %c1_i32_218 = arith.constant 1 : i32
    %753 = arith.subi %c17_i32, %c1_i32_218 : i32
    %c0_i32_219 = arith.constant 0 : i32
    %754 = arith.maxsi %753, %c0_i32_219 : i32
    %755 = arith.index_cast %754 : i32 to index
    %c0_220 = arith.constant 0 : index
    %756 = vector.load %arg21[%755, %c0_220] : memref<24x32xf32, #tpu.memory_space<vmem>>, vector<1x32xf32>
    tpu.vector_store %arg21[%755, %c0_220], %752 {strides = array<i32>} : memref<24x32xf32, #tpu.memory_space<vmem>>, vector<1x32xf32>,
    %c18_i32 = arith.constant 18 : i32
    %757 = tpu.concatenate %740, %752 in 1 : vector<1x32xf32>, vector<1x32xf32> -> vector<1x64xf32>
    %c23_i32_221 = arith.constant 23 : i32
    %758 = arith.minsi %c18_i32, %c23_i32_221 : i32
    %759 = arith.index_cast %758 : i32 to index
    %c0_222 = arith.constant 0 : index
    %760 = vector.load %arg20[%759, %c0_222] : memref<24x256xf32, #tpu.memory_space<vmem>>, vector<1x256xf32>
    %c0_223 = arith.constant 0 : index
    %c0_224 = arith.constant 0 : index
    %761 = vector.load %arg13[%c0_223, %c0_224] : memref<64x256xf32, #tpu.memory_space<vmem>>, vector<64x256xf32>
    %cst_225 = arith.constant dense<0.000000e+00> : vector<1x256xf32>
    %762 = tpu.matmul %757, %761, %cst_225 {dimension_numbers = #tpu.dot_dimension_numbers<[1], [0], [0], [1], [0, 0, 1, 1], [], []>} : vector<1x64xf32>, vector<64x256xf32>, vector<1x256xf32> -> vector<1x256xf32>
    %763 = arith.addf %760, %762 : vector<1x256xf32>
    %764 = arith.negf %763 : vector<1x256xf32>
    %765 = math.exp %764 : vector<1x256xf32>
    %cst_226 = arith.constant 1.000000e+00 : f32
    %766 = vector.broadcast %cst_226 : f32 to vector<1x256xf32>
    %767 = arith.addf %766, %765 : vector<1x256xf32>
    %768 = arith.divf %766, %767 : vector<1x256xf32>
    %769 = math.tanh %763 : vector<1x256xf32>
    %770 = arith.select %53, %769, %768 : vector<1x256xi1>, vector<1x256xf32>
    %771 = vector.extract_strided_slice %770 {offsets = [0, 0], sizes = [1, 32], strides = [1, 1]} : vector<1x256xf32> to vector<1x32xf32>
    %772 = vector.extract_strided_slice %770 {offsets = [0, 32], sizes = [1, 32], strides = [1, 1]} : vector<1x256xf32> to vector<1x32xf32>
    %773 = vector.extract_strided_slice %770 {offsets = [0, 64], sizes = [1, 32], strides = [1, 1]} : vector<1x256xf32> to vector<1x32xf32>
    %774 = vector.extract_strided_slice %770 {offsets = [0, 96], sizes = [1, 32], strides = [1, 1]} : vector<1x256xf32> to vector<1x32xf32>
    %775 = arith.mulf %772, %738 : vector<1x32xf32>
    %776 = arith.mulf %771, %773 : vector<1x32xf32>
    %777 = arith.addf %775, %776 : vector<1x32xf32>
    %778 = math.tanh %777 : vector<1x32xf32>
    %779 = arith.mulf %774, %778 : vector<1x32xf32>
    %780 = vector.extract_strided_slice %770 {offsets = [0, 128], sizes = [1, 32], strides = [1, 1]} : vector<1x256xf32> to vector<1x32xf32>
    %781 = vector.extract_strided_slice %770 {offsets = [0, 160], sizes = [1, 32], strides = [1, 1]} : vector<1x256xf32> to vector<1x32xf32>
    %782 = vector.extract_strided_slice %770 {offsets = [0, 192], sizes = [1, 32], strides = [1, 1]} : vector<1x256xf32> to vector<1x32xf32>
    %783 = vector.extract_strided_slice %770 {offsets = [0, 224], sizes = [1, 32], strides = [1, 1]} : vector<1x256xf32> to vector<1x32xf32>
    %784 = arith.mulf %781, %751 : vector<1x32xf32>
    %785 = arith.mulf %780, %782 : vector<1x32xf32>
    %786 = arith.addf %784, %785 : vector<1x32xf32>
    %787 = math.tanh %786 : vector<1x32xf32>
    %788 = arith.mulf %783, %787 : vector<1x32xf32>
    %c1_i32_227 = arith.constant 1 : i32
    %789 = arith.cmpi sge, %c18_i32, %c1_i32_227 : i32
    %790 = arith.select %789, %786, %751 : vector<1x32xf32>
    %791 = arith.select %789, %788, %752 : vector<1x32xf32>
    %c1_i32_228 = arith.constant 1 : i32
    %792 = arith.subi %c18_i32, %c1_i32_228 : i32
    %c0_i32_229 = arith.constant 0 : i32
    %793 = arith.maxsi %792, %c0_i32_229 : i32
    %794 = arith.index_cast %793 : i32 to index
    %c0_230 = arith.constant 0 : index
    %795 = vector.load %arg21[%794, %c0_230] : memref<24x32xf32, #tpu.memory_space<vmem>>, vector<1x32xf32>
    tpu.vector_store %arg21[%794, %c0_230], %791 {strides = array<i32>} : memref<24x32xf32, #tpu.memory_space<vmem>>, vector<1x32xf32>,
    %c19_i32 = arith.constant 19 : i32
    %796 = tpu.concatenate %779, %791 in 1 : vector<1x32xf32>, vector<1x32xf32> -> vector<1x64xf32>
    %c23_i32_231 = arith.constant 23 : i32
    %797 = arith.minsi %c19_i32, %c23_i32_231 : i32
    %798 = arith.index_cast %797 : i32 to index
    %c0_232 = arith.constant 0 : index
    %799 = vector.load %arg20[%798, %c0_232] : memref<24x256xf32, #tpu.memory_space<vmem>>, vector<1x256xf32>
    %c0_233 = arith.constant 0 : index
    %c0_234 = arith.constant 0 : index
    %800 = vector.load %arg13[%c0_233, %c0_234] : memref<64x256xf32, #tpu.memory_space<vmem>>, vector<64x256xf32>
    %cst_235 = arith.constant dense<0.000000e+00> : vector<1x256xf32>
    %801 = tpu.matmul %796, %800, %cst_235 {dimension_numbers = #tpu.dot_dimension_numbers<[1], [0], [0], [1], [0, 0, 1, 1], [], []>} : vector<1x64xf32>, vector<64x256xf32>, vector<1x256xf32> -> vector<1x256xf32>
    %802 = arith.addf %799, %801 : vector<1x256xf32>
    %803 = arith.negf %802 : vector<1x256xf32>
    %804 = math.exp %803 : vector<1x256xf32>
    %cst_236 = arith.constant 1.000000e+00 : f32
    %805 = vector.broadcast %cst_236 : f32 to vector<1x256xf32>
    %806 = arith.addf %805, %804 : vector<1x256xf32>
    %807 = arith.divf %805, %806 : vector<1x256xf32>
    %808 = math.tanh %802 : vector<1x256xf32>
    %809 = arith.select %53, %808, %807 : vector<1x256xi1>, vector<1x256xf32>
    %810 = vector.extract_strided_slice %809 {offsets = [0, 0], sizes = [1, 32], strides = [1, 1]} : vector<1x256xf32> to vector<1x32xf32>
    %811 = vector.extract_strided_slice %809 {offsets = [0, 32], sizes = [1, 32], strides = [1, 1]} : vector<1x256xf32> to vector<1x32xf32>
    %812 = vector.extract_strided_slice %809 {offsets = [0, 64], sizes = [1, 32], strides = [1, 1]} : vector<1x256xf32> to vector<1x32xf32>
    %813 = vector.extract_strided_slice %809 {offsets = [0, 96], sizes = [1, 32], strides = [1, 1]} : vector<1x256xf32> to vector<1x32xf32>
    %814 = arith.mulf %811, %777 : vector<1x32xf32>
    %815 = arith.mulf %810, %812 : vector<1x32xf32>
    %816 = arith.addf %814, %815 : vector<1x32xf32>
    %817 = math.tanh %816 : vector<1x32xf32>
    %818 = arith.mulf %813, %817 : vector<1x32xf32>
    %819 = vector.extract_strided_slice %809 {offsets = [0, 128], sizes = [1, 32], strides = [1, 1]} : vector<1x256xf32> to vector<1x32xf32>
    %820 = vector.extract_strided_slice %809 {offsets = [0, 160], sizes = [1, 32], strides = [1, 1]} : vector<1x256xf32> to vector<1x32xf32>
    %821 = vector.extract_strided_slice %809 {offsets = [0, 192], sizes = [1, 32], strides = [1, 1]} : vector<1x256xf32> to vector<1x32xf32>
    %822 = vector.extract_strided_slice %809 {offsets = [0, 224], sizes = [1, 32], strides = [1, 1]} : vector<1x256xf32> to vector<1x32xf32>
    %823 = arith.mulf %820, %790 : vector<1x32xf32>
    %824 = arith.mulf %819, %821 : vector<1x32xf32>
    %825 = arith.addf %823, %824 : vector<1x32xf32>
    %826 = math.tanh %825 : vector<1x32xf32>
    %827 = arith.mulf %822, %826 : vector<1x32xf32>
    %c1_i32_237 = arith.constant 1 : i32
    %828 = arith.cmpi sge, %c19_i32, %c1_i32_237 : i32
    %829 = arith.select %828, %825, %790 : vector<1x32xf32>
    %830 = arith.select %828, %827, %791 : vector<1x32xf32>
    %c1_i32_238 = arith.constant 1 : i32
    %831 = arith.subi %c19_i32, %c1_i32_238 : i32
    %c0_i32_239 = arith.constant 0 : i32
    %832 = arith.maxsi %831, %c0_i32_239 : i32
    %833 = arith.index_cast %832 : i32 to index
    %c0_240 = arith.constant 0 : index
    %834 = vector.load %arg21[%833, %c0_240] : memref<24x32xf32, #tpu.memory_space<vmem>>, vector<1x32xf32>
    tpu.vector_store %arg21[%833, %c0_240], %830 {strides = array<i32>} : memref<24x32xf32, #tpu.memory_space<vmem>>, vector<1x32xf32>,
    %c20_i32 = arith.constant 20 : i32
    %835 = tpu.concatenate %818, %830 in 1 : vector<1x32xf32>, vector<1x32xf32> -> vector<1x64xf32>
    %c23_i32_241 = arith.constant 23 : i32
    %836 = arith.minsi %c20_i32, %c23_i32_241 : i32
    %837 = arith.index_cast %836 : i32 to index
    %c0_242 = arith.constant 0 : index
    %838 = vector.load %arg20[%837, %c0_242] : memref<24x256xf32, #tpu.memory_space<vmem>>, vector<1x256xf32>
    %c0_243 = arith.constant 0 : index
    %c0_244 = arith.constant 0 : index
    %839 = vector.load %arg13[%c0_243, %c0_244] : memref<64x256xf32, #tpu.memory_space<vmem>>, vector<64x256xf32>
    %cst_245 = arith.constant dense<0.000000e+00> : vector<1x256xf32>
    %840 = tpu.matmul %835, %839, %cst_245 {dimension_numbers = #tpu.dot_dimension_numbers<[1], [0], [0], [1], [0, 0, 1, 1], [], []>} : vector<1x64xf32>, vector<64x256xf32>, vector<1x256xf32> -> vector<1x256xf32>
    %841 = arith.addf %838, %840 : vector<1x256xf32>
    %842 = arith.negf %841 : vector<1x256xf32>
    %843 = math.exp %842 : vector<1x256xf32>
    %cst_246 = arith.constant 1.000000e+00 : f32
    %844 = vector.broadcast %cst_246 : f32 to vector<1x256xf32>
    %845 = arith.addf %844, %843 : vector<1x256xf32>
    %846 = arith.divf %844, %845 : vector<1x256xf32>
    %847 = math.tanh %841 : vector<1x256xf32>
    %848 = arith.select %53, %847, %846 : vector<1x256xi1>, vector<1x256xf32>
    %849 = vector.extract_strided_slice %848 {offsets = [0, 0], sizes = [1, 32], strides = [1, 1]} : vector<1x256xf32> to vector<1x32xf32>
    %850 = vector.extract_strided_slice %848 {offsets = [0, 32], sizes = [1, 32], strides = [1, 1]} : vector<1x256xf32> to vector<1x32xf32>
    %851 = vector.extract_strided_slice %848 {offsets = [0, 64], sizes = [1, 32], strides = [1, 1]} : vector<1x256xf32> to vector<1x32xf32>
    %852 = vector.extract_strided_slice %848 {offsets = [0, 96], sizes = [1, 32], strides = [1, 1]} : vector<1x256xf32> to vector<1x32xf32>
    %853 = arith.mulf %850, %816 : vector<1x32xf32>
    %854 = arith.mulf %849, %851 : vector<1x32xf32>
    %855 = arith.addf %853, %854 : vector<1x32xf32>
    %856 = math.tanh %855 : vector<1x32xf32>
    %857 = arith.mulf %852, %856 : vector<1x32xf32>
    %858 = vector.extract_strided_slice %848 {offsets = [0, 128], sizes = [1, 32], strides = [1, 1]} : vector<1x256xf32> to vector<1x32xf32>
    %859 = vector.extract_strided_slice %848 {offsets = [0, 160], sizes = [1, 32], strides = [1, 1]} : vector<1x256xf32> to vector<1x32xf32>
    %860 = vector.extract_strided_slice %848 {offsets = [0, 192], sizes = [1, 32], strides = [1, 1]} : vector<1x256xf32> to vector<1x32xf32>
    %861 = vector.extract_strided_slice %848 {offsets = [0, 224], sizes = [1, 32], strides = [1, 1]} : vector<1x256xf32> to vector<1x32xf32>
    %862 = arith.mulf %859, %829 : vector<1x32xf32>
    %863 = arith.mulf %858, %860 : vector<1x32xf32>
    %864 = arith.addf %862, %863 : vector<1x32xf32>
    %865 = math.tanh %864 : vector<1x32xf32>
    %866 = arith.mulf %861, %865 : vector<1x32xf32>
    %c1_i32_247 = arith.constant 1 : i32
    %867 = arith.cmpi sge, %c20_i32, %c1_i32_247 : i32
    %868 = arith.select %867, %864, %829 : vector<1x32xf32>
    %869 = arith.select %867, %866, %830 : vector<1x32xf32>
    %c1_i32_248 = arith.constant 1 : i32
    %870 = arith.subi %c20_i32, %c1_i32_248 : i32
    %c0_i32_249 = arith.constant 0 : i32
    %871 = arith.maxsi %870, %c0_i32_249 : i32
    %872 = arith.index_cast %871 : i32 to index
    %c0_250 = arith.constant 0 : index
    %873 = vector.load %arg21[%872, %c0_250] : memref<24x32xf32, #tpu.memory_space<vmem>>, vector<1x32xf32>
    tpu.vector_store %arg21[%872, %c0_250], %869 {strides = array<i32>} : memref<24x32xf32, #tpu.memory_space<vmem>>, vector<1x32xf32>,
    %c21_i32 = arith.constant 21 : i32
    %874 = tpu.concatenate %857, %869 in 1 : vector<1x32xf32>, vector<1x32xf32> -> vector<1x64xf32>
    %c23_i32_251 = arith.constant 23 : i32
    %875 = arith.minsi %c21_i32, %c23_i32_251 : i32
    %876 = arith.index_cast %875 : i32 to index
    %c0_252 = arith.constant 0 : index
    %877 = vector.load %arg20[%876, %c0_252] : memref<24x256xf32, #tpu.memory_space<vmem>>, vector<1x256xf32>
    %c0_253 = arith.constant 0 : index
    %c0_254 = arith.constant 0 : index
    %878 = vector.load %arg13[%c0_253, %c0_254] : memref<64x256xf32, #tpu.memory_space<vmem>>, vector<64x256xf32>
    %cst_255 = arith.constant dense<0.000000e+00> : vector<1x256xf32>
    %879 = tpu.matmul %874, %878, %cst_255 {dimension_numbers = #tpu.dot_dimension_numbers<[1], [0], [0], [1], [0, 0, 1, 1], [], []>} : vector<1x64xf32>, vector<64x256xf32>, vector<1x256xf32> -> vector<1x256xf32>
    %880 = arith.addf %877, %879 : vector<1x256xf32>
    %881 = arith.negf %880 : vector<1x256xf32>
    %882 = math.exp %881 : vector<1x256xf32>
    %cst_256 = arith.constant 1.000000e+00 : f32
    %883 = vector.broadcast %cst_256 : f32 to vector<1x256xf32>
    %884 = arith.addf %883, %882 : vector<1x256xf32>
    %885 = arith.divf %883, %884 : vector<1x256xf32>
    %886 = math.tanh %880 : vector<1x256xf32>
    %887 = arith.select %53, %886, %885 : vector<1x256xi1>, vector<1x256xf32>
    %888 = vector.extract_strided_slice %887 {offsets = [0, 0], sizes = [1, 32], strides = [1, 1]} : vector<1x256xf32> to vector<1x32xf32>
    %889 = vector.extract_strided_slice %887 {offsets = [0, 32], sizes = [1, 32], strides = [1, 1]} : vector<1x256xf32> to vector<1x32xf32>
    %890 = vector.extract_strided_slice %887 {offsets = [0, 64], sizes = [1, 32], strides = [1, 1]} : vector<1x256xf32> to vector<1x32xf32>
    %891 = vector.extract_strided_slice %887 {offsets = [0, 96], sizes = [1, 32], strides = [1, 1]} : vector<1x256xf32> to vector<1x32xf32>
    %892 = arith.mulf %889, %855 : vector<1x32xf32>
    %893 = arith.mulf %888, %890 : vector<1x32xf32>
    %894 = arith.addf %892, %893 : vector<1x32xf32>
    %895 = math.tanh %894 : vector<1x32xf32>
    %896 = arith.mulf %891, %895 : vector<1x32xf32>
    %897 = vector.extract_strided_slice %887 {offsets = [0, 128], sizes = [1, 32], strides = [1, 1]} : vector<1x256xf32> to vector<1x32xf32>
    %898 = vector.extract_strided_slice %887 {offsets = [0, 160], sizes = [1, 32], strides = [1, 1]} : vector<1x256xf32> to vector<1x32xf32>
    %899 = vector.extract_strided_slice %887 {offsets = [0, 192], sizes = [1, 32], strides = [1, 1]} : vector<1x256xf32> to vector<1x32xf32>
    %900 = vector.extract_strided_slice %887 {offsets = [0, 224], sizes = [1, 32], strides = [1, 1]} : vector<1x256xf32> to vector<1x32xf32>
    %901 = arith.mulf %898, %868 : vector<1x32xf32>
    %902 = arith.mulf %897, %899 : vector<1x32xf32>
    %903 = arith.addf %901, %902 : vector<1x32xf32>
    %904 = math.tanh %903 : vector<1x32xf32>
    %905 = arith.mulf %900, %904 : vector<1x32xf32>
    %c1_i32_257 = arith.constant 1 : i32
    %906 = arith.cmpi sge, %c21_i32, %c1_i32_257 : i32
    %907 = arith.select %906, %903, %868 : vector<1x32xf32>
    %908 = arith.select %906, %905, %869 : vector<1x32xf32>
    %c1_i32_258 = arith.constant 1 : i32
    %909 = arith.subi %c21_i32, %c1_i32_258 : i32
    %c0_i32_259 = arith.constant 0 : i32
    %910 = arith.maxsi %909, %c0_i32_259 : i32
    %911 = arith.index_cast %910 : i32 to index
    %c0_260 = arith.constant 0 : index
    %912 = vector.load %arg21[%911, %c0_260] : memref<24x32xf32, #tpu.memory_space<vmem>>, vector<1x32xf32>
    tpu.vector_store %arg21[%911, %c0_260], %908 {strides = array<i32>} : memref<24x32xf32, #tpu.memory_space<vmem>>, vector<1x32xf32>,
    %c22_i32 = arith.constant 22 : i32
    %913 = tpu.concatenate %896, %908 in 1 : vector<1x32xf32>, vector<1x32xf32> -> vector<1x64xf32>
    %c23_i32_261 = arith.constant 23 : i32
    %914 = arith.minsi %c22_i32, %c23_i32_261 : i32
    %915 = arith.index_cast %914 : i32 to index
    %c0_262 = arith.constant 0 : index
    %916 = vector.load %arg20[%915, %c0_262] : memref<24x256xf32, #tpu.memory_space<vmem>>, vector<1x256xf32>
    %c0_263 = arith.constant 0 : index
    %c0_264 = arith.constant 0 : index
    %917 = vector.load %arg13[%c0_263, %c0_264] : memref<64x256xf32, #tpu.memory_space<vmem>>, vector<64x256xf32>
    %cst_265 = arith.constant dense<0.000000e+00> : vector<1x256xf32>
    %918 = tpu.matmul %913, %917, %cst_265 {dimension_numbers = #tpu.dot_dimension_numbers<[1], [0], [0], [1], [0, 0, 1, 1], [], []>} : vector<1x64xf32>, vector<64x256xf32>, vector<1x256xf32> -> vector<1x256xf32>
    %919 = arith.addf %916, %918 : vector<1x256xf32>
    %920 = arith.negf %919 : vector<1x256xf32>
    %921 = math.exp %920 : vector<1x256xf32>
    %cst_266 = arith.constant 1.000000e+00 : f32
    %922 = vector.broadcast %cst_266 : f32 to vector<1x256xf32>
    %923 = arith.addf %922, %921 : vector<1x256xf32>
    %924 = arith.divf %922, %923 : vector<1x256xf32>
    %925 = math.tanh %919 : vector<1x256xf32>
    %926 = arith.select %53, %925, %924 : vector<1x256xi1>, vector<1x256xf32>
    %927 = vector.extract_strided_slice %926 {offsets = [0, 0], sizes = [1, 32], strides = [1, 1]} : vector<1x256xf32> to vector<1x32xf32>
    %928 = vector.extract_strided_slice %926 {offsets = [0, 32], sizes = [1, 32], strides = [1, 1]} : vector<1x256xf32> to vector<1x32xf32>
    %929 = vector.extract_strided_slice %926 {offsets = [0, 64], sizes = [1, 32], strides = [1, 1]} : vector<1x256xf32> to vector<1x32xf32>
    %930 = vector.extract_strided_slice %926 {offsets = [0, 96], sizes = [1, 32], strides = [1, 1]} : vector<1x256xf32> to vector<1x32xf32>
    %931 = arith.mulf %928, %894 : vector<1x32xf32>
    %932 = arith.mulf %927, %929 : vector<1x32xf32>
    %933 = arith.addf %931, %932 : vector<1x32xf32>
    %934 = math.tanh %933 : vector<1x32xf32>
    %935 = arith.mulf %930, %934 : vector<1x32xf32>
    %936 = vector.extract_strided_slice %926 {offsets = [0, 128], sizes = [1, 32], strides = [1, 1]} : vector<1x256xf32> to vector<1x32xf32>
    %937 = vector.extract_strided_slice %926 {offsets = [0, 160], sizes = [1, 32], strides = [1, 1]} : vector<1x256xf32> to vector<1x32xf32>
    %938 = vector.extract_strided_slice %926 {offsets = [0, 192], sizes = [1, 32], strides = [1, 1]} : vector<1x256xf32> to vector<1x32xf32>
    %939 = vector.extract_strided_slice %926 {offsets = [0, 224], sizes = [1, 32], strides = [1, 1]} : vector<1x256xf32> to vector<1x32xf32>
    %940 = arith.mulf %937, %907 : vector<1x32xf32>
    %941 = arith.mulf %936, %938 : vector<1x32xf32>
    %942 = arith.addf %940, %941 : vector<1x32xf32>
    %943 = math.tanh %942 : vector<1x32xf32>
    %944 = arith.mulf %939, %943 : vector<1x32xf32>
    %c1_i32_267 = arith.constant 1 : i32
    %945 = arith.cmpi sge, %c22_i32, %c1_i32_267 : i32
    %946 = arith.select %945, %942, %907 : vector<1x32xf32>
    %947 = arith.select %945, %944, %908 : vector<1x32xf32>
    %c1_i32_268 = arith.constant 1 : i32
    %948 = arith.subi %c22_i32, %c1_i32_268 : i32
    %c0_i32_269 = arith.constant 0 : i32
    %949 = arith.maxsi %948, %c0_i32_269 : i32
    %950 = arith.index_cast %949 : i32 to index
    %c0_270 = arith.constant 0 : index
    %951 = vector.load %arg21[%950, %c0_270] : memref<24x32xf32, #tpu.memory_space<vmem>>, vector<1x32xf32>
    tpu.vector_store %arg21[%950, %c0_270], %947 {strides = array<i32>} : memref<24x32xf32, #tpu.memory_space<vmem>>, vector<1x32xf32>,
    %c23_i32_271 = arith.constant 23 : i32
    %952 = tpu.concatenate %935, %947 in 1 : vector<1x32xf32>, vector<1x32xf32> -> vector<1x64xf32>
    %c23_i32_272 = arith.constant 23 : i32
    %953 = arith.minsi %c23_i32_271, %c23_i32_272 : i32
    %954 = arith.index_cast %953 : i32 to index
    %c0_273 = arith.constant 0 : index
    %955 = vector.load %arg20[%954, %c0_273] : memref<24x256xf32, #tpu.memory_space<vmem>>, vector<1x256xf32>
    %c0_274 = arith.constant 0 : index
    %c0_275 = arith.constant 0 : index
    %956 = vector.load %arg13[%c0_274, %c0_275] : memref<64x256xf32, #tpu.memory_space<vmem>>, vector<64x256xf32>
    %cst_276 = arith.constant dense<0.000000e+00> : vector<1x256xf32>
    %957 = tpu.matmul %952, %956, %cst_276 {dimension_numbers = #tpu.dot_dimension_numbers<[1], [0], [0], [1], [0, 0, 1, 1], [], []>} : vector<1x64xf32>, vector<64x256xf32>, vector<1x256xf32> -> vector<1x256xf32>
    %958 = arith.addf %955, %957 : vector<1x256xf32>
    %959 = arith.negf %958 : vector<1x256xf32>
    %960 = math.exp %959 : vector<1x256xf32>
    %cst_277 = arith.constant 1.000000e+00 : f32
    %961 = vector.broadcast %cst_277 : f32 to vector<1x256xf32>
    %962 = arith.addf %961, %960 : vector<1x256xf32>
    %963 = arith.divf %961, %962 : vector<1x256xf32>
    %964 = math.tanh %958 : vector<1x256xf32>
    %965 = arith.select %53, %964, %963 : vector<1x256xi1>, vector<1x256xf32>
    %966 = vector.extract_strided_slice %965 {offsets = [0, 0], sizes = [1, 32], strides = [1, 1]} : vector<1x256xf32> to vector<1x32xf32>
    %967 = vector.extract_strided_slice %965 {offsets = [0, 32], sizes = [1, 32], strides = [1, 1]} : vector<1x256xf32> to vector<1x32xf32>
    %968 = vector.extract_strided_slice %965 {offsets = [0, 64], sizes = [1, 32], strides = [1, 1]} : vector<1x256xf32> to vector<1x32xf32>
    %969 = vector.extract_strided_slice %965 {offsets = [0, 96], sizes = [1, 32], strides = [1, 1]} : vector<1x256xf32> to vector<1x32xf32>
    %970 = arith.mulf %967, %933 : vector<1x32xf32>
    %971 = arith.mulf %966, %968 : vector<1x32xf32>
    %972 = arith.addf %970, %971 : vector<1x32xf32>
    %973 = math.tanh %972 : vector<1x32xf32>
    %974 = arith.mulf %969, %973 : vector<1x32xf32>
    %975 = vector.extract_strided_slice %965 {offsets = [0, 128], sizes = [1, 32], strides = [1, 1]} : vector<1x256xf32> to vector<1x32xf32>
    %976 = vector.extract_strided_slice %965 {offsets = [0, 160], sizes = [1, 32], strides = [1, 1]} : vector<1x256xf32> to vector<1x32xf32>
    %977 = vector.extract_strided_slice %965 {offsets = [0, 192], sizes = [1, 32], strides = [1, 1]} : vector<1x256xf32> to vector<1x32xf32>
    %978 = vector.extract_strided_slice %965 {offsets = [0, 224], sizes = [1, 32], strides = [1, 1]} : vector<1x256xf32> to vector<1x32xf32>
    %979 = arith.mulf %976, %946 : vector<1x32xf32>
    %980 = arith.mulf %975, %977 : vector<1x32xf32>
    %981 = arith.addf %979, %980 : vector<1x32xf32>
    %982 = math.tanh %981 : vector<1x32xf32>
    %983 = arith.mulf %978, %982 : vector<1x32xf32>
    %c1_i32_278 = arith.constant 1 : i32
    %984 = arith.cmpi sge, %c23_i32_271, %c1_i32_278 : i32
    %985 = arith.select %984, %981, %946 : vector<1x32xf32>
    %986 = arith.select %984, %983, %947 : vector<1x32xf32>
    %c1_i32_279 = arith.constant 1 : i32
    %987 = arith.subi %c23_i32_271, %c1_i32_279 : i32
    %c0_i32_280 = arith.constant 0 : i32
    %988 = arith.maxsi %987, %c0_i32_280 : i32
    %989 = arith.index_cast %988 : i32 to index
    %c0_281 = arith.constant 0 : index
    %990 = vector.load %arg21[%989, %c0_281] : memref<24x32xf32, #tpu.memory_space<vmem>>, vector<1x32xf32>
    tpu.vector_store %arg21[%989, %c0_281], %986 {strides = array<i32>} : memref<24x32xf32, #tpu.memory_space<vmem>>, vector<1x32xf32>,
    %c24_i32 = arith.constant 24 : i32
    %991 = tpu.concatenate %974, %986 in 1 : vector<1x32xf32>, vector<1x32xf32> -> vector<1x64xf32>
    %c23_i32_282 = arith.constant 23 : i32
    %992 = arith.minsi %c24_i32, %c23_i32_282 : i32
    %993 = arith.index_cast %992 : i32 to index
    %c0_283 = arith.constant 0 : index
    %994 = vector.load %arg20[%993, %c0_283] : memref<24x256xf32, #tpu.memory_space<vmem>>, vector<1x256xf32>
    %c0_284 = arith.constant 0 : index
    %c0_285 = arith.constant 0 : index
    %995 = vector.load %arg13[%c0_284, %c0_285] : memref<64x256xf32, #tpu.memory_space<vmem>>, vector<64x256xf32>
    %cst_286 = arith.constant dense<0.000000e+00> : vector<1x256xf32>
    %996 = tpu.matmul %991, %995, %cst_286 {dimension_numbers = #tpu.dot_dimension_numbers<[1], [0], [0], [1], [0, 0, 1, 1], [], []>} : vector<1x64xf32>, vector<64x256xf32>, vector<1x256xf32> -> vector<1x256xf32>
    %997 = arith.addf %994, %996 : vector<1x256xf32>
    %998 = arith.negf %997 : vector<1x256xf32>
    %999 = math.exp %998 : vector<1x256xf32>
    %cst_287 = arith.constant 1.000000e+00 : f32
    %1000 = vector.broadcast %cst_287 : f32 to vector<1x256xf32>
    %1001 = arith.addf %1000, %999 : vector<1x256xf32>
    %1002 = arith.divf %1000, %1001 : vector<1x256xf32>
    %1003 = math.tanh %997 : vector<1x256xf32>
    %1004 = arith.select %53, %1003, %1002 : vector<1x256xi1>, vector<1x256xf32>
    %1005 = vector.extract_strided_slice %1004 {offsets = [0, 0], sizes = [1, 32], strides = [1, 1]} : vector<1x256xf32> to vector<1x32xf32>
    %1006 = vector.extract_strided_slice %1004 {offsets = [0, 32], sizes = [1, 32], strides = [1, 1]} : vector<1x256xf32> to vector<1x32xf32>
    %1007 = vector.extract_strided_slice %1004 {offsets = [0, 64], sizes = [1, 32], strides = [1, 1]} : vector<1x256xf32> to vector<1x32xf32>
    %1008 = vector.extract_strided_slice %1004 {offsets = [0, 96], sizes = [1, 32], strides = [1, 1]} : vector<1x256xf32> to vector<1x32xf32>
    %1009 = arith.mulf %1006, %972 : vector<1x32xf32>
    %1010 = arith.mulf %1005, %1007 : vector<1x32xf32>
    %1011 = arith.addf %1009, %1010 : vector<1x32xf32>
    %1012 = math.tanh %1011 : vector<1x32xf32>
    %1013 = arith.mulf %1008, %1012 : vector<1x32xf32>
    %1014 = vector.extract_strided_slice %1004 {offsets = [0, 128], sizes = [1, 32], strides = [1, 1]} : vector<1x256xf32> to vector<1x32xf32>
    %1015 = vector.extract_strided_slice %1004 {offsets = [0, 160], sizes = [1, 32], strides = [1, 1]} : vector<1x256xf32> to vector<1x32xf32>
    %1016 = vector.extract_strided_slice %1004 {offsets = [0, 192], sizes = [1, 32], strides = [1, 1]} : vector<1x256xf32> to vector<1x32xf32>
    %1017 = vector.extract_strided_slice %1004 {offsets = [0, 224], sizes = [1, 32], strides = [1, 1]} : vector<1x256xf32> to vector<1x32xf32>
    %1018 = arith.mulf %1015, %985 : vector<1x32xf32>
    %1019 = arith.mulf %1014, %1016 : vector<1x32xf32>
    %1020 = arith.addf %1018, %1019 : vector<1x32xf32>
    %1021 = math.tanh %1020 : vector<1x32xf32>
    %1022 = arith.mulf %1017, %1021 : vector<1x32xf32>
    %c1_i32_288 = arith.constant 1 : i32
    %1023 = arith.cmpi sge, %c24_i32, %c1_i32_288 : i32
    %1024 = arith.select %1023, %1020, %985 : vector<1x32xf32>
    %1025 = arith.select %1023, %1022, %986 : vector<1x32xf32>
    %c1_i32_289 = arith.constant 1 : i32
    %1026 = arith.subi %c24_i32, %c1_i32_289 : i32
    %c0_i32_290 = arith.constant 0 : i32
    %1027 = arith.maxsi %1026, %c0_i32_290 : i32
    %1028 = arith.index_cast %1027 : i32 to index
    %c0_291 = arith.constant 0 : index
    %1029 = vector.load %arg21[%1028, %c0_291] : memref<24x32xf32, #tpu.memory_space<vmem>>, vector<1x32xf32>
    tpu.vector_store %arg21[%1028, %c0_291], %1025 {strides = array<i32>} : memref<24x32xf32, #tpu.memory_space<vmem>>, vector<1x32xf32>,
    %c25_i32 = arith.constant 25 : i32
    %c0_292 = arith.constant 0 : index
    %c0_293 = arith.constant 0 : index
    %1030 = vector.load %arg21[%c0_292, %c0_293] : memref<24x32xf32, #tpu.memory_space<vmem>>, vector<24x32xf32>
    %c0_294 = arith.constant 0 : index
    %c0_295 = arith.constant 0 : index
    %1031 = vector.load %arg15[%c0_294, %c0_295] : memref<32x16xf32, #tpu.memory_space<vmem>>, vector<32x16xf32>
    %cst_296 = arith.constant dense<0.000000e+00> : vector<24x16xf32>
    %1032 = tpu.matmul %1030, %1031, %cst_296 {dimension_numbers = #tpu.dot_dimension_numbers<[1], [0], [0], [1], [0, 0, 1, 1], [], []>} : vector<24x32xf32>, vector<32x16xf32>, vector<24x16xf32> -> vector<24x16xf32>
    %c0_297 = arith.constant 0 : index
    %c0_298 = arith.constant 0 : index
    %1033 = vector.load %arg16[%c0_297, %c0_298] : memref<1x16xf32, #tpu.memory_space<vmem>>, vector<1x16xf32>
    %1034 = vector.broadcast %1033 : vector<1x16xf32> to vector<24x16xf32>
    %1035 = arith.addf %1032, %1034 : vector<24x16xf32>
    %cst_299 = arith.constant 0.000000e+00 : f32
    %1036 = vector.broadcast %cst_299 : f32 to vector<24x16xf32>
    %1037 = arith.maximumf %1035, %1036 : vector<24x16xf32>
    %c0_300 = arith.constant 0 : index
    %c0_301 = arith.constant 0 : index
    %1038 = vector.load %arg17[%c0_300, %c0_301] : memref<1x16xf32, #tpu.memory_space<vmem>>, vector<1x16xf32>
    %1039 = vector.broadcast %1038 : vector<1x16xf32> to vector<24x16xf32>
    %1040 = arith.mulf %1037, %1039 : vector<24x16xf32>
    %cst_302 = arith.constant dense<0.000000e+00> : vector<24xf32>
    %1041 = vector.multi_reduction <add>, %1040, %cst_302 [1] : vector<24x16xf32> to vector<24xf32>
    %1042 = vector.shape_cast %1041 : vector<24xf32> to vector<24x1xf32>
    %c0_303 = arith.constant 0 : index
    %c0_304 = arith.constant 0 : index
    %1043 = vector.load %arg18[%c0_303, %c0_304] : memref<1x1xf32, #tpu.memory_space<vmem>>, vector<1x1xf32>
    %1044 = vector.broadcast %1043 : vector<1x1xf32> to vector<24x1xf32>
    %1045 = arith.addf %1042, %1044 : vector<24x1xf32>
    %c0_305 = arith.constant 0 : index
    %c0_306 = arith.constant 0 : index
    %1046 = vector.load %arg19[%c0_305, %c0_306] : memref<24x1xf32, #tpu.memory_space<vmem>>, vector<24x1xf32>
    tpu.vector_store %arg19[%c0_305, %c0_306], %1045 {strides = array<i32>} : memref<24x1xf32, #tpu.memory_space<vmem>>, vector<24x1xf32>,
    return
  }
}

</mosaic_0001>

<llo_original>
// kernel: edge_gcn_lstm_forward.1
$region0: #{edge_gcn_lstm_forward.1}
  #allocation0 [shape = 'u32[]', space=smem, size = 0x4, offset = 0x4, fixed_abs, tag = 'smem constant byte address 0x4 - core index']
  #allocation1 [shape = 'u32[144,128]{1,0:T(1,128)}', space=vmem, size = 0x12000, scoped, tag = 'internal scratch']
  #allocation2 [shape = 'f32[24,256]{1,0:T(8,128)}', space=vmem, size = 0x6000, scoped, tag = 'scratch operand']
  #allocation3 [shape = 'f32[24,32]{1,0:T(8,128)}', space=vmem, size = 0x3000, scoped, tag = 'scratch operand']
  #allocation4 [shape = 'f32[1,1]{1,0:T(1,128)S(1)}', space=vmem, size = 0x200, scoped, tag = 'scoped memory for edge_gcn_lstm_forward.1']
  %s0 = inlined_call_operand.vmem [shape: f32[16,16], index: 0, kind: input, shape index: {}]
  %s1 = inlined_call_operand.vmem [shape: f32[16,1], index: 1, kind: input, shape index: {}]
  %s2 = inlined_call_operand.vmem [shape: f32[1,8], index: 2, kind: input, shape index: {}]
  %s3 = inlined_call_operand.vmem [shape: f32[1,8], index: 3, kind: input, shape index: {}]
  %s4 = inlined_call_operand.vmem [shape: f32[8,8], index: 4, kind: input, shape index: {}]
  %s5 = inlined_call_operand.vmem [shape: f32[1,8], index: 5, kind: input, shape index: {}]
  %s6 = inlined_call_operand.vmem [shape: f32[24,16], index: 6, kind: input, shape index: {}]
  %s7 = inlined_call_operand.vmem [shape: f32[24,16], index: 7, kind: input, shape index: {}]
  %s8 = inlined_call_operand.vmem [shape: f32[24,8], index: 8, kind: input, shape index: {}]
  %s9 = inlined_call_operand.vmem [shape: f32[8,128], index: 9, kind: input, shape index: {}]
  %s10 = inlined_call_operand.vmem [shape: f32[8,128], index: 10, kind: input, shape index: {}]
  %s11 = inlined_call_operand.vmem [shape: f32[8,128], index: 11, kind: input, shape index: {}]
  %s12 = inlined_call_operand.vmem [shape: f32[1,128], index: 12, kind: input, shape index: {}]
  %s13 = inlined_call_operand.vmem [shape: f32[64,256], index: 13, kind: input, shape index: {}]
  %s14 = inlined_call_operand.vmem [shape: f32[1,128], index: 14, kind: input, shape index: {}]
  %s15 = inlined_call_operand.vmem [shape: f32[32,16], index: 15, kind: input, shape index: {}]
  %s16 = inlined_call_operand.vmem [shape: f32[1,16], index: 16, kind: input, shape index: {}]
  %s17 = inlined_call_operand.vmem [shape: f32[1,16], index: 17, kind: input, shape index: {}]
  %s18 = inlined_call_operand.<no memory space> [shape: f32[1,1], index: 18, kind: input, shape index: {}]
  %s19 = inlined_call_operand.vmem [shape: f32[24,1], index: 19, kind: output, shape index: {}]
  %s20 = sld [smem:[#allocation0]]
  $region86: #{edge_gcn_lstm_forward.1} parent=0
    _
  %s22 = ssub.s32 1, %s20
  %s23 = scalar_select 0, %s22, %s20
  %v24 = vstv %s18
  %25 = vst [vmem:[#allocation4] sm:$0x1] %v24
  // Predicated region
  $region2: #{edge_gcn_lstm_forward.1} parent=0 // pred_check
    _
  $region3: #{edge_gcn_lstm_forward.1} parent=0 // pred_check_branch
    %27 = sbr.rel (0) target = $region5
  $region4: #{edge_gcn_lstm_forward.1} parent=0 // pred_region
    _
  $region5: #{edge_gcn_lstm_forward.1} parent=0 // pred_fallthru
    _
  // Predicated region
  $region6: #{edge_gcn_lstm_forward.1} parent=0 // pred_check
    _
  $region7: #{edge_gcn_lstm_forward.1} parent=0 // pred_check_branch
    %29 = sbr.rel (0) target = $region9
  $region8: #{edge_gcn_lstm_forward.1} parent=0 // pred_region
    _
  $region9: #{edge_gcn_lstm_forward.1} parent=0 // pred_fallthru
    _
  // Predicated region
  $region10: #{edge_gcn_lstm_forward.1} parent=0 // pred_check
    _
  $region11: #{edge_gcn_lstm_forward.1} parent=0 // pred_check_branch
    %31 = sbr.rel (0) target = $region13
  $region12: #{edge_gcn_lstm_forward.1} parent=0 // pred_region
    _
  $region13: #{edge_gcn_lstm_forward.1} parent=0 // pred_fallthru
    _
  // Predicated region
  $region14: #{edge_gcn_lstm_forward.1} parent=0 // pred_check
    _
  $region15: #{edge_gcn_lstm_forward.1} parent=0 // pred_check_branch
    %33 = sbr.rel (0) target = $region17
  $region16: #{edge_gcn_lstm_forward.1} parent=0 // pred_region
    _
  $region17: #{edge_gcn_lstm_forward.1} parent=0 // pred_fallthru
    _
  // Predicated region
  $region18: #{edge_gcn_lstm_forward.1} parent=0 // pred_check
    _
  $region19: #{edge_gcn_lstm_forward.1} parent=0 // pred_check_branch
    %35 = sbr.rel (0) target = $region21
  $region20: #{edge_gcn_lstm_forward.1} parent=0 // pred_region
    _
  $region21: #{edge_gcn_lstm_forward.1} parent=0 // pred_fallthru
    _
  // Predicated region
  $region22: #{edge_gcn_lstm_forward.1} parent=0 // pred_check
    _
  $region23: #{edge_gcn_lstm_forward.1} parent=0 // pred_check_branch
    %37 = sbr.rel (0) target = $region25
  $region24: #{edge_gcn_lstm_forward.1} parent=0 // pred_region
    _
  $region25: #{edge_gcn_lstm_forward.1} parent=0 // pred_fallthru
    _
  // Predicated region
  $region26: #{edge_gcn_lstm_forward.1} parent=0 // pred_check
    _
  $region27: #{edge_gcn_lstm_forward.1} parent=0 // pred_check_branch
    %39 = sbr.rel (0) target = $region29
  $region28: #{edge_gcn_lstm_forward.1} parent=0 // pred_region
    _
  $region29: #{edge_gcn_lstm_forward.1} parent=0 // pred_fallthru
    _
  // Predicated region
  $region30: #{edge_gcn_lstm_forward.1} parent=0 // pred_check
    _
  $region31: #{edge_gcn_lstm_forward.1} parent=0 // pred_check_branch
    %41 = sbr.rel (0) target = $region33
  $region32: #{edge_gcn_lstm_forward.1} parent=0 // pred_region
    _
  $region33: #{edge_gcn_lstm_forward.1} parent=0 // pred_fallthru
    _
  // Predicated region
  $region34: #{edge_gcn_lstm_forward.1} parent=0 // pred_check
    _
  $region35: #{edge_gcn_lstm_forward.1} parent=0 // pred_check_branch
    %43 = sbr.rel (0) target = $region37
  $region36: #{edge_gcn_lstm_forward.1} parent=0 // pred_region
    _
  $region37: #{edge_gcn_lstm_forward.1} parent=0 // pred_fallthru
    _
  // Predicated region
  $region38: #{edge_gcn_lstm_forward.1} parent=0 // pred_check
    _
  $region39: #{edge_gcn_lstm_forward.1} parent=0 // pred_check_branch
    %45 = sbr.rel (0) target = $region41
  $region40: #{edge_gcn_lstm_forward.1} parent=0 // pred_region
    _
  $region41: #{edge_gcn_lstm_forward.1} parent=0 // pred_fallthru
    _
  // Predicated region
  $region42: #{edge_gcn_lstm_forward.1} parent=0 // pred_check
    _
  $region43: #{edge_gcn_lstm_forward.1} parent=0 // pred_check_branch
    %47 = sbr.rel (0) target = $region45
  $region44: #{edge_gcn_lstm_forward.1} parent=0 // pred_region
    _
  $region45: #{edge_gcn_lstm_forward.1} parent=0 // pred_fallthru
    _
  // Predicated region
  $region46: #{edge_gcn_lstm_forward.1} parent=0 // pred_check
    _
  $region47: #{edge_gcn_lstm_forward.1} parent=0 // pred_check_branch
    %49 = sbr.rel (0) target = $region49
  $region48: #{edge_gcn_lstm_forward.1} parent=0 // pred_region
    _
  $region49: #{edge_gcn_lstm_forward.1} parent=0 // pred_fallthru
    _
  // Predicated region
  $region50: #{edge_gcn_lstm_forward.1} parent=0 // pred_check
    _
  $region51: #{edge_gcn_lstm_forward.1} parent=0 // pred_check_branch
    %51 = sbr.rel (0) target = $region53
  $region52: #{edge_gcn_lstm_forward.1} parent=0 // pred_region
    _
  $region53: #{edge_gcn_lstm_forward.1} parent=0 // pred_fallthru
    _
  // Predicated region
  $region54: #{edge_gcn_lstm_forward.1} parent=0 // pred_check
    _
  $region55: #{edge_gcn_lstm_forward.1} parent=0 // pred_check_branch
    %53 = sbr.rel (0) target = $region57
  $region56: #{edge_gcn_lstm_forward.1} parent=0 // pred_region
    _
  $region57: #{edge_gcn_lstm_forward.1} parent=0 // pred_fallthru
    _
  // Predicated region
  $region58: #{edge_gcn_lstm_forward.1} parent=0 // pred_check
    _
  $region59: #{edge_gcn_lstm_forward.1} parent=0 // pred_check_branch
    %55 = sbr.rel (0) target = $region61
  $region60: #{edge_gcn_lstm_forward.1} parent=0 // pred_region
    _
  $region61: #{edge_gcn_lstm_forward.1} parent=0 // pred_fallthru
    _
  // Predicated region
  $region62: #{edge_gcn_lstm_forward.1} parent=0 // pred_check
    _
  $region63: #{edge_gcn_lstm_forward.1} parent=0 // pred_check_branch
    %57 = sbr.rel (0) target = $region65
  $region64: #{edge_gcn_lstm_forward.1} parent=0 // pred_region
    _
  $region65: #{edge_gcn_lstm_forward.1} parent=0 // pred_fallthru
    _
  // Predicated region
  $region66: #{edge_gcn_lstm_forward.1} parent=0 // pred_check
    _
  $region67: #{edge_gcn_lstm_forward.1} parent=0 // pred_check_branch
    %59 = sbr.rel (0) target = $region69
  $region68: #{edge_gcn_lstm_forward.1} parent=0 // pred_region
    _
  $region69: #{edge_gcn_lstm_forward.1} parent=0 // pred_fallthru
    _
  // Predicated region
  $region70: #{edge_gcn_lstm_forward.1} parent=0 // pred_check
    _
  $region71: #{edge_gcn_lstm_forward.1} parent=0 // pred_check_branch
    %61 = sbr.rel (0) target = $region73
  $region72: #{edge_gcn_lstm_forward.1} parent=0 // pred_region
    _
  $region73: #{edge_gcn_lstm_forward.1} parent=0 // pred_fallthru
    _
  // Predicated region
  $region74: #{edge_gcn_lstm_forward.1} parent=0 // pred_check
    _
  $region75: #{edge_gcn_lstm_forward.1} parent=0 // pred_check_branch
    %63 = sbr.rel (0) target = $region77
  $region76: #{edge_gcn_lstm_forward.1} parent=0 // pred_region
    _
  $region77: #{edge_gcn_lstm_forward.1} parent=0 // pred_fallthru
    _
  %v64 = vld [vmem:[%s1] sm:$0xff]
  %v65 = vld [vmem:[%s1 + $0x8] sm:$0xff]
  %v66 = vld [vmem:[%s2] sm:$0x1]
  %68 = vset.pattern.permute.xlu0 0
  %69 = vperm.xlu0 %68, %v64
  %v70 = vpop.permute.xlu0 %69
  %73 = vset.pattern.permute.xlu0 0
  %74 = vperm.xlu0 %73, %v65
  %v75 = vpop.permute.xlu0 %74
  %v78 = vlaneseq
  %v79 = vshrl.u32 %v78, 7
  %v80 = vsub.s32 0, %v79
  %v81 = vrot.slane %v66, %v80
  %v83 = vmul.f32 %v70, %v81
  %v84 = vmul.f32 %v75, %v81
  %v85 = vld [vmem:[%s0] sm:$0xff]
  %v86 = vld [vmem:[%s0 + $0x8] sm:$0xff]
  %v87 = vld [vmem:[%s3] sm:$0x1]
  %v89 = vlaneseq
  %v90 = vshrl.u32 %v89, 7
  %v91 = vsub.s32 0, %v90
  %v92 = vrot.slane %v87, %v91
  %vm94 = vcmask 130048
  %v96 = vsel %vm94, %v85, 0
  %v99 = vsel %vm94, %v86, 0
  %101 = vmatprep.subr.mxu0 0.0
  %102 = vmatpush1.msra.mxu0 0.0
  %103 = vmatprep.subr.mxu0 0.0
  %104 = vmatpush1.msra.mxu0 0.0
  %105 = vmatprep.subr.mxu0 0.0
  %106 = vmatpush1.msra.mxu0 0.0
  %107 = vmatprep.subr.mxu0 0.0
  %108 = vmatpush1.msra.mxu0 0.0
  %109 = vmatprep.subr.mxu0 0.0
  %110 = vmatpush1.msra.mxu0 0.0
  %111 = vmatprep.subr.mxu0 0.0
  %112 = vmatpush1.msra.mxu0 0.0
  %113 = vmatprep.subr.mxu0 0.0
  %114 = vmatpush1.msra.mxu0 0.0
  %115 = vmatprep.subr.mxu0 0.0
  %116 = vmatpush1.msra.mxu0 0.0
  %117 = vmatprep.subr.mxu0 0.0
  %118 = vmatpush1.msra.mxu0 0.0
  %119 = vmatprep.subr.mxu0 0.0
  %120 = vmatpush1.msra.mxu0 0.0
  %121 = vmatprep.subr.mxu0 0.0
  %122 = vmatpush1.msra.mxu0 0.0
  %123 = vmatprep.subr.mxu0 0.0
  %124 = vmatpush1.msra.mxu0 0.0
  %125 = vmatprep.subr.mxu0 0.0
  %126 = vmatpush1.msra.mxu0 0.0
  %127 = vmatprep.subr.mxu0 0.0
  %128 = vmatpush1.msra.mxu0 0.0
  %129 = vmatprep.subr.mxu0 0.0
  %130 = vmatpush1.msra.mxu0 %v84
  %131 = vmatprep.subr.mxu0 0.0
  %132 = vmatpush1.msra.mxu0 %v83
  %133 = vmatprep.subr.mxu0 0.0
  %134 = vmatpush2.msra.mxu0 0.0
  %135 = vmatprep.subr.mxu0 0.0
  %136 = vmatpush2.msra.mxu0 0.0
  %137 = vmatprep.subr.mxu0 0.0
  %138 = vmatpush2.msra.mxu0 0.0
  %139 = vmatprep.subr.mxu0 0.0
  %140 = vmatpush2.msra.mxu0 0.0
  %141 = vmatprep.subr.mxu0 0.0
  %142 = vmatpush2.msra.mxu0 0.0
  %143 = vmatprep.subr.mxu0 0.0
  %144 = vmatpush2.msra.mxu0 0.0
  %145 = vmatprep.subr.mxu0 0.0
  %146 = vmatpush2.msra.mxu0 0.0
  %147 = vmatprep.subr.mxu0 0.0
  %148 = vmatpush2.msra.mxu0 0.0
  %149 = vmatprep.subr.mxu0 0.0
  %150 = vmatpush2.msra.mxu0 0.0
  %151 = vmatprep.subr.mxu0 0.0
  %152 = vmatpush2.msra.mxu0 0.0
  %153 = vmatprep.subr.mxu0 0.0
  %154 = vmatpush2.msra.mxu0 0.0
  %155 = vmatprep.subr.mxu0 0.0
  %156 = vmatpush2.msra.mxu0 0.0
  %157 = vmatprep.subr.mxu0 0.0
  %158 = vmatpush2.msra.mxu0 0.0
  %159 = vmatprep.subr.mxu0 0.0
  %160 = vmatpush2.msra.mxu0 0.0
  %161 = vmatprep.subr.mxu0 0.0
  %162 = vmatpush2.msra.mxu0 0.0
  %163 = vmatprep.subr.mxu0 0.0
  %164 = vmatpush2.msra.mxu0 0.0
  %165 = vmatprep.mubr.f32.mxu0 0.0
  %166 = vmatmul.mubr.f32.gmra.mxu0 %v96
  %v167 = vpop.f32.mrf.mxu0
  %v168 = vadd.f32 %v92, %v167
  %v169 = vpop.f32.mrf.mxu0
  %170 = vmatprep.mubr.f32.mxu0 0.0
  %171 = vmatmul.mubr.f32.gmra.mxu0 %v99
  %v172 = vpop.f32.mrf.mxu0
  %v173 = vadd.f32 %v92, %v172
  %v174 = vpop.f32.mrf.mxu0
  %175 = vdwg.mxu0
  %v176 = vmax.f32 %v168, 0.0
  %v177 = vmax.f32 %v173, 0.0
  %v178 = vld [vmem:[%s4] sm:$0xff]
  %vm179 = vcmask 64512
  %v181 = vsel %vm179, %v176, 0
  %v184 = vsel %vm179, %v177, 0
  %186 = vmatprep.subr.mxu0 0.0
  %187 = vmatpush1.msra.mxu0 0.0
  %188 = vmatprep.subr.mxu0 0.0
  %189 = vmatpush1.msra.mxu0 0.0
  %190 = vmatprep.subr.mxu0 0.0
  %191 = vmatpush1.msra.mxu0 0.0
  %192 = vmatprep.subr.mxu0 0.0
  %193 = vmatpush1.msra.mxu0 0.0
  %194 = vmatprep.subr.mxu0 0.0
  %195 = vmatpush1.msra.mxu0 0.0
  %196 = vmatprep.subr.mxu0 0.0
  %197 = vmatpush1.msra.mxu0 0.0
  %198 = vmatprep.subr.mxu0 0.0
  %199 = vmatpush1.msra.mxu0 0.0
  %200 = vmatprep.subr.mxu0 0.0
  %201 = vmatpush1.msra.mxu0 0.0
  %202 = vmatprep.subr.mxu0 0.0
  %203 = vmatpush1.msra.mxu0 0.0
  %204 = vmatprep.subr.mxu0 0.0
  %205 = vmatpush1.msra.mxu0 0.0
  %206 = vmatprep.subr.mxu0 0.0
  %207 = vmatpush1.msra.mxu0 0.0
  %208 = vmatprep.subr.mxu0 0.0
  %209 = vmatpush1.msra.mxu0 0.0
  %210 = vmatprep.subr.mxu0 0.0
  %211 = vmatpush1.msra.mxu0 0.0
  %212 = vmatprep.subr.mxu0 0.0
  %213 = vmatpush1.msra.mxu0 0.0
  %214 = vmatprep.subr.mxu0 0.0
  %215 = vmatpush1.msra.mxu0 0.0
  %216 = vmatprep.subr.mxu0 0.0
  %217 = vmatpush1.msra.mxu0 %v178
  %218 = vmatprep.subr.mxu0 0.0
  %219 = vmatpush2.msra.mxu0 0.0
  %220 = vmatprep.subr.mxu0 0.0
  %221 = vmatpush2.msra.mxu0 0.0
  %222 = vmatprep.subr.mxu0 0.0
  %223 = vmatpush2.msra.mxu0 0.0
  %224 = vmatprep.subr.mxu0 0.0
  %225 = vmatpush2.msra.mxu0 0.0
  %226 = vmatprep.subr.mxu0 0.0
  %227 = vmatpush2.msra.mxu0 0.0
  %228 = vmatprep.subr.mxu0 0.0
  %229 = vmatpush2.msra.mxu0 0.0
  %230 = vmatprep.subr.mxu0 0.0
  %231 = vmatpush2.msra.mxu0 0.0
  %232 = vmatprep.subr.mxu0 0.0
  %233 = vmatpush2.msra.mxu0 0.0
  %234 = vmatprep.subr.mxu0 0.0
  %235 = vmatpush2.msra.mxu0 0.0
  %236 = vmatprep.subr.mxu0 0.0
  %237 = vmatpush2.msra.mxu0 0.0
  %238 = vmatprep.subr.mxu0 0.0
  %239 = vmatpush2.msra.mxu0 0.0
  %240 = vmatprep.subr.mxu0 0.0
  %241 = vmatpush2.msra.mxu0 0.0
  %242 = vmatprep.subr.mxu0 0.0
  %243 = vmatpush2.msra.mxu0 0.0
  %244 = vmatprep.subr.mxu0 0.0
  %245 = vmatpush2.msra.mxu0 0.0
  %246 = vmatprep.subr.mxu0 0.0
  %247 = vmatpush2.msra.mxu0 0.0
  %248 = vmatprep.subr.mxu0 0.0
  %249 = vmatpush2.msra.mxu0 0.0
  %250 = vmatprep.mubr.f32.mxu0 0.0
  %251 = vmatmul.mubr.f32.gmra.mxu0 %v181
  %v252 = vpop.f32.mrf.mxu0
  %v253 = vadd.f32 0.0, %v252
  %v254 = vpop.f32.mrf.mxu0
  %255 = vmatprep.mubr.f32.mxu0 0.0
  %256 = vmatmul.mubr.f32.gmra.mxu0 %v184
  %v257 = vpop.f32.mrf.mxu0
  %v258 = vadd.f32 0.0, %v257
  %v259 = vpop.f32.mrf.mxu0
  %260 = vdwg.mxu0
  %v261 = vld [vmem:[%s5] sm:$0x1]
  %v263 = vlaneseq
  %v264 = vshrl.u32 %v263, 7
  %v265 = vsub.s32 0, %v264
  %v266 = vrot.slane %v261, %v265
  %268 = vmatprep.subr.mxu0 0.0
  %269 = vmatpush1.msra.mxu0 0.0
  %270 = vmatprep.subr.mxu0 0.0
  %271 = vmatpush1.msra.mxu0 0.0
  %272 = vmatprep.subr.mxu0 0.0
  %273 = vmatpush1.msra.mxu0 0.0
  %274 = vmatprep.subr.mxu0 0.0
  %275 = vmatpush1.msra.mxu0 0.0
  %276 = vmatprep.subr.mxu0 0.0
  %277 = vmatpush1.msra.mxu0 0.0
  %278 = vmatprep.subr.mxu0 0.0
  %279 = vmatpush1.msra.mxu0 0.0
  %280 = vmatprep.subr.mxu0 0.0
  %281 = vmatpush1.msra.mxu0 0.0
  %282 = vmatprep.subr.mxu0 0.0
  %283 = vmatpush1.msra.mxu0 0.0
  %284 = vmatprep.subr.mxu0 0.0
  %285 = vmatpush1.msra.mxu0 0.0
  %286 = vmatprep.subr.mxu0 0.0
  %287 = vmatpush1.msra.mxu0 0.0
  %288 = vmatprep.subr.mxu0 0.0
  %289 = vmatpush1.msra.mxu0 0.0
  %290 = vmatprep.subr.mxu0 0.0
  %291 = vmatpush1.msra.mxu0 0.0
  %292 = vmatprep.subr.mxu0 0.0
  %293 = vmatpush1.msra.mxu0 0.0
  %294 = vmatprep.subr.mxu0 0.0
  %295 = vmatpush1.msra.mxu0 0.0
  %296 = vmatprep.subr.mxu0 0.0
  %297 = vmatpush1.msra.mxu0 %v258
  %298 = vmatprep.subr.mxu0 0.0
  %299 = vmatpush1.msra.mxu0 %v253
  %300 = vmatprep.subr.mxu0 0.0
  %301 = vmatpush2.msra.mxu0 0.0
  %302 = vmatprep.subr.mxu0 0.0
  %303 = vmatpush2.msra.mxu0 0.0
  %304 = vmatprep.subr.mxu0 0.0
  %305 = vmatpush2.msra.mxu0 0.0
  %306 = vmatprep.subr.mxu0 0.0
  %307 = vmatpush2.msra.mxu0 0.0
  %308 = vmatprep.subr.mxu0 0.0
  %309 = vmatpush2.msra.mxu0 0.0
  %310 = vmatprep.subr.mxu0 0.0
  %311 = vmatpush2.msra.mxu0 0.0
  %312 = vmatprep.subr.mxu0 0.0
  %313 = vmatpush2.msra.mxu0 0.0
  %314 = vmatprep.subr.mxu0 0.0
  %315 = vmatpush2.msra.mxu0 0.0
  %316 = vmatprep.subr.mxu0 0.0
  %317 = vmatpush2.msra.mxu0 0.0
  %318 = vmatprep.subr.mxu0 0.0
  %319 = vmatpush2.msra.mxu0 0.0
  %320 = vmatprep.subr.mxu0 0.0
  %321 = vmatpush2.msra.mxu0 0.0
  %322 = vmatprep.subr.mxu0 0.0
  %323 = vmatpush2.msra.mxu0 0.0
  %324 = vmatprep.subr.mxu0 0.0
  %325 = vmatpush2.msra.mxu0 0.0
  %326 = vmatprep.subr.mxu0 0.0
  %327 = vmatpush2.msra.mxu0 0.0
  %328 = vmatprep.subr.mxu0 0.0
  %329 = vmatpush2.msra.mxu0 0.0
  %330 = vmatprep.subr.mxu0 0.0
  %331 = vmatpush2.msra.mxu0 0.0
  %332 = vmatprep.mubr.f32.mxu0 0.0
  %333 = vmatmul.mubr.f32.gmra.mxu0 %v96
  %v334 = vpop.f32.mrf.mxu0
  %v335 = vadd.f32 %v266, %v334
  %v336 = vpop.f32.mrf.mxu0
  %337 = vmatprep.mubr.f32.mxu0 0.0
  %338 = vmatmul.mubr.f32.gmra.mxu0 %v99
  %v339 = vpop.f32.mrf.mxu0
  %v340 = vadd.f32 %v266, %v339
  %v341 = vpop.f32.mrf.mxu0
  %342 = vdwg.mxu0
  %v343 = vmax.f32 %v335, 0.0
  %v344 = vmax.f32 %v340, 0.0
  %v345 = vld [vmem:[%s9] sm:$0xff]
  %v347 = vsel %vm179, %v343, 0
  %v350 = vsel %vm179, %v344, 0
  %352 = vmatprep.subr.mxu0 0.0
  %353 = vmatpush1.msra.mxu0 0.0
  %354 = vmatprep.subr.mxu0 0.0
  %355 = vmatpush1.msra.mxu0 0.0
  %356 = vmatprep.subr.mxu0 0.0
  %357 = vmatpush1.msra.mxu0 0.0
  %358 = vmatprep.subr.mxu0 0.0
  %359 = vmatpush1.msra.mxu0 0.0
  %360 = vmatprep.subr.mxu0 0.0
  %361 = vmatpush1.msra.mxu0 0.0
  %362 = vmatprep.subr.mxu0 0.0
  %363 = vmatpush1.msra.mxu0 0.0
  %364 = vmatprep.subr.mxu0 0.0
  %365 = vmatpush1.msra.mxu0 0.0
  %366 = vmatprep.subr.mxu0 0.0
  %367 = vmatpush1.msra.mxu0 0.0
  %368 = vmatprep.subr.mxu0 0.0
  %369 = vmatpush1.msra.mxu0 0.0
  %370 = vmatprep.subr.mxu0 0.0
  %371 = vmatpush1.msra.mxu0 0.0
  %372 = vmatprep.subr.mxu0 0.0
  %373 = vmatpush1.msra.mxu0 0.0
  %374 = vmatprep.subr.mxu0 0.0
  %375 = vmatpush1.msra.mxu0 0.0
  %376 = vmatprep.subr.mxu0 0.0
  %377 = vmatpush1.msra.mxu0 0.0
  %378 = vmatprep.subr.mxu0 0.0
  %379 = vmatpush1.msra.mxu0 0.0
  %380 = vmatprep.subr.mxu0 0.0
  %381 = vmatpush1.msra.mxu0 0.0
  %382 = vmatprep.subr.mxu0 0.0
  %383 = vmatpush1.msra.mxu0 %v345
  %384 = vmatprep.subr.mxu0 0.0
  %385 = vmatpush2.msra.mxu0 0.0
  %386 = vmatprep.subr.mxu0 0.0
  %387 = vmatpush2.msra.mxu0 0.0
  %388 = vmatprep.subr.mxu0 0.0
  %389 = vmatpush2.msra.mxu0 0.0
  %390 = vmatprep.subr.mxu0 0.0
  %391 = vmatpush2.msra.mxu0 0.0
  %392 = vmatprep.subr.mxu0 0.0
  %393 = vmatpush2.msra.mxu0 0.0
  %394 = vmatprep.subr.mxu0 0.0
  %395 = vmatpush2.msra.mxu0 0.0
  %396 = vmatprep.subr.mxu0 0.0
  %397 = vmatpush2.msra.mxu0 0.0
  %398 = vmatprep.subr.mxu0 0.0
  %399 = vmatpush2.msra.mxu0 0.0
  %400 = vmatprep.subr.mxu0 0.0
  %401 = vmatpush2.msra.mxu0 0.0
  %402 = vmatprep.subr.mxu0 0.0
  %403 = vmatpush2.msra.mxu0 0.0
  %404 = vmatprep.subr.mxu0 0.0
  %405 = vmatpush2.msra.mxu0 0.0
  %406 = vmatprep.subr.mxu0 0.0
  %407 = vmatpush2.msra.mxu0 0.0
  %408 = vmatprep.subr.mxu0 0.0
  %409 = vmatpush2.msra.mxu0 0.0
  %410 = vmatprep.subr.mxu0 0.0
  %411 = vmatpush2.msra.mxu0 0.0
  %412 = vmatprep.subr.mxu0 0.0
  %413 = vmatpush2.msra.mxu0 0.0
  %414 = vmatprep.subr.mxu0 0.0
  %415 = vmatpush2.msra.mxu0 0.0
  %416 = vmatprep.mubr.f32.mxu0 0.0
  %417 = vmatmul.mubr.f32.gmra.mxu0 %v347
  %v418 = vpop.f32.mrf.mxu0
  %v419 = vadd.f32 0.0, %v418
  %v420 = vpop.f32.mrf.mxu0
  %421 = vmatprep.mubr.f32.mxu0 0.0
  %422 = vmatmul.mubr.f32.gmra.mxu0 %v350
  %v423 = vpop.f32.mrf.mxu0
  %v424 = vadd.f32 0.0, %v423
  %v425 = vpop.f32.mrf.mxu0
  %426 = vdwg.mxu0
  %v427 = vld [vmem:[%s10] sm:$0xff]
  %428 = vmatprep.subr.mxu0 0.0
  %429 = vmatpush1.msra.mxu0 0.0
  %430 = vmatprep.subr.mxu0 0.0
  %431 = vmatpush1.msra.mxu0 0.0
  %432 = vmatprep.subr.mxu0 0.0
  %433 = vmatpush1.msra.mxu0 0.0
  %434 = vmatprep.subr.mxu0 0.0
  %435 = vmatpush1.msra.mxu0 0.0
  %436 = vmatprep.subr.mxu0 0.0
  %437 = vmatpush1.msra.mxu0 0.0
  %438 = vmatprep.subr.mxu0 0.0
  %439 = vmatpush1.msra.mxu0 0.0
  %440 = vmatprep.subr.mxu0 0.0
  %441 = vmatpush1.msra.mxu0 0.0
  %442 = vmatprep.subr.mxu0 0.0
  %443 = vmatpush1.msra.mxu0 0.0
  %444 = vmatprep.subr.mxu0 0.0
  %445 = vmatpush1.msra.mxu0 0.0
  %446 = vmatprep.subr.mxu0 0.0
  %447 = vmatpush1.msra.mxu0 0.0
  %448 = vmatprep.subr.mxu0 0.0
  %449 = vmatpush1.msra.mxu0 0.0
  %450 = vmatprep.subr.mxu0 0.0
  %451 = vmatpush1.msra.mxu0 0.0
  %452 = vmatprep.subr.mxu0 0.0
  %453 = vmatpush1.msra.mxu0 0.0
  %454 = vmatprep.subr.mxu0 0.0
  %455 = vmatpush1.msra.mxu0 0.0
  %456 = vmatprep.subr.mxu0 0.0
  %457 = vmatpush1.msra.mxu0 0.0
  %458 = vmatprep.subr.mxu0 0.0
  %459 = vmatpush1.msra.mxu0 %v427
  %460 = vmatprep.subr.mxu0 0.0
  %461 = vmatpush2.msra.mxu0 0.0
  %462 = vmatprep.subr.mxu0 0.0
  %463 = vmatpush2.msra.mxu0 0.0
  %464 = vmatprep.subr.mxu0 0.0
  %465 = vmatpush2.msra.mxu0 0.0
  %466 = vmatprep.subr.mxu0 0.0
  %467 = vmatpush2.msra.mxu0 0.0
  %468 = vmatprep.subr.mxu0 0.0
  %469 = vmatpush2.msra.mxu0 0.0
  %470 = vmatprep.subr.mxu0 0.0
  %471 = vmatpush2.msra.mxu0 0.0
  %472 = vmatprep.subr.mxu0 0.0
  %473 = vmatpush2.msra.mxu0 0.0
  %474 = vmatprep.subr.mxu0 0.0
  %475 = vmatpush2.msra.mxu0 0.0
  %476 = vmatprep.subr.mxu0 0.0
  %477 = vmatpush2.msra.mxu0 0.0
  %478 = vmatprep.subr.mxu0 0.0
  %479 = vmatpush2.msra.mxu0 0.0
  %480 = vmatprep.subr.mxu0 0.0
  %481 = vmatpush2.msra.mxu0 0.0
  %482 = vmatprep.subr.mxu0 0.0
  %483 = vmatpush2.msra.mxu0 0.0
  %484 = vmatprep.subr.mxu0 0.0
  %485 = vmatpush2.msra.mxu0 0.0
  %486 = vmatprep.subr.mxu0 0.0
  %487 = vmatpush2.msra.mxu0 0.0
  %488 = vmatprep.subr.mxu0 0.0
  %489 = vmatpush2.msra.mxu0 0.0
  %490 = vmatprep.subr.mxu0 0.0
  %491 = vmatpush2.msra.mxu0 0.0
  %492 = vmatprep.mubr.f32.mxu0 0.0
  %493 = vmatmul.mubr.f32.gmra.mxu0 %v347
  %v494 = vpop.f32.mrf.mxu0
  %v495 = vadd.f32 0.0, %v494
  %v496 = vpop.f32.mrf.mxu0
  %497 = vmatprep.mubr.f32.mxu0 0.0
  %498 = vmatmul.mubr.f32.gmra.mxu0 %v350
  %v499 = vpop.f32.mrf.mxu0
  %v500 = vadd.f32 0.0, %v499
  %v501 = vpop.f32.mrf.mxu0
  %502 = vdwg.mxu0
  %v503 = vld [vmem:[%s6] sm:$0xff]
  %v504 = vld [vmem:[%s6 + $0x8] sm:$0xff]
  %v505 = vld [vmem:[%s6 + $0x10] sm:$0xff]
  %v506 = vld [vmem:[%s7] sm:$0xff]
  %v507 = vld [vmem:[%s7 + $0x8] sm:$0xff]
  %v508 = vld [vmem:[%s7 + $0x10] sm:$0xff]
  %v510 = vsel %vm94, %v506, 0
  %v513 = vsel %vm94, %v507, 0
  %v516 = vsel %vm94, %v508, 0
  %518 = vmatprep.subr.mxu0 0.0
  %519 = vmatpush1.msra.mxu0 0.0
  %520 = vmatprep.subr.mxu0 0.0
  %521 = vmatpush1.msra.mxu0 0.0
  %522 = vmatprep.subr.mxu0 0.0
  %523 = vmatpush1.msra.mxu0 0.0
  %524 = vmatprep.subr.mxu0 0.0
  %525 = vmatpush1.msra.mxu0 0.0
  %526 = vmatprep.subr.mxu0 0.0
  %527 = vmatpush1.msra.mxu0 0.0
  %528 = vmatprep.subr.mxu0 0.0
  %529 = vmatpush1.msra.mxu0 0.0
  %530 = vmatprep.subr.mxu0 0.0
  %531 = vmatpush1.msra.mxu0 0.0
  %532 = vmatprep.subr.mxu0 0.0
  %533 = vmatpush1.msra.mxu0 0.0
  %534 = vmatprep.subr.mxu0 0.0
  %535 = vmatpush1.msra.mxu0 0.0
  %536 = vmatprep.subr.mxu0 0.0
  %537 = vmatpush1.msra.mxu0 0.0
  %538 = vmatprep.subr.mxu0 0.0
  %539 = vmatpush1.msra.mxu0 0.0
  %540 = vmatprep.subr.mxu0 0.0
  %541 = vmatpush1.msra.mxu0 0.0
  %542 = vmatprep.subr.mxu0 0.0
  %543 = vmatpush1.msra.mxu0 0.0
  %544 = vmatprep.subr.mxu0 0.0
  %545 = vmatpush1.msra.mxu0 0.0
  %546 = vmatprep.subr.mxu0 0.0
  %547 = vmatpush1.msra.mxu0 %v500
  %548 = vmatprep.subr.mxu0 0.0
  %549 = vmatpush1.msra.mxu0 %v495
  %550 = vmatprep.subr.mxu0 0.0
  %551 = vmatpush2.msra.mxu0 0.0
  %552 = vmatprep.subr.mxu0 0.0
  %553 = vmatpush2.msra.mxu0 0.0
  %554 = vmatprep.subr.mxu0 0.0
  %555 = vmatpush2.msra.mxu0 0.0
  %556 = vmatprep.subr.mxu0 0.0
  %557 = vmatpush2.msra.mxu0 0.0
  %558 = vmatprep.subr.mxu0 0.0
  %559 = vmatpush2.msra.mxu0 0.0
  %560 = vmatprep.subr.mxu0 0.0
  %561 = vmatpush2.msra.mxu0 0.0
  %562 = vmatprep.subr.mxu0 0.0
  %563 = vmatpush2.msra.mxu0 0.0
  %564 = vmatprep.subr.mxu0 0.0
  %565 = vmatpush2.msra.mxu0 0.0
  %566 = vmatprep.subr.mxu0 0.0
  %567 = vmatpush2.msra.mxu0 0.0
  %568 = vmatprep.subr.mxu0 0.0
  %569 = vmatpush2.msra.mxu0 0.0
  %570 = vmatprep.subr.mxu0 0.0
  %571 = vmatpush2.msra.mxu0 0.0
  %572 = vmatprep.subr.mxu0 0.0
  %573 = vmatpush2.msra.mxu0 0.0
  %574 = vmatprep.subr.mxu0 0.0
  %575 = vmatpush2.msra.mxu0 0.0
  %576 = vmatprep.subr.mxu0 0.0
  %577 = vmatpush2.msra.mxu0 0.0
  %578 = vmatprep.subr.mxu0 0.0
  %579 = vmatpush2.msra.mxu0 0.0
  %580 = vmatprep.subr.mxu0 0.0
  %581 = vmatpush2.msra.mxu0 0.0
  %582 = vmatprep.mubr.f32.mxu0 0.0
  %583 = vmatmul.mubr.f32.gmra.mxu0 %v510
  %v584 = vpop.f32.mrf.mxu0
  %v585 = vadd.f32 0.0, %v584
  %v586 = vpop.f32.mrf.mxu0
  %587 = vmatprep.mubr.f32.mxu0 0.0
  %588 = vmatmul.mubr.f32.gmra.mxu0 %v513
  %v589 = vpop.f32.mrf.mxu0
  %v590 = vadd.f32 0.0, %v589
  %v591 = vpop.f32.mrf.mxu0
  %592 = vmatprep.mubr.f32.mxu0 0.0
  %593 = vmatmul.mubr.f32.gmra.mxu0 %v516
  %v594 = vpop.f32.mrf.mxu0
  %v595 = vadd.f32 0.0, %v594
  %v596 = vpop.f32.mrf.mxu0
  %597 = vdwg.mxu0
  %v599 = vsel %vm94, %v503, 0
  %v602 = vsel %vm94, %v504, 0
  %v605 = vsel %vm94, %v505, 0
  %607 = vmatprep.subr.mxu0 0.0
  %608 = vmatpush1.msra.mxu0 0.0
  %609 = vmatprep.subr.mxu0 0.0
  %610 = vmatpush1.msra.mxu0 0.0
  %611 = vmatprep.subr.mxu0 0.0
  %612 = vmatpush1.msra.mxu0 0.0
  %613 = vmatprep.subr.mxu0 0.0
  %614 = vmatpush1.msra.mxu0 0.0
  %615 = vmatprep.subr.mxu0 0.0
  %616 = vmatpush1.msra.mxu0 0.0
  %617 = vmatprep.subr.mxu0 0.0
  %618 = vmatpush1.msra.mxu0 0.0
  %619 = vmatprep.subr.mxu0 0.0
  %620 = vmatpush1.msra.mxu0 0.0
  %621 = vmatprep.subr.mxu0 0.0
  %622 = vmatpush1.msra.mxu0 0.0
  %623 = vmatprep.subr.mxu0 0.0
  %624 = vmatpush1.msra.mxu0 0.0
  %625 = vmatprep.subr.mxu0 0.0
  %626 = vmatpush1.msra.mxu0 0.0
  %627 = vmatprep.subr.mxu0 0.0
  %628 = vmatpush1.msra.mxu0 0.0
  %629 = vmatprep.subr.mxu0 0.0
  %630 = vmatpush1.msra.mxu0 0.0
  %631 = vmatprep.subr.mxu0 0.0
  %632 = vmatpush1.msra.mxu0 0.0
  %633 = vmatprep.subr.mxu0 0.0
  %634 = vmatpush1.msra.mxu0 0.0
  %635 = vmatprep.subr.mxu0 0.0
  %636 = vmatpush1.msra.mxu0 %v424
  %637 = vmatprep.subr.mxu0 0.0
  %638 = vmatpush1.msra.mxu0 %v419
  %639 = vmatprep.subr.mxu0 0.0
  %640 = vmatpush2.msra.mxu0 0.0
  %641 = vmatprep.subr.mxu0 0.0
  %642 = vmatpush2.msra.mxu0 0.0
  %643 = vmatprep.subr.mxu0 0.0
  %644 = vmatpush2.msra.mxu0 0.0
  %645 = vmatprep.subr.mxu0 0.0
  %646 = vmatpush2.msra.mxu0 0.0
  %647 = vmatprep.subr.mxu0 0.0
  %648 = vmatpush2.msra.mxu0 0.0
  %649 = vmatprep.subr.mxu0 0.0
  %650 = vmatpush2.msra.mxu0 0.0
  %651 = vmatprep.subr.mxu0 0.0
  %652 = vmatpush2.msra.mxu0 0.0
  %653 = vmatprep.subr.mxu0 0.0
  %654 = vmatpush2.msra.mxu0 0.0
  %655 = vmatprep.subr.mxu0 0.0
  %656 = vmatpush2.msra.mxu0 0.0
  %657 = vmatprep.subr.mxu0 0.0
  %658 = vmatpush2.msra.mxu0 0.0
  %659 = vmatprep.subr.mxu0 0.0
  %660 = vmatpush2.msra.mxu0 0.0
  %661 = vmatprep.subr.mxu0 0.0
  %662 = vmatpush2.msra.mxu0 0.0
  %663 = vmatprep.subr.mxu0 0.0
  %664 = vmatpush2.msra.mxu0 0.0
  %665 = vmatprep.subr.mxu0 0.0
  %666 = vmatpush2.msra.mxu0 0.0
  %667 = vmatprep.subr.mxu0 0.0
  %668 = vmatpush2.msra.mxu0 0.0
  %669 = vmatprep.subr.mxu0 0.0
  %670 = vmatpush2.msra.mxu0 0.0
  %671 = vmatprep.mubr.f32.mxu0 0.0
  %672 = vmatmul.mubr.f32.gmra.mxu0 %v599
  %v673 = vpop.f32.mrf.mxu0
  %v674 = vadd.f32 %v585, %v673
  %v675 = vpop.f32.mrf.mxu0
  %676 = vmatprep.mubr.f32.mxu0 0.0
  %677 = vmatmul.mubr.f32.gmra.mxu0 %v602
  %v678 = vpop.f32.mrf.mxu0
  %v679 = vadd.f32 %v590, %v678
  %v680 = vpop.f32.mrf.mxu0
  %681 = vmatprep.mubr.f32.mxu0 0.0
  %682 = vmatmul.mubr.f32.gmra.mxu0 %v605
  %v683 = vpop.f32.mrf.mxu0
  %v684 = vadd.f32 %v595, %v683
  %v685 = vpop.f32.mrf.mxu0
  %686 = vdwg.mxu0
  %v687 = vld [vmem:[%s8] sm:$0xff]
  %v688 = vld [vmem:[%s8 + $0x8] sm:$0xff]
  %v689 = vld [vmem:[%s8 + $0x10] sm:$0xff]
  %v690 = vld [vmem:[%s11] sm:$0xff]
  %v692 = vsel %vm179, %v687, 0
  %v695 = vsel %vm179, %v688, 0
  %v698 = vsel %vm179, %v689, 0
  %700 = vmatprep.subr.mxu0 0.0
  %701 = vmatpush1.msra.mxu0 0.0
  %702 = vmatprep.subr.mxu0 0.0
  %703 = vmatpush1.msra.mxu0 0.0
  %704 = vmatprep.subr.mxu0 0.0
  %705 = vmatpush1.msra.mxu0 0.0
  %706 = vmatprep.subr.mxu0 0.0
  %707 = vmatpush1.msra.mxu0 0.0
  %708 = vmatprep.subr.mxu0 0.0
  %709 = vmatpush1.msra.mxu0 0.0
  %710 = vmatprep.subr.mxu0 0.0
  %711 = vmatpush1.msra.mxu0 0.0
  %712 = vmatprep.subr.mxu0 0.0
  %713 = vmatpush1.msra.mxu0 0.0
  %714 = vmatprep.subr.mxu0 0.0
  %715 = vmatpush1.msra.mxu0 0.0
  %716 = vmatprep.subr.mxu0 0.0
  %717 = vmatpush1.msra.mxu0 0.0
  %718 = vmatprep.subr.mxu0 0.0
  %719 = vmatpush1.msra.mxu0 0.0
  %720 = vmatprep.subr.mxu0 0.0
  %721 = vmatpush1.msra.mxu0 0.0
  %722 = vmatprep.subr.mxu0 0.0
  %723 = vmatpush1.msra.mxu0 0.0
  %724 = vmatprep.subr.mxu0 0.0
  %725 = vmatpush1.msra.mxu0 0.0
  %726 = vmatprep.subr.mxu0 0.0
  %727 = vmatpush1.msra.mxu0 0.0
  %728 = vmatprep.subr.mxu0 0.0
  %729 = vmatpush1.msra.mxu0 0.0
  %730 = vmatprep.subr.mxu0 0.0
  %731 = vmatpush1.msra.mxu0 %v690
  %732 = vmatprep.subr.mxu0 0.0
  %733 = vmatpush2.msra.mxu0 0.0
  %734 = vmatprep.subr.mxu0 0.0
  %735 = vmatpush2.msra.mxu0 0.0
  %736 = vmatprep.subr.mxu0 0.0
  %737 = vmatpush2.msra.mxu0 0.0
  %738 = vmatprep.subr.mxu0 0.0
  %739 = vmatpush2.msra.mxu0 0.0
  %740 = vmatprep.subr.mxu0 0.0
  %741 = vmatpush2.msra.mxu0 0.0
  %742 = vmatprep.subr.mxu0 0.0
  %743 = vmatpush2.msra.mxu0 0.0
  %744 = vmatprep.subr.mxu0 0.0
  %745 = vmatpush2.msra.mxu0 0.0
  %746 = vmatprep.subr.mxu0 0.0
  %747 = vmatpush2.msra.mxu0 0.0
  %748 = vmatprep.subr.mxu0 0.0
  %749 = vmatpush2.msra.mxu0 0.0
  %750 = vmatprep.subr.mxu0 0.0
  %751 = vmatpush2.msra.mxu0 0.0
  %752 = vmatprep.subr.mxu0 0.0
  %753 = vmatpush2.msra.mxu0 0.0
  %754 = vmatprep.subr.mxu0 0.0
  %755 = vmatpush2.msra.mxu0 0.0
  %756 = vmatprep.subr.mxu0 0.0
  %757 = vmatpush2.msra.mxu0 0.0
  %758 = vmatprep.subr.mxu0 0.0
  %759 = vmatpush2.msra.mxu0 0.0
  %760 = vmatprep.subr.mxu0 0.0
  %761 = vmatpush2.msra.mxu0 0.0
  %762 = vmatprep.subr.mxu0 0.0
  %763 = vmatpush2.msra.mxu0 0.0
  %764 = vmatprep.mubr.f32.mxu0 0.0
  %765 = vmatmul.mubr.f32.gmra.mxu0 %v692
  %v766 = vpop.f32.mrf.mxu0
  %v767 = vadd.f32 0.0, %v766
  %v768 = vpop.f32.mrf.mxu0
  %769 = vmatprep.mubr.f32.mxu0 0.0
  %770 = vmatmul.mubr.f32.gmra.mxu0 %v695
  %v771 = vpop.f32.mrf.mxu0
  %v772 = vadd.f32 0.0, %v771
  %v773 = vpop.f32.mrf.mxu0
  %774 = vmatprep.mubr.f32.mxu0 0.0
  %775 = vmatmul.mubr.f32.gmra.mxu0 %v698
  %v776 = vpop.f32.mrf.mxu0
  %v777 = vadd.f32 0.0, %v776
  %v778 = vpop.f32.mrf.mxu0
  %779 = vdwg.mxu0
  %v780 = vadd.f32 %v674, %v767
  %v781 = vadd.f32 %v679, %v772
  %v782 = vadd.f32 %v684, %v777
  %v783 = vld [vmem:[%s12] sm:$0x1]
  %v785 = vlaneseq
  %v786 = vshrl.u32 %v785, 7
  %v787 = vsub.s32 0, %v786
  %v788 = vrot.slane %v783, %v787
  %v790 = vadd.f32 %v780, %v788
  %v791 = vadd.f32 %v781, %v788
  %v792 = vadd.f32 %v782, %v788
  %793 = vst [vmem:[#allocation2] sm:$0xff] %v790
  %794 = vst [vmem:[#allocation2 + $0x10] sm:$0xff] %v791
  %795 = vst [vmem:[#allocation2 + $0x20] sm:$0xff] %v792
  %v796 = vld [vmem:[%s14] sm:$0x1]
  %v798 = vlaneseq
  %v799 = vshrl.u32 %v798, 7
  %v800 = vsub.s32 0, %v799
  %v801 = vrot.slane %v796, %v800
  %803 = vst [vmem:[#allocation2 + $0x8] sm:$0xff] %v801
  %804 = vst [vmem:[#allocation2 + $0x18] sm:$0xff] %v801
  %805 = vst [vmem:[#allocation2 + $0x28] sm:$0xff] %v801
  %v806 = vlaneseq
  %v807 = vand.u32 %v806, 127
  %v808 = vadd.s32 %v807, 128
  %vm809 = vcmp.ge.s32.totalorder %v807, 64
  %vm810 = vcmp.ge.s32.totalorder %v808, 64
  %vm811 = vcmp.lt.s32.totalorder %v807, 96
  %vm812 = vcmp.lt.s32.totalorder %v808, 96
  %vm813 = vmand %vm809, %vm811
  %vm814 = vmand %vm810, %vm812
  %vm815 = vcmp.ge.s32.totalorder %v807, 192
  %vm816 = vcmp.ge.s32.totalorder %v808, 192
  %vm817 = vcmp.lt.s32.totalorder %v807, 224
  %vm818 = vcmp.lt.s32.totalorder %v808, 224
  %vm819 = vmand %vm815, %vm817
  %vm820 = vmand %vm816, %vm818
  %vm821 = vmor %vm813, %vm819
  %vm822 = vmor %vm814, %vm820
  %v823 = vld [vmem:[#allocation2] ss:$8 sm:$0x3]
  %v824 = vld [vmem:[%s13] sm:$0xff]
  %v825 = vld [vmem:[%s13 + $0x8] sm:$0xff]
  %v826 = vld [vmem:[%s13 + $0x10] sm:$0xff]
  %v827 = vld [vmem:[%s13 + $0x18] sm:$0xff]
  %v828 = vld [vmem:[%s13 + $0x20] sm:$0xff]
  %v829 = vld [vmem:[%s13 + $0x28] sm:$0xff]
  %v830 = vld [vmem:[%s13 + $0x30] sm:$0xff]
  %v831 = vld [vmem:[%s13 + $0x38] sm:$0xff]
  %v832 = vld [vmem:[%s13 + $0x40] sm:$0xff]
  %v833 = vld [vmem:[%s13 + $0x48] sm:$0xff]
  %v834 = vld [vmem:[%s13 + $0x50] sm:$0xff]
  %v835 = vld [vmem:[%s13 + $0x58] sm:$0xff]
  %v836 = vld [vmem:[%s13 + $0x60] sm:$0xff]
  %v837 = vld [vmem:[%s13 + $0x68] sm:$0xff]
  %v838 = vld [vmem:[%s13 + $0x70] sm:$0xff]
  %v839 = vld [vmem:[%s13 + $0x78] sm:$0xff]
  %vm840 = vcmask 523264
  %v842 = vsel %vm840, 0.0, 0
  %844 = vmatprep.subr.mxu0 0.0
  %845 = vmatpush1.msra.mxu0 0.0
  %846 = vmatprep.subr.mxu0 0.0
  %847 = vmatpush1.msra.mxu0 0.0
  %848 = vmatprep.subr.mxu0 0.0
  %849 = vmatpush1.msra.mxu0 0.0
  %850 = vmatprep.subr.mxu0 0.0
  %851 = vmatpush1.msra.mxu0 0.0
  %852 = vmatprep.subr.mxu0 0.0
  %853 = vmatpush1.msra.mxu0 0.0
  %854 = vmatprep.subr.mxu0 0.0
  %855 = vmatpush1.msra.mxu0 0.0
  %856 = vmatprep.subr.mxu0 0.0
  %857 = vmatpush1.msra.mxu0 0.0
  %858 = vmatprep.subr.mxu0 0.0
  %859 = vmatpush1.msra.mxu0 0.0
  %860 = vmatprep.subr.mxu0 %v839
  %861 = vmatpush1.msra.mxu0 %v838
  %862 = vmatprep.subr.mxu0 %v837
  %863 = vmatpush1.msra.mxu0 %v836
  %864 = vmatprep.subr.mxu0 %v835
  %865 = vmatpush1.msra.mxu0 %v834
  %866 = vmatprep.subr.mxu0 %v833
  %867 = vmatpush1.msra.mxu0 %v832
  %868 = vmatprep.subr.mxu0 %v831
  %869 = vmatpush1.msra.mxu0 %v830
  %870 = vmatprep.subr.mxu0 %v829
  %871 = vmatpush1.msra.mxu0 %v828
  %872 = vmatprep.subr.mxu0 %v827
  %873 = vmatpush1.msra.mxu0 %v826
  %874 = vmatprep.subr.mxu0 %v825
  %875 = vmatpush1.msra.mxu0 %v824
  %876 = vmatprep.subr.mxu0 0.0
  %877 = vmatpush2.msra.mxu0 0.0
  %878 = vmatprep.subr.mxu0 0.0
  %879 = vmatpush2.msra.mxu0 0.0
  %880 = vmatprep.subr.mxu0 0.0
  %881 = vmatpush2.msra.mxu0 0.0
  %882 = vmatprep.subr.mxu0 0.0
  %883 = vmatpush2.msra.mxu0 0.0
  %884 = vmatprep.subr.mxu0 0.0
  %885 = vmatpush2.msra.mxu0 0.0
  %886 = vmatprep.subr.mxu0 0.0
  %887 = vmatpush2.msra.mxu0 0.0
  %888 = vmatprep.subr.mxu0 0.0
  %889 = vmatpush2.msra.mxu0 0.0
  %890 = vmatprep.subr.mxu0 0.0
  %891 = vmatpush2.msra.mxu0 0.0
  %892 = vmatprep.subr.mxu0 0.0
  %893 = vmatpush2.msra.mxu0 0.0
  %894 = vmatprep.subr.mxu0 0.0
  %895 = vmatpush2.msra.mxu0 0.0
  %896 = vmatprep.subr.mxu0 0.0
  %897 = vmatpush2.msra.mxu0 0.0
  %898 = vmatprep.subr.mxu0 0.0
  %899 = vmatpush2.msra.mxu0 0.0
  %900 = vmatprep.subr.mxu0 0.0
  %901 = vmatpush2.msra.mxu0 0.0
  %902 = vmatprep.subr.mxu0 0.0
  %903 = vmatpush2.msra.mxu0 0.0
  %904 = vmatprep.subr.mxu0 0.0
  %905 = vmatpush2.msra.mxu0 0.0
  %906 = vmatprep.subr.mxu0 0.0
  %907 = vmatpush2.msra.mxu0 0.0
  %908 = vmatprep.mubr.f32.mxu0 0.0
  %909 = vmatmul.mubr.f32.gmra.mxu0 %v842
  %v910 = vpop.f32.mrf.mxu0
  %v911 = vadd.f32 0.0, %v910
  %v912 = vpop.f32.mrf.mxu0
  %v913 = vadd.f32 0.0, %v912
  %914 = vdwg.mxu0
  %v917 = vcombine.low %v911, %v913
  %v919 = vunpack.c.l.s4 1966171168
  %v920 = vunpack.c.0.s8 %v919
  %v921 = vlaneseq
  %v922 = vshrl.u32 %v921, 7
  %v923 = vsub.s32 %v920, %v922
  %v924 = vrot.slane %v917, %v923
  %v926 = vunpack.c.l.s4 1966171168
  %v927 = vunpack.c.0.s8 %v926
  %v928 = vlaneseq
  %v929 = vshrl.u32 %v928, 7
  %v930 = vsub.s32 %v927, %v929
  %v931 = vrot.slane %v924, %v930
  %v933 = vadd.f32 %v823, %v931
  %v934 = vxor.u32 %v933, 2147483648
  %v935 = vmul.f32 %v934, 1.442695
  %v936 = vpow.pop %v935
  %v937 = vadd.f32 %v936, 1.0
  %v938 = vrcp.pop %v937
  %v939 = vmul.f32 1.0, %v938
  %v940 = vtanh.pop %v933
  %v942 = vlaneseq
  %v943 = vshrl.u32 %v942, 7
  %v944 = vsub.s32 0, %v943
  %v945 = vrot.slane %v940, %v944
  %v948 = vlaneseq
  %v949 = vshrl.u32 %v948, 7
  %v950 = vsub.s32 0, %v949
  %v951 = vrot.slane %v939, %v950
  %v953 = vsel %vm821, %v945, %v951
  %v954 = vmul.f32 %v953, 0.0
  %956 = vrot.lane.b32.xlu0 %v953, 64
  %v957 = vpop.permute.xlu0 %956
  %v959 = vmul.f32 %v953, %v957
  %961 = vrot.lane.b32.xlu0 %v959, 32
  %v962 = vpop.permute.xlu0 %961
  %v964 = vadd.f32 %v954, %v962
  %v965 = vtanh.pop %v964
  %967 = vrot.lane.b32.xlu0 %v965, 64
  %v968 = vpop.permute.xlu0 %967
  %v970 = vmul.f32 %v953, %v968
  %vm971 = vcmask 253952
  %972 = vst.msk [vmem:[#allocation3] sm:$0x1] %vm971, 0.0
  %974 = vrot.lane.b32.xlu0 %v970, 32
  %v975 = vpop.permute.xlu0 %974
  %vm977 = vcmask 261120
  %v978 = vsel %vm977, %v975, 0.0
  %s979 = scalar_lea.vmem [#allocation2], 1
  %v980 = vld [vmem:[%s979] ss:$8 sm:$0x3]
  %v981 = vld [vmem:[%s13] sm:$0xff]
  %v982 = vld [vmem:[%s13 + $0x8] sm:$0xff]
  %v983 = vld [vmem:[%s13 + $0x10] sm:$0xff]
  %v984 = vld [vmem:[%s13 + $0x18] sm:$0xff]
  %v985 = vld [vmem:[%s13 + $0x20] sm:$0xff]
  %v986 = vld [vmem:[%s13 + $0x28] sm:$0xff]
  %v987 = vld [vmem:[%s13 + $0x30] sm:$0xff]
  %v988 = vld [vmem:[%s13 + $0x38] sm:$0xff]
  %v989 = vld [vmem:[%s13 + $0x40] sm:$0xff]
  %v990 = vld [vmem:[%s13 + $0x48] sm:$0xff]
  %v991 = vld [vmem:[%s13 + $0x50] sm:$0xff]
  %v992 = vld [vmem:[%s13 + $0x58] sm:$0xff]
  %v993 = vld [vmem:[%s13 + $0x60] sm:$0xff]
  %v994 = vld [vmem:[%s13 + $0x68] sm:$0xff]
  %v995 = vld [vmem:[%s13 + $0x70] sm:$0xff]
  %v996 = vld [vmem:[%s13 + $0x78] sm:$0xff]
  %v998 = vsel %vm840, %v978, 0
  %1000 = vmatprep.subr.mxu0 0.0
  %1001 = vmatpush1.msra.mxu0 0.0
  %1002 = vmatprep.subr.mxu0 0.0
  %1003 = vmatpush1.msra.mxu0 0.0
  %1004 = vmatprep.subr.mxu0 0.0
  %1005 = vmatpush1.msra.mxu0 0.0
  %1006 = vmatprep.subr.mxu0 0.0
  %1007 = vmatpush1.msra.mxu0 0.0
  %1008 = vmatprep.subr.mxu0 0.0
  %1009 = vmatpush1.msra.mxu0 0.0
  %1010 = vmatprep.subr.mxu0 0.0
  %1011 = vmatpush1.msra.mxu0 0.0
  %1012 = vmatprep.subr.mxu0 0.0
  %1013 = vmatpush1.msra.mxu0 0.0
  %1014 = vmatprep.subr.mxu0 0.0
  %1015 = vmatpush1.msra.mxu0 0.0
  %1016 = vmatprep.subr.mxu0 %v996
  %1017 = vmatpush1.msra.mxu0 %v995
  %1018 = vmatprep.subr.mxu0 %v994
  %1019 = vmatpush1.msra.mxu0 %v993
  %1020 = vmatprep.subr.mxu0 %v992
  %1021 = vmatpush1.msra.mxu0 %v991
  %1022 = vmatprep.subr.mxu0 %v990
  %1023 = vmatpush1.msra.mxu0 %v989
  %1024 = vmatprep.subr.mxu0 %v988
  %1025 = vmatpush1.msra.mxu0 %v987
  %1026 = vmatprep.subr.mxu0 %v986
  %1027 = vmatpush1.msra.mxu0 %v985
  %1028 = vmatprep.subr.mxu0 %v984
  %1029 = vmatpush1.msra.mxu0 %v983
  %1030 = vmatprep.subr.mxu0 %v982
  %1031 = vmatpush1.msra.mxu0 %v981
  %1032 = vmatprep.subr.mxu0 0.0
  %1033 = vmatpush2.msra.mxu0 0.0
  %1034 = vmatprep.subr.mxu0 0.0
  %1035 = vmatpush2.msra.mxu0 0.0
  %1036 = vmatprep.subr.mxu0 0.0
  %1037 = vmatpush2.msra.mxu0 0.0
  %1038 = vmatprep.subr.mxu0 0.0
  %1039 = vmatpush2.msra.mxu0 0.0
  %1040 = vmatprep.subr.mxu0 0.0
  %1041 = vmatpush2.msra.mxu0 0.0
  %1042 = vmatprep.subr.mxu0 0.0
  %1043 = vmatpush2.msra.mxu0 0.0
  %1044 = vmatprep.subr.mxu0 0.0
  %1045 = vmatpush2.msra.mxu0 0.0
  %1046 = vmatprep.subr.mxu0 0.0
  %1047 = vmatpush2.msra.mxu0 0.0
  %1048 = vmatprep.subr.mxu0 0.0
  %1049 = vmatpush2.msra.mxu0 0.0
  %1050 = vmatprep.subr.mxu0 0.0
  %1051 = vmatpush2.msra.mxu0 0.0
  %1052 = vmatprep.subr.mxu0 0.0
  %1053 = vmatpush2.msra.mxu0 0.0
  %1054 = vmatprep.subr.mxu0 0.0
  %1055 = vmatpush2.msra.mxu0 0.0
  %1056 = vmatprep.subr.mxu0 0.0
  %1057 = vmatpush2.msra.mxu0 0.0
  %1058 = vmatprep.subr.mxu0 0.0
  %1059 = vmatpush2.msra.mxu0 0.0
  %1060 = vmatprep.subr.mxu0 0.0
  %1061 = vmatpush2.msra.mxu0 0.0
  %1062 = vmatprep.subr.mxu0 0.0
  %1063 = vmatpush2.msra.mxu0 0.0
  %1064 = vmatprep.mubr.f32.mxu0 0.0
  %1065 = vmatmul.mubr.f32.gmra.mxu0 %v998
  %v1066 = vpop.f32.mrf.mxu0
  %v1067 = vadd.f32 0.0, %v1066
  %v1068 = vpop.f32.mrf.mxu0
  %v1069 = vadd.f32 0.0, %v1068
  %1070 = vdwg.mxu0
  %v1073 = vcombine.low %v1067, %v1069
  %v1075 = vunpack.c.l.s4 1966171168
  %v1076 = vunpack.c.0.s8 %v1075
  %v1077 = vlaneseq
  %v1078 = vshrl.u32 %v1077, 7
  %v1079 = vsub.s32 %v1076, %v1078
  %v1080 = vrot.slane %v1073, %v1079
  %v1082 = vunpack.c.l.s4 1966171168
  %v1083 = vunpack.c.0.s8 %v1082
  %v1084 = vlaneseq
  %v1085 = vshrl.u32 %v1084, 7
  %v1086 = vsub.s32 %v1083, %v1085
  %v1087 = vrot.slane %v1080, %v1086
  %v1089 = vadd.f32 %v980, %v1087
  %v1090 = vxor.u32 %v1089, 2147483648
  %v1091 = vmul.f32 %v1090, 1.442695
  %v1092 = vpow.pop %v1091
  %v1093 = vadd.f32 %v1092, 1.0
  %v1094 = vrcp.pop %v1093
  %v1095 = vmul.f32 1.0, %v1094
  %v1096 = vtanh.pop %v1089
  %v1098 = vlaneseq
  %v1099 = vshrl.u32 %v1098, 7
  %v1100 = vsub.s32 0, %v1099
  %v1101 = vrot.slane %v1096, %v1100
  %v1102 = vlaneseq
  %v1103 = vshrl.u32 %v1102, 7
  %v1104 = vsub.s32 1, %v1103
  %v1105 = vrot.slane %v1096, %v1104
  %v1109 = vlaneseq
  %v1110 = vshrl.u32 %v1109, 7
  %v1111 = vsub.s32 0, %v1110
  %v1112 = vrot.slane %v1095, %v1111
  %v1113 = vlaneseq
  %v1114 = vshrl.u32 %v1113, 7
  %v1115 = vsub.s32 1, %v1114
  %v1116 = vrot.slane %v1095, %v1115
  %v1119 = vsel %vm821, %v1101, %v1112
  %v1120 = vsel %vm822, %v1105, %v1116
  %v1121 = vmul.f32 %v1119, %v964
  %1123 = vrot.lane.b32.xlu0 %v1119, 64
  %v1124 = vpop.permute.xlu0 %1123
  %v1126 = vmul.f32 %v1119, %v1124
  %1128 = vrot.lane.b32.xlu0 %v1126, 32
  %v1129 = vpop.permute.xlu0 %1128
  %v1131 = vadd.f32 %v1121, %v1129
  %v1132 = vtanh.pop %v1131
  %1134 = vrot.lane.b32.xlu0 %v1132, 64
  %v1135 = vpop.permute.xlu0 %1134
  %v1137 = vmul.f32 %v1119, %v1135
  %v1138 = vmul.f32 %v1120, 0.0
  %1140 = vrot.lane.b32.xlu0 %v1120, 64
  %v1141 = vpop.permute.xlu0 %1140
  %v1143 = vmul.f32 %v1120, %v1141
  %1145 = vrot.lane.b32.xlu0 %v1143, 32
  %v1146 = vpop.permute.xlu0 %1145
  %v1148 = vadd.f32 %v1138, %v1146
  %v1149 = vtanh.pop %v1148
  %1151 = vrot.lane.b32.xlu0 %v1149, 64
  %v1152 = vpop.permute.xlu0 %1151
  %v1154 = vmul.f32 %v1120, %v1152
  %1156 = vrot.lane.b32.xlu0 %v1154, 32
  %v1157 = vpop.permute.xlu0 %1156
  %1159 = vst.msk [vmem:[#allocation3] sm:$0x1] %vm971, %v1157
  %1161 = vrot.lane.b32.xlu0 %v1137, 32
  %v1162 = vpop.permute.xlu0 %1161
  %1164 = vrot.lane.b32.xlu0 %v1154, 64
  %v1165 = vpop.permute.xlu0 %1164
  %v1167 = vsel %vm977, %v1162, %v1165
  %s1168 = scalar_lea.vmem [#allocation2], 2
  %v1169 = vld [vmem:[%s1168] ss:$8 sm:$0x3]
  %v1170 = vld [vmem:[%s13] sm:$0xff]
  %v1171 = vld [vmem:[%s13 + $0x8] sm:$0xff]
  %v1172 = vld [vmem:[%s13 + $0x10] sm:$0xff]
  %v1173 = vld [vmem:[%s13 + $0x18] sm:$0xff]
  %v1174 = vld [vmem:[%s13 + $0x20] sm:$0xff]
  %v1175 = vld [vmem:[%s13 + $0x28] sm:$0xff]
  %v1176 = vld [vmem:[%s13 + $0x30] sm:$0xff]
  %v1177 = vld [vmem:[%s13 + $0x38] sm:$0xff]
  %v1178 = vld [vmem:[%s13 + $0x40] sm:$0xff]
  %v1179 = vld [vmem:[%s13 + $0x48] sm:$0xff]
  %v1180 = vld [vmem:[%s13 + $0x50] sm:$0xff]
  %v1181 = vld [vmem:[%s13 + $0x58] sm:$0xff]
  %v1182 = vld [vmem:[%s13 + $0x60] sm:$0xff]
  %v1183 = vld [vmem:[%s13 + $0x68] sm:$0xff]
  %v1184 = vld [vmem:[%s13 + $0x70] sm:$0xff]
  %v1185 = vld [vmem:[%s13 + $0x78] sm:$0xff]
  %v1187 = vsel %vm840, %v1167, 0
  %1189 = vmatprep.subr.mxu0 0.0
  %1190 = vmatpush1.msra.mxu0 0.0
  %1191 = vmatprep.subr.mxu0 0.0
  %1192 = vmatpush1.msra.mxu0 0.0
  %1193 = vmatprep.subr.mxu0 0.0
  %1194 = vmatpush1.msra.mxu0 0.0
  %1195 = vmatprep.subr.mxu0 0.0
  %1196 = vmatpush1.msra.mxu0 0.0
  %1197 = vmatprep.subr.mxu0 0.0
  %1198 = vmatpush1.msra.mxu0 0.0
  %1199 = vmatprep.subr.mxu0 0.0
  %1200 = vmatpush1.msra.mxu0 0.0
  %1201 = vmatprep.subr.mxu0 0.0
  %1202 = vmatpush1.msra.mxu0 0.0
  %1203 = vmatprep.subr.mxu0 0.0
  %1204 = vmatpush1.msra.mxu0 0.0
  %1205 = vmatprep.subr.mxu0 %v1185
  %1206 = vmatpush1.msra.mxu0 %v1184
  %1207 = vmatprep.subr.mxu0 %v1183
  %1208 = vmatpush1.msra.mxu0 %v1182
  %1209 = vmatprep.subr.mxu0 %v1181
  %1210 = vmatpush1.msra.mxu0 %v1180
  %1211 = vmatprep.subr.mxu0 %v1179
  %1212 = vmatpush1.msra.mxu0 %v1178
  %1213 = vmatprep.subr.mxu0 %v1177
  %1214 = vmatpush1.msra.mxu0 %v1176
  %1215 = vmatprep.subr.mxu0 %v1175
  %1216 = vmatpush1.msra.mxu0 %v1174
  %1217 = vmatprep.subr.mxu0 %v1173
  %1218 = vmatpush1.msra.mxu0 %v1172
  %1219 = vmatprep.subr.mxu0 %v1171
  %1220 = vmatpush1.msra.mxu0 %v1170
  %1221 = vmatprep.subr.mxu0 0.0
  %1222 = vmatpush2.msra.mxu0 0.0
  %1223 = vmatprep.subr.mxu0 0.0
  %1224 = vmatpush2.msra.mxu0 0.0
  %1225 = vmatprep.subr.mxu0 0.0
  %1226 = vmatpush2.msra.mxu0 0.0
  %1227 = vmatprep.subr.mxu0 0.0
  %1228 = vmatpush2.msra.mxu0 0.0
  %1229 = vmatprep.subr.mxu0 0.0
  %1230 = vmatpush2.msra.mxu0 0.0
  %1231 = vmatprep.subr.mxu0 0.0
  %1232 = vmatpush2.msra.mxu0 0.0
  %1233 = vmatprep.subr.mxu0 0.0
  %1234 = vmatpush2.msra.mxu0 0.0
  %1235 = vmatprep.subr.mxu0 0.0
  %1236 = vmatpush2.msra.mxu0 0.0
  %1237 = vmatprep.subr.mxu0 0.0
  %1238 = vmatpush2.msra.mxu0 0.0
  %1239 = vmatprep.subr.mxu0 0.0
  %1240 = vmatpush2.msra.mxu0 0.0
  %1241 = vmatprep.subr.mxu0 0.0
  %1242 = vmatpush2.msra.mxu0 0.0
  %1243 = vmatprep.subr.mxu0 0.0
  %1244 = vmatpush2.msra.mxu0 0.0
  %1245 = vmatprep.subr.mxu0 0.0
  %1246 = vmatpush2.msra.mxu0 0.0
  %1247 = vmatprep.subr.mxu0 0.0
  %1248 = vmatpush2.msra.mxu0 0.0
  %1249 = vmatprep.subr.mxu0 0.0
  %1250 = vmatpush2.msra.mxu0 0.0
  %1251 = vmatprep.subr.mxu0 0.0
  %1252 = vmatpush2.msra.mxu0 0.0
  %1253 = vmatprep.mubr.f32.mxu0 0.0
  %1254 = vmatmul.mubr.f32.gmra.mxu0 %v1187
  %v1255 = vpop.f32.mrf.mxu0
  %v1256 = vadd.f32 0.0, %v1255
  %v1257 = vpop.f32.mrf.mxu0
  %v1258 = vadd.f32 0.0, %v1257
  %1259 = vdwg.mxu0
  %v1262 = vcombine.low %v1256, %v1258
  %v1264 = vunpack.c.l.s4 1966171168
  %v1265 = vunpack.c.0.s8 %v1264
  %v1266 = vlaneseq
  %v1267 = vshrl.u32 %v1266, 7
  %v1268 = vsub.s32 %v1265, %v1267
  %v1269 = vrot.slane %v1262, %v1268
  %v1271 = vunpack.c.l.s4 1966171168
  %v1272 = vunpack.c.0.s8 %v1271
  %v1273 = vlaneseq
  %v1274 = vshrl.u32 %v1273, 7
  %v1275 = vsub.s32 %v1272, %v1274
  %v1276 = vrot.slane %v1269, %v1275
  %v1278 = vadd.f32 %v1169, %v1276
  %v1279 = vxor.u32 %v1278, 2147483648
  %v1280 = vmul.f32 %v1279, 1.442695
  %v1281 = vpow.pop %v1280
  %v1282 = vadd.f32 %v1281, 1.0
  %v1283 = vrcp.pop %v1282
  %v1284 = vmul.f32 1.0, %v1283
  %v1285 = vtanh.pop %v1278
  %v1287 = vlaneseq
  %v1288 = vshrl.u32 %v1287, 7
  %v1289 = vsub.s32 0, %v1288
  %v1290 = vrot.slane %v1285, %v1289
  %v1291 = vlaneseq
  %v1292 = vshrl.u32 %v1291, 7
  %v1293 = vsub.s32 1, %v1292
  %v1294 = vrot.slane %v1285, %v1293
  %v1298 = vlaneseq
  %v1299 = vshrl.u32 %v1298, 7
  %v1300 = vsub.s32 0, %v1299
  %v1301 = vrot.slane %v1284, %v1300
  %v1302 = vlaneseq
  %v1303 = vshrl.u32 %v1302, 7
  %v1304 = vsub.s32 1, %v1303
  %v1305 = vrot.slane %v1284, %v1304
  %v1308 = vsel %vm821, %v1290, %v1301
  %v1309 = vsel %vm822, %v1294, %v1305
  %v1310 = vmul.f32 %v1308, %v1131
  %1312 = vrot.lane.b32.xlu0 %v1308, 64
  %v1313 = vpop.permute.xlu0 %1312
  %v1315 = vmul.f32 %v1308, %v1313
  %1317 = vrot.lane.b32.xlu0 %v1315, 32
  %v1318 = vpop.permute.xlu0 %1317
  %v1320 = vadd.f32 %v1310, %v1318
  %v1321 = vtanh.pop %v1320
  %1323 = vrot.lane.b32.xlu0 %v1321, 64
  %v1324 = vpop.permute.xlu0 %1323
  %v1326 = vmul.f32 %v1308, %v1324
  %v1327 = vmul.f32 %v1309, %v1148
  %1329 = vrot.lane.b32.xlu0 %v1309, 64
  %v1330 = vpop.permute.xlu0 %1329
  %v1332 = vmul.f32 %v1309, %v1330
  %1334 = vrot.lane.b32.xlu0 %v1332, 32
  %v1335 = vpop.permute.xlu0 %1334
  %v1337 = vadd.f32 %v1327, %v1335
  %v1338 = vtanh.pop %v1337
  %1340 = vrot.lane.b32.xlu0 %v1338, 64
  %v1341 = vpop.permute.xlu0 %1340
  %v1343 = vmul.f32 %v1309, %v1341
  %1345 = vrot.lane.b32.xlu0 %v1343, 32
  %v1346 = vpop.permute.xlu0 %1345
  %1348 = vst.msk [vmem:[#allocation3 + $0x1] sm:$0x1] %vm971, %v1346
  %1350 = vrot.lane.b32.xlu0 %v1326, 32
  %v1351 = vpop.permute.xlu0 %1350
  %1353 = vrot.lane.b32.xlu0 %v1343, 64
  %v1354 = vpop.permute.xlu0 %1353
  %v1356 = vsel %vm977, %v1351, %v1354
  %s1357 = scalar_lea.vmem [#allocation2], 3
  %v1358 = vld [vmem:[%s1357] ss:$8 sm:$0x3]
  %v1359 = vld [vmem:[%s13] sm:$0xff]
  %v1360 = vld [vmem:[%s13 + $0x8] sm:$0xff]
  %v1361 = vld [vmem:[%s13 + $0x10] sm:$0xff]
  %v1362 = vld [vmem:[%s13 + $0x18] sm:$0xff]
  %v1363 = vld [vmem:[%s13 + $0x20] sm:$0xff]
  %v1364 = vld [vmem:[%s13 + $0x28] sm:$0xff]
  %v1365 = vld [vmem:[%s13 + $0x30] sm:$0xff]
  %v1366 = vld [vmem:[%s13 + $0x38] sm:$0xff]
  %v1367 = vld [vmem:[%s13 + $0x40] sm:$0xff]
  %v1368 = vld [vmem:[%s13 + $0x48] sm:$0xff]
  %v1369 = vld [vmem:[%s13 + $0x50] sm:$0xff]
  %v1370 = vld [vmem:[%s13 + $0x58] sm:$0xff]
  %v1371 = vld [vmem:[%s13 + $0x60] sm:$0xff]
  %v1372 = vld [vmem:[%s13 + $0x68] sm:$0xff]
  %v1373 = vld [vmem:[%s13 + $0x70] sm:$0xff]
  %v1374 = vld [vmem:[%s13 + $0x78] sm:$0xff]
  %v1376 = vsel %vm840, %v1356, 0
  %1378 = vmatprep.subr.mxu0 0.0
  %1379 = vmatpush1.msra.mxu0 0.0
  %1380 = vmatprep.subr.mxu0 0.0
  %1381 = vmatpush1.msra.mxu0 0.0
  %1382 = vmatprep.subr.mxu0 0.0
  %1383 = vmatpush1.msra.mxu0 0.0
  %1384 = vmatprep.subr.mxu0 0.0
  %1385 = vmatpush1.msra.mxu0 0.0
  %1386 = vmatprep.subr.mxu0 0.0
  %1387 = vmatpush1.msra.mxu0 0.0
  %1388 = vmatprep.subr.mxu0 0.0
  %1389 = vmatpush1.msra.mxu0 0.0
  %1390 = vmatprep.subr.mxu0 0.0
  %1391 = vmatpush1.msra.mxu0 0.0
  %1392 = vmatprep.subr.mxu0 0.0
  %1393 = vmatpush1.msra.mxu0 0.0
  %1394 = vmatprep.subr.mxu0 %v1374
  %1395 = vmatpush1.msra.mxu0 %v1373
  %1396 = vmatprep.subr.mxu0 %v1372
  %1397 = vmatpush1.msra.mxu0 %v1371
  %1398 = vmatprep.subr.mxu0 %v1370
  %1399 = vmatpush1.msra.mxu0 %v1369
  %1400 = vmatprep.subr.mxu0 %v1368
  %1401 = vmatpush1.msra.mxu0 %v1367
  %1402 = vmatprep.subr.mxu0 %v1366
  %1403 = vmatpush1.msra.mxu0 %v1365
  %1404 = vmatprep.subr.mxu0 %v1364
  %1405 = vmatpush1.msra.mxu0 %v1363
  %1406 = vmatprep.subr.mxu0 %v1362
  %1407 = vmatpush1.msra.mxu0 %v1361
  %1408 = vmatprep.subr.mxu0 %v1360
  %1409 = vmatpush1.msra.mxu0 %v1359
  %1410 = vmatprep.subr.mxu0 0.0
  %1411 = vmatpush2.msra.mxu0 0.0
  %1412 = vmatprep.subr.mxu0 0.0
  %1413 = vmatpush2.msra.mxu0 0.0
  %1414 = vmatprep.subr.mxu0 0.0
  %1415 = vmatpush2.msra.mxu0 0.0
  %1416 = vmatprep.subr.mxu0 0.0
  %1417 = vmatpush2.msra.mxu0 0.0
  %1418 = vmatprep.subr.mxu0 0.0
  %1419 = vmatpush2.msra.mxu0 0.0
  %1420 = vmatprep.subr.mxu0 0.0
  %1421 = vmatpush2.msra.mxu0 0.0
  %1422 = vmatprep.subr.mxu0 0.0
  %1423 = vmatpush2.msra.mxu0 0.0
  %1424 = vmatprep.subr.mxu0 0.0
  %1425 = vmatpush2.msra.mxu0 0.0
  %1426 = vmatprep.subr.mxu0 0.0
  %1427 = vmatpush2.msra.mxu0 0.0
  %1428 = vmatprep.subr.mxu0 0.0
  %1429 = vmatpush2.msra.mxu0 0.0
  %1430 = vmatprep.subr.mxu0 0.0
  %1431 = vmatpush2.msra.mxu0 0.0
  %1432 = vmatprep.subr.mxu0 0.0
  %1433 = vmatpush2.msra.mxu0 0.0
  %1434 = vmatprep.subr.mxu0 0.0
  %1435 = vmatpush2.msra.mxu0 0.0
  %1436 = vmatprep.subr.mxu0 0.0
  %1437 = vmatpush2.msra.mxu0 0.0
  %1438 = vmatprep.subr.mxu0 0.0
  %1439 = vmatpush2.msra.mxu0 0.0
  %1440 = vmatprep.subr.mxu0 0.0
  %1441 = vmatpush2.msra.mxu0 0.0
  %1442 = vmatprep.mubr.f32.mxu0 0.0
  %1443 = vmatmul.mubr.f32.gmra.mxu0 %v1376
  %v1444 = vpop.f32.mrf.mxu0
  %v1445 = vadd.f32 0.0, %v1444
  %v1446 = vpop.f32.mrf.mxu0
  %v1447 = vadd.f32 0.0, %v1446
  %1448 = vdwg.mxu0
  %v1451 = vcombine.low %v1445, %v1447
  %v1453 = vunpack.c.l.s4 1966171168
  %v1454 = vunpack.c.0.s8 %v1453
  %v1455 = vlaneseq
  %v1456 = vshrl.u32 %v1455, 7
  %v1457 = vsub.s32 %v1454, %v1456
  %v1458 = vrot.slane %v1451, %v1457
  %v1460 = vunpack.c.l.s4 1966171168
  %v1461 = vunpack.c.0.s8 %v1460
  %v1462 = vlaneseq
  %v1463 = vshrl.u32 %v1462, 7
  %v1464 = vsub.s32 %v1461, %v1463
  %v1465 = vrot.slane %v1458, %v1464
  %v1467 = vadd.f32 %v1358, %v1465
  %v1468 = vxor.u32 %v1467, 2147483648
  %v1469 = vmul.f32 %v1468, 1.442695
  %v1470 = vpow.pop %v1469
  %v1471 = vadd.f32 %v1470, 1.0
  %v1472 = vrcp.pop %v1471
  %v1473 = vmul.f32 1.0, %v1472
  %v1474 = vtanh.pop %v1467
  %v1476 = vlaneseq
  %v1477 = vshrl.u32 %v1476, 7
  %v1478 = vsub.s32 0, %v1477
  %v1479 = vrot.slane %v1474, %v1478
  %v1480 = vlaneseq
  %v1481 = vshrl.u32 %v1480, 7
  %v1482 = vsub.s32 1, %v1481
  %v1483 = vrot.slane %v1474, %v1482
  %v1487 = vlaneseq
  %v1488 = vshrl.u32 %v1487, 7
  %v1489 = vsub.s32 0, %v1488
  %v1490 = vrot.slane %v1473, %v1489
  %v1491 = vlaneseq
  %v1492 = vshrl.u32 %v1491, 7
  %v1493 = vsub.s32 1, %v1492
  %v1494 = vrot.slane %v1473, %v1493
  %v1497 = vsel %vm821, %v1479, %v1490
  %v1498 = vsel %vm822, %v1483, %v1494
  %v1499 = vmul.f32 %v1497, %v1320
  %1501 = vrot.lane.b32.xlu0 %v1497, 64
  %v1502 = vpop.permute.xlu0 %1501
  %v1504 = vmul.f32 %v1497, %v1502
  %1506 = vrot.lane.b32.xlu0 %v1504, 32
  %v1507 = vpop.permute.xlu0 %1506
  %v1509 = vadd.f32 %v1499, %v1507
  %v1510 = vtanh.pop %v1509
  %1512 = vrot.lane.b32.xlu0 %v1510, 64
  %v1513 = vpop.permute.xlu0 %1512
  %v1515 = vmul.f32 %v1497, %v1513
  %v1516 = vmul.f32 %v1498, %v1337
  %1518 = vrot.lane.b32.xlu0 %v1498, 64
  %v1519 = vpop.permute.xlu0 %1518
  %v1521 = vmul.f32 %v1498, %v1519
  %1523 = vrot.lane.b32.xlu0 %v1521, 32
  %v1524 = vpop.permute.xlu0 %1523
  %v1526 = vadd.f32 %v1516, %v1524
  %v1527 = vtanh.pop %v1526
  %1529 = vrot.lane.b32.xlu0 %v1527, 64
  %v1530 = vpop.permute.xlu0 %1529
  %v1532 = vmul.f32 %v1498, %v1530
  %1534 = vrot.lane.b32.xlu0 %v1532, 32
  %v1535 = vpop.permute.xlu0 %1534
  %1537 = vst.msk [vmem:[#allocation3 + $0x2] sm:$0x1] %vm971, %v1535
  %1539 = vrot.lane.b32.xlu0 %v1515, 32
  %v1540 = vpop.permute.xlu0 %1539
  %1542 = vrot.lane.b32.xlu0 %v1532, 64
  %v1543 = vpop.permute.xlu0 %1542
  %v1545 = vsel %vm977, %v1540, %v1543
  %s1546 = scalar_lea.vmem [#allocation2], 4
  %v1547 = vld [vmem:[%s1546] ss:$8 sm:$0x3]
  %v1548 = vld [vmem:[%s13] sm:$0xff]
  %v1549 = vld [vmem:[%s13 + $0x8] sm:$0xff]
  %v1550 = vld [vmem:[%s13 + $0x10] sm:$0xff]
  %v1551 = vld [vmem:[%s13 + $0x18] sm:$0xff]
  %v1552 = vld [vmem:[%s13 + $0x20] sm:$0xff]
  %v1553 = vld [vmem:[%s13 + $0x28] sm:$0xff]
  %v1554 = vld [vmem:[%s13 + $0x30] sm:$0xff]
  %v1555 = vld [vmem:[%s13 + $0x38] sm:$0xff]
  %v1556 = vld [vmem:[%s13 + $0x40] sm:$0xff]
  %v1557 = vld [vmem:[%s13 + $0x48] sm:$0xff]
  %v1558 = vld [vmem:[%s13 + $0x50] sm:$0xff]
  %v1559 = vld [vmem:[%s13 + $0x58] sm:$0xff]
  %v1560 = vld [vmem:[%s13 + $0x60] sm:$0xff]
  %v1561 = vld [vmem:[%s13 + $0x68] sm:$0xff]
  %v1562 = vld [vmem:[%s13 + $0x70] sm:$0xff]
  %v1563 = vld [vmem:[%s13 + $0x78] sm:$0xff]
  %v1565 = vsel %vm840, %v1545, 0
  %1567 = vmatprep.subr.mxu0 0.0
  %1568 = vmatpush1.msra.mxu0 0.0
  %1569 = vmatprep.subr.mxu0 0.0
  %1570 = vmatpush1.msra.mxu0 0.0
  %1571 = vmatprep.subr.mxu0 0.0
  %1572 = vmatpush1.msra.mxu0 0.0
  %1573 = vmatprep.subr.mxu0 0.0
  %1574 = vmatpush1.msra.mxu0 0.0
  %1575 = vmatprep.subr.mxu0 0.0
  %1576 = vmatpush1.msra.mxu0 0.0
  %1577 = vmatprep.subr.mxu0 0.0
  %1578 = vmatpush1.msra.mxu0 0.0
  %1579 = vmatprep.subr.mxu0 0.0
  %1580 = vmatpush1.msra.mxu0 0.0
  %1581 = vmatprep.subr.mxu0 0.0
  %1582 = vmatpush1.msra.mxu0 0.0
  %1583 = vmatprep.subr.mxu0 %v1563
  %1584 = vmatpush1.msra.mxu0 %v1562
  %1585 = vmatprep.subr.mxu0 %v1561
  %1586 = vmatpush1.msra.mxu0 %v1560
  %1587 = vmatprep.subr.mxu0 %v1559
  %1588 = vmatpush1.msra.mxu0 %v1558
  %1589 = vmatprep.subr.mxu0 %v1557
  %1590 = vmatpush1.msra.mxu0 %v1556
  %1591 = vmatprep.subr.mxu0 %v1555
  %1592 = vmatpush1.msra.mxu0 %v1554
  %1593 = vmatprep.subr.mxu0 %v1553
  %1594 = vmatpush1.msra.mxu0 %v1552
  %1595 = vmatprep.subr.mxu0 %v1551
  %1596 = vmatpush1.msra.mxu0 %v1550
  %1597 = vmatprep.subr.mxu0 %v1549
  %1598 = vmatpush1.msra.mxu0 %v1548
  %1599 = vmatprep.subr.mxu0 0.0
  %1600 = vmatpush2.msra.mxu0 0.0
  %1601 = vmatprep.subr.mxu0 0.0
  %1602 = vmatpush2.msra.mxu0 0.0
  %1603 = vmatprep.subr.mxu0 0.0
  %1604 = vmatpush2.msra.mxu0 0.0
  %1605 = vmatprep.subr.mxu0 0.0
  %1606 = vmatpush2.msra.mxu0 0.0
  %1607 = vmatprep.subr.mxu0 0.0
  %1608 = vmatpush2.msra.mxu0 0.0
  %1609 = vmatprep.subr.mxu0 0.0
  %1610 = vmatpush2.msra.mxu0 0.0
  %1611 = vmatprep.subr.mxu0 0.0
  %1612 = vmatpush2.msra.mxu0 0.0
  %1613 = vmatprep.subr.mxu0 0.0
  %1614 = vmatpush2.msra.mxu0 0.0
  %1615 = vmatprep.subr.mxu0 0.0
  %1616 = vmatpush2.msra.mxu0 0.0
  %1617 = vmatprep.subr.mxu0 0.0
  %1618 = vmatpush2.msra.mxu0 0.0
  %1619 = vmatprep.subr.mxu0 0.0
  %1620 = vmatpush2.msra.mxu0 0.0
  %1621 = vmatprep.subr.mxu0 0.0
  %1622 = vmatpush2.msra.mxu0 0.0
  %1623 = vmatprep.subr.mxu0 0.0
  %1624 = vmatpush2.msra.mxu0 0.0
  %1625 = vmatprep.subr.mxu0 0.0
  %1626 = vmatpush2.msra.mxu0 0.0
  %1627 = vmatprep.subr.mxu0 0.0
  %1628 = vmatpush2.msra.mxu0 0.0
  %1629 = vmatprep.subr.mxu0 0.0
  %1630 = vmatpush2.msra.mxu0 0.0
  %1631 = vmatprep.mubr.f32.mxu0 0.0
  %1632 = vmatmul.mubr.f32.gmra.mxu0 %v1565
  %v1633 = vpop.f32.mrf.mxu0
  %v1634 = vadd.f32 0.0, %v1633
  %v1635 = vpop.f32.mrf.mxu0
  %v1636 = vadd.f32 0.0, %v1635
  %1637 = vdwg.mxu0
  %v1640 = vcombine.low %v1634, %v1636
  %v1642 = vunpack.c.l.s4 1966171168
  %v1643 = vunpack.c.0.s8 %v1642
  %v1644 = vlaneseq
  %v1645 = vshrl.u32 %v1644, 7
  %v1646 = vsub.s32 %v1643, %v1645
  %v1647 = vrot.slane %v1640, %v1646
  %v1649 = vunpack.c.l.s4 1966171168
  %v1650 = vunpack.c.0.s8 %v1649
  %v1651 = vlaneseq
  %v1652 = vshrl.u32 %v1651, 7
  %v1653 = vsub.s32 %v1650, %v1652
  %v1654 = vrot.slane %v1647, %v1653
  %v1656 = vadd.f32 %v1547, %v1654
  %v1657 = vxor.u32 %v1656, 2147483648
  %v1658 = vmul.f32 %v1657, 1.442695
  %v1659 = vpow.pop %v1658
  %v1660 = vadd.f32 %v1659, 1.0
  %v1661 = vrcp.pop %v1660
  %v1662 = vmul.f32 1.0, %v1661
  %v1663 = vtanh.pop %v1656
  %v1665 = vlaneseq
  %v1666 = vshrl.u32 %v1665, 7
  %v1667 = vsub.s32 0, %v1666
  %v1668 = vrot.slane %v1663, %v1667
  %v1669 = vlaneseq
  %v1670 = vshrl.u32 %v1669, 7
  %v1671 = vsub.s32 1, %v1670
  %v1672 = vrot.slane %v1663, %v1671
  %v1676 = vlaneseq
  %v1677 = vshrl.u32 %v1676, 7
  %v1678 = vsub.s32 0, %v1677
  %v1679 = vrot.slane %v1662, %v1678
  %v1680 = vlaneseq
  %v1681 = vshrl.u32 %v1680, 7
  %v1682 = vsub.s32 1, %v1681
  %v1683 = vrot.slane %v1662, %v1682
  %v1686 = vsel %vm821, %v1668, %v1679
  %v1687 = vsel %vm822, %v1672, %v1683
  %v1688 = vmul.f32 %v1686, %v1509
  %1690 = vrot.lane.b32.xlu0 %v1686, 64
  %v1691 = vpop.permute.xlu0 %1690
  %v1693 = vmul.f32 %v1686, %v1691
  %1695 = vrot.lane.b32.xlu0 %v1693, 32
  %v1696 = vpop.permute.xlu0 %1695
  %v1698 = vadd.f32 %v1688, %v1696
  %v1699 = vtanh.pop %v1698
  %1701 = vrot.lane.b32.xlu0 %v1699, 64
  %v1702 = vpop.permute.xlu0 %1701
  %v1704 = vmul.f32 %v1686, %v1702
  %v1705 = vmul.f32 %v1687, %v1526
  %1707 = vrot.lane.b32.xlu0 %v1687, 64
  %v1708 = vpop.permute.xlu0 %1707
  %v1710 = vmul.f32 %v1687, %v1708
  %1712 = vrot.lane.b32.xlu0 %v1710, 32
  %v1713 = vpop.permute.xlu0 %1712
  %v1715 = vadd.f32 %v1705, %v1713
  %v1716 = vtanh.pop %v1715
  %1718 = vrot.lane.b32.xlu0 %v1716, 64
  %v1719 = vpop.permute.xlu0 %1718
  %v1721 = vmul.f32 %v1687, %v1719
  %1723 = vrot.lane.b32.xlu0 %v1721, 32
  %v1724 = vpop.permute.xlu0 %1723
  %1726 = vst.msk [vmem:[#allocation3 + $0x3] sm:$0x1] %vm971, %v1724
  %1728 = vrot.lane.b32.xlu0 %v1704, 32
  %v1729 = vpop.permute.xlu0 %1728
  %1731 = vrot.lane.b32.xlu0 %v1721, 64
  %v1732 = vpop.permute.xlu0 %1731
  %v1734 = vsel %vm977, %v1729, %v1732
  %s1735 = scalar_lea.vmem [#allocation2], 5
  %v1736 = vld [vmem:[%s1735] ss:$8 sm:$0x3]
  %v1737 = vld [vmem:[%s13] sm:$0xff]
  %v1738 = vld [vmem:[%s13 + $0x8] sm:$0xff]
  %v1739 = vld [vmem:[%s13 + $0x10] sm:$0xff]
  %v1740 = vld [vmem:[%s13 + $0x18] sm:$0xff]
  %v1741 = vld [vmem:[%s13 + $0x20] sm:$0xff]
  %v1742 = vld [vmem:[%s13 + $0x28] sm:$0xff]
  %v1743 = vld [vmem:[%s13 + $0x30] sm:$0xff]
  %v1744 = vld [vmem:[%s13 + $0x38] sm:$0xff]
  %v1745 = vld [vmem:[%s13 + $0x40] sm:$0xff]
  %v1746 = vld [vmem:[%s13 + $0x48] sm:$0xff]
  %v1747 = vld [vmem:[%s13 + $0x50] sm:$0xff]
  %v1748 = vld [vmem:[%s13 + $0x58] sm:$0xff]
  %v1749 = vld [vmem:[%s13 + $0x60] sm:$0xff]
  %v1750 = vld [vmem:[%s13 + $0x68] sm:$0xff]
  %v1751 = vld [vmem:[%s13 + $0x70] sm:$0xff]
  %v1752 = vld [vmem:[%s13 + $0x78] sm:$0xff]
  %v1754 = vsel %vm840, %v1734, 0
  %1756 = vmatprep.subr.mxu0 0.0
  %1757 = vmatpush1.msra.mxu0 0.0
  %1758 = vmatprep.subr.mxu0 0.0
  %1759 = vmatpush1.msra.mxu0 0.0
  %1760 = vmatprep.subr.mxu0 0.0
  %1761 = vmatpush1.msra.mxu0 0.0
  %1762 = vmatprep.subr.mxu0 0.0
  %1763 = vmatpush1.msra.mxu0 0.0
  %1764 = vmatprep.subr.mxu0 0.0
  %1765 = vmatpush1.msra.mxu0 0.0
  %1766 = vmatprep.subr.mxu0 0.0
  %1767 = vmatpush1.msra.mxu0 0.0
  %1768 = vmatprep.subr.mxu0 0.0
  %1769 = vmatpush1.msra.mxu0 0.0
  %1770 = vmatprep.subr.mxu0 0.0
  %1771 = vmatpush1.msra.mxu0 0.0
  %1772 = vmatprep.subr.mxu0 %v1752
  %1773 = vmatpush1.msra.mxu0 %v1751
  %1774 = vmatprep.subr.mxu0 %v1750
  %1775 = vmatpush1.msra.mxu0 %v1749
  %1776 = vmatprep.subr.mxu0 %v1748
  %1777 = vmatpush1.msra.mxu0 %v1747
  %1778 = vmatprep.subr.mxu0 %v1746
  %1779 = vmatpush1.msra.mxu0 %v1745
  %1780 = vmatprep.subr.mxu0 %v1744
  %1781 = vmatpush1.msra.mxu0 %v1743
  %1782 = vmatprep.subr.mxu0 %v1742
  %1783 = vmatpush1.msra.mxu0 %v1741
  %1784 = vmatprep.subr.mxu0 %v1740
  %1785 = vmatpush1.msra.mxu0 %v1739
  %1786 = vmatprep.subr.mxu0 %v1738
  %1787 = vmatpush1.msra.mxu0 %v1737
  %1788 = vmatprep.subr.mxu0 0.0
  %1789 = vmatpush2.msra.mxu0 0.0
  %1790 = vmatprep.subr.mxu0 0.0
  %1791 = vmatpush2.msra.mxu0 0.0
  %1792 = vmatprep.subr.mxu0 0.0
  %1793 = vmatpush2.msra.mxu0 0.0
  %1794 = vmatprep.subr.mxu0 0.0
  %1795 = vmatpush2.msra.mxu0 0.0
  %1796 = vmatprep.subr.mxu0 0.0
  %1797 = vmatpush2.msra.mxu0 0.0
  %1798 = vmatprep.subr.mxu0 0.0
  %1799 = vmatpush2.msra.mxu0 0.0
  %1800 = vmatprep.subr.mxu0 0.0
  %1801 = vmatpush2.msra.mxu0 0.0
  %1802 = vmatprep.subr.mxu0 0.0
  %1803 = vmatpush2.msra.mxu0 0.0
  %1804 = vmatprep.subr.mxu0 0.0
  %1805 = vmatpush2.msra.mxu0 0.0
  %1806 = vmatprep.subr.mxu0 0.0
  %1807 = vmatpush2.msra.mxu0 0.0
  %1808 = vmatprep.subr.mxu0 0.0
  %1809 = vmatpush2.msra.mxu0 0.0
  %1810 = vmatprep.subr.mxu0 0.0
  %1811 = vmatpush2.msra.mxu0 0.0
  %1812 = vmatprep.subr.mxu0 0.0
  %1813 = vmatpush2.msra.mxu0 0.0
  %1814 = vmatprep.subr.mxu0 0.0
  %1815 = vmatpush2.msra.mxu0 0.0
  %1816 = vmatprep.subr.mxu0 0.0
  %1817 = vmatpush2.msra.mxu0 0.0
  %1818 = vmatprep.subr.mxu0 0.0
  %1819 = vmatpush2.msra.mxu0 0.0
  %1820 = vmatprep.mubr.f32.mxu0 0.0
  %1821 = vmatmul.mubr.f32.gmra.mxu0 %v1754
  %v1822 = vpop.f32.mrf.mxu0
  %v1823 = vadd.f32 0.0, %v1822
  %v1824 = vpop.f32.mrf.mxu0
  %v1825 = vadd.f32 0.0, %v1824
  %1826 = vdwg.mxu0
  %v1829 = vcombine.low %v1823, %v1825
  %v1831 = vunpack.c.l.s4 1966171168
  %v1832 = vunpack.c.0.s8 %v1831
  %v1833 = vlaneseq
  %v1834 = vshrl.u32 %v1833, 7
  %v1835 = vsub.s32 %v1832, %v1834
  %v1836 = vrot.slane %v1829, %v1835
  %v1838 = vunpack.c.l.s4 1966171168
  %v1839 = vunpack.c.0.s8 %v1838
  %v1840 = vlaneseq
  %v1841 = vshrl.u32 %v1840, 7
  %v1842 = vsub.s32 %v1839, %v1841
  %v1843 = vrot.slane %v1836, %v1842
  %v1845 = vadd.f32 %v1736, %v1843
  %v1846 = vxor.u32 %v1845, 2147483648
  %v1847 = vmul.f32 %v1846, 1.442695
  %v1848 = vpow.pop %v1847
  %v1849 = vadd.f32 %v1848, 1.0
  %v1850 = vrcp.pop %v1849
  %v1851 = vmul.f32 1.0, %v1850
  %v1852 = vtanh.pop %v1845
  %v1854 = vlaneseq
  %v1855 = vshrl.u32 %v1854, 7
  %v1856 = vsub.s32 0, %v1855
  %v1857 = vrot.slane %v1852, %v1856
  %v1858 = vlaneseq
  %v1859 = vshrl.u32 %v1858, 7
  %v1860 = vsub.s32 1, %v1859
  %v1861 = vrot.slane %v1852, %v1860
  %v1865 = vlaneseq
  %v1866 = vshrl.u32 %v1865, 7
  %v1867 = vsub.s32 0, %v1866
  %v1868 = vrot.slane %v1851, %v1867
  %v1869 = vlaneseq
  %v1870 = vshrl.u32 %v1869, 7
  %v1871 = vsub.s32 1, %v1870
  %v1872 = vrot.slane %v1851, %v1871
  %v1875 = vsel %vm821, %v1857, %v1868
  %v1876 = vsel %vm822, %v1861, %v1872
  %v1877 = vmul.f32 %v1875, %v1698
  %1879 = vrot.lane.b32.xlu0 %v1875, 64
  %v1880 = vpop.permute.xlu0 %1879
  %v1882 = vmul.f32 %v1875, %v1880
  %1884 = vrot.lane.b32.xlu0 %v1882, 32
  %v1885 = vpop.permute.xlu0 %1884
  %v1887 = vadd.f32 %v1877, %v1885
  %v1888 = vtanh.pop %v1887
  %1890 = vrot.lane.b32.xlu0 %v1888, 64
  %v1891 = vpop.permute.xlu0 %1890
  %v1893 = vmul.f32 %v1875, %v1891
  %v1894 = vmul.f32 %v1876, %v1715
  %1896 = vrot.lane.b32.xlu0 %v1876, 64
  %v1897 = vpop.permute.xlu0 %1896
  %v1899 = vmul.f32 %v1876, %v1897
  %1901 = vrot.lane.b32.xlu0 %v1899, 32
  %v1902 = vpop.permute.xlu0 %1901
  %v1904 = vadd.f32 %v1894, %v1902
  %v1905 = vtanh.pop %v1904
  %1907 = vrot.lane.b32.xlu0 %v1905, 64
  %v1908 = vpop.permute.xlu0 %1907
  %v1910 = vmul.f32 %v1876, %v1908
  %1912 = vrot.lane.b32.xlu0 %v1910, 32
  %v1913 = vpop.permute.xlu0 %1912
  %1915 = vst.msk [vmem:[#allocation3 + $0x4] sm:$0x1] %vm971, %v1913
  %1917 = vrot.lane.b32.xlu0 %v1893, 32
  %v1918 = vpop.permute.xlu0 %1917
  %1920 = vrot.lane.b32.xlu0 %v1910, 64
  %v1921 = vpop.permute.xlu0 %1920
  %v1923 = vsel %vm977, %v1918, %v1921
  %s1924 = scalar_lea.vmem [#allocation2], 6
  %v1925 = vld [vmem:[%s1924] ss:$8 sm:$0x3]
  %v1926 = vld [vmem:[%s13] sm:$0xff]
  %v1927 = vld [vmem:[%s13 + $0x8] sm:$0xff]
  %v1928 = vld [vmem:[%s13 + $0x10] sm:$0xff]
  %v1929 = vld [vmem:[%s13 + $0x18] sm:$0xff]
  %v1930 = vld [vmem:[%s13 + $0x20] sm:$0xff]
  %v1931 = vld [vmem:[%s13 + $0x28] sm:$0xff]
  %v1932 = vld [vmem:[%s13 + $0x30] sm:$0xff]
  %v1933 = vld [vmem:[%s13 + $0x38] sm:$0xff]
  %v1934 = vld [vmem:[%s13 + $0x40] sm:$0xff]
  %v1935 = vld [vmem:[%s13 + $0x48] sm:$0xff]
  %v1936 = vld [vmem:[%s13 + $0x50] sm:$0xff]
  %v1937 = vld [vmem:[%s13 + $0x58] sm:$0xff]
  %v1938 = vld [vmem:[%s13 + $0x60] sm:$0xff]
  %v1939 = vld [vmem:[%s13 + $0x68] sm:$0xff]
  %v1940 = vld [vmem:[%s13 + $0x70] sm:$0xff]
  %v1941 = vld [vmem:[%s13 + $0x78] sm:$0xff]
  %v1943 = vsel %vm840, %v1923, 0
  %1945 = vmatprep.subr.mxu0 0.0
  %1946 = vmatpush1.msra.mxu0 0.0
  %1947 = vmatprep.subr.mxu0 0.0
  %1948 = vmatpush1.msra.mxu0 0.0
  %1949 = vmatprep.subr.mxu0 0.0
  %1950 = vmatpush1.msra.mxu0 0.0
  %1951 = vmatprep.subr.mxu0 0.0
  %1952 = vmatpush1.msra.mxu0 0.0
  %1953 = vmatprep.subr.mxu0 0.0
  %1954 = vmatpush1.msra.mxu0 0.0
  %1955 = vmatprep.subr.mxu0 0.0
  %1956 = vmatpush1.msra.mxu0 0.0
  %1957 = vmatprep.subr.mxu0 0.0
  %1958 = vmatpush1.msra.mxu0 0.0
  %1959 = vmatprep.subr.mxu0 0.0
  %1960 = vmatpush1.msra.mxu0 0.0
  %1961 = vmatprep.subr.mxu0 %v1941
  %1962 = vmatpush1.msra.mxu0 %v1940
  %1963 = vmatprep.subr.mxu0 %v1939
  %1964 = vmatpush1.msra.mxu0 %v1938
  %1965 = vmatprep.subr.mxu0 %v1937
  %1966 = vmatpush1.msra.mxu0 %v1936
  %1967 = vmatprep.subr.mxu0 %v1935
  %1968 = vmatpush1.msra.mxu0 %v1934
  %1969 = vmatprep.subr.mxu0 %v1933
  %1970 = vmatpush1.msra.mxu0 %v1932
  %1971 = vmatprep.subr.mxu0 %v1931
  %1972 = vmatpush1.msra.mxu0 %v1930
  %1973 = vmatprep.subr.mxu0 %v1929
  %1974 = vmatpush1.msra.mxu0 %v1928
  %1975 = vmatprep.subr.mxu0 %v1927
  %1976 = vmatpush1.msra.mxu0 %v1926
  %1977 = vmatprep.subr.mxu0 0.0
  %1978 = vmatpush2.msra.mxu0 0.0
  %1979 = vmatprep.subr.mxu0 0.0
  %1980 = vmatpush2.msra.mxu0 0.0
  %1981 = vmatprep.subr.mxu0 0.0
  %1982 = vmatpush2.msra.mxu0 0.0
  %1983 = vmatprep.subr.mxu0 0.0
  %1984 = vmatpush2.msra.mxu0 0.0
  %1985 = vmatprep.subr.mxu0 0.0
  %1986 = vmatpush2.msra.mxu0 0.0
  %1987 = vmatprep.subr.mxu0 0.0
  %1988 = vmatpush2.msra.mxu0 0.0
  %1989 = vmatprep.subr.mxu0 0.0
  %1990 = vmatpush2.msra.mxu0 0.0
  %1991 = vmatprep.subr.mxu0 0.0
  %1992 = vmatpush2.msra.mxu0 0.0
  %1993 = vmatprep.subr.mxu0 0.0
  %1994 = vmatpush2.msra.mxu0 0.0
  %1995 = vmatprep.subr.mxu0 0.0
  %1996 = vmatpush2.msra.mxu0 0.0
  %1997 = vmatprep.subr.mxu0 0.0
  %1998 = vmatpush2.msra.mxu0 0.0
  %1999 = vmatprep.subr.mxu0 0.0
  %2000 = vmatpush2.msra.mxu0 0.0
  %2001 = vmatprep.subr.mxu0 0.0
  %2002 = vmatpush2.msra.mxu0 0.0
  %2003 = vmatprep.subr.mxu0 0.0
  %2004 = vmatpush2.msra.mxu0 0.0
  %2005 = vmatprep.subr.mxu0 0.0
  %2006 = vmatpush2.msra.mxu0 0.0
  %2007 = vmatprep.subr.mxu0 0.0
  %2008 = vmatpush2.msra.mxu0 0.0
  %2009 = vmatprep.mubr.f32.mxu0 0.0
  %2010 = vmatmul.mubr.f32.gmra.mxu0 %v1943
  %v2011 = vpop.f32.mrf.mxu0
  %v2012 = vadd.f32 0.0, %v2011
  %v2013 = vpop.f32.mrf.mxu0
  %v2014 = vadd.f32 0.0, %v2013
  %2015 = vdwg.mxu0
  %v2018 = vcombine.low %v2012, %v2014
  %v2020 = vunpack.c.l.s4 1966171168
  %v2021 = vunpack.c.0.s8 %v2020
  %v2022 = vlaneseq
  %v2023 = vshrl.u32 %v2022, 7
  %v2024 = vsub.s32 %v2021, %v2023
  %v2025 = vrot.slane %v2018, %v2024
  %v2027 = vunpack.c.l.s4 1966171168
  %v2028 = vunpack.c.0.s8 %v2027
  %v2029 = vlaneseq
  %v2030 = vshrl.u32 %v2029, 7
  %v2031 = vsub.s32 %v2028, %v2030
  %v2032 = vrot.slane %v2025, %v2031
  %v2034 = vadd.f32 %v1925, %v2032
  %v2035 = vxor.u32 %v2034, 2147483648
  %v2036 = vmul.f32 %v2035, 1.442695
  %v2037 = vpow.pop %v2036
  %v2038 = vadd.f32 %v2037, 1.0
  %v2039 = vrcp.pop %v2038
  %v2040 = vmul.f32 1.0, %v2039
  %v2041 = vtanh.pop %v2034
  %v2043 = vlaneseq
  %v2044 = vshrl.u32 %v2043, 7
  %v2045 = vsub.s32 0, %v2044
  %v2046 = vrot.slane %v2041, %v2045
  %v2047 = vlaneseq
  %v2048 = vshrl.u32 %v2047, 7
  %v2049 = vsub.s32 1, %v2048
  %v2050 = vrot.slane %v2041, %v2049
  %v2054 = vlaneseq
  %v2055 = vshrl.u32 %v2054, 7
  %v2056 = vsub.s32 0, %v2055
  %v2057 = vrot.slane %v2040, %v2056
  %v2058 = vlaneseq
  %v2059 = vshrl.u32 %v2058, 7
  %v2060 = vsub.s32 1, %v2059
  %v2061 = vrot.slane %v2040, %v2060
  %v2064 = vsel %vm821, %v2046, %v2057
  %v2065 = vsel %vm822, %v2050, %v2061
  %v2066 = vmul.f32 %v2064, %v1887
  %2068 = vrot.lane.b32.xlu0 %v2064, 64
  %v2069 = vpop.permute.xlu0 %2068
  %v2071 = vmul.f32 %v2064, %v2069
  %2073 = vrot.lane.b32.xlu0 %v2071, 32
  %v2074 = vpop.permute.xlu0 %2073
  %v2076 = vadd.f32 %v2066, %v2074
  %v2077 = vtanh.pop %v2076
  %2079 = vrot.lane.b32.xlu0 %v2077, 64
  %v2080 = vpop.permute.xlu0 %2079
  %v2082 = vmul.f32 %v2064, %v2080
  %v2083 = vmul.f32 %v2065, %v1904
  %2085 = vrot.lane.b32.xlu0 %v2065, 64
  %v2086 = vpop.permute.xlu0 %2085
  %v2088 = vmul.f32 %v2065, %v2086
  %2090 = vrot.lane.b32.xlu0 %v2088, 32
  %v2091 = vpop.permute.xlu0 %2090
  %v2093 = vadd.f32 %v2083, %v2091
  %v2094 = vtanh.pop %v2093
  %2096 = vrot.lane.b32.xlu0 %v2094, 64
  %v2097 = vpop.permute.xlu0 %2096
  %v2099 = vmul.f32 %v2065, %v2097
  %2101 = vrot.lane.b32.xlu0 %v2099, 32
  %v2102 = vpop.permute.xlu0 %2101
  %2104 = vst.msk [vmem:[#allocation3 + $0x5] sm:$0x1] %vm971, %v2102
  %2106 = vrot.lane.b32.xlu0 %v2082, 32
  %v2107 = vpop.permute.xlu0 %2106
  %2109 = vrot.lane.b32.xlu0 %v2099, 64
  %v2110 = vpop.permute.xlu0 %2109
  %v2112 = vsel %vm977, %v2107, %v2110
  %s2113 = scalar_lea.vmem [#allocation2], 7
  %v2114 = vld [vmem:[%s2113] ss:$8 sm:$0x3]
  %v2115 = vld [vmem:[%s13] sm:$0xff]
  %v2116 = vld [vmem:[%s13 + $0x8] sm:$0xff]
  %v2117 = vld [vmem:[%s13 + $0x10] sm:$0xff]
  %v2118 = vld [vmem:[%s13 + $0x18] sm:$0xff]
  %v2119 = vld [vmem:[%s13 + $0x20] sm:$0xff]
  %v2120 = vld [vmem:[%s13 + $0x28] sm:$0xff]
  %v2121 = vld [vmem:[%s13 + $0x30] sm:$0xff]
  %v2122 = vld [vmem:[%s13 + $0x38] sm:$0xff]
  %v2123 = vld [vmem:[%s13 + $0x40] sm:$0xff]
  %v2124 = vld [vmem:[%s13 + $0x48] sm:$0xff]
  %v2125 = vld [vmem:[%s13 + $0x50] sm:$0xff]
  %v2126 = vld [vmem:[%s13 + $0x58] sm:$0xff]
  %v2127 = vld [vmem:[%s13 + $0x60] sm:$0xff]
  %v2128 = vld [vmem:[%s13 + $0x68] sm:$0xff]
  %v2129 = vld [vmem:[%s13 + $0x70] sm:$0xff]
  %v2130 = vld [vmem:[%s13 + $0x78] sm:$0xff]
  %v2132 = vsel %vm840, %v2112, 0
  %2134 = vmatprep.subr.mxu0 0.0
  %2135 = vmatpush1.msra.mxu0 0.0
  %2136 = vmatprep.subr.mxu0 0.0
  %2137 = vmatpush1.msra.mxu0 0.0
  %2138 = vmatprep.subr.mxu0 0.0
  %2139 = vmatpush1.msra.mxu0 0.0
  %2140 = vmatprep.subr.mxu0 0.0
  %2141 = vmatpush1.msra.mxu0 0.0
  %2142 = vmatprep.subr.mxu0 0.0
  %2143 = vmatpush1.msra.mxu0 0.0
  %2144 = vmatprep.subr.mxu0 0.0
  %2145 = vmatpush1.msra.mxu0 0.0
  %2146 = vmatprep.subr.mxu0 0.0
  %2147 = vmatpush1.msra.mxu0 0.0
  %2148 = vmatprep.subr.mxu0 0.0
  %2149 = vmatpush1.msra.mxu0 0.0
  %2150 = vmatprep.subr.mxu0 %v2130
  %2151 = vmatpush1.msra.mxu0 %v2129
  %2152 = vmatprep.subr.mxu0 %v2128
  %2153 = vmatpush1.msra.mxu0 %v2127
  %2154 = vmatprep.subr.mxu0 %v2126
  %2155 = vmatpush1.msra.mxu0 %v2125
  %2156 = vmatprep.subr.mxu0 %v2124
  %2157 = vmatpush1.msra.mxu0 %v2123
  %2158 = vmatprep.subr.mxu0 %v2122
  %2159 = vmatpush1.msra.mxu0 %v2121
  %2160 = vmatprep.subr.mxu0 %v2120
  %2161 = vmatpush1.msra.mxu0 %v2119
  %2162 = vmatprep.subr.mxu0 %v2118
  %2163 = vmatpush1.msra.mxu0 %v2117
  %2164 = vmatprep.subr.mxu0 %v2116
  %2165 = vmatpush1.msra.mxu0 %v2115
  %2166 = vmatprep.subr.mxu0 0.0
  %2167 = vmatpush2.msra.mxu0 0.0
  %2168 = vmatprep.subr.mxu0 0.0
  %2169 = vmatpush2.msra.mxu0 0.0
  %2170 = vmatprep.subr.mxu0 0.0
  %2171 = vmatpush2.msra.mxu0 0.0
  %2172 = vmatprep.subr.mxu0 0.0
  %2173 = vmatpush2.msra.mxu0 0.0
  %2174 = vmatprep.subr.mxu0 0.0
  %2175 = vmatpush2.msra.mxu0 0.0
  %2176 = vmatprep.subr.mxu0 0.0
  %2177 = vmatpush2.msra.mxu0 0.0
  %2178 = vmatprep.subr.mxu0 0.0
  %2179 = vmatpush2.msra.mxu0 0.0
  %2180 = vmatprep.subr.mxu0 0.0
  %2181 = vmatpush2.msra.mxu0 0.0
  %2182 = vmatprep.subr.mxu0 0.0
  %2183 = vmatpush2.msra.mxu0 0.0
  %2184 = vmatprep.subr.mxu0 0.0
  %2185 = vmatpush2.msra.mxu0 0.0
  %2186 = vmatprep.subr.mxu0 0.0
  %2187 = vmatpush2.msra.mxu0 0.0
  %2188 = vmatprep.subr.mxu0 0.0
  %2189 = vmatpush2.msra.mxu0 0.0
  %2190 = vmatprep.subr.mxu0 0.0
  %2191 = vmatpush2.msra.mxu0 0.0
  %2192 = vmatprep.subr.mxu0 0.0
  %2193 = vmatpush2.msra.mxu0 0.0
  %2194 = vmatprep.subr.mxu0 0.0
  %2195 = vmatpush2.msra.mxu0 0.0
  %2196 = vmatprep.subr.mxu0 0.0
  %2197 = vmatpush2.msra.mxu0 0.0
  %2198 = vmatprep.mubr.f32.mxu0 0.0
  %2199 = vmatmul.mubr.f32.gmra.mxu0 %v2132
  %v2200 = vpop.f32.mrf.mxu0
  %v2201 = vadd.f32 0.0, %v2200
  %v2202 = vpop.f32.mrf.mxu0
  %v2203 = vadd.f32 0.0, %v2202
  %2204 = vdwg.mxu0
  %v2207 = vcombine.low %v2201, %v2203
  %v2209 = vunpack.c.l.s4 1966171168
  %v2210 = vunpack.c.0.s8 %v2209
  %v2211 = vlaneseq
  %v2212 = vshrl.u32 %v2211, 7
  %v2213 = vsub.s32 %v2210, %v2212
  %v2214 = vrot.slane %v2207, %v2213
  %v2216 = vunpack.c.l.s4 1966171168
  %v2217 = vunpack.c.0.s8 %v2216
  %v2218 = vlaneseq
  %v2219 = vshrl.u32 %v2218, 7
  %v2220 = vsub.s32 %v2217, %v2219
  %v2221 = vrot.slane %v2214, %v2220
  %v2223 = vadd.f32 %v2114, %v2221
  %v2224 = vxor.u32 %v2223, 2147483648
  %v2225 = vmul.f32 %v2224, 1.442695
  %v2226 = vpow.pop %v2225
  %v2227 = vadd.f32 %v2226, 1.0
  %v2228 = vrcp.pop %v2227
  %v2229 = vmul.f32 1.0, %v2228
  %v2230 = vtanh.pop %v2223
  %v2232 = vlaneseq
  %v2233 = vshrl.u32 %v2232, 7
  %v2234 = vsub.s32 0, %v2233
  %v2235 = vrot.slane %v2230, %v2234
  %v2236 = vlaneseq
  %v2237 = vshrl.u32 %v2236, 7
  %v2238 = vsub.s32 1, %v2237
  %v2239 = vrot.slane %v2230, %v2238
  %v2243 = vlaneseq
  %v2244 = vshrl.u32 %v2243, 7
  %v2245 = vsub.s32 0, %v2244
  %v2246 = vrot.slane %v2229, %v2245
  %v2247 = vlaneseq
  %v2248 = vshrl.u32 %v2247, 7
  %v2249 = vsub.s32 1, %v2248
  %v2250 = vrot.slane %v2229, %v2249
  %v2253 = vsel %vm821, %v2235, %v2246
  %v2254 = vsel %vm822, %v2239, %v2250
  %v2255 = vmul.f32 %v2253, %v2076
  %2257 = vrot.lane.b32.xlu0 %v2253, 64
  %v2258 = vpop.permute.xlu0 %2257
  %v2260 = vmul.f32 %v2253, %v2258
  %2262 = vrot.lane.b32.xlu0 %v2260, 32
  %v2263 = vpop.permute.xlu0 %2262
  %v2265 = vadd.f32 %v2255, %v2263
  %v2266 = vtanh.pop %v2265
  %2268 = vrot.lane.b32.xlu0 %v2266, 64
  %v2269 = vpop.permute.xlu0 %2268
  %v2271 = vmul.f32 %v2253, %v2269
  %v2272 = vmul.f32 %v2254, %v2093
  %2274 = vrot.lane.b32.xlu0 %v2254, 64
  %v2275 = vpop.permute.xlu0 %2274
  %v2277 = vmul.f32 %v2254, %v2275
  %2279 = vrot.lane.b32.xlu0 %v2277, 32
  %v2280 = vpop.permute.xlu0 %2279
  %v2282 = vadd.f32 %v2272, %v2280
  %v2283 = vtanh.pop %v2282
  %2285 = vrot.lane.b32.xlu0 %v2283, 64
  %v2286 = vpop.permute.xlu0 %2285
  %v2288 = vmul.f32 %v2254, %v2286
  %2290 = vrot.lane.b32.xlu0 %v2288, 32
  %v2291 = vpop.permute.xlu0 %2290
  %2293 = vst.msk [vmem:[#allocation3 + $0x6] sm:$0x1] %vm971, %v2291
  %2295 = vrot.lane.b32.xlu0 %v2271, 32
  %v2296 = vpop.permute.xlu0 %2295
  %2298 = vrot.lane.b32.xlu0 %v2288, 64
  %v2299 = vpop.permute.xlu0 %2298
  %v2301 = vsel %vm977, %v2296, %v2299
  %s2302 = scalar_lea.vmem [#allocation2], 16
  %v2303 = vld [vmem:[%s2302] ss:$8 sm:$0x3]
  %v2304 = vld [vmem:[%s13] sm:$0xff]
  %v2305 = vld [vmem:[%s13 + $0x8] sm:$0xff]
  %v2306 = vld [vmem:[%s13 + $0x10] sm:$0xff]
  %v2307 = vld [vmem:[%s13 + $0x18] sm:$0xff]
  %v2308 = vld [vmem:[%s13 + $0x20] sm:$0xff]
  %v2309 = vld [vmem:[%s13 + $0x28] sm:$0xff]
  %v2310 = vld [vmem:[%s13 + $0x30] sm:$0xff]
  %v2311 = vld [vmem:[%s13 + $0x38] sm:$0xff]
  %v2312 = vld [vmem:[%s13 + $0x40] sm:$0xff]
  %v2313 = vld [vmem:[%s13 + $0x48] sm:$0xff]
  %v2314 = vld [vmem:[%s13 + $0x50] sm:$0xff]
  %v2315 = vld [vmem:[%s13 + $0x58] sm:$0xff]
  %v2316 = vld [vmem:[%s13 + $0x60] sm:$0xff]
  %v2317 = vld [vmem:[%s13 + $0x68] sm:$0xff]
  %v2318 = vld [vmem:[%s13 + $0x70] sm:$0xff]
  %v2319 = vld [vmem:[%s13 + $0x78] sm:$0xff]
  %v2321 = vsel %vm840, %v2301, 0
  %2323 = vmatprep.subr.mxu0 0.0
  %2324 = vmatpush1.msra.mxu0 0.0
  %2325 = vmatprep.subr.mxu0 0.0
  %2326 = vmatpush1.msra.mxu0 0.0
  %2327 = vmatprep.subr.mxu0 0.0
  %2328 = vmatpush1.msra.mxu0 0.0
  %2329 = vmatprep.subr.mxu0 0.0
  %2330 = vmatpush1.msra.mxu0 0.0
  %2331 = vmatprep.subr.mxu0 0.0
  %2332 = vmatpush1.msra.mxu0 0.0
  %2333 = vmatprep.subr.mxu0 0.0
  %2334 = vmatpush1.msra.mxu0 0.0
  %2335 = vmatprep.subr.mxu0 0.0
  %2336 = vmatpush1.msra.mxu0 0.0
  %2337 = vmatprep.subr.mxu0 0.0
  %2338 = vmatpush1.msra.mxu0 0.0
  %2339 = vmatprep.subr.mxu0 %v2319
  %2340 = vmatpush1.msra.mxu0 %v2318
  %2341 = vmatprep.subr.mxu0 %v2317
  %2342 = vmatpush1.msra.mxu0 %v2316
  %2343 = vmatprep.subr.mxu0 %v2315
  %2344 = vmatpush1.msra.mxu0 %v2314
  %2345 = vmatprep.subr.mxu0 %v2313
  %2346 = vmatpush1.msra.mxu0 %v2312
  %2347 = vmatprep.subr.mxu0 %v2311
  %2348 = vmatpush1.msra.mxu0 %v2310
  %2349 = vmatprep.subr.mxu0 %v2309
  %2350 = vmatpush1.msra.mxu0 %v2308
  %2351 = vmatprep.subr.mxu0 %v2307
  %2352 = vmatpush1.msra.mxu0 %v2306
  %2353 = vmatprep.subr.mxu0 %v2305
  %2354 = vmatpush1.msra.mxu0 %v2304
  %2355 = vmatprep.subr.mxu0 0.0
  %2356 = vmatpush2.msra.mxu0 0.0
  %2357 = vmatprep.subr.mxu0 0.0
  %2358 = vmatpush2.msra.mxu0 0.0
  %2359 = vmatprep.subr.mxu0 0.0
  %2360 = vmatpush2.msra.mxu0 0.0
  %2361 = vmatprep.subr.mxu0 0.0
  %2362 = vmatpush2.msra.mxu0 0.0
  %2363 = vmatprep.subr.mxu0 0.0
  %2364 = vmatpush2.msra.mxu0 0.0
  %2365 = vmatprep.subr.mxu0 0.0
  %2366 = vmatpush2.msra.mxu0 0.0
  %2367 = vmatprep.subr.mxu0 0.0
  %2368 = vmatpush2.msra.mxu0 0.0
  %2369 = vmatprep.subr.mxu0 0.0
  %2370 = vmatpush2.msra.mxu0 0.0
  %2371 = vmatprep.subr.mxu0 0.0
  %2372 = vmatpush2.msra.mxu0 0.0
  %2373 = vmatprep.subr.mxu0 0.0
  %2374 = vmatpush2.msra.mxu0 0.0
  %2375 = vmatprep.subr.mxu0 0.0
  %2376 = vmatpush2.msra.mxu0 0.0
  %2377 = vmatprep.subr.mxu0 0.0
  %2378 = vmatpush2.msra.mxu0 0.0
  %2379 = vmatprep.subr.mxu0 0.0
  %2380 = vmatpush2.msra.mxu0 0.0
  %2381 = vmatprep.subr.mxu0 0.0
  %2382 = vmatpush2.msra.mxu0 0.0
  %2383 = vmatprep.subr.mxu0 0.0
  %2384 = vmatpush2.msra.mxu0 0.0
  %2385 = vmatprep.subr.mxu0 0.0
  %2386 = vmatpush2.msra.mxu0 0.0
  %2387 = vmatprep.mubr.f32.mxu0 0.0
  %2388 = vmatmul.mubr.f32.gmra.mxu0 %v2321
  %v2389 = vpop.f32.mrf.mxu0
  %v2390 = vadd.f32 0.0, %v2389
  %v2391 = vpop.f32.mrf.mxu0
  %v2392 = vadd.f32 0.0, %v2391
  %2393 = vdwg.mxu0
  %v2396 = vcombine.low %v2390, %v2392
  %v2398 = vunpack.c.l.s4 1966171168
  %v2399 = vunpack.c.0.s8 %v2398
  %v2400 = vlaneseq
  %v2401 = vshrl.u32 %v2400, 7
  %v2402 = vsub.s32 %v2399, %v2401
  %v2403 = vrot.slane %v2396, %v2402
  %v2405 = vunpack.c.l.s4 1966171168
  %v2406 = vunpack.c.0.s8 %v2405
  %v2407 = vlaneseq
  %v2408 = vshrl.u32 %v2407, 7
  %v2409 = vsub.s32 %v2406, %v2408
  %v2410 = vrot.slane %v2403, %v2409
  %v2412 = vadd.f32 %v2303, %v2410
  %v2413 = vxor.u32 %v2412, 2147483648
  %v2414 = vmul.f32 %v2413, 1.442695
  %v2415 = vpow.pop %v2414
  %v2416 = vadd.f32 %v2415, 1.0
  %v2417 = vrcp.pop %v2416
  %v2418 = vmul.f32 1.0, %v2417
  %v2419 = vtanh.pop %v2412
  %v2421 = vlaneseq
  %v2422 = vshrl.u32 %v2421, 7
  %v2423 = vsub.s32 0, %v2422
  %v2424 = vrot.slane %v2419, %v2423
  %v2425 = vlaneseq
  %v2426 = vshrl.u32 %v2425, 7
  %v2427 = vsub.s32 1, %v2426
  %v2428 = vrot.slane %v2419, %v2427
  %v2432 = vlaneseq
  %v2433 = vshrl.u32 %v2432, 7
  %v2434 = vsub.s32 0, %v2433
  %v2435 = vrot.slane %v2418, %v2434
  %v2436 = vlaneseq
  %v2437 = vshrl.u32 %v2436, 7
  %v2438 = vsub.s32 1, %v2437
  %v2439 = vrot.slane %v2418, %v2438
  %v2442 = vsel %vm821, %v2424, %v2435
  %v2443 = vsel %vm822, %v2428, %v2439
  %v2444 = vmul.f32 %v2442, %v2265
  %2446 = vrot.lane.b32.xlu0 %v2442, 64
  %v2447 = vpop.permute.xlu0 %2446
  %v2449 = vmul.f32 %v2442, %v2447
  %2451 = vrot.lane.b32.xlu0 %v2449, 32
  %v2452 = vpop.permute.xlu0 %2451
  %v2454 = vadd.f32 %v2444, %v2452
  %v2455 = vtanh.pop %v2454
  %2457 = vrot.lane.b32.xlu0 %v2455, 64
  %v2458 = vpop.permute.xlu0 %2457
  %v2460 = vmul.f32 %v2442, %v2458
  %v2461 = vmul.f32 %v2443, %v2282
  %2463 = vrot.lane.b32.xlu0 %v2443, 64
  %v2464 = vpop.permute.xlu0 %2463
  %v2466 = vmul.f32 %v2443, %v2464
  %2468 = vrot.lane.b32.xlu0 %v2466, 32
  %v2469 = vpop.permute.xlu0 %2468
  %v2471 = vadd.f32 %v2461, %v2469
  %v2472 = vtanh.pop %v2471
  %2474 = vrot.lane.b32.xlu0 %v2472, 64
  %v2475 = vpop.permute.xlu0 %2474
  %v2477 = vmul.f32 %v2443, %v2475
  %2479 = vrot.lane.b32.xlu0 %v2477, 32
  %v2480 = vpop.permute.xlu0 %2479
  %2482 = vst.msk [vmem:[#allocation3 + $0x7] sm:$0x1] %vm971, %v2480
  %2484 = vrot.lane.b32.xlu0 %v2460, 32
  %v2485 = vpop.permute.xlu0 %2484
  %2487 = vrot.lane.b32.xlu0 %v2477, 64
  %v2488 = vpop.permute.xlu0 %2487
  %v2490 = vsel %vm977, %v2485, %v2488
  %s2491 = scalar_lea.vmem [#allocation2], 17
  %v2492 = vld [vmem:[%s2491] ss:$8 sm:$0x3]
  %v2493 = vld [vmem:[%s13] sm:$0xff]
  %v2494 = vld [vmem:[%s13 + $0x8] sm:$0xff]
  %v2495 = vld [vmem:[%s13 + $0x10] sm:$0xff]
  %v2496 = vld [vmem:[%s13 + $0x18] sm:$0xff]
  %v2497 = vld [vmem:[%s13 + $0x20] sm:$0xff]
  %v2498 = vld [vmem:[%s13 + $0x28] sm:$0xff]
  %v2499 = vld [vmem:[%s13 + $0x30] sm:$0xff]
  %v2500 = vld [vmem:[%s13 + $0x38] sm:$0xff]
  %v2501 = vld [vmem:[%s13 + $0x40] sm:$0xff]
  %v2502 = vld [vmem:[%s13 + $0x48] sm:$0xff]
  %v2503 = vld [vmem:[%s13 + $0x50] sm:$0xff]
  %v2504 = vld [vmem:[%s13 + $0x58] sm:$0xff]
  %v2505 = vld [vmem:[%s13 + $0x60] sm:$0xff]
  %v2506 = vld [vmem:[%s13 + $0x68] sm:$0xff]
  %v2507 = vld [vmem:[%s13 + $0x70] sm:$0xff]
  %v2508 = vld [vmem:[%s13 + $0x78] sm:$0xff]
  %v2510 = vsel %vm840, %v2490, 0
  %2512 = vmatprep.subr.mxu0 0.0
  %2513 = vmatpush1.msra.mxu0 0.0
  %2514 = vmatprep.subr.mxu0 0.0
  %2515 = vmatpush1.msra.mxu0 0.0
  %2516 = vmatprep.subr.mxu0 0.0
  %2517 = vmatpush1.msra.mxu0 0.0
  %2518 = vmatprep.subr.mxu0 0.0
  %2519 = vmatpush1.msra.mxu0 0.0
  %2520 = vmatprep.subr.mxu0 0.0
  %2521 = vmatpush1.msra.mxu0 0.0
  %2522 = vmatprep.subr.mxu0 0.0
  %2523 = vmatpush1.msra.mxu0 0.0
  %2524 = vmatprep.subr.mxu0 0.0
  %2525 = vmatpush1.msra.mxu0 0.0
  %2526 = vmatprep.subr.mxu0 0.0
  %2527 = vmatpush1.msra.mxu0 0.0
  %2528 = vmatprep.subr.mxu0 %v2508
  %2529 = vmatpush1.msra.mxu0 %v2507
  %2530 = vmatprep.subr.mxu0 %v2506
  %2531 = vmatpush1.msra.mxu0 %v2505
  %2532 = vmatprep.subr.mxu0 %v2504
  %2533 = vmatpush1.msra.mxu0 %v2503
  %2534 = vmatprep.subr.mxu0 %v2502
  %2535 = vmatpush1.msra.mxu0 %v2501
  %2536 = vmatprep.subr.mxu0 %v2500
  %2537 = vmatpush1.msra.mxu0 %v2499
  %2538 = vmatprep.subr.mxu0 %v2498
  %2539 = vmatpush1.msra.mxu0 %v2497
  %2540 = vmatprep.subr.mxu0 %v2496
  %2541 = vmatpush1.msra.mxu0 %v2495
  %2542 = vmatprep.subr.mxu0 %v2494
  %2543 = vmatpush1.msra.mxu0 %v2493
  %2544 = vmatprep.subr.mxu0 0.0
  %2545 = vmatpush2.msra.mxu0 0.0
  %2546 = vmatprep.subr.mxu0 0.0
  %2547 = vmatpush2.msra.mxu0 0.0
  %2548 = vmatprep.subr.mxu0 0.0
  %2549 = vmatpush2.msra.mxu0 0.0
  %2550 = vmatprep.subr.mxu0 0.0
  %2551 = vmatpush2.msra.mxu0 0.0
  %2552 = vmatprep.subr.mxu0 0.0
  %2553 = vmatpush2.msra.mxu0 0.0
  %2554 = vmatprep.subr.mxu0 0.0
  %2555 = vmatpush2.msra.mxu0 0.0
  %2556 = vmatprep.subr.mxu0 0.0
  %2557 = vmatpush2.msra.mxu0 0.0
  %2558 = vmatprep.subr.mxu0 0.0
  %2559 = vmatpush2.msra.mxu0 0.0
  %2560 = vmatprep.subr.mxu0 0.0
  %2561 = vmatpush2.msra.mxu0 0.0
  %2562 = vmatprep.subr.mxu0 0.0
  %2563 = vmatpush2.msra.mxu0 0.0
  %2564 = vmatprep.subr.mxu0 0.0
  %2565 = vmatpush2.msra.mxu0 0.0
  %2566 = vmatprep.subr.mxu0 0.0
  %2567 = vmatpush2.msra.mxu0 0.0
  %2568 = vmatprep.subr.mxu0 0.0
  %2569 = vmatpush2.msra.mxu0 0.0
  %2570 = vmatprep.subr.mxu0 0.0
  %2571 = vmatpush2.msra.mxu0 0.0
  %2572 = vmatprep.subr.mxu0 0.0
  %2573 = vmatpush2.msra.mxu0 0.0
  %2574 = vmatprep.subr.mxu0 0.0
  %2575 = vmatpush2.msra.mxu0 0.0
  %2576 = vmatprep.mubr.f32.mxu0 0.0
  %2577 = vmatmul.mubr.f32.gmra.mxu0 %v2510
  %v2578 = vpop.f32.mrf.mxu0
  %v2579 = vadd.f32 0.0, %v2578
  %v2580 = vpop.f32.mrf.mxu0
  %v2581 = vadd.f32 0.0, %v2580
  %2582 = vdwg.mxu0
  %v2585 = vcombine.low %v2579, %v2581
  %v2587 = vunpack.c.l.s4 1966171168
  %v2588 = vunpack.c.0.s8 %v2587
  %v2589 = vlaneseq
  %v2590 = vshrl.u32 %v2589, 7
  %v2591 = vsub.s32 %v2588, %v2590
  %v2592 = vrot.slane %v2585, %v2591
  %v2594 = vunpack.c.l.s4 1966171168
  %v2595 = vunpack.c.0.s8 %v2594
  %v2596 = vlaneseq
  %v2597 = vshrl.u32 %v2596, 7
  %v2598 = vsub.s32 %v2595, %v2597
  %v2599 = vrot.slane %v2592, %v2598
  %v2601 = vadd.f32 %v2492, %v2599
  %v2602 = vxor.u32 %v2601, 2147483648
  %v2603 = vmul.f32 %v2602, 1.442695
  %v2604 = vpow.pop %v2603
  %v2605 = vadd.f32 %v2604, 1.0
  %v2606 = vrcp.pop %v2605
  %v2607 = vmul.f32 1.0, %v2606
  %v2608 = vtanh.pop %v2601
  %v2610 = vlaneseq
  %v2611 = vshrl.u32 %v2610, 7
  %v2612 = vsub.s32 0, %v2611
  %v2613 = vrot.slane %v2608, %v2612
  %v2614 = vlaneseq
  %v2615 = vshrl.u32 %v2614, 7
  %v2616 = vsub.s32 1, %v2615
  %v2617 = vrot.slane %v2608, %v2616
  %v2621 = vlaneseq
  %v2622 = vshrl.u32 %v2621, 7
  %v2623 = vsub.s32 0, %v2622
  %v2624 = vrot.slane %v2607, %v2623
  %v2625 = vlaneseq
  %v2626 = vshrl.u32 %v2625, 7
  %v2627 = vsub.s32 1, %v2626
  %v2628 = vrot.slane %v2607, %v2627
  %v2631 = vsel %vm821, %v2613, %v2624
  %v2632 = vsel %vm822, %v2617, %v2628
  %v2633 = vmul.f32 %v2631, %v2454
  %2635 = vrot.lane.b32.xlu0 %v2631, 64
  %v2636 = vpop.permute.xlu0 %2635
  %v2638 = vmul.f32 %v2631, %v2636
  %2640 = vrot.lane.b32.xlu0 %v2638, 32
  %v2641 = vpop.permute.xlu0 %2640
  %v2643 = vadd.f32 %v2633, %v2641
  %v2644 = vtanh.pop %v2643
  %2646 = vrot.lane.b32.xlu0 %v2644, 64
  %v2647 = vpop.permute.xlu0 %2646
  %v2649 = vmul.f32 %v2631, %v2647
  %v2650 = vmul.f32 %v2632, %v2471
  %2652 = vrot.lane.b32.xlu0 %v2632, 64
  %v2653 = vpop.permute.xlu0 %2652
  %v2655 = vmul.f32 %v2632, %v2653
  %2657 = vrot.lane.b32.xlu0 %v2655, 32
  %v2658 = vpop.permute.xlu0 %2657
  %v2660 = vadd.f32 %v2650, %v2658
  %v2661 = vtanh.pop %v2660
  %2663 = vrot.lane.b32.xlu0 %v2661, 64
  %v2664 = vpop.permute.xlu0 %2663
  %v2666 = vmul.f32 %v2632, %v2664
  %2668 = vrot.lane.b32.xlu0 %v2666, 32
  %v2669 = vpop.permute.xlu0 %2668
  %2671 = vst.msk [vmem:[#allocation3 + $0x8] sm:$0x1] %vm971, %v2669
  %2673 = vrot.lane.b32.xlu0 %v2649, 32
  %v2674 = vpop.permute.xlu0 %2673
  %2676 = vrot.lane.b32.xlu0 %v2666, 64
  %v2677 = vpop.permute.xlu0 %2676
  %v2679 = vsel %vm977, %v2674, %v2677
  %s2680 = scalar_lea.vmem [#allocation2], 18
  %v2681 = vld [vmem:[%s2680] ss:$8 sm:$0x3]
  %v2682 = vld [vmem:[%s13] sm:$0xff]
  %v2683 = vld [vmem:[%s13 + $0x8] sm:$0xff]
  %v2684 = vld [vmem:[%s13 + $0x10] sm:$0xff]
  %v2685 = vld [vmem:[%s13 + $0x18] sm:$0xff]
  %v2686 = vld [vmem:[%s13 + $0x20] sm:$0xff]
  %v2687 = vld [vmem:[%s13 + $0x28] sm:$0xff]
  %v2688 = vld [vmem:[%s13 + $0x30] sm:$0xff]
  %v2689 = vld [vmem:[%s13 + $0x38] sm:$0xff]
  %v2690 = vld [vmem:[%s13 + $0x40] sm:$0xff]
  %v2691 = vld [vmem:[%s13 + $0x48] sm:$0xff]
  %v2692 = vld [vmem:[%s13 + $0x50] sm:$0xff]
  %v2693 = vld [vmem:[%s13 + $0x58] sm:$0xff]
  %v2694 = vld [vmem:[%s13 + $0x60] sm:$0xff]
  %v2695 = vld [vmem:[%s13 + $0x68] sm:$0xff]
  %v2696 = vld [vmem:[%s13 + $0x70] sm:$0xff]
  %v2697 = vld [vmem:[%s13 + $0x78] sm:$0xff]
  %v2699 = vsel %vm840, %v2679, 0
  %2701 = vmatprep.subr.mxu0 0.0
  %2702 = vmatpush1.msra.mxu0 0.0
  %2703 = vmatprep.subr.mxu0 0.0
  %2704 = vmatpush1.msra.mxu0 0.0
  %2705 = vmatprep.subr.mxu0 0.0
  %2706 = vmatpush1.msra.mxu0 0.0
  %2707 = vmatprep.subr.mxu0 0.0
  %2708 = vmatpush1.msra.mxu0 0.0
  %2709 = vmatprep.subr.mxu0 0.0
  %2710 = vmatpush1.msra.mxu0 0.0
  %2711 = vmatprep.subr.mxu0 0.0
  %2712 = vmatpush1.msra.mxu0 0.0
  %2713 = vmatprep.subr.mxu0 0.0
  %2714 = vmatpush1.msra.mxu0 0.0
  %2715 = vmatprep.subr.mxu0 0.0
  %2716 = vmatpush1.msra.mxu0 0.0
  %2717 = vmatprep.subr.mxu0 %v2697
  %2718 = vmatpush1.msra.mxu0 %v2696
  %2719 = vmatprep.subr.mxu0 %v2695
  %2720 = vmatpush1.msra.mxu0 %v2694
  %2721 = vmatprep.subr.mxu0 %v2693
  %2722 = vmatpush1.msra.mxu0 %v2692
  %2723 = vmatprep.subr.mxu0 %v2691
  %2724 = vmatpush1.msra.mxu0 %v2690
  %2725 = vmatprep.subr.mxu0 %v2689
  %2726 = vmatpush1.msra.mxu0 %v2688
  %2727 = vmatprep.subr.mxu0 %v2687
  %2728 = vmatpush1.msra.mxu0 %v2686
  %2729 = vmatprep.subr.mxu0 %v2685
  %2730 = vmatpush1.msra.mxu0 %v2684
  %2731 = vmatprep.subr.mxu0 %v2683
  %2732 = vmatpush1.msra.mxu0 %v2682
  %2733 = vmatprep.subr.mxu0 0.0
  %2734 = vmatpush2.msra.mxu0 0.0
  %2735 = vmatprep.subr.mxu0 0.0
  %2736 = vmatpush2.msra.mxu0 0.0
  %2737 = vmatprep.subr.mxu0 0.0
  %2738 = vmatpush2.msra.mxu0 0.0
  %2739 = vmatprep.subr.mxu0 0.0
  %2740 = vmatpush2.msra.mxu0 0.0
  %2741 = vmatprep.subr.mxu0 0.0
  %2742 = vmatpush2.msra.mxu0 0.0
  %2743 = vmatprep.subr.mxu0 0.0
  %2744 = vmatpush2.msra.mxu0 0.0
  %2745 = vmatprep.subr.mxu0 0.0
  %2746 = vmatpush2.msra.mxu0 0.0
  %2747 = vmatprep.subr.mxu0 0.0
  %2748 = vmatpush2.msra.mxu0 0.0
  %2749 = vmatprep.subr.mxu0 0.0
  %2750 = vmatpush2.msra.mxu0 0.0
  %2751 = vmatprep.subr.mxu0 0.0
  %2752 = vmatpush2.msra.mxu0 0.0
  %2753 = vmatprep.subr.mxu0 0.0
  %2754 = vmatpush2.msra.mxu0 0.0
  %2755 = vmatprep.subr.mxu0 0.0
  %2756 = vmatpush2.msra.mxu0 0.0
  %2757 = vmatprep.subr.mxu0 0.0
  %2758 = vmatpush2.msra.mxu0 0.0
  %2759 = vmatprep.subr.mxu0 0.0
  %2760 = vmatpush2.msra.mxu0 0.0
  %2761 = vmatprep.subr.mxu0 0.0
  %2762 = vmatpush2.msra.mxu0 0.0
  %2763 = vmatprep.subr.mxu0 0.0
  %2764 = vmatpush2.msra.mxu0 0.0
  %2765 = vmatprep.mubr.f32.mxu0 0.0
  %2766 = vmatmul.mubr.f32.gmra.mxu0 %v2699
  %v2767 = vpop.f32.mrf.mxu0
  %v2768 = vadd.f32 0.0, %v2767
  %v2769 = vpop.f32.mrf.mxu0
  %v2770 = vadd.f32 0.0, %v2769
  %2771 = vdwg.mxu0
  %v2774 = vcombine.low %v2768, %v2770
  %v2776 = vunpack.c.l.s4 1966171168
  %v2777 = vunpack.c.0.s8 %v2776
  %v2778 = vlaneseq
  %v2779 = vshrl.u32 %v2778, 7
  %v2780 = vsub.s32 %v2777, %v2779
  %v2781 = vrot.slane %v2774, %v2780
  %v2783 = vunpack.c.l.s4 1966171168
  %v2784 = vunpack.c.0.s8 %v2783
  %v2785 = vlaneseq
  %v2786 = vshrl.u32 %v2785, 7
  %v2787 = vsub.s32 %v2784, %v2786
  %v2788 = vrot.slane %v2781, %v2787
  %v2790 = vadd.f32 %v2681, %v2788
  %v2791 = vxor.u32 %v2790, 2147483648
  %v2792 = vmul.f32 %v2791, 1.442695
  %v2793 = vpow.pop %v2792
  %v2794 = vadd.f32 %v2793, 1.0
  %v2795 = vrcp.pop %v2794
  %v2796 = vmul.f32 1.0, %v2795
  %v2797 = vtanh.pop %v2790
  %v2799 = vlaneseq
  %v2800 = vshrl.u32 %v2799, 7
  %v2801 = vsub.s32 0, %v2800
  %v2802 = vrot.slane %v2797, %v2801
  %v2803 = vlaneseq
  %v2804 = vshrl.u32 %v2803, 7
  %v2805 = vsub.s32 1, %v2804
  %v2806 = vrot.slane %v2797, %v2805
  %v2810 = vlaneseq
  %v2811 = vshrl.u32 %v2810, 7
  %v2812 = vsub.s32 0, %v2811
  %v2813 = vrot.slane %v2796, %v2812
  %v2814 = vlaneseq
  %v2815 = vshrl.u32 %v2814, 7
  %v2816 = vsub.s32 1, %v2815
  %v2817 = vrot.slane %v2796, %v2816
  %v2820 = vsel %vm821, %v2802, %v2813
  %v2821 = vsel %vm822, %v2806, %v2817
  %v2822 = vmul.f32 %v2820, %v2643
  %2824 = vrot.lane.b32.xlu0 %v2820, 64
  %v2825 = vpop.permute.xlu0 %2824
  %v2827 = vmul.f32 %v2820, %v2825
  %2829 = vrot.lane.b32.xlu0 %v2827, 32
  %v2830 = vpop.permute.xlu0 %2829
  %v2832 = vadd.f32 %v2822, %v2830
  %v2833 = vtanh.pop %v2832
  %2835 = vrot.lane.b32.xlu0 %v2833, 64
  %v2836 = vpop.permute.xlu0 %2835
  %v2838 = vmul.f32 %v2820, %v2836
  %v2839 = vmul.f32 %v2821, %v2660
  %2841 = vrot.lane.b32.xlu0 %v2821, 64
  %v2842 = vpop.permute.xlu0 %2841
  %v2844 = vmul.f32 %v2821, %v2842
  %2846 = vrot.lane.b32.xlu0 %v2844, 32
  %v2847 = vpop.permute.xlu0 %2846
  %v2849 = vadd.f32 %v2839, %v2847
  %v2850 = vtanh.pop %v2849
  %2852 = vrot.lane.b32.xlu0 %v2850, 64
  %v2853 = vpop.permute.xlu0 %2852
  %v2855 = vmul.f32 %v2821, %v2853
  %2857 = vrot.lane.b32.xlu0 %v2855, 32
  %v2858 = vpop.permute.xlu0 %2857
  %2860 = vst.msk [vmem:[#allocation3 + $0x9] sm:$0x1] %vm971, %v2858
  %2862 = vrot.lane.b32.xlu0 %v2838, 32
  %v2863 = vpop.permute.xlu0 %2862
  %2865 = vrot.lane.b32.xlu0 %v2855, 64
  %v2866 = vpop.permute.xlu0 %2865
  %v2868 = vsel %vm977, %v2863, %v2866
  %s2869 = scalar_lea.vmem [#allocation2], 19
  %v2870 = vld [vmem:[%s2869] ss:$8 sm:$0x3]
  %v2871 = vld [vmem:[%s13] sm:$0xff]
  %v2872 = vld [vmem:[%s13 + $0x8] sm:$0xff]
  %v2873 = vld [vmem:[%s13 + $0x10] sm:$0xff]
  %v2874 = vld [vmem:[%s13 + $0x18] sm:$0xff]
  %v2875 = vld [vmem:[%s13 + $0x20] sm:$0xff]
  %v2876 = vld [vmem:[%s13 + $0x28] sm:$0xff]
  %v2877 = vld [vmem:[%s13 + $0x30] sm:$0xff]
  %v2878 = vld [vmem:[%s13 + $0x38] sm:$0xff]
  %v2879 = vld [vmem:[%s13 + $0x40] sm:$0xff]
  %v2880 = vld [vmem:[%s13 + $0x48] sm:$0xff]
  %v2881 = vld [vmem:[%s13 + $0x50] sm:$0xff]
  %v2882 = vld [vmem:[%s13 + $0x58] sm:$0xff]
  %v2883 = vld [vmem:[%s13 + $0x60] sm:$0xff]
  %v2884 = vld [vmem:[%s13 + $0x68] sm:$0xff]
  %v2885 = vld [vmem:[%s13 + $0x70] sm:$0xff]
  %v2886 = vld [vmem:[%s13 + $0x78] sm:$0xff]
  %v2888 = vsel %vm840, %v2868, 0
  %2890 = vmatprep.subr.mxu0 0.0
  %2891 = vmatpush1.msra.mxu0 0.0
  %2892 = vmatprep.subr.mxu0 0.0
  %2893 = vmatpush1.msra.mxu0 0.0
  %2894 = vmatprep.subr.mxu0 0.0
  %2895 = vmatpush1.msra.mxu0 0.0
  %2896 = vmatprep.subr.mxu0 0.0
  %2897 = vmatpush1.msra.mxu0 0.0
  %2898 = vmatprep.subr.mxu0 0.0
  %2899 = vmatpush1.msra.mxu0 0.0
  %2900 = vmatprep.subr.mxu0 0.0
  %2901 = vmatpush1.msra.mxu0 0.0
  %2902 = vmatprep.subr.mxu0 0.0
  %2903 = vmatpush1.msra.mxu0 0.0
  %2904 = vmatprep.subr.mxu0 0.0
  %2905 = vmatpush1.msra.mxu0 0.0
  %2906 = vmatprep.subr.mxu0 %v2886
  %2907 = vmatpush1.msra.mxu0 %v2885
  %2908 = vmatprep.subr.mxu0 %v2884
  %2909 = vmatpush1.msra.mxu0 %v2883
  %2910 = vmatprep.subr.mxu0 %v2882
  %2911 = vmatpush1.msra.mxu0 %v2881
  %2912 = vmatprep.subr.mxu0 %v2880
  %2913 = vmatpush1.msra.mxu0 %v2879
  %2914 = vmatprep.subr.mxu0 %v2878
  %2915 = vmatpush1.msra.mxu0 %v2877
  %2916 = vmatprep.subr.mxu0 %v2876
  %2917 = vmatpush1.msra.mxu0 %v2875
  %2918 = vmatprep.subr.mxu0 %v2874
  %2919 = vmatpush1.msra.mxu0 %v2873
  %2920 = vmatprep.subr.mxu0 %v2872
  %2921 = vmatpush1.msra.mxu0 %v2871
  %2922 = vmatprep.subr.mxu0 0.0
  %2923 = vmatpush2.msra.mxu0 0.0
  %2924 = vmatprep.subr.mxu0 0.0
  %2925 = vmatpush2.msra.mxu0 0.0
  %2926 = vmatprep.subr.mxu0 0.0
  %2927 = vmatpush2.msra.mxu0 0.0
  %2928 = vmatprep.subr.mxu0 0.0
  %2929 = vmatpush2.msra.mxu0 0.0
  %2930 = vmatprep.subr.mxu0 0.0
  %2931 = vmatpush2.msra.mxu0 0.0
  %2932 = vmatprep.subr.mxu0 0.0
  %2933 = vmatpush2.msra.mxu0 0.0
  %2934 = vmatprep.subr.mxu0 0.0
  %2935 = vmatpush2.msra.mxu0 0.0
  %2936 = vmatprep.subr.mxu0 0.0
  %2937 = vmatpush2.msra.mxu0 0.0
  %2938 = vmatprep.subr.mxu0 0.0
  %2939 = vmatpush2.msra.mxu0 0.0
  %2940 = vmatprep.subr.mxu0 0.0
  %2941 = vmatpush2.msra.mxu0 0.0
  %2942 = vmatprep.subr.mxu0 0.0
  %2943 = vmatpush2.msra.mxu0 0.0
  %2944 = vmatprep.subr.mxu0 0.0
  %2945 = vmatpush2.msra.mxu0 0.0
  %2946 = vmatprep.subr.mxu0 0.0
  %2947 = vmatpush2.msra.mxu0 0.0
  %2948 = vmatprep.subr.mxu0 0.0
  %2949 = vmatpush2.msra.mxu0 0.0
  %2950 = vmatprep.subr.mxu0 0.0
  %2951 = vmatpush2.msra.mxu0 0.0
  %2952 = vmatprep.subr.mxu0 0.0
  %2953 = vmatpush2.msra.mxu0 0.0
  %2954 = vmatprep.mubr.f32.mxu0 0.0
  %2955 = vmatmul.mubr.f32.gmra.mxu0 %v2888
  %v2956 = vpop.f32.mrf.mxu0
  %v2957 = vadd.f32 0.0, %v2956
  %v2958 = vpop.f32.mrf.mxu0
  %v2959 = vadd.f32 0.0, %v2958
  %2960 = vdwg.mxu0
  %v2963 = vcombine.low %v2957, %v2959
  %v2965 = vunpack.c.l.s4 1966171168
  %v2966 = vunpack.c.0.s8 %v2965
  %v2967 = vlaneseq
  %v2968 = vshrl.u32 %v2967, 7
  %v2969 = vsub.s32 %v2966, %v2968
  %v2970 = vrot.slane %v2963, %v2969
  %v2972 = vunpack.c.l.s4 1966171168
  %v2973 = vunpack.c.0.s8 %v2972
  %v2974 = vlaneseq
  %v2975 = vshrl.u32 %v2974, 7
  %v2976 = vsub.s32 %v2973, %v2975
  %v2977 = vrot.slane %v2970, %v2976
  %v2979 = vadd.f32 %v2870, %v2977
  %v2980 = vxor.u32 %v2979, 2147483648
  %v2981 = vmul.f32 %v2980, 1.442695
  %v2982 = vpow.pop %v2981
  %v2983 = vadd.f32 %v2982, 1.0
  %v2984 = vrcp.pop %v2983
  %v2985 = vmul.f32 1.0, %v2984
  %v2986 = vtanh.pop %v2979
  %v2988 = vlaneseq
  %v2989 = vshrl.u32 %v2988, 7
  %v2990 = vsub.s32 0, %v2989
  %v2991 = vrot.slane %v2986, %v2990
  %v2992 = vlaneseq
  %v2993 = vshrl.u32 %v2992, 7
  %v2994 = vsub.s32 1, %v2993
  %v2995 = vrot.slane %v2986, %v2994
  %v2999 = vlaneseq
  %v3000 = vshrl.u32 %v2999, 7
  %v3001 = vsub.s32 0, %v3000
  %v3002 = vrot.slane %v2985, %v3001
  %v3003 = vlaneseq
  %v3004 = vshrl.u32 %v3003, 7
  %v3005 = vsub.s32 1, %v3004
  %v3006 = vrot.slane %v2985, %v3005
  %v3009 = vsel %vm821, %v2991, %v3002
  %v3010 = vsel %vm822, %v2995, %v3006
  %v3011 = vmul.f32 %v3009, %v2832
  %3013 = vrot.lane.b32.xlu0 %v3009, 64
  %v3014 = vpop.permute.xlu0 %3013
  %v3016 = vmul.f32 %v3009, %v3014
  %3018 = vrot.lane.b32.xlu0 %v3016, 32
  %v3019 = vpop.permute.xlu0 %3018
  %v3021 = vadd.f32 %v3011, %v3019
  %v3022 = vtanh.pop %v3021
  %3024 = vrot.lane.b32.xlu0 %v3022, 64
  %v3025 = vpop.permute.xlu0 %3024
  %v3027 = vmul.f32 %v3009, %v3025
  %v3028 = vmul.f32 %v3010, %v2849
  %3030 = vrot.lane.b32.xlu0 %v3010, 64
  %v3031 = vpop.permute.xlu0 %3030
  %v3033 = vmul.f32 %v3010, %v3031
  %3035 = vrot.lane.b32.xlu0 %v3033, 32
  %v3036 = vpop.permute.xlu0 %3035
  %v3038 = vadd.f32 %v3028, %v3036
  %v3039 = vtanh.pop %v3038
  %3041 = vrot.lane.b32.xlu0 %v3039, 64
  %v3042 = vpop.permute.xlu0 %3041
  %v3044 = vmul.f32 %v3010, %v3042
  %3046 = vrot.lane.b32.xlu0 %v3044, 32
  %v3047 = vpop.permute.xlu0 %3046
  %3049 = vst.msk [vmem:[#allocation3 + $0xa] sm:$0x1] %vm971, %v3047
  %3051 = vrot.lane.b32.xlu0 %v3027, 32
  %v3052 = vpop.permute.xlu0 %3051
  %3054 = vrot.lane.b32.xlu0 %v3044, 64
  %v3055 = vpop.permute.xlu0 %3054
  %v3057 = vsel %vm977, %v3052, %v3055
  %s3058 = scalar_lea.vmem [#allocation2], 20
  %v3059 = vld [vmem:[%s3058] ss:$8 sm:$0x3]
  %v3060 = vld [vmem:[%s13] sm:$0xff]
  %v3061 = vld [vmem:[%s13 + $0x8] sm:$0xff]
  %v3062 = vld [vmem:[%s13 + $0x10] sm:$0xff]
  %v3063 = vld [vmem:[%s13 + $0x18] sm:$0xff]
  %v3064 = vld [vmem:[%s13 + $0x20] sm:$0xff]
  %v3065 = vld [vmem:[%s13 + $0x28] sm:$0xff]
  %v3066 = vld [vmem:[%s13 + $0x30] sm:$0xff]
  %v3067 = vld [vmem:[%s13 + $0x38] sm:$0xff]
  %v3068 = vld [vmem:[%s13 + $0x40] sm:$0xff]
  %v3069 = vld [vmem:[%s13 + $0x48] sm:$0xff]
  %v3070 = vld [vmem:[%s13 + $0x50] sm:$0xff]
  %v3071 = vld [vmem:[%s13 + $0x58] sm:$0xff]
  %v3072 = vld [vmem:[%s13 + $0x60] sm:$0xff]
  %v3073 = vld [vmem:[%s13 + $0x68] sm:$0xff]
  %v3074 = vld [vmem:[%s13 + $0x70] sm:$0xff]
  %v3075 = vld [vmem:[%s13 + $0x78] sm:$0xff]
  %v3077 = vsel %vm840, %v3057, 0
  %3079 = vmatprep.subr.mxu0 0.0
  %3080 = vmatpush1.msra.mxu0 0.0
  %3081 = vmatprep.subr.mxu0 0.0
  %3082 = vmatpush1.msra.mxu0 0.0
  %3083 = vmatprep.subr.mxu0 0.0
  %3084 = vmatpush1.msra.mxu0 0.0
  %3085 = vmatprep.subr.mxu0 0.0
  %3086 = vmatpush1.msra.mxu0 0.0
  %3087 = vmatprep.subr.mxu0 0.0
  %3088 = vmatpush1.msra.mxu0 0.0
  %3089 = vmatprep.subr.mxu0 0.0
  %3090 = vmatpush1.msra.mxu0 0.0
  %3091 = vmatprep.subr.mxu0 0.0
  %3092 = vmatpush1.msra.mxu0 0.0
  %3093 = vmatprep.subr.mxu0 0.0
  %3094 = vmatpush1.msra.mxu0 0.0
  %3095 = vmatprep.subr.mxu0 %v3075
  %3096 = vmatpush1.msra.mxu0 %v3074
  %3097 = vmatprep.subr.mxu0 %v3073
  %3098 = vmatpush1.msra.mxu0 %v3072
  %3099 = vmatprep.subr.mxu0 %v3071
  %3100 = vmatpush1.msra.mxu0 %v3070
  %3101 = vmatprep.subr.mxu0 %v3069
  %3102 = vmatpush1.msra.mxu0 %v3068
  %3103 = vmatprep.subr.mxu0 %v3067
  %3104 = vmatpush1.msra.mxu0 %v3066
  %3105 = vmatprep.subr.mxu0 %v3065
  %3106 = vmatpush1.msra.mxu0 %v3064
  %3107 = vmatprep.subr.mxu0 %v3063
  %3108 = vmatpush1.msra.mxu0 %v3062
  %3109 = vmatprep.subr.mxu0 %v3061
  %3110 = vmatpush1.msra.mxu0 %v3060
  %3111 = vmatprep.subr.mxu0 0.0
  %3112 = vmatpush2.msra.mxu0 0.0
  %3113 = vmatprep.subr.mxu0 0.0
  %3114 = vmatpush2.msra.mxu0 0.0
  %3115 = vmatprep.subr.mxu0 0.0
  %3116 = vmatpush2.msra.mxu0 0.0
  %3117 = vmatprep.subr.mxu0 0.0
  %3118 = vmatpush2.msra.mxu0 0.0
  %3119 = vmatprep.subr.mxu0 0.0
  %3120 = vmatpush2.msra.mxu0 0.0
  %3121 = vmatprep.subr.mxu0 0.0
  %3122 = vmatpush2.msra.mxu0 0.0
  %3123 = vmatprep.subr.mxu0 0.0
  %3124 = vmatpush2.msra.mxu0 0.0
  %3125 = vmatprep.subr.mxu0 0.0
  %3126 = vmatpush2.msra.mxu0 0.0
  %3127 = vmatprep.subr.mxu0 0.0
  %3128 = vmatpush2.msra.mxu0 0.0
  %3129 = vmatprep.subr.mxu0 0.0
  %3130 = vmatpush2.msra.mxu0 0.0
  %3131 = vmatprep.subr.mxu0 0.0
  %3132 = vmatpush2.msra.mxu0 0.0
  %3133 = vmatprep.subr.mxu0 0.0
  %3134 = vmatpush2.msra.mxu0 0.0
  %3135 = vmatprep.subr.mxu0 0.0
  %3136 = vmatpush2.msra.mxu0 0.0
  %3137 = vmatprep.subr.mxu0 0.0
  %3138 = vmatpush2.msra.mxu0 0.0
  %3139 = vmatprep.subr.mxu0 0.0
  %3140 = vmatpush2.msra.mxu0 0.0
  %3141 = vmatprep.subr.mxu0 0.0
  %3142 = vmatpush2.msra.mxu0 0.0
  %3143 = vmatprep.mubr.f32.mxu0 0.0
  %3144 = vmatmul.mubr.f32.gmra.mxu0 %v3077
  %v3145 = vpop.f32.mrf.mxu0
  %v3146 = vadd.f32 0.0, %v3145
  %v3147 = vpop.f32.mrf.mxu0
  %v3148 = vadd.f32 0.0, %v3147
  %3149 = vdwg.mxu0
  %v3152 = vcombine.low %v3146, %v3148
  %v3154 = vunpack.c.l.s4 1966171168
  %v3155 = vunpack.c.0.s8 %v3154
  %v3156 = vlaneseq
  %v3157 = vshrl.u32 %v3156, 7
  %v3158 = vsub.s32 %v3155, %v3157
  %v3159 = vrot.slane %v3152, %v3158
  %v3161 = vunpack.c.l.s4 1966171168
  %v3162 = vunpack.c.0.s8 %v3161
  %v3163 = vlaneseq
  %v3164 = vshrl.u32 %v3163, 7
  %v3165 = vsub.s32 %v3162, %v3164
  %v3166 = vrot.slane %v3159, %v3165
  %v3168 = vadd.f32 %v3059, %v3166
  %v3169 = vxor.u32 %v3168, 2147483648
  %v3170 = vmul.f32 %v3169, 1.442695
  %v3171 = vpow.pop %v3170
  %v3172 = vadd.f32 %v3171, 1.0
  %v3173 = vrcp.pop %v3172
  %v3174 = vmul.f32 1.0, %v3173
  %v3175 = vtanh.pop %v3168
  %v3177 = vlaneseq
  %v3178 = vshrl.u32 %v3177, 7
  %v3179 = vsub.s32 0, %v3178
  %v3180 = vrot.slane %v3175, %v3179
  %v3181 = vlaneseq
  %v3182 = vshrl.u32 %v3181, 7
  %v3183 = vsub.s32 1, %v3182
  %v3184 = vrot.slane %v3175, %v3183
  %v3188 = vlaneseq
  %v3189 = vshrl.u32 %v3188, 7
  %v3190 = vsub.s32 0, %v3189
  %v3191 = vrot.slane %v3174, %v3190
  %v3192 = vlaneseq
  %v3193 = vshrl.u32 %v3192, 7
  %v3194 = vsub.s32 1, %v3193
  %v3195 = vrot.slane %v3174, %v3194
  %v3198 = vsel %vm821, %v3180, %v3191
  %v3199 = vsel %vm822, %v3184, %v3195
  %v3200 = vmul.f32 %v3198, %v3021
  %3202 = vrot.lane.b32.xlu0 %v3198, 64
  %v3203 = vpop.permute.xlu0 %3202
  %v3205 = vmul.f32 %v3198, %v3203
  %3207 = vrot.lane.b32.xlu0 %v3205, 32
  %v3208 = vpop.permute.xlu0 %3207
  %v3210 = vadd.f32 %v3200, %v3208
  %v3211 = vtanh.pop %v3210
  %3213 = vrot.lane.b32.xlu0 %v3211, 64
  %v3214 = vpop.permute.xlu0 %3213
  %v3216 = vmul.f32 %v3198, %v3214
  %v3217 = vmul.f32 %v3199, %v3038
  %3219 = vrot.lane.b32.xlu0 %v3199, 64
  %v3220 = vpop.permute.xlu0 %3219
  %v3222 = vmul.f32 %v3199, %v3220
  %3224 = vrot.lane.b32.xlu0 %v3222, 32
  %v3225 = vpop.permute.xlu0 %3224
  %v3227 = vadd.f32 %v3217, %v3225
  %v3228 = vtanh.pop %v3227
  %3230 = vrot.lane.b32.xlu0 %v3228, 64
  %v3231 = vpop.permute.xlu0 %3230
  %v3233 = vmul.f32 %v3199, %v3231
  %3235 = vrot.lane.b32.xlu0 %v3233, 32
  %v3236 = vpop.permute.xlu0 %3235
  %3238 = vst.msk [vmem:[#allocation3 + $0xb] sm:$0x1] %vm971, %v3236
  %3240 = vrot.lane.b32.xlu0 %v3216, 32
  %v3241 = vpop.permute.xlu0 %3240
  %3243 = vrot.lane.b32.xlu0 %v3233, 64
  %v3244 = vpop.permute.xlu0 %3243
  %v3246 = vsel %vm977, %v3241, %v3244
  %s3247 = scalar_lea.vmem [#allocation2], 21
  %v3248 = vld [vmem:[%s3247] ss:$8 sm:$0x3]
  %v3249 = vld [vmem:[%s13] sm:$0xff]
  %v3250 = vld [vmem:[%s13 + $0x8] sm:$0xff]
  %v3251 = vld [vmem:[%s13 + $0x10] sm:$0xff]
  %v3252 = vld [vmem:[%s13 + $0x18] sm:$0xff]
  %v3253 = vld [vmem:[%s13 + $0x20] sm:$0xff]
  %v3254 = vld [vmem:[%s13 + $0x28] sm:$0xff]
  %v3255 = vld [vmem:[%s13 + $0x30] sm:$0xff]
  %v3256 = vld [vmem:[%s13 + $0x38] sm:$0xff]
  %v3257 = vld [vmem:[%s13 + $0x40] sm:$0xff]
  %v3258 = vld [vmem:[%s13 + $0x48] sm:$0xff]
  %v3259 = vld [vmem:[%s13 + $0x50] sm:$0xff]
  %v3260 = vld [vmem:[%s13 + $0x58] sm:$0xff]
  %v3261 = vld [vmem:[%s13 + $0x60] sm:$0xff]
  %v3262 = vld [vmem:[%s13 + $0x68] sm:$0xff]
  %v3263 = vld [vmem:[%s13 + $0x70] sm:$0xff]
  %v3264 = vld [vmem:[%s13 + $0x78] sm:$0xff]
  %v3266 = vsel %vm840, %v3246, 0
  %3268 = vmatprep.subr.mxu0 0.0
  %3269 = vmatpush1.msra.mxu0 0.0
  %3270 = vmatprep.subr.mxu0 0.0
  %3271 = vmatpush1.msra.mxu0 0.0
  %3272 = vmatprep.subr.mxu0 0.0
  %3273 = vmatpush1.msra.mxu0 0.0
  %3274 = vmatprep.subr.mxu0 0.0
  %3275 = vmatpush1.msra.mxu0 0.0
  %3276 = vmatprep.subr.mxu0 0.0
  %3277 = vmatpush1.msra.mxu0 0.0
  %3278 = vmatprep.subr.mxu0 0.0
  %3279 = vmatpush1.msra.mxu0 0.0
  %3280 = vmatprep.subr.mxu0 0.0
  %3281 = vmatpush1.msra.mxu0 0.0
  %3282 = vmatprep.subr.mxu0 0.0
  %3283 = vmatpush1.msra.mxu0 0.0
  %3284 = vmatprep.subr.mxu0 %v3264
  %3285 = vmatpush1.msra.mxu0 %v3263
  %3286 = vmatprep.subr.mxu0 %v3262
  %3287 = vmatpush1.msra.mxu0 %v3261
  %3288 = vmatprep.subr.mxu0 %v3260
  %3289 = vmatpush1.msra.mxu0 %v3259
  %3290 = vmatprep.subr.mxu0 %v3258
  %3291 = vmatpush1.msra.mxu0 %v3257
  %3292 = vmatprep.subr.mxu0 %v3256
  %3293 = vmatpush1.msra.mxu0 %v3255
  %3294 = vmatprep.subr.mxu0 %v3254
  %3295 = vmatpush1.msra.mxu0 %v3253
  %3296 = vmatprep.subr.mxu0 %v3252
  %3297 = vmatpush1.msra.mxu0 %v3251
  %3298 = vmatprep.subr.mxu0 %v3250
  %3299 = vmatpush1.msra.mxu0 %v3249
  %3300 = vmatprep.subr.mxu0 0.0
  %3301 = vmatpush2.msra.mxu0 0.0
  %3302 = vmatprep.subr.mxu0 0.0
  %3303 = vmatpush2.msra.mxu0 0.0
  %3304 = vmatprep.subr.mxu0 0.0
  %3305 = vmatpush2.msra.mxu0 0.0
  %3306 = vmatprep.subr.mxu0 0.0
  %3307 = vmatpush2.msra.mxu0 0.0
  %3308 = vmatprep.subr.mxu0 0.0
  %3309 = vmatpush2.msra.mxu0 0.0
  %3310 = vmatprep.subr.mxu0 0.0
  %3311 = vmatpush2.msra.mxu0 0.0
  %3312 = vmatprep.subr.mxu0 0.0
  %3313 = vmatpush2.msra.mxu0 0.0
  %3314 = vmatprep.subr.mxu0 0.0
  %3315 = vmatpush2.msra.mxu0 0.0
  %3316 = vmatprep.subr.mxu0 0.0
  %3317 = vmatpush2.msra.mxu0 0.0
  %3318 = vmatprep.subr.mxu0 0.0
  %3319 = vmatpush2.msra.mxu0 0.0
  %3320 = vmatprep.subr.mxu0 0.0
  %3321 = vmatpush2.msra.mxu0 0.0
  %3322 = vmatprep.subr.mxu0 0.0
  %3323 = vmatpush2.msra.mxu0 0.0
  %3324 = vmatprep.subr.mxu0 0.0
  %3325 = vmatpush2.msra.mxu0 0.0
  %3326 = vmatprep.subr.mxu0 0.0
  %3327 = vmatpush2.msra.mxu0 0.0
  %3328 = vmatprep.subr.mxu0 0.0
  %3329 = vmatpush2.msra.mxu0 0.0
  %3330 = vmatprep.subr.mxu0 0.0
  %3331 = vmatpush2.msra.mxu0 0.0
  %3332 = vmatprep.mubr.f32.mxu0 0.0
  %3333 = vmatmul.mubr.f32.gmra.mxu0 %v3266
  %v3334 = vpop.f32.mrf.mxu0
  %v3335 = vadd.f32 0.0, %v3334
  %v3336 = vpop.f32.mrf.mxu0
  %v3337 = vadd.f32 0.0, %v3336
  %3338 = vdwg.mxu0
  %v3341 = vcombine.low %v3335, %v3337
  %v3343 = vunpack.c.l.s4 1966171168
  %v3344 = vunpack.c.0.s8 %v3343
  %v3345 = vlaneseq
  %v3346 = vshrl.u32 %v3345, 7
  %v3347 = vsub.s32 %v3344, %v3346
  %v3348 = vrot.slane %v3341, %v3347
  %v3350 = vunpack.c.l.s4 1966171168
  %v3351 = vunpack.c.0.s8 %v3350
  %v3352 = vlaneseq
  %v3353 = vshrl.u32 %v3352, 7
  %v3354 = vsub.s32 %v3351, %v3353
  %v3355 = vrot.slane %v3348, %v3354
  %v3357 = vadd.f32 %v3248, %v3355
  %v3358 = vxor.u32 %v3357, 2147483648
  %v3359 = vmul.f32 %v3358, 1.442695
  %v3360 = vpow.pop %v3359
  %v3361 = vadd.f32 %v3360, 1.0
  %v3362 = vrcp.pop %v3361
  %v3363 = vmul.f32 1.0, %v3362
  %v3364 = vtanh.pop %v3357
  %v3366 = vlaneseq
  %v3367 = vshrl.u32 %v3366, 7
  %v3368 = vsub.s32 0, %v3367
  %v3369 = vrot.slane %v3364, %v3368
  %v3370 = vlaneseq
  %v3371 = vshrl.u32 %v3370, 7
  %v3372 = vsub.s32 1, %v3371
  %v3373 = vrot.slane %v3364, %v3372
  %v3377 = vlaneseq
  %v3378 = vshrl.u32 %v3377, 7
  %v3379 = vsub.s32 0, %v3378
  %v3380 = vrot.slane %v3363, %v3379
  %v3381 = vlaneseq
  %v3382 = vshrl.u32 %v3381, 7
  %v3383 = vsub.s32 1, %v3382
  %v3384 = vrot.slane %v3363, %v3383
  %v3387 = vsel %vm821, %v3369, %v3380
  %v3388 = vsel %vm822, %v3373, %v3384
  %v3389 = vmul.f32 %v3387, %v3210
  %3391 = vrot.lane.b32.xlu0 %v3387, 64
  %v3392 = vpop.permute.xlu0 %3391
  %v3394 = vmul.f32 %v3387, %v3392
  %3396 = vrot.lane.b32.xlu0 %v3394, 32
  %v3397 = vpop.permute.xlu0 %3396
  %v3399 = vadd.f32 %v3389, %v3397
  %v3400 = vtanh.pop %v3399
  %3402 = vrot.lane.b32.xlu0 %v3400, 64
  %v3403 = vpop.permute.xlu0 %3402
  %v3405 = vmul.f32 %v3387, %v3403
  %v3406 = vmul.f32 %v3388, %v3227
  %3408 = vrot.lane.b32.xlu0 %v3388, 64
  %v3409 = vpop.permute.xlu0 %3408
  %v3411 = vmul.f32 %v3388, %v3409
  %3413 = vrot.lane.b32.xlu0 %v3411, 32
  %v3414 = vpop.permute.xlu0 %3413
  %v3416 = vadd.f32 %v3406, %v3414
  %v3417 = vtanh.pop %v3416
  %3419 = vrot.lane.b32.xlu0 %v3417, 64
  %v3420 = vpop.permute.xlu0 %3419
  %v3422 = vmul.f32 %v3388, %v3420
  %3424 = vrot.lane.b32.xlu0 %v3422, 32
  %v3425 = vpop.permute.xlu0 %3424
  %3427 = vst.msk [vmem:[#allocation3 + $0xc] sm:$0x1] %vm971, %v3425
  %3429 = vrot.lane.b32.xlu0 %v3405, 32
  %v3430 = vpop.permute.xlu0 %3429
  %3432 = vrot.lane.b32.xlu0 %v3422, 64
  %v3433 = vpop.permute.xlu0 %3432
  %v3435 = vsel %vm977, %v3430, %v3433
  %s3436 = scalar_lea.vmem [#allocation2], 22
  %v3437 = vld [vmem:[%s3436] ss:$8 sm:$0x3]
  %v3438 = vld [vmem:[%s13] sm:$0xff]
  %v3439 = vld [vmem:[%s13 + $0x8] sm:$0xff]
  %v3440 = vld [vmem:[%s13 + $0x10] sm:$0xff]
  %v3441 = vld [vmem:[%s13 + $0x18] sm:$0xff]
  %v3442 = vld [vmem:[%s13 + $0x20] sm:$0xff]
  %v3443 = vld [vmem:[%s13 + $0x28] sm:$0xff]
  %v3444 = vld [vmem:[%s13 + $0x30] sm:$0xff]
  %v3445 = vld [vmem:[%s13 + $0x38] sm:$0xff]
  %v3446 = vld [vmem:[%s13 + $0x40] sm:$0xff]
  %v3447 = vld [vmem:[%s13 + $0x48] sm:$0xff]
  %v3448 = vld [vmem:[%s13 + $0x50] sm:$0xff]
  %v3449 = vld [vmem:[%s13 + $0x58] sm:$0xff]
  %v3450 = vld [vmem:[%s13 + $0x60] sm:$0xff]
  %v3451 = vld [vmem:[%s13 + $0x68] sm:$0xff]
  %v3452 = vld [vmem:[%s13 + $0x70] sm:$0xff]
  %v3453 = vld [vmem:[%s13 + $0x78] sm:$0xff]
  %v3455 = vsel %vm840, %v3435, 0
  %3457 = vmatprep.subr.mxu0 0.0
  %3458 = vmatpush1.msra.mxu0 0.0
  %3459 = vmatprep.subr.mxu0 0.0
  %3460 = vmatpush1.msra.mxu0 0.0
  %3461 = vmatprep.subr.mxu0 0.0
  %3462 = vmatpush1.msra.mxu0 0.0
  %3463 = vmatprep.subr.mxu0 0.0
  %3464 = vmatpush1.msra.mxu0 0.0
  %3465 = vmatprep.subr.mxu0 0.0
  %3466 = vmatpush1.msra.mxu0 0.0
  %3467 = vmatprep.subr.mxu0 0.0
  %3468 = vmatpush1.msra.mxu0 0.0
  %3469 = vmatprep.subr.mxu0 0.0
  %3470 = vmatpush1.msra.mxu0 0.0
  %3471 = vmatprep.subr.mxu0 0.0
  %3472 = vmatpush1.msra.mxu0 0.0
  %3473 = vmatprep.subr.mxu0 %v3453
  %3474 = vmatpush1.msra.mxu0 %v3452
  %3475 = vmatprep.subr.mxu0 %v3451
  %3476 = vmatpush1.msra.mxu0 %v3450
  %3477 = vmatprep.subr.mxu0 %v3449
  %3478 = vmatpush1.msra.mxu0 %v3448
  %3479 = vmatprep.subr.mxu0 %v3447
  %3480 = vmatpush1.msra.mxu0 %v3446
  %3481 = vmatprep.subr.mxu0 %v3445
  %3482 = vmatpush1.msra.mxu0 %v3444
  %3483 = vmatprep.subr.mxu0 %v3443
  %3484 = vmatpush1.msra.mxu0 %v3442
  %3485 = vmatprep.subr.mxu0 %v3441
  %3486 = vmatpush1.msra.mxu0 %v3440
  %3487 = vmatprep.subr.mxu0 %v3439
  %3488 = vmatpush1.msra.mxu0 %v3438
  %3489 = vmatprep.subr.mxu0 0.0
  %3490 = vmatpush2.msra.mxu0 0.0
  %3491 = vmatprep.subr.mxu0 0.0
  %3492 = vmatpush2.msra.mxu0 0.0
  %3493 = vmatprep.subr.mxu0 0.0
  %3494 = vmatpush2.msra.mxu0 0.0
  %3495 = vmatprep.subr.mxu0 0.0
  %3496 = vmatpush2.msra.mxu0 0.0
  %3497 = vmatprep.subr.mxu0 0.0
  %3498 = vmatpush2.msra.mxu0 0.0
  %3499 = vmatprep.subr.mxu0 0.0
  %3500 = vmatpush2.msra.mxu0 0.0
  %3501 = vmatprep.subr.mxu0 0.0
  %3502 = vmatpush2.msra.mxu0 0.0
  %3503 = vmatprep.subr.mxu0 0.0
  %3504 = vmatpush2.msra.mxu0 0.0
  %3505 = vmatprep.subr.mxu0 0.0
  %3506 = vmatpush2.msra.mxu0 0.0
  %3507 = vmatprep.subr.mxu0 0.0
  %3508 = vmatpush2.msra.mxu0 0.0
  %3509 = vmatprep.subr.mxu0 0.0
  %3510 = vmatpush2.msra.mxu0 0.0
  %3511 = vmatprep.subr.mxu0 0.0
  %3512 = vmatpush2.msra.mxu0 0.0
  %3513 = vmatprep.subr.mxu0 0.0
  %3514 = vmatpush2.msra.mxu0 0.0
  %3515 = vmatprep.subr.mxu0 0.0
  %3516 = vmatpush2.msra.mxu0 0.0
  %3517 = vmatprep.subr.mxu0 0.0
  %3518 = vmatpush2.msra.mxu0 0.0
  %3519 = vmatprep.subr.mxu0 0.0
  %3520 = vmatpush2.msra.mxu0 0.0
  %3521 = vmatprep.mubr.f32.mxu0 0.0
  %3522 = vmatmul.mubr.f32.gmra.mxu0 %v3455
  %v3523 = vpop.f32.mrf.mxu0
  %v3524 = vadd.f32 0.0, %v3523
  %v3525 = vpop.f32.mrf.mxu0
  %v3526 = vadd.f32 0.0, %v3525
  %3527 = vdwg.mxu0
  %v3530 = vcombine.low %v3524, %v3526
  %v3532 = vunpack.c.l.s4 1966171168
  %v3533 = vunpack.c.0.s8 %v3532
  %v3534 = vlaneseq
  %v3535 = vshrl.u32 %v3534, 7
  %v3536 = vsub.s32 %v3533, %v3535
  %v3537 = vrot.slane %v3530, %v3536
  %v3539 = vunpack.c.l.s4 1966171168
  %v3540 = vunpack.c.0.s8 %v3539
  %v3541 = vlaneseq
  %v3542 = vshrl.u32 %v3541, 7
  %v3543 = vsub.s32 %v3540, %v3542
  %v3544 = vrot.slane %v3537, %v3543
  %v3546 = vadd.f32 %v3437, %v3544
  %v3547 = vxor.u32 %v3546, 2147483648
  %v3548 = vmul.f32 %v3547, 1.442695
  %v3549 = vpow.pop %v3548
  %v3550 = vadd.f32 %v3549, 1.0
  %v3551 = vrcp.pop %v3550
  %v3552 = vmul.f32 1.0, %v3551
  %v3553 = vtanh.pop %v3546
  %v3555 = vlaneseq
  %v3556 = vshrl.u32 %v3555, 7
  %v3557 = vsub.s32 0, %v3556
  %v3558 = vrot.slane %v3553, %v3557
  %v3559 = vlaneseq
  %v3560 = vshrl.u32 %v3559, 7
  %v3561 = vsub.s32 1, %v3560
  %v3562 = vrot.slane %v3553, %v3561
  %v3566 = vlaneseq
  %v3567 = vshrl.u32 %v3566, 7
  %v3568 = vsub.s32 0, %v3567
  %v3569 = vrot.slane %v3552, %v3568
  %v3570 = vlaneseq
  %v3571 = vshrl.u32 %v3570, 7
  %v3572 = vsub.s32 1, %v3571
  %v3573 = vrot.slane %v3552, %v3572
  %v3576 = vsel %vm821, %v3558, %v3569
  %v3577 = vsel %vm822, %v3562, %v3573
  %v3578 = vmul.f32 %v3576, %v3399
  %3580 = vrot.lane.b32.xlu0 %v3576, 64
  %v3581 = vpop.permute.xlu0 %3580
  %v3583 = vmul.f32 %v3576, %v3581
  %3585 = vrot.lane.b32.xlu0 %v3583, 32
  %v3586 = vpop.permute.xlu0 %3585
  %v3588 = vadd.f32 %v3578, %v3586
  %v3589 = vtanh.pop %v3588
  %3591 = vrot.lane.b32.xlu0 %v3589, 64
  %v3592 = vpop.permute.xlu0 %3591
  %v3594 = vmul.f32 %v3576, %v3592
  %v3595 = vmul.f32 %v3577, %v3416
  %3597 = vrot.lane.b32.xlu0 %v3577, 64
  %v3598 = vpop.permute.xlu0 %3597
  %v3600 = vmul.f32 %v3577, %v3598
  %3602 = vrot.lane.b32.xlu0 %v3600, 32
  %v3603 = vpop.permute.xlu0 %3602
  %v3605 = vadd.f32 %v3595, %v3603
  %v3606 = vtanh.pop %v3605
  %3608 = vrot.lane.b32.xlu0 %v3606, 64
  %v3609 = vpop.permute.xlu0 %3608
  %v3611 = vmul.f32 %v3577, %v3609
  %3613 = vrot.lane.b32.xlu0 %v3611, 32
  %v3614 = vpop.permute.xlu0 %3613
  %3616 = vst.msk [vmem:[#allocation3 + $0xd] sm:$0x1] %vm971, %v3614
  %3618 = vrot.lane.b32.xlu0 %v3594, 32
  %v3619 = vpop.permute.xlu0 %3618
  %3621 = vrot.lane.b32.xlu0 %v3611, 64
  %v3622 = vpop.permute.xlu0 %3621
  %v3624 = vsel %vm977, %v3619, %v3622
  %s3625 = scalar_lea.vmem [#allocation2], 23
  %v3626 = vld [vmem:[%s3625] ss:$8 sm:$0x3]
  %v3627 = vld [vmem:[%s13] sm:$0xff]
  %v3628 = vld [vmem:[%s13 + $0x8] sm:$0xff]
  %v3629 = vld [vmem:[%s13 + $0x10] sm:$0xff]
  %v3630 = vld [vmem:[%s13 + $0x18] sm:$0xff]
  %v3631 = vld [vmem:[%s13 + $0x20] sm:$0xff]
  %v3632 = vld [vmem:[%s13 + $0x28] sm:$0xff]
  %v3633 = vld [vmem:[%s13 + $0x30] sm:$0xff]
  %v3634 = vld [vmem:[%s13 + $0x38] sm:$0xff]
  %v3635 = vld [vmem:[%s13 + $0x40] sm:$0xff]
  %v3636 = vld [vmem:[%s13 + $0x48] sm:$0xff]
  %v3637 = vld [vmem:[%s13 + $0x50] sm:$0xff]
  %v3638 = vld [vmem:[%s13 + $0x58] sm:$0xff]
  %v3639 = vld [vmem:[%s13 + $0x60] sm:$0xff]
  %v3640 = vld [vmem:[%s13 + $0x68] sm:$0xff]
  %v3641 = vld [vmem:[%s13 + $0x70] sm:$0xff]
  %v3642 = vld [vmem:[%s13 + $0x78] sm:$0xff]
  %v3644 = vsel %vm840, %v3624, 0
  %3646 = vmatprep.subr.mxu0 0.0
  %3647 = vmatpush1.msra.mxu0 0.0
  %3648 = vmatprep.subr.mxu0 0.0
  %3649 = vmatpush1.msra.mxu0 0.0
  %3650 = vmatprep.subr.mxu0 0.0
  %3651 = vmatpush1.msra.mxu0 0.0
  %3652 = vmatprep.subr.mxu0 0.0
  %3653 = vmatpush1.msra.mxu0 0.0
  %3654 = vmatprep.subr.mxu0 0.0
  %3655 = vmatpush1.msra.mxu0 0.0
  %3656 = vmatprep.subr.mxu0 0.0
  %3657 = vmatpush1.msra.mxu0 0.0
  %3658 = vmatprep.subr.mxu0 0.0
  %3659 = vmatpush1.msra.mxu0 0.0
  %3660 = vmatprep.subr.mxu0 0.0
  %3661 = vmatpush1.msra.mxu0 0.0
  %3662 = vmatprep.subr.mxu0 %v3642
  %3663 = vmatpush1.msra.mxu0 %v3641
  %3664 = vmatprep.subr.mxu0 %v3640
  %3665 = vmatpush1.msra.mxu0 %v3639
  %3666 = vmatprep.subr.mxu0 %v3638
  %3667 = vmatpush1.msra.mxu0 %v3637
  %3668 = vmatprep.subr.mxu0 %v3636
  %3669 = vmatpush1.msra.mxu0 %v3635
  %3670 = vmatprep.subr.mxu0 %v3634
  %3671 = vmatpush1.msra.mxu0 %v3633
  %3672 = vmatprep.subr.mxu0 %v3632
  %3673 = vmatpush1.msra.mxu0 %v3631
  %3674 = vmatprep.subr.mxu0 %v3630
  %3675 = vmatpush1.msra.mxu0 %v3629
  %3676 = vmatprep.subr.mxu0 %v3628
  %3677 = vmatpush1.msra.mxu0 %v3627
  %3678 = vmatprep.subr.mxu0 0.0
  %3679 = vmatpush2.msra.mxu0 0.0
  %3680 = vmatprep.subr.mxu0 0.0
  %3681 = vmatpush2.msra.mxu0 0.0
  %3682 = vmatprep.subr.mxu0 0.0
  %3683 = vmatpush2.msra.mxu0 0.0
  %3684 = vmatprep.subr.mxu0 0.0
  %3685 = vmatpush2.msra.mxu0 0.0
  %3686 = vmatprep.subr.mxu0 0.0
  %3687 = vmatpush2.msra.mxu0 0.0
  %3688 = vmatprep.subr.mxu0 0.0
  %3689 = vmatpush2.msra.mxu0 0.0
  %3690 = vmatprep.subr.mxu0 0.0
  %3691 = vmatpush2.msra.mxu0 0.0
  %3692 = vmatprep.subr.mxu0 0.0
  %3693 = vmatpush2.msra.mxu0 0.0
  %3694 = vmatprep.subr.mxu0 0.0
  %3695 = vmatpush2.msra.mxu0 0.0
  %3696 = vmatprep.subr.mxu0 0.0
  %3697 = vmatpush2.msra.mxu0 0.0
  %3698 = vmatprep.subr.mxu0 0.0
  %3699 = vmatpush2.msra.mxu0 0.0
  %3700 = vmatprep.subr.mxu0 0.0
  %3701 = vmatpush2.msra.mxu0 0.0
  %3702 = vmatprep.subr.mxu0 0.0
  %3703 = vmatpush2.msra.mxu0 0.0
  %3704 = vmatprep.subr.mxu0 0.0
  %3705 = vmatpush2.msra.mxu0 0.0
  %3706 = vmatprep.subr.mxu0 0.0
  %3707 = vmatpush2.msra.mxu0 0.0
  %3708 = vmatprep.subr.mxu0 0.0
  %3709 = vmatpush2.msra.mxu0 0.0
  %3710 = vmatprep.mubr.f32.mxu0 0.0
  %3711 = vmatmul.mubr.f32.gmra.mxu0 %v3644
  %v3712 = vpop.f32.mrf.mxu0
  %v3713 = vadd.f32 0.0, %v3712
  %v3714 = vpop.f32.mrf.mxu0
  %v3715 = vadd.f32 0.0, %v3714
  %3716 = vdwg.mxu0
  %v3719 = vcombine.low %v3713, %v3715
  %v3721 = vunpack.c.l.s4 1966171168
  %v3722 = vunpack.c.0.s8 %v3721
  %v3723 = vlaneseq
  %v3724 = vshrl.u32 %v3723, 7
  %v3725 = vsub.s32 %v3722, %v3724
  %v3726 = vrot.slane %v3719, %v3725
  %v3728 = vunpack.c.l.s4 1966171168
  %v3729 = vunpack.c.0.s8 %v3728
  %v3730 = vlaneseq
  %v3731 = vshrl.u32 %v3730, 7
  %v3732 = vsub.s32 %v3729, %v3731
  %v3733 = vrot.slane %v3726, %v3732
  %v3735 = vadd.f32 %v3626, %v3733
  %v3736 = vxor.u32 %v3735, 2147483648
  %v3737 = vmul.f32 %v3736, 1.442695
  %v3738 = vpow.pop %v3737
  %v3739 = vadd.f32 %v3738, 1.0
  %v3740 = vrcp.pop %v3739
  %v3741 = vmul.f32 1.0, %v3740
  %v3742 = vtanh.pop %v3735
  %v3744 = vlaneseq
  %v3745 = vshrl.u32 %v3744, 7
  %v3746 = vsub.s32 0, %v3745
  %v3747 = vrot.slane %v3742, %v3746
  %v3748 = vlaneseq
  %v3749 = vshrl.u32 %v3748, 7
  %v3750 = vsub.s32 1, %v3749
  %v3751 = vrot.slane %v3742, %v3750
  %v3755 = vlaneseq
  %v3756 = vshrl.u32 %v3755, 7
  %v3757 = vsub.s32 0, %v3756
  %v3758 = vrot.slane %v3741, %v3757
  %v3759 = vlaneseq
  %v3760 = vshrl.u32 %v3759, 7
  %v3761 = vsub.s32 1, %v3760
  %v3762 = vrot.slane %v3741, %v3761
  %v3765 = vsel %vm821, %v3747, %v3758
  %v3766 = vsel %vm822, %v3751, %v3762
  %v3767 = vmul.f32 %v3765, %v3588
  %3769 = vrot.lane.b32.xlu0 %v3765, 64
  %v3770 = vpop.permute.xlu0 %3769
  %v3772 = vmul.f32 %v3765, %v3770
  %3774 = vrot.lane.b32.xlu0 %v3772, 32
  %v3775 = vpop.permute.xlu0 %3774
  %v3777 = vadd.f32 %v3767, %v3775
  %v3778 = vtanh.pop %v3777
  %3780 = vrot.lane.b32.xlu0 %v3778, 64
  %v3781 = vpop.permute.xlu0 %3780
  %v3783 = vmul.f32 %v3765, %v3781
  %v3784 = vmul.f32 %v3766, %v3605
  %3786 = vrot.lane.b32.xlu0 %v3766, 64
  %v3787 = vpop.permute.xlu0 %3786
  %v3789 = vmul.f32 %v3766, %v3787
  %3791 = vrot.lane.b32.xlu0 %v3789, 32
  %v3792 = vpop.permute.xlu0 %3791
  %v3794 = vadd.f32 %v3784, %v3792
  %v3795 = vtanh.pop %v3794
  %3797 = vrot.lane.b32.xlu0 %v3795, 64
  %v3798 = vpop.permute.xlu0 %3797
  %v3800 = vmul.f32 %v3766, %v3798
  %3802 = vrot.lane.b32.xlu0 %v3800, 32
  %v3803 = vpop.permute.xlu0 %3802
  %3805 = vst.msk [vmem:[#allocation3 + $0xe] sm:$0x1] %vm971, %v3803
  %3807 = vrot.lane.b32.xlu0 %v3783, 32
  %v3808 = vpop.permute.xlu0 %3807
  %3810 = vrot.lane.b32.xlu0 %v3800, 64
  %v3811 = vpop.permute.xlu0 %3810
  %v3813 = vsel %vm977, %v3808, %v3811
  %s3814 = scalar_lea.vmem [#allocation2], 32
  %v3815 = vld [vmem:[%s3814] ss:$8 sm:$0x3]
  %v3816 = vld [vmem:[%s13] sm:$0xff]
  %v3817 = vld [vmem:[%s13 + $0x8] sm:$0xff]
  %v3818 = vld [vmem:[%s13 + $0x10] sm:$0xff]
  %v3819 = vld [vmem:[%s13 + $0x18] sm:$0xff]
  %v3820 = vld [vmem:[%s13 + $0x20] sm:$0xff]
  %v3821 = vld [vmem:[%s13 + $0x28] sm:$0xff]
  %v3822 = vld [vmem:[%s13 + $0x30] sm:$0xff]
  %v3823 = vld [vmem:[%s13 + $0x38] sm:$0xff]
  %v3824 = vld [vmem:[%s13 + $0x40] sm:$0xff]
  %v3825 = vld [vmem:[%s13 + $0x48] sm:$0xff]
  %v3826 = vld [vmem:[%s13 + $0x50] sm:$0xff]
  %v3827 = vld [vmem:[%s13 + $0x58] sm:$0xff]
  %v3828 = vld [vmem:[%s13 + $0x60] sm:$0xff]
  %v3829 = vld [vmem:[%s13 + $0x68] sm:$0xff]
  %v3830 = vld [vmem:[%s13 + $0x70] sm:$0xff]
  %v3831 = vld [vmem:[%s13 + $0x78] sm:$0xff]
  %v3833 = vsel %vm840, %v3813, 0
  %3835 = vmatprep.subr.mxu0 0.0
  %3836 = vmatpush1.msra.mxu0 0.0
  %3837 = vmatprep.subr.mxu0 0.0
  %3838 = vmatpush1.msra.mxu0 0.0
  %3839 = vmatprep.subr.mxu0 0.0
  %3840 = vmatpush1.msra.mxu0 0.0
  %3841 = vmatprep.subr.mxu0 0.0
  %3842 = vmatpush1.msra.mxu0 0.0
  %3843 = vmatprep.subr.mxu0 0.0
  %3844 = vmatpush1.msra.mxu0 0.0
  %3845 = vmatprep.subr.mxu0 0.0
  %3846 = vmatpush1.msra.mxu0 0.0
  %3847 = vmatprep.subr.mxu0 0.0
  %3848 = vmatpush1.msra.mxu0 0.0
  %3849 = vmatprep.subr.mxu0 0.0
  %3850 = vmatpush1.msra.mxu0 0.0
  %3851 = vmatprep.subr.mxu0 %v3831
  %3852 = vmatpush1.msra.mxu0 %v3830
  %3853 = vmatprep.subr.mxu0 %v3829
  %3854 = vmatpush1.msra.mxu0 %v3828
  %3855 = vmatprep.subr.mxu0 %v3827
  %3856 = vmatpush1.msra.mxu0 %v3826
  %3857 = vmatprep.subr.mxu0 %v3825
  %3858 = vmatpush1.msra.mxu0 %v3824
  %3859 = vmatprep.subr.mxu0 %v3823
  %3860 = vmatpush1.msra.mxu0 %v3822
  %3861 = vmatprep.subr.mxu0 %v3821
  %3862 = vmatpush1.msra.mxu0 %v3820
  %3863 = vmatprep.subr.mxu0 %v3819
  %3864 = vmatpush1.msra.mxu0 %v3818
  %3865 = vmatprep.subr.mxu0 %v3817
  %3866 = vmatpush1.msra.mxu0 %v3816
  %3867 = vmatprep.subr.mxu0 0.0
  %3868 = vmatpush2.msra.mxu0 0.0
  %3869 = vmatprep.subr.mxu0 0.0
  %3870 = vmatpush2.msra.mxu0 0.0
  %3871 = vmatprep.subr.mxu0 0.0
  %3872 = vmatpush2.msra.mxu0 0.0
  %3873 = vmatprep.subr.mxu0 0.0
  %3874 = vmatpush2.msra.mxu0 0.0
  %3875 = vmatprep.subr.mxu0 0.0
  %3876 = vmatpush2.msra.mxu0 0.0
  %3877 = vmatprep.subr.mxu0 0.0
  %3878 = vmatpush2.msra.mxu0 0.0
  %3879 = vmatprep.subr.mxu0 0.0
  %3880 = vmatpush2.msra.mxu0 0.0
  %3881 = vmatprep.subr.mxu0 0.0
  %3882 = vmatpush2.msra.mxu0 0.0
  %3883 = vmatprep.subr.mxu0 0.0
  %3884 = vmatpush2.msra.mxu0 0.0
  %3885 = vmatprep.subr.mxu0 0.0
  %3886 = vmatpush2.msra.mxu0 0.0
  %3887 = vmatprep.subr.mxu0 0.0
  %3888 = vmatpush2.msra.mxu0 0.0
  %3889 = vmatprep.subr.mxu0 0.0
  %3890 = vmatpush2.msra.mxu0 0.0
  %3891 = vmatprep.subr.mxu0 0.0
  %3892 = vmatpush2.msra.mxu0 0.0
  %3893 = vmatprep.subr.mxu0 0.0
  %3894 = vmatpush2.msra.mxu0 0.0
  %3895 = vmatprep.subr.mxu0 0.0
  %3896 = vmatpush2.msra.mxu0 0.0
  %3897 = vmatprep.subr.mxu0 0.0
  %3898 = vmatpush2.msra.mxu0 0.0
  %3899 = vmatprep.mubr.f32.mxu0 0.0
  %3900 = vmatmul.mubr.f32.gmra.mxu0 %v3833
  %v3901 = vpop.f32.mrf.mxu0
  %v3902 = vadd.f32 0.0, %v3901
  %v3903 = vpop.f32.mrf.mxu0
  %v3904 = vadd.f32 0.0, %v3903
  %3905 = vdwg.mxu0
  %v3908 = vcombine.low %v3902, %v3904
  %v3910 = vunpack.c.l.s4 1966171168
  %v3911 = vunpack.c.0.s8 %v3910
  %v3912 = vlaneseq
  %v3913 = vshrl.u32 %v3912, 7
  %v3914 = vsub.s32 %v3911, %v3913
  %v3915 = vrot.slane %v3908, %v3914
  %v3917 = vunpack.c.l.s4 1966171168
  %v3918 = vunpack.c.0.s8 %v3917
  %v3919 = vlaneseq
  %v3920 = vshrl.u32 %v3919, 7
  %v3921 = vsub.s32 %v3918, %v3920
  %v3922 = vrot.slane %v3915, %v3921
  %v3924 = vadd.f32 %v3815, %v3922
  %v3925 = vxor.u32 %v3924, 2147483648
  %v3926 = vmul.f32 %v3925, 1.442695
  %v3927 = vpow.pop %v3926
  %v3928 = vadd.f32 %v3927, 1.0
  %v3929 = vrcp.pop %v3928
  %v3930 = vmul.f32 1.0, %v3929
  %v3931 = vtanh.pop %v3924
  %v3933 = vlaneseq
  %v3934 = vshrl.u32 %v3933, 7
  %v3935 = vsub.s32 0, %v3934
  %v3936 = vrot.slane %v3931, %v3935
  %v3937 = vlaneseq
  %v3938 = vshrl.u32 %v3937, 7
  %v3939 = vsub.s32 1, %v3938
  %v3940 = vrot.slane %v3931, %v3939
  %v3944 = vlaneseq
  %v3945 = vshrl.u32 %v3944, 7
  %v3946 = vsub.s32 0, %v3945
  %v3947 = vrot.slane %v3930, %v3946
  %v3948 = vlaneseq
  %v3949 = vshrl.u32 %v3948, 7
  %v3950 = vsub.s32 1, %v3949
  %v3951 = vrot.slane %v3930, %v3950
  %v3954 = vsel %vm821, %v3936, %v3947
  %v3955 = vsel %vm822, %v3940, %v3951
  %v3956 = vmul.f32 %v3954, %v3777
  %3958 = vrot.lane.b32.xlu0 %v3954, 64
  %v3959 = vpop.permute.xlu0 %3958
  %v3961 = vmul.f32 %v3954, %v3959
  %3963 = vrot.lane.b32.xlu0 %v3961, 32
  %v3964 = vpop.permute.xlu0 %3963
  %v3966 = vadd.f32 %v3956, %v3964
  %v3967 = vtanh.pop %v3966
  %3969 = vrot.lane.b32.xlu0 %v3967, 64
  %v3970 = vpop.permute.xlu0 %3969
  %v3972 = vmul.f32 %v3954, %v3970
  %v3973 = vmul.f32 %v3955, %v3794
  %3975 = vrot.lane.b32.xlu0 %v3955, 64
  %v3976 = vpop.permute.xlu0 %3975
  %v3978 = vmul.f32 %v3955, %v3976
  %3980 = vrot.lane.b32.xlu0 %v3978, 32
  %v3981 = vpop.permute.xlu0 %3980
  %v3983 = vadd.f32 %v3973, %v3981
  %v3984 = vtanh.pop %v3983
  %3986 = vrot.lane.b32.xlu0 %v3984, 64
  %v3987 = vpop.permute.xlu0 %3986
  %v3989 = vmul.f32 %v3955, %v3987
  %3991 = vrot.lane.b32.xlu0 %v3989, 32
  %v3992 = vpop.permute.xlu0 %3991
  %3994 = vst.msk [vmem:[#allocation3 + $0xf] sm:$0x1] %vm971, %v3992
  %3996 = vrot.lane.b32.xlu0 %v3972, 32
  %v3997 = vpop.permute.xlu0 %3996
  %3999 = vrot.lane.b32.xlu0 %v3989, 64
  %v4000 = vpop.permute.xlu0 %3999
  %v4002 = vsel %vm977, %v3997, %v4000
  %s4003 = scalar_lea.vmem [#allocation2], 33
  %v4004 = vld [vmem:[%s4003] ss:$8 sm:$0x3]
  %v4005 = vld [vmem:[%s13] sm:$0xff]
  %v4006 = vld [vmem:[%s13 + $0x8] sm:$0xff]
  %v4007 = vld [vmem:[%s13 + $0x10] sm:$0xff]
  %v4008 = vld [vmem:[%s13 + $0x18] sm:$0xff]
  %v4009 = vld [vmem:[%s13 + $0x20] sm:$0xff]
  %v4010 = vld [vmem:[%s13 + $0x28] sm:$0xff]
  %v4011 = vld [vmem:[%s13 + $0x30] sm:$0xff]
  %v4012 = vld [vmem:[%s13 + $0x38] sm:$0xff]
  %v4013 = vld [vmem:[%s13 + $0x40] sm:$0xff]
  %v4014 = vld [vmem:[%s13 + $0x48] sm:$0xff]
  %v4015 = vld [vmem:[%s13 + $0x50] sm:$0xff]
  %v4016 = vld [vmem:[%s13 + $0x58] sm:$0xff]
  %v4017 = vld [vmem:[%s13 + $0x60] sm:$0xff]
  %v4018 = vld [vmem:[%s13 + $0x68] sm:$0xff]
  %v4019 = vld [vmem:[%s13 + $0x70] sm:$0xff]
  %v4020 = vld [vmem:[%s13 + $0x78] sm:$0xff]
  %v4022 = vsel %vm840, %v4002, 0
  %4024 = vmatprep.subr.mxu0 0.0
  %4025 = vmatpush1.msra.mxu0 0.0
  %4026 = vmatprep.subr.mxu0 0.0
  %4027 = vmatpush1.msra.mxu0 0.0
  %4028 = vmatprep.subr.mxu0 0.0
  %4029 = vmatpush1.msra.mxu0 0.0
  %4030 = vmatprep.subr.mxu0 0.0
  %4031 = vmatpush1.msra.mxu0 0.0
  %4032 = vmatprep.subr.mxu0 0.0
  %4033 = vmatpush1.msra.mxu0 0.0
  %4034 = vmatprep.subr.mxu0 0.0
  %4035 = vmatpush1.msra.mxu0 0.0
  %4036 = vmatprep.subr.mxu0 0.0
  %4037 = vmatpush1.msra.mxu0 0.0
  %4038 = vmatprep.subr.mxu0 0.0
  %4039 = vmatpush1.msra.mxu0 0.0
  %4040 = vmatprep.subr.mxu0 %v4020
  %4041 = vmatpush1.msra.mxu0 %v4019
  %4042 = vmatprep.subr.mxu0 %v4018
  %4043 = vmatpush1.msra.mxu0 %v4017
  %4044 = vmatprep.subr.mxu0 %v4016
  %4045 = vmatpush1.msra.mxu0 %v4015
  %4046 = vmatprep.subr.mxu0 %v4014
  %4047 = vmatpush1.msra.mxu0 %v4013
  %4048 = vmatprep.subr.mxu0 %v4012
  %4049 = vmatpush1.msra.mxu0 %v4011
  %4050 = vmatprep.subr.mxu0 %v4010
  %4051 = vmatpush1.msra.mxu0 %v4009
  %4052 = vmatprep.subr.mxu0 %v4008
  %4053 = vmatpush1.msra.mxu0 %v4007
  %4054 = vmatprep.subr.mxu0 %v4006
  %4055 = vmatpush1.msra.mxu0 %v4005
  %4056 = vmatprep.subr.mxu0 0.0
  %4057 = vmatpush2.msra.mxu0 0.0
  %4058 = vmatprep.subr.mxu0 0.0
  %4059 = vmatpush2.msra.mxu0 0.0
  %4060 = vmatprep.subr.mxu0 0.0
  %4061 = vmatpush2.msra.mxu0 0.0
  %4062 = vmatprep.subr.mxu0 0.0
  %4063 = vmatpush2.msra.mxu0 0.0
  %4064 = vmatprep.subr.mxu0 0.0
  %4065 = vmatpush2.msra.mxu0 0.0
  %4066 = vmatprep.subr.mxu0 0.0
  %4067 = vmatpush2.msra.mxu0 0.0
  %4068 = vmatprep.subr.mxu0 0.0
  %4069 = vmatpush2.msra.mxu0 0.0
  %4070 = vmatprep.subr.mxu0 0.0
  %4071 = vmatpush2.msra.mxu0 0.0
  %4072 = vmatprep.subr.mxu0 0.0
  %4073 = vmatpush2.msra.mxu0 0.0
  %4074 = vmatprep.subr.mxu0 0.0
  %4075 = vmatpush2.msra.mxu0 0.0
  %4076 = vmatprep.subr.mxu0 0.0
  %4077 = vmatpush2.msra.mxu0 0.0
  %4078 = vmatprep.subr.mxu0 0.0
  %4079 = vmatpush2.msra.mxu0 0.0
  %4080 = vmatprep.subr.mxu0 0.0
  %4081 = vmatpush2.msra.mxu0 0.0
  %4082 = vmatprep.subr.mxu0 0.0
  %4083 = vmatpush2.msra.mxu0 0.0
  %4084 = vmatprep.subr.mxu0 0.0
  %4085 = vmatpush2.msra.mxu0 0.0
  %4086 = vmatprep.subr.mxu0 0.0
  %4087 = vmatpush2.msra.mxu0 0.0
  %4088 = vmatprep.mubr.f32.mxu0 0.0
  %4089 = vmatmul.mubr.f32.gmra.mxu0 %v4022
  %v4090 = vpop.f32.mrf.mxu0
  %v4091 = vadd.f32 0.0, %v4090
  %v4092 = vpop.f32.mrf.mxu0
  %v4093 = vadd.f32 0.0, %v4092
  %4094 = vdwg.mxu0
  %v4097 = vcombine.low %v4091, %v4093
  %v4099 = vunpack.c.l.s4 1966171168
  %v4100 = vunpack.c.0.s8 %v4099
  %v4101 = vlaneseq
  %v4102 = vshrl.u32 %v4101, 7
  %v4103 = vsub.s32 %v4100, %v4102
  %v4104 = vrot.slane %v4097, %v4103
  %v4106 = vunpack.c.l.s4 1966171168
  %v4107 = vunpack.c.0.s8 %v4106
  %v4108 = vlaneseq
  %v4109 = vshrl.u32 %v4108, 7
  %v4110 = vsub.s32 %v4107, %v4109
  %v4111 = vrot.slane %v4104, %v4110
  %v4113 = vadd.f32 %v4004, %v4111
  %v4114 = vxor.u32 %v4113, 2147483648
  %v4115 = vmul.f32 %v4114, 1.442695
  %v4116 = vpow.pop %v4115
  %v4117 = vadd.f32 %v4116, 1.0
  %v4118 = vrcp.pop %v4117
  %v4119 = vmul.f32 1.0, %v4118
  %v4120 = vtanh.pop %v4113
  %v4122 = vlaneseq
  %v4123 = vshrl.u32 %v4122, 7
  %v4124 = vsub.s32 0, %v4123
  %v4125 = vrot.slane %v4120, %v4124
  %v4126 = vlaneseq
  %v4127 = vshrl.u32 %v4126, 7
  %v4128 = vsub.s32 1, %v4127
  %v4129 = vrot.slane %v4120, %v4128
  %v4133 = vlaneseq
  %v4134 = vshrl.u32 %v4133, 7
  %v4135 = vsub.s32 0, %v4134
  %v4136 = vrot.slane %v4119, %v4135
  %v4137 = vlaneseq
  %v4138 = vshrl.u32 %v4137, 7
  %v4139 = vsub.s32 1, %v4138
  %v4140 = vrot.slane %v4119, %v4139
  %v4143 = vsel %vm821, %v4125, %v4136
  %v4144 = vsel %vm822, %v4129, %v4140
  %v4145 = vmul.f32 %v4143, %v3966
  %4147 = vrot.lane.b32.xlu0 %v4143, 64
  %v4148 = vpop.permute.xlu0 %4147
  %v4150 = vmul.f32 %v4143, %v4148
  %4152 = vrot.lane.b32.xlu0 %v4150, 32
  %v4153 = vpop.permute.xlu0 %4152
  %v4155 = vadd.f32 %v4145, %v4153
  %v4156 = vtanh.pop %v4155
  %4158 = vrot.lane.b32.xlu0 %v4156, 64
  %v4159 = vpop.permute.xlu0 %4158
  %v4161 = vmul.f32 %v4143, %v4159
  %v4162 = vmul.f32 %v4144, %v3983
  %4164 = vrot.lane.b32.xlu0 %v4144, 64
  %v4165 = vpop.permute.xlu0 %4164
  %v4167 = vmul.f32 %v4144, %v4165
  %4169 = vrot.lane.b32.xlu0 %v4167, 32
  %v4170 = vpop.permute.xlu0 %4169
  %v4172 = vadd.f32 %v4162, %v4170
  %v4173 = vtanh.pop %v4172
  %4175 = vrot.lane.b32.xlu0 %v4173, 64
  %v4176 = vpop.permute.xlu0 %4175
  %v4178 = vmul.f32 %v4144, %v4176
  %4180 = vrot.lane.b32.xlu0 %v4178, 32
  %v4181 = vpop.permute.xlu0 %4180
  %4183 = vst.msk [vmem:[#allocation3 + $0x10] sm:$0x1] %vm971, %v4181
  %4185 = vrot.lane.b32.xlu0 %v4161, 32
  %v4186 = vpop.permute.xlu0 %4185
  %4188 = vrot.lane.b32.xlu0 %v4178, 64
  %v4189 = vpop.permute.xlu0 %4188
  %v4191 = vsel %vm977, %v4186, %v4189
  %s4192 = scalar_lea.vmem [#allocation2], 34
  %v4193 = vld [vmem:[%s4192] ss:$8 sm:$0x3]
  %v4194 = vld [vmem:[%s13] sm:$0xff]
  %v4195 = vld [vmem:[%s13 + $0x8] sm:$0xff]
  %v4196 = vld [vmem:[%s13 + $0x10] sm:$0xff]
  %v4197 = vld [vmem:[%s13 + $0x18] sm:$0xff]
  %v4198 = vld [vmem:[%s13 + $0x20] sm:$0xff]
  %v4199 = vld [vmem:[%s13 + $0x28] sm:$0xff]
  %v4200 = vld [vmem:[%s13 + $0x30] sm:$0xff]
  %v4201 = vld [vmem:[%s13 + $0x38] sm:$0xff]
  %v4202 = vld [vmem:[%s13 + $0x40] sm:$0xff]
  %v4203 = vld [vmem:[%s13 + $0x48] sm:$0xff]
  %v4204 = vld [vmem:[%s13 + $0x50] sm:$0xff]
  %v4205 = vld [vmem:[%s13 + $0x58] sm:$0xff]
  %v4206 = vld [vmem:[%s13 + $0x60] sm:$0xff]
  %v4207 = vld [vmem:[%s13 + $0x68] sm:$0xff]
  %v4208 = vld [vmem:[%s13 + $0x70] sm:$0xff]
  %v4209 = vld [vmem:[%s13 + $0x78] sm:$0xff]
  %v4211 = vsel %vm840, %v4191, 0
  %4213 = vmatprep.subr.mxu0 0.0
  %4214 = vmatpush1.msra.mxu0 0.0
  %4215 = vmatprep.subr.mxu0 0.0
  %4216 = vmatpush1.msra.mxu0 0.0
  %4217 = vmatprep.subr.mxu0 0.0
  %4218 = vmatpush1.msra.mxu0 0.0
  %4219 = vmatprep.subr.mxu0 0.0
  %4220 = vmatpush1.msra.mxu0 0.0
  %4221 = vmatprep.subr.mxu0 0.0
  %4222 = vmatpush1.msra.mxu0 0.0
  %4223 = vmatprep.subr.mxu0 0.0
  %4224 = vmatpush1.msra.mxu0 0.0
  %4225 = vmatprep.subr.mxu0 0.0
  %4226 = vmatpush1.msra.mxu0 0.0
  %4227 = vmatprep.subr.mxu0 0.0
  %4228 = vmatpush1.msra.mxu0 0.0
  %4229 = vmatprep.subr.mxu0 %v4209
  %4230 = vmatpush1.msra.mxu0 %v4208
  %4231 = vmatprep.subr.mxu0 %v4207
  %4232 = vmatpush1.msra.mxu0 %v4206
  %4233 = vmatprep.subr.mxu0 %v4205
  %4234 = vmatpush1.msra.mxu0 %v4204
  %4235 = vmatprep.subr.mxu0 %v4203
  %4236 = vmatpush1.msra.mxu0 %v4202
  %4237 = vmatprep.subr.mxu0 %v4201
  %4238 = vmatpush1.msra.mxu0 %v4200
  %4239 = vmatprep.subr.mxu0 %v4199
  %4240 = vmatpush1.msra.mxu0 %v4198
  %4241 = vmatprep.subr.mxu0 %v4197
  %4242 = vmatpush1.msra.mxu0 %v4196
  %4243 = vmatprep.subr.mxu0 %v4195
  %4244 = vmatpush1.msra.mxu0 %v4194
  %4245 = vmatprep.subr.mxu0 0.0
  %4246 = vmatpush2.msra.mxu0 0.0
  %4247 = vmatprep.subr.mxu0 0.0
  %4248 = vmatpush2.msra.mxu0 0.0
  %4249 = vmatprep.subr.mxu0 0.0
  %4250 = vmatpush2.msra.mxu0 0.0
  %4251 = vmatprep.subr.mxu0 0.0
  %4252 = vmatpush2.msra.mxu0 0.0
  %4253 = vmatprep.subr.mxu0 0.0
  %4254 = vmatpush2.msra.mxu0 0.0
  %4255 = vmatprep.subr.mxu0 0.0
  %4256 = vmatpush2.msra.mxu0 0.0
  %4257 = vmatprep.subr.mxu0 0.0
  %4258 = vmatpush2.msra.mxu0 0.0
  %4259 = vmatprep.subr.mxu0 0.0
  %4260 = vmatpush2.msra.mxu0 0.0
  %4261 = vmatprep.subr.mxu0 0.0
  %4262 = vmatpush2.msra.mxu0 0.0
  %4263 = vmatprep.subr.mxu0 0.0
  %4264 = vmatpush2.msra.mxu0 0.0
  %4265 = vmatprep.subr.mxu0 0.0
  %4266 = vmatpush2.msra.mxu0 0.0
  %4267 = vmatprep.subr.mxu0 0.0
  %4268 = vmatpush2.msra.mxu0 0.0
  %4269 = vmatprep.subr.mxu0 0.0
  %4270 = vmatpush2.msra.mxu0 0.0
  %4271 = vmatprep.subr.mxu0 0.0
  %4272 = vmatpush2.msra.mxu0 0.0
  %4273 = vmatprep.subr.mxu0 0.0
  %4274 = vmatpush2.msra.mxu0 0.0
  %4275 = vmatprep.subr.mxu0 0.0
  %4276 = vmatpush2.msra.mxu0 0.0
  %4277 = vmatprep.mubr.f32.mxu0 0.0
  %4278 = vmatmul.mubr.f32.gmra.mxu0 %v4211
  %v4279 = vpop.f32.mrf.mxu0
  %v4280 = vadd.f32 0.0, %v4279
  %v4281 = vpop.f32.mrf.mxu0
  %v4282 = vadd.f32 0.0, %v4281
  %4283 = vdwg.mxu0
  %v4286 = vcombine.low %v4280, %v4282
  %v4288 = vunpack.c.l.s4 1966171168
  %v4289 = vunpack.c.0.s8 %v4288
  %v4290 = vlaneseq
  %v4291 = vshrl.u32 %v4290, 7
  %v4292 = vsub.s32 %v4289, %v4291
  %v4293 = vrot.slane %v4286, %v4292
  %v4295 = vunpack.c.l.s4 1966171168
  %v4296 = vunpack.c.0.s8 %v4295
  %v4297 = vlaneseq
  %v4298 = vshrl.u32 %v4297, 7
  %v4299 = vsub.s32 %v4296, %v4298
  %v4300 = vrot.slane %v4293, %v4299
  %v4302 = vadd.f32 %v4193, %v4300
  %v4303 = vxor.u32 %v4302, 2147483648
  %v4304 = vmul.f32 %v4303, 1.442695
  %v4305 = vpow.pop %v4304
  %v4306 = vadd.f32 %v4305, 1.0
  %v4307 = vrcp.pop %v4306
  %v4308 = vmul.f32 1.0, %v4307
  %v4309 = vtanh.pop %v4302
  %v4311 = vlaneseq
  %v4312 = vshrl.u32 %v4311, 7
  %v4313 = vsub.s32 0, %v4312
  %v4314 = vrot.slane %v4309, %v4313
  %v4315 = vlaneseq
  %v4316 = vshrl.u32 %v4315, 7
  %v4317 = vsub.s32 1, %v4316
  %v4318 = vrot.slane %v4309, %v4317
  %v4322 = vlaneseq
  %v4323 = vshrl.u32 %v4322, 7
  %v4324 = vsub.s32 0, %v4323
  %v4325 = vrot.slane %v4308, %v4324
  %v4326 = vlaneseq
  %v4327 = vshrl.u32 %v4326, 7
  %v4328 = vsub.s32 1, %v4327
  %v4329 = vrot.slane %v4308, %v4328
  %v4332 = vsel %vm821, %v4314, %v4325
  %v4333 = vsel %vm822, %v4318, %v4329
  %v4334 = vmul.f32 %v4332, %v4155
  %4336 = vrot.lane.b32.xlu0 %v4332, 64
  %v4337 = vpop.permute.xlu0 %4336
  %v4339 = vmul.f32 %v4332, %v4337
  %4341 = vrot.lane.b32.xlu0 %v4339, 32
  %v4342 = vpop.permute.xlu0 %4341
  %v4344 = vadd.f32 %v4334, %v4342
  %v4345 = vtanh.pop %v4344
  %4347 = vrot.lane.b32.xlu0 %v4345, 64
  %v4348 = vpop.permute.xlu0 %4347
  %v4350 = vmul.f32 %v4332, %v4348
  %v4351 = vmul.f32 %v4333, %v4172
  %4353 = vrot.lane.b32.xlu0 %v4333, 64
  %v4354 = vpop.permute.xlu0 %4353
  %v4356 = vmul.f32 %v4333, %v4354
  %4358 = vrot.lane.b32.xlu0 %v4356, 32
  %v4359 = vpop.permute.xlu0 %4358
  %v4361 = vadd.f32 %v4351, %v4359
  %v4362 = vtanh.pop %v4361
  %4364 = vrot.lane.b32.xlu0 %v4362, 64
  %v4365 = vpop.permute.xlu0 %4364
  %v4367 = vmul.f32 %v4333, %v4365
  %4369 = vrot.lane.b32.xlu0 %v4367, 32
  %v4370 = vpop.permute.xlu0 %4369
  %4372 = vst.msk [vmem:[#allocation3 + $0x11] sm:$0x1] %vm971, %v4370
  %4374 = vrot.lane.b32.xlu0 %v4350, 32
  %v4375 = vpop.permute.xlu0 %4374
  %4377 = vrot.lane.b32.xlu0 %v4367, 64
  %v4378 = vpop.permute.xlu0 %4377
  %v4380 = vsel %vm977, %v4375, %v4378
  %s4381 = scalar_lea.vmem [#allocation2], 35
  %v4382 = vld [vmem:[%s4381] ss:$8 sm:$0x3]
  %v4383 = vld [vmem:[%s13] sm:$0xff]
  %v4384 = vld [vmem:[%s13 + $0x8] sm:$0xff]
  %v4385 = vld [vmem:[%s13 + $0x10] sm:$0xff]
  %v4386 = vld [vmem:[%s13 + $0x18] sm:$0xff]
  %v4387 = vld [vmem:[%s13 + $0x20] sm:$0xff]
  %v4388 = vld [vmem:[%s13 + $0x28] sm:$0xff]
  %v4389 = vld [vmem:[%s13 + $0x30] sm:$0xff]
  %v4390 = vld [vmem:[%s13 + $0x38] sm:$0xff]
  %v4391 = vld [vmem:[%s13 + $0x40] sm:$0xff]
  %v4392 = vld [vmem:[%s13 + $0x48] sm:$0xff]
  %v4393 = vld [vmem:[%s13 + $0x50] sm:$0xff]
  %v4394 = vld [vmem:[%s13 + $0x58] sm:$0xff]
  %v4395 = vld [vmem:[%s13 + $0x60] sm:$0xff]
  %v4396 = vld [vmem:[%s13 + $0x68] sm:$0xff]
  %v4397 = vld [vmem:[%s13 + $0x70] sm:$0xff]
  %v4398 = vld [vmem:[%s13 + $0x78] sm:$0xff]
  %v4400 = vsel %vm840, %v4380, 0
  %4402 = vmatprep.subr.mxu0 0.0
  %4403 = vmatpush1.msra.mxu0 0.0
  %4404 = vmatprep.subr.mxu0 0.0
  %4405 = vmatpush1.msra.mxu0 0.0
  %4406 = vmatprep.subr.mxu0 0.0
  %4407 = vmatpush1.msra.mxu0 0.0
  %4408 = vmatprep.subr.mxu0 0.0
  %4409 = vmatpush1.msra.mxu0 0.0
  %4410 = vmatprep.subr.mxu0 0.0
  %4411 = vmatpush1.msra.mxu0 0.0
  %4412 = vmatprep.subr.mxu0 0.0
  %4413 = vmatpush1.msra.mxu0 0.0
  %4414 = vmatprep.subr.mxu0 0.0
  %4415 = vmatpush1.msra.mxu0 0.0
  %4416 = vmatprep.subr.mxu0 0.0
  %4417 = vmatpush1.msra.mxu0 0.0
  %4418 = vmatprep.subr.mxu0 %v4398
  %4419 = vmatpush1.msra.mxu0 %v4397
  %4420 = vmatprep.subr.mxu0 %v4396
  %4421 = vmatpush1.msra.mxu0 %v4395
  %4422 = vmatprep.subr.mxu0 %v4394
  %4423 = vmatpush1.msra.mxu0 %v4393
  %4424 = vmatprep.subr.mxu0 %v4392
  %4425 = vmatpush1.msra.mxu0 %v4391
  %4426 = vmatprep.subr.mxu0 %v4390
  %4427 = vmatpush1.msra.mxu0 %v4389
  %4428 = vmatprep.subr.mxu0 %v4388
  %4429 = vmatpush1.msra.mxu0 %v4387
  %4430 = vmatprep.subr.mxu0 %v4386
  %4431 = vmatpush1.msra.mxu0 %v4385
  %4432 = vmatprep.subr.mxu0 %v4384
  %4433 = vmatpush1.msra.mxu0 %v4383
  %4434 = vmatprep.subr.mxu0 0.0
  %4435 = vmatpush2.msra.mxu0 0.0
  %4436 = vmatprep.subr.mxu0 0.0
  %4437 = vmatpush2.msra.mxu0 0.0
  %4438 = vmatprep.subr.mxu0 0.0
  %4439 = vmatpush2.msra.mxu0 0.0
  %4440 = vmatprep.subr.mxu0 0.0
  %4441 = vmatpush2.msra.mxu0 0.0
  %4442 = vmatprep.subr.mxu0 0.0
  %4443 = vmatpush2.msra.mxu0 0.0
  %4444 = vmatprep.subr.mxu0 0.0
  %4445 = vmatpush2.msra.mxu0 0.0
  %4446 = vmatprep.subr.mxu0 0.0
  %4447 = vmatpush2.msra.mxu0 0.0
  %4448 = vmatprep.subr.mxu0 0.0
  %4449 = vmatpush2.msra.mxu0 0.0
  %4450 = vmatprep.subr.mxu0 0.0
  %4451 = vmatpush2.msra.mxu0 0.0
  %4452 = vmatprep.subr.mxu0 0.0
  %4453 = vmatpush2.msra.mxu0 0.0
  %4454 = vmatprep.subr.mxu0 0.0
  %4455 = vmatpush2.msra.mxu0 0.0
  %4456 = vmatprep.subr.mxu0 0.0
  %4457 = vmatpush2.msra.mxu0 0.0
  %4458 = vmatprep.subr.mxu0 0.0
  %4459 = vmatpush2.msra.mxu0 0.0
  %4460 = vmatprep.subr.mxu0 0.0
  %4461 = vmatpush2.msra.mxu0 0.0
  %4462 = vmatprep.subr.mxu0 0.0
  %4463 = vmatpush2.msra.mxu0 0.0
  %4464 = vmatprep.subr.mxu0 0.0
  %4465 = vmatpush2.msra.mxu0 0.0
  %4466 = vmatprep.mubr.f32.mxu0 0.0
  %4467 = vmatmul.mubr.f32.gmra.mxu0 %v4400
  %v4468 = vpop.f32.mrf.mxu0
  %v4469 = vadd.f32 0.0, %v4468
  %v4470 = vpop.f32.mrf.mxu0
  %v4471 = vadd.f32 0.0, %v4470
  %4472 = vdwg.mxu0
  %v4475 = vcombine.low %v4469, %v4471
  %v4477 = vunpack.c.l.s4 1966171168
  %v4478 = vunpack.c.0.s8 %v4477
  %v4479 = vlaneseq
  %v4480 = vshrl.u32 %v4479, 7
  %v4481 = vsub.s32 %v4478, %v4480
  %v4482 = vrot.slane %v4475, %v4481
  %v4484 = vunpack.c.l.s4 1966171168
  %v4485 = vunpack.c.0.s8 %v4484
  %v4486 = vlaneseq
  %v4487 = vshrl.u32 %v4486, 7
  %v4488 = vsub.s32 %v4485, %v4487
  %v4489 = vrot.slane %v4482, %v4488
  %v4491 = vadd.f32 %v4382, %v4489
  %v4492 = vxor.u32 %v4491, 2147483648
  %v4493 = vmul.f32 %v4492, 1.442695
  %v4494 = vpow.pop %v4493
  %v4495 = vadd.f32 %v4494, 1.0
  %v4496 = vrcp.pop %v4495
  %v4497 = vmul.f32 1.0, %v4496
  %v4498 = vtanh.pop %v4491
  %v4500 = vlaneseq
  %v4501 = vshrl.u32 %v4500, 7
  %v4502 = vsub.s32 0, %v4501
  %v4503 = vrot.slane %v4498, %v4502
  %v4504 = vlaneseq
  %v4505 = vshrl.u32 %v4504, 7
  %v4506 = vsub.s32 1, %v4505
  %v4507 = vrot.slane %v4498, %v4506
  %v4511 = vlaneseq
  %v4512 = vshrl.u32 %v4511, 7
  %v4513 = vsub.s32 0, %v4512
  %v4514 = vrot.slane %v4497, %v4513
  %v4515 = vlaneseq
  %v4516 = vshrl.u32 %v4515, 7
  %v4517 = vsub.s32 1, %v4516
  %v4518 = vrot.slane %v4497, %v4517
  %v4521 = vsel %vm821, %v4503, %v4514
  %v4522 = vsel %vm822, %v4507, %v4518
  %v4523 = vmul.f32 %v4521, %v4344
  %4525 = vrot.lane.b32.xlu0 %v4521, 64
  %v4526 = vpop.permute.xlu0 %4525
  %v4528 = vmul.f32 %v4521, %v4526
  %4530 = vrot.lane.b32.xlu0 %v4528, 32
  %v4531 = vpop.permute.xlu0 %4530
  %v4533 = vadd.f32 %v4523, %v4531
  %v4534 = vtanh.pop %v4533
  %4536 = vrot.lane.b32.xlu0 %v4534, 64
  %v4537 = vpop.permute.xlu0 %4536
  %v4539 = vmul.f32 %v4521, %v4537
  %v4540 = vmul.f32 %v4522, %v4361
  %4542 = vrot.lane.b32.xlu0 %v4522, 64
  %v4543 = vpop.permute.xlu0 %4542
  %v4545 = vmul.f32 %v4522, %v4543
  %4547 = vrot.lane.b32.xlu0 %v4545, 32
  %v4548 = vpop.permute.xlu0 %4547
  %v4550 = vadd.f32 %v4540, %v4548
  %v4551 = vtanh.pop %v4550
  %4553 = vrot.lane.b32.xlu0 %v4551, 64
  %v4554 = vpop.permute.xlu0 %4553
  %v4556 = vmul.f32 %v4522, %v4554
  %4558 = vrot.lane.b32.xlu0 %v4556, 32
  %v4559 = vpop.permute.xlu0 %4558
  %4561 = vst.msk [vmem:[#allocation3 + $0x12] sm:$0x1] %vm971, %v4559
  %4563 = vrot.lane.b32.xlu0 %v4539, 32
  %v4564 = vpop.permute.xlu0 %4563
  %4566 = vrot.lane.b32.xlu0 %v4556, 64
  %v4567 = vpop.permute.xlu0 %4566
  %v4569 = vsel %vm977, %v4564, %v4567
  %s4570 = scalar_lea.vmem [#allocation2], 36
  %v4571 = vld [vmem:[%s4570] ss:$8 sm:$0x3]
  %v4572 = vld [vmem:[%s13] sm:$0xff]
  %v4573 = vld [vmem:[%s13 + $0x8] sm:$0xff]
  %v4574 = vld [vmem:[%s13 + $0x10] sm:$0xff]
  %v4575 = vld [vmem:[%s13 + $0x18] sm:$0xff]
  %v4576 = vld [vmem:[%s13 + $0x20] sm:$0xff]
  %v4577 = vld [vmem:[%s13 + $0x28] sm:$0xff]
  %v4578 = vld [vmem:[%s13 + $0x30] sm:$0xff]
  %v4579 = vld [vmem:[%s13 + $0x38] sm:$0xff]
  %v4580 = vld [vmem:[%s13 + $0x40] sm:$0xff]
  %v4581 = vld [vmem:[%s13 + $0x48] sm:$0xff]
  %v4582 = vld [vmem:[%s13 + $0x50] sm:$0xff]
  %v4583 = vld [vmem:[%s13 + $0x58] sm:$0xff]
  %v4584 = vld [vmem:[%s13 + $0x60] sm:$0xff]
  %v4585 = vld [vmem:[%s13 + $0x68] sm:$0xff]
  %v4586 = vld [vmem:[%s13 + $0x70] sm:$0xff]
  %v4587 = vld [vmem:[%s13 + $0x78] sm:$0xff]
  %v4589 = vsel %vm840, %v4569, 0
  %4591 = vmatprep.subr.mxu0 0.0
  %4592 = vmatpush1.msra.mxu0 0.0
  %4593 = vmatprep.subr.mxu0 0.0
  %4594 = vmatpush1.msra.mxu0 0.0
  %4595 = vmatprep.subr.mxu0 0.0
  %4596 = vmatpush1.msra.mxu0 0.0
  %4597 = vmatprep.subr.mxu0 0.0
  %4598 = vmatpush1.msra.mxu0 0.0
  %4599 = vmatprep.subr.mxu0 0.0
  %4600 = vmatpush1.msra.mxu0 0.0
  %4601 = vmatprep.subr.mxu0 0.0
  %4602 = vmatpush1.msra.mxu0 0.0
  %4603 = vmatprep.subr.mxu0 0.0
  %4604 = vmatpush1.msra.mxu0 0.0
  %4605 = vmatprep.subr.mxu0 0.0
  %4606 = vmatpush1.msra.mxu0 0.0
  %4607 = vmatprep.subr.mxu0 %v4587
  %4608 = vmatpush1.msra.mxu0 %v4586
  %4609 = vmatprep.subr.mxu0 %v4585
  %4610 = vmatpush1.msra.mxu0 %v4584
  %4611 = vmatprep.subr.mxu0 %v4583
  %4612 = vmatpush1.msra.mxu0 %v4582
  %4613 = vmatprep.subr.mxu0 %v4581
  %4614 = vmatpush1.msra.mxu0 %v4580
  %4615 = vmatprep.subr.mxu0 %v4579
  %4616 = vmatpush1.msra.mxu0 %v4578
  %4617 = vmatprep.subr.mxu0 %v4577
  %4618 = vmatpush1.msra.mxu0 %v4576
  %4619 = vmatprep.subr.mxu0 %v4575
  %4620 = vmatpush1.msra.mxu0 %v4574
  %4621 = vmatprep.subr.mxu0 %v4573
  %4622 = vmatpush1.msra.mxu0 %v4572
  %4623 = vmatprep.subr.mxu0 0.0
  %4624 = vmatpush2.msra.mxu0 0.0
  %4625 = vmatprep.subr.mxu0 0.0
  %4626 = vmatpush2.msra.mxu0 0.0
  %4627 = vmatprep.subr.mxu0 0.0
  %4628 = vmatpush2.msra.mxu0 0.0
  %4629 = vmatprep.subr.mxu0 0.0
  %4630 = vmatpush2.msra.mxu0 0.0
  %4631 = vmatprep.subr.mxu0 0.0
  %4632 = vmatpush2.msra.mxu0 0.0
  %4633 = vmatprep.subr.mxu0 0.0
  %4634 = vmatpush2.msra.mxu0 0.0
  %4635 = vmatprep.subr.mxu0 0.0
  %4636 = vmatpush2.msra.mxu0 0.0
  %4637 = vmatprep.subr.mxu0 0.0
  %4638 = vmatpush2.msra.mxu0 0.0
  %4639 = vmatprep.subr.mxu0 0.0
  %4640 = vmatpush2.msra.mxu0 0.0
  %4641 = vmatprep.subr.mxu0 0.0
  %4642 = vmatpush2.msra.mxu0 0.0
  %4643 = vmatprep.subr.mxu0 0.0
  %4644 = vmatpush2.msra.mxu0 0.0
  %4645 = vmatprep.subr.mxu0 0.0
  %4646 = vmatpush2.msra.mxu0 0.0
  %4647 = vmatprep.subr.mxu0 0.0
  %4648 = vmatpush2.msra.mxu0 0.0
  %4649 = vmatprep.subr.mxu0 0.0
  %4650 = vmatpush2.msra.mxu0 0.0
  %4651 = vmatprep.subr.mxu0 0.0
  %4652 = vmatpush2.msra.mxu0 0.0
  %4653 = vmatprep.subr.mxu0 0.0
  %4654 = vmatpush2.msra.mxu0 0.0
  %4655 = vmatprep.mubr.f32.mxu0 0.0
  %4656 = vmatmul.mubr.f32.gmra.mxu0 %v4589
  %v4657 = vpop.f32.mrf.mxu0
  %v4658 = vadd.f32 0.0, %v4657
  %v4659 = vpop.f32.mrf.mxu0
  %v4660 = vadd.f32 0.0, %v4659
  %4661 = vdwg.mxu0
  %v4664 = vcombine.low %v4658, %v4660
  %v4666 = vunpack.c.l.s4 1966171168
  %v4667 = vunpack.c.0.s8 %v4666
  %v4668 = vlaneseq
  %v4669 = vshrl.u32 %v4668, 7
  %v4670 = vsub.s32 %v4667, %v4669
  %v4671 = vrot.slane %v4664, %v4670
  %v4673 = vunpack.c.l.s4 1966171168
  %v4674 = vunpack.c.0.s8 %v4673
  %v4675 = vlaneseq
  %v4676 = vshrl.u32 %v4675, 7
  %v4677 = vsub.s32 %v4674, %v4676
  %v4678 = vrot.slane %v4671, %v4677
  %v4680 = vadd.f32 %v4571, %v4678
  %v4681 = vxor.u32 %v4680, 2147483648
  %v4682 = vmul.f32 %v4681, 1.442695
  %v4683 = vpow.pop %v4682
  %v4684 = vadd.f32 %v4683, 1.0
  %v4685 = vrcp.pop %v4684
  %v4686 = vmul.f32 1.0, %v4685
  %v4687 = vtanh.pop %v4680
  %v4689 = vlaneseq
  %v4690 = vshrl.u32 %v4689, 7
  %v4691 = vsub.s32 0, %v4690
  %v4692 = vrot.slane %v4687, %v4691
  %v4693 = vlaneseq
  %v4694 = vshrl.u32 %v4693, 7
  %v4695 = vsub.s32 1, %v4694
  %v4696 = vrot.slane %v4687, %v4695
  %v4700 = vlaneseq
  %v4701 = vshrl.u32 %v4700, 7
  %v4702 = vsub.s32 0, %v4701
  %v4703 = vrot.slane %v4686, %v4702
  %v4704 = vlaneseq
  %v4705 = vshrl.u32 %v4704, 7
  %v4706 = vsub.s32 1, %v4705
  %v4707 = vrot.slane %v4686, %v4706
  %v4710 = vsel %vm821, %v4692, %v4703
  %v4711 = vsel %vm822, %v4696, %v4707
  %v4712 = vmul.f32 %v4710, %v4533
  %4714 = vrot.lane.b32.xlu0 %v4710, 64
  %v4715 = vpop.permute.xlu0 %4714
  %v4717 = vmul.f32 %v4710, %v4715
  %4719 = vrot.lane.b32.xlu0 %v4717, 32
  %v4720 = vpop.permute.xlu0 %4719
  %v4722 = vadd.f32 %v4712, %v4720
  %v4723 = vtanh.pop %v4722
  %4725 = vrot.lane.b32.xlu0 %v4723, 64
  %v4726 = vpop.permute.xlu0 %4725
  %v4728 = vmul.f32 %v4710, %v4726
  %v4729 = vmul.f32 %v4711, %v4550
  %4731 = vrot.lane.b32.xlu0 %v4711, 64
  %v4732 = vpop.permute.xlu0 %4731
  %v4734 = vmul.f32 %v4711, %v4732
  %4736 = vrot.lane.b32.xlu0 %v4734, 32
  %v4737 = vpop.permute.xlu0 %4736
  %v4739 = vadd.f32 %v4729, %v4737
  %v4740 = vtanh.pop %v4739
  %4742 = vrot.lane.b32.xlu0 %v4740, 64
  %v4743 = vpop.permute.xlu0 %4742
  %v4745 = vmul.f32 %v4711, %v4743
  %4747 = vrot.lane.b32.xlu0 %v4745, 32
  %v4748 = vpop.permute.xlu0 %4747
  %4750 = vst.msk [vmem:[#allocation3 + $0x13] sm:$0x1] %vm971, %v4748
  %4752 = vrot.lane.b32.xlu0 %v4728, 32
  %v4753 = vpop.permute.xlu0 %4752
  %4755 = vrot.lane.b32.xlu0 %v4745, 64
  %v4756 = vpop.permute.xlu0 %4755
  %v4758 = vsel %vm977, %v4753, %v4756
  %s4759 = scalar_lea.vmem [#allocation2], 37
  %v4760 = vld [vmem:[%s4759] ss:$8 sm:$0x3]
  %v4761 = vld [vmem:[%s13] sm:$0xff]
  %v4762 = vld [vmem:[%s13 + $0x8] sm:$0xff]
  %v4763 = vld [vmem:[%s13 + $0x10] sm:$0xff]
  %v4764 = vld [vmem:[%s13 + $0x18] sm:$0xff]
  %v4765 = vld [vmem:[%s13 + $0x20] sm:$0xff]
  %v4766 = vld [vmem:[%s13 + $0x28] sm:$0xff]
  %v4767 = vld [vmem:[%s13 + $0x30] sm:$0xff]
  %v4768 = vld [vmem:[%s13 + $0x38] sm:$0xff]
  %v4769 = vld [vmem:[%s13 + $0x40] sm:$0xff]
  %v4770 = vld [vmem:[%s13 + $0x48] sm:$0xff]
  %v4771 = vld [vmem:[%s13 + $0x50] sm:$0xff]
  %v4772 = vld [vmem:[%s13 + $0x58] sm:$0xff]
  %v4773 = vld [vmem:[%s13 + $0x60] sm:$0xff]
  %v4774 = vld [vmem:[%s13 + $0x68] sm:$0xff]
  %v4775 = vld [vmem:[%s13 + $0x70] sm:$0xff]
  %v4776 = vld [vmem:[%s13 + $0x78] sm:$0xff]
  %v4778 = vsel %vm840, %v4758, 0
  %4780 = vmatprep.subr.mxu0 0.0
  %4781 = vmatpush1.msra.mxu0 0.0
  %4782 = vmatprep.subr.mxu0 0.0
  %4783 = vmatpush1.msra.mxu0 0.0
  %4784 = vmatprep.subr.mxu0 0.0
  %4785 = vmatpush1.msra.mxu0 0.0
  %4786 = vmatprep.subr.mxu0 0.0
  %4787 = vmatpush1.msra.mxu0 0.0
  %4788 = vmatprep.subr.mxu0 0.0
  %4789 = vmatpush1.msra.mxu0 0.0
  %4790 = vmatprep.subr.mxu0 0.0
  %4791 = vmatpush1.msra.mxu0 0.0
  %4792 = vmatprep.subr.mxu0 0.0
  %4793 = vmatpush1.msra.mxu0 0.0
  %4794 = vmatprep.subr.mxu0 0.0
  %4795 = vmatpush1.msra.mxu0 0.0
  %4796 = vmatprep.subr.mxu0 %v4776
  %4797 = vmatpush1.msra.mxu0 %v4775
  %4798 = vmatprep.subr.mxu0 %v4774
  %4799 = vmatpush1.msra.mxu0 %v4773
  %4800 = vmatprep.subr.mxu0 %v4772
  %4801 = vmatpush1.msra.mxu0 %v4771
  %4802 = vmatprep.subr.mxu0 %v4770
  %4803 = vmatpush1.msra.mxu0 %v4769
  %4804 = vmatprep.subr.mxu0 %v4768
  %4805 = vmatpush1.msra.mxu0 %v4767
  %4806 = vmatprep.subr.mxu0 %v4766
  %4807 = vmatpush1.msra.mxu0 %v4765
  %4808 = vmatprep.subr.mxu0 %v4764
  %4809 = vmatpush1.msra.mxu0 %v4763
  %4810 = vmatprep.subr.mxu0 %v4762
  %4811 = vmatpush1.msra.mxu0 %v4761
  %4812 = vmatprep.subr.mxu0 0.0
  %4813 = vmatpush2.msra.mxu0 0.0
  %4814 = vmatprep.subr.mxu0 0.0
  %4815 = vmatpush2.msra.mxu0 0.0
  %4816 = vmatprep.subr.mxu0 0.0
  %4817 = vmatpush2.msra.mxu0 0.0
  %4818 = vmatprep.subr.mxu0 0.0
  %4819 = vmatpush2.msra.mxu0 0.0
  %4820 = vmatprep.subr.mxu0 0.0
  %4821 = vmatpush2.msra.mxu0 0.0
  %4822 = vmatprep.subr.mxu0 0.0
  %4823 = vmatpush2.msra.mxu0 0.0
  %4824 = vmatprep.subr.mxu0 0.0
  %4825 = vmatpush2.msra.mxu0 0.0
  %4826 = vmatprep.subr.mxu0 0.0
  %4827 = vmatpush2.msra.mxu0 0.0
  %4828 = vmatprep.subr.mxu0 0.0
  %4829 = vmatpush2.msra.mxu0 0.0
  %4830 = vmatprep.subr.mxu0 0.0
  %4831 = vmatpush2.msra.mxu0 0.0
  %4832 = vmatprep.subr.mxu0 0.0
  %4833 = vmatpush2.msra.mxu0 0.0
  %4834 = vmatprep.subr.mxu0 0.0
  %4835 = vmatpush2.msra.mxu0 0.0
  %4836 = vmatprep.subr.mxu0 0.0
  %4837 = vmatpush2.msra.mxu0 0.0
  %4838 = vmatprep.subr.mxu0 0.0
  %4839 = vmatpush2.msra.mxu0 0.0
  %4840 = vmatprep.subr.mxu0 0.0
  %4841 = vmatpush2.msra.mxu0 0.0
  %4842 = vmatprep.subr.mxu0 0.0
  %4843 = vmatpush2.msra.mxu0 0.0
  %4844 = vmatprep.mubr.f32.mxu0 0.0
  %4845 = vmatmul.mubr.f32.gmra.mxu0 %v4778
  %v4846 = vpop.f32.mrf.mxu0
  %v4847 = vadd.f32 0.0, %v4846
  %v4848 = vpop.f32.mrf.mxu0
  %v4849 = vadd.f32 0.0, %v4848
  %4850 = vdwg.mxu0
  %v4853 = vcombine.low %v4847, %v4849
  %v4855 = vunpack.c.l.s4 1966171168
  %v4856 = vunpack.c.0.s8 %v4855
  %v4857 = vlaneseq
  %v4858 = vshrl.u32 %v4857, 7
  %v4859 = vsub.s32 %v4856, %v4858
  %v4860 = vrot.slane %v4853, %v4859
  %v4862 = vunpack.c.l.s4 1966171168
  %v4863 = vunpack.c.0.s8 %v4862
  %v4864 = vlaneseq
  %v4865 = vshrl.u32 %v4864, 7
  %v4866 = vsub.s32 %v4863, %v4865
  %v4867 = vrot.slane %v4860, %v4866
  %v4869 = vadd.f32 %v4760, %v4867
  %v4870 = vxor.u32 %v4869, 2147483648
  %v4871 = vmul.f32 %v4870, 1.442695
  %v4872 = vpow.pop %v4871
  %v4873 = vadd.f32 %v4872, 1.0
  %v4874 = vrcp.pop %v4873
  %v4875 = vmul.f32 1.0, %v4874
  %v4876 = vtanh.pop %v4869
  %v4878 = vlaneseq
  %v4879 = vshrl.u32 %v4878, 7
  %v4880 = vsub.s32 0, %v4879
  %v4881 = vrot.slane %v4876, %v4880
  %v4882 = vlaneseq
  %v4883 = vshrl.u32 %v4882, 7
  %v4884 = vsub.s32 1, %v4883
  %v4885 = vrot.slane %v4876, %v4884
  %v4889 = vlaneseq
  %v4890 = vshrl.u32 %v4889, 7
  %v4891 = vsub.s32 0, %v4890
  %v4892 = vrot.slane %v4875, %v4891
  %v4893 = vlaneseq
  %v4894 = vshrl.u32 %v4893, 7
  %v4895 = vsub.s32 1, %v4894
  %v4896 = vrot.slane %v4875, %v4895
  %v4899 = vsel %vm821, %v4881, %v4892
  %v4900 = vsel %vm822, %v4885, %v4896
  %v4901 = vmul.f32 %v4899, %v4722
  %4903 = vrot.lane.b32.xlu0 %v4899, 64
  %v4904 = vpop.permute.xlu0 %4903
  %v4906 = vmul.f32 %v4899, %v4904
  %4908 = vrot.lane.b32.xlu0 %v4906, 32
  %v4909 = vpop.permute.xlu0 %4908
  %v4911 = vadd.f32 %v4901, %v4909
  %v4912 = vtanh.pop %v4911
  %4914 = vrot.lane.b32.xlu0 %v4912, 64
  %v4915 = vpop.permute.xlu0 %4914
  %v4917 = vmul.f32 %v4899, %v4915
  %v4918 = vmul.f32 %v4900, %v4739
  %4920 = vrot.lane.b32.xlu0 %v4900, 64
  %v4921 = vpop.permute.xlu0 %4920
  %v4923 = vmul.f32 %v4900, %v4921
  %4925 = vrot.lane.b32.xlu0 %v4923, 32
  %v4926 = vpop.permute.xlu0 %4925
  %v4928 = vadd.f32 %v4918, %v4926
  %v4929 = vtanh.pop %v4928
  %4931 = vrot.lane.b32.xlu0 %v4929, 64
  %v4932 = vpop.permute.xlu0 %4931
  %v4934 = vmul.f32 %v4900, %v4932
  %4936 = vrot.lane.b32.xlu0 %v4934, 32
  %v4937 = vpop.permute.xlu0 %4936
  %4939 = vst.msk [vmem:[#allocation3 + $0x14] sm:$0x1] %vm971, %v4937
  %4941 = vrot.lane.b32.xlu0 %v4917, 32
  %v4942 = vpop.permute.xlu0 %4941
  %4944 = vrot.lane.b32.xlu0 %v4934, 64
  %v4945 = vpop.permute.xlu0 %4944
  %v4947 = vsel %vm977, %v4942, %v4945
  %s4948 = scalar_lea.vmem [#allocation2], 38
  %v4949 = vld [vmem:[%s4948] ss:$8 sm:$0x3]
  %v4950 = vld [vmem:[%s13] sm:$0xff]
  %v4951 = vld [vmem:[%s13 + $0x8] sm:$0xff]
  %v4952 = vld [vmem:[%s13 + $0x10] sm:$0xff]
  %v4953 = vld [vmem:[%s13 + $0x18] sm:$0xff]
  %v4954 = vld [vmem:[%s13 + $0x20] sm:$0xff]
  %v4955 = vld [vmem:[%s13 + $0x28] sm:$0xff]
  %v4956 = vld [vmem:[%s13 + $0x30] sm:$0xff]
  %v4957 = vld [vmem:[%s13 + $0x38] sm:$0xff]
  %v4958 = vld [vmem:[%s13 + $0x40] sm:$0xff]
  %v4959 = vld [vmem:[%s13 + $0x48] sm:$0xff]
  %v4960 = vld [vmem:[%s13 + $0x50] sm:$0xff]
  %v4961 = vld [vmem:[%s13 + $0x58] sm:$0xff]
  %v4962 = vld [vmem:[%s13 + $0x60] sm:$0xff]
  %v4963 = vld [vmem:[%s13 + $0x68] sm:$0xff]
  %v4964 = vld [vmem:[%s13 + $0x70] sm:$0xff]
  %v4965 = vld [vmem:[%s13 + $0x78] sm:$0xff]
  %v4967 = vsel %vm840, %v4947, 0
  %4969 = vmatprep.subr.mxu0 0.0
  %4970 = vmatpush1.msra.mxu0 0.0
  %4971 = vmatprep.subr.mxu0 0.0
  %4972 = vmatpush1.msra.mxu0 0.0
  %4973 = vmatprep.subr.mxu0 0.0
  %4974 = vmatpush1.msra.mxu0 0.0
  %4975 = vmatprep.subr.mxu0 0.0
  %4976 = vmatpush1.msra.mxu0 0.0
  %4977 = vmatprep.subr.mxu0 0.0
  %4978 = vmatpush1.msra.mxu0 0.0
  %4979 = vmatprep.subr.mxu0 0.0
  %4980 = vmatpush1.msra.mxu0 0.0
  %4981 = vmatprep.subr.mxu0 0.0
  %4982 = vmatpush1.msra.mxu0 0.0
  %4983 = vmatprep.subr.mxu0 0.0
  %4984 = vmatpush1.msra.mxu0 0.0
  %4985 = vmatprep.subr.mxu0 %v4965
  %4986 = vmatpush1.msra.mxu0 %v4964
  %4987 = vmatprep.subr.mxu0 %v4963
  %4988 = vmatpush1.msra.mxu0 %v4962
  %4989 = vmatprep.subr.mxu0 %v4961
  %4990 = vmatpush1.msra.mxu0 %v4960
  %4991 = vmatprep.subr.mxu0 %v4959
  %4992 = vmatpush1.msra.mxu0 %v4958
  %4993 = vmatprep.subr.mxu0 %v4957
  %4994 = vmatpush1.msra.mxu0 %v4956
  %4995 = vmatprep.subr.mxu0 %v4955
  %4996 = vmatpush1.msra.mxu0 %v4954
  %4997 = vmatprep.subr.mxu0 %v4953
  %4998 = vmatpush1.msra.mxu0 %v4952
  %4999 = vmatprep.subr.mxu0 %v4951
  %5000 = vmatpush1.msra.mxu0 %v4950
  %5001 = vmatprep.subr.mxu0 0.0
  %5002 = vmatpush2.msra.mxu0 0.0
  %5003 = vmatprep.subr.mxu0 0.0
  %5004 = vmatpush2.msra.mxu0 0.0
  %5005 = vmatprep.subr.mxu0 0.0
  %5006 = vmatpush2.msra.mxu0 0.0
  %5007 = vmatprep.subr.mxu0 0.0
  %5008 = vmatpush2.msra.mxu0 0.0
  %5009 = vmatprep.subr.mxu0 0.0
  %5010 = vmatpush2.msra.mxu0 0.0
  %5011 = vmatprep.subr.mxu0 0.0
  %5012 = vmatpush2.msra.mxu0 0.0
  %5013 = vmatprep.subr.mxu0 0.0
  %5014 = vmatpush2.msra.mxu0 0.0
  %5015 = vmatprep.subr.mxu0 0.0
  %5016 = vmatpush2.msra.mxu0 0.0
  %5017 = vmatprep.subr.mxu0 0.0
  %5018 = vmatpush2.msra.mxu0 0.0
  %5019 = vmatprep.subr.mxu0 0.0
  %5020 = vmatpush2.msra.mxu0 0.0
  %5021 = vmatprep.subr.mxu0 0.0
  %5022 = vmatpush2.msra.mxu0 0.0
  %5023 = vmatprep.subr.mxu0 0.0
  %5024 = vmatpush2.msra.mxu0 0.0
  %5025 = vmatprep.subr.mxu0 0.0
  %5026 = vmatpush2.msra.mxu0 0.0
  %5027 = vmatprep.subr.mxu0 0.0
  %5028 = vmatpush2.msra.mxu0 0.0
  %5029 = vmatprep.subr.mxu0 0.0
  %5030 = vmatpush2.msra.mxu0 0.0
  %5031 = vmatprep.subr.mxu0 0.0
  %5032 = vmatpush2.msra.mxu0 0.0
  %5033 = vmatprep.mubr.f32.mxu0 0.0
  %5034 = vmatmul.mubr.f32.gmra.mxu0 %v4967
  %v5035 = vpop.f32.mrf.mxu0
  %v5036 = vadd.f32 0.0, %v5035
  %v5037 = vpop.f32.mrf.mxu0
  %v5038 = vadd.f32 0.0, %v5037
  %5039 = vdwg.mxu0
  %v5042 = vcombine.low %v5036, %v5038
  %v5044 = vunpack.c.l.s4 1966171168
  %v5045 = vunpack.c.0.s8 %v5044
  %v5046 = vlaneseq
  %v5047 = vshrl.u32 %v5046, 7
  %v5048 = vsub.s32 %v5045, %v5047
  %v5049 = vrot.slane %v5042, %v5048
  %v5051 = vunpack.c.l.s4 1966171168
  %v5052 = vunpack.c.0.s8 %v5051
  %v5053 = vlaneseq
  %v5054 = vshrl.u32 %v5053, 7
  %v5055 = vsub.s32 %v5052, %v5054
  %v5056 = vrot.slane %v5049, %v5055
  %v5058 = vadd.f32 %v4949, %v5056
  %v5059 = vxor.u32 %v5058, 2147483648
  %v5060 = vmul.f32 %v5059, 1.442695
  %v5061 = vpow.pop %v5060
  %v5062 = vadd.f32 %v5061, 1.0
  %v5063 = vrcp.pop %v5062
  %v5064 = vmul.f32 1.0, %v5063
  %v5065 = vtanh.pop %v5058
  %v5067 = vlaneseq
  %v5068 = vshrl.u32 %v5067, 7
  %v5069 = vsub.s32 0, %v5068
  %v5070 = vrot.slane %v5065, %v5069
  %v5071 = vlaneseq
  %v5072 = vshrl.u32 %v5071, 7
  %v5073 = vsub.s32 1, %v5072
  %v5074 = vrot.slane %v5065, %v5073
  %v5078 = vlaneseq
  %v5079 = vshrl.u32 %v5078, 7
  %v5080 = vsub.s32 0, %v5079
  %v5081 = vrot.slane %v5064, %v5080
  %v5082 = vlaneseq
  %v5083 = vshrl.u32 %v5082, 7
  %v5084 = vsub.s32 1, %v5083
  %v5085 = vrot.slane %v5064, %v5084
  %v5088 = vsel %vm821, %v5070, %v5081
  %v5089 = vsel %vm822, %v5074, %v5085
  %v5090 = vmul.f32 %v5088, %v4911
  %5092 = vrot.lane.b32.xlu0 %v5088, 64
  %v5093 = vpop.permute.xlu0 %5092
  %v5095 = vmul.f32 %v5088, %v5093
  %5097 = vrot.lane.b32.xlu0 %v5095, 32
  %v5098 = vpop.permute.xlu0 %5097
  %v5100 = vadd.f32 %v5090, %v5098
  %v5101 = vtanh.pop %v5100
  %5103 = vrot.lane.b32.xlu0 %v5101, 64
  %v5104 = vpop.permute.xlu0 %5103
  %v5106 = vmul.f32 %v5088, %v5104
  %v5107 = vmul.f32 %v5089, %v4928
  %5109 = vrot.lane.b32.xlu0 %v5089, 64
  %v5110 = vpop.permute.xlu0 %5109
  %v5112 = vmul.f32 %v5089, %v5110
  %5114 = vrot.lane.b32.xlu0 %v5112, 32
  %v5115 = vpop.permute.xlu0 %5114
  %v5117 = vadd.f32 %v5107, %v5115
  %v5118 = vtanh.pop %v5117
  %5120 = vrot.lane.b32.xlu0 %v5118, 64
  %v5121 = vpop.permute.xlu0 %5120
  %v5123 = vmul.f32 %v5089, %v5121
  %5125 = vrot.lane.b32.xlu0 %v5123, 32
  %v5126 = vpop.permute.xlu0 %5125
  %5128 = vst.msk [vmem:[#allocation3 + $0x15] sm:$0x1] %vm971, %v5126
  %5130 = vrot.lane.b32.xlu0 %v5106, 32
  %v5131 = vpop.permute.xlu0 %5130
  %5133 = vrot.lane.b32.xlu0 %v5123, 64
  %v5134 = vpop.permute.xlu0 %5133
  %v5136 = vsel %vm977, %v5131, %v5134
  %s5137 = scalar_lea.vmem [#allocation2], 39
  %v5138 = vld [vmem:[%s5137] ss:$8 sm:$0x3]
  %v5139 = vld [vmem:[%s13] sm:$0xff]
  %v5140 = vld [vmem:[%s13 + $0x8] sm:$0xff]
  %v5141 = vld [vmem:[%s13 + $0x10] sm:$0xff]
  %v5142 = vld [vmem:[%s13 + $0x18] sm:$0xff]
  %v5143 = vld [vmem:[%s13 + $0x20] sm:$0xff]
  %v5144 = vld [vmem:[%s13 + $0x28] sm:$0xff]
  %v5145 = vld [vmem:[%s13 + $0x30] sm:$0xff]
  %v5146 = vld [vmem:[%s13 + $0x38] sm:$0xff]
  %v5147 = vld [vmem:[%s13 + $0x40] sm:$0xff]
  %v5148 = vld [vmem:[%s13 + $0x48] sm:$0xff]
  %v5149 = vld [vmem:[%s13 + $0x50] sm:$0xff]
  %v5150 = vld [vmem:[%s13 + $0x58] sm:$0xff]
  %v5151 = vld [vmem:[%s13 + $0x60] sm:$0xff]
  %v5152 = vld [vmem:[%s13 + $0x68] sm:$0xff]
  %v5153 = vld [vmem:[%s13 + $0x70] sm:$0xff]
  %v5154 = vld [vmem:[%s13 + $0x78] sm:$0xff]
  %v5156 = vsel %vm840, %v5136, 0
  %5158 = vmatprep.subr.mxu0 0.0
  %5159 = vmatpush1.msra.mxu0 0.0
  %5160 = vmatprep.subr.mxu0 0.0
  %5161 = vmatpush1.msra.mxu0 0.0
  %5162 = vmatprep.subr.mxu0 0.0
  %5163 = vmatpush1.msra.mxu0 0.0
  %5164 = vmatprep.subr.mxu0 0.0
  %5165 = vmatpush1.msra.mxu0 0.0
  %5166 = vmatprep.subr.mxu0 0.0
  %5167 = vmatpush1.msra.mxu0 0.0
  %5168 = vmatprep.subr.mxu0 0.0
  %5169 = vmatpush1.msra.mxu0 0.0
  %5170 = vmatprep.subr.mxu0 0.0
  %5171 = vmatpush1.msra.mxu0 0.0
  %5172 = vmatprep.subr.mxu0 0.0
  %5173 = vmatpush1.msra.mxu0 0.0
  %5174 = vmatprep.subr.mxu0 %v5154
  %5175 = vmatpush1.msra.mxu0 %v5153
  %5176 = vmatprep.subr.mxu0 %v5152
  %5177 = vmatpush1.msra.mxu0 %v5151
  %5178 = vmatprep.subr.mxu0 %v5150
  %5179 = vmatpush1.msra.mxu0 %v5149
  %5180 = vmatprep.subr.mxu0 %v5148
  %5181 = vmatpush1.msra.mxu0 %v5147
  %5182 = vmatprep.subr.mxu0 %v5146
  %5183 = vmatpush1.msra.mxu0 %v5145
  %5184 = vmatprep.subr.mxu0 %v5144
  %5185 = vmatpush1.msra.mxu0 %v5143
  %5186 = vmatprep.subr.mxu0 %v5142
  %5187 = vmatpush1.msra.mxu0 %v5141
  %5188 = vmatprep.subr.mxu0 %v5140
  %5189 = vmatpush1.msra.mxu0 %v5139
  %5190 = vmatprep.subr.mxu0 0.0
  %5191 = vmatpush2.msra.mxu0 0.0
  %5192 = vmatprep.subr.mxu0 0.0
  %5193 = vmatpush2.msra.mxu0 0.0
  %5194 = vmatprep.subr.mxu0 0.0
  %5195 = vmatpush2.msra.mxu0 0.0
  %5196 = vmatprep.subr.mxu0 0.0
  %5197 = vmatpush2.msra.mxu0 0.0
  %5198 = vmatprep.subr.mxu0 0.0
  %5199 = vmatpush2.msra.mxu0 0.0
  %5200 = vmatprep.subr.mxu0 0.0
  %5201 = vmatpush2.msra.mxu0 0.0
  %5202 = vmatprep.subr.mxu0 0.0
  %5203 = vmatpush2.msra.mxu0 0.0
  %5204 = vmatprep.subr.mxu0 0.0
  %5205 = vmatpush2.msra.mxu0 0.0
  %5206 = vmatprep.subr.mxu0 0.0
  %5207 = vmatpush2.msra.mxu0 0.0
  %5208 = vmatprep.subr.mxu0 0.0
  %5209 = vmatpush2.msra.mxu0 0.0
  %5210 = vmatprep.subr.mxu0 0.0
  %5211 = vmatpush2.msra.mxu0 0.0
  %5212 = vmatprep.subr.mxu0 0.0
  %5213 = vmatpush2.msra.mxu0 0.0
  %5214 = vmatprep.subr.mxu0 0.0
  %5215 = vmatpush2.msra.mxu0 0.0
  %5216 = vmatprep.subr.mxu0 0.0
  %5217 = vmatpush2.msra.mxu0 0.0
  %5218 = vmatprep.subr.mxu0 0.0
  %5219 = vmatpush2.msra.mxu0 0.0
  %5220 = vmatprep.subr.mxu0 0.0
  %5221 = vmatpush2.msra.mxu0 0.0
  %5222 = vmatprep.mubr.f32.mxu0 0.0
  %5223 = vmatmul.mubr.f32.gmra.mxu0 %v5156
  %v5224 = vpop.f32.mrf.mxu0
  %v5225 = vadd.f32 0.0, %v5224
  %v5226 = vpop.f32.mrf.mxu0
  %v5227 = vadd.f32 0.0, %v5226
  %5228 = vdwg.mxu0
  %v5231 = vcombine.low %v5225, %v5227
  %v5233 = vunpack.c.l.s4 1966171168
  %v5234 = vunpack.c.0.s8 %v5233
  %v5235 = vlaneseq
  %v5236 = vshrl.u32 %v5235, 7
  %v5237 = vsub.s32 %v5234, %v5236
  %v5238 = vrot.slane %v5231, %v5237
  %v5240 = vunpack.c.l.s4 1966171168
  %v5241 = vunpack.c.0.s8 %v5240
  %v5242 = vlaneseq
  %v5243 = vshrl.u32 %v5242, 7
  %v5244 = vsub.s32 %v5241, %v5243
  %v5245 = vrot.slane %v5238, %v5244
  %v5247 = vadd.f32 %v5138, %v5245
  %v5248 = vxor.u32 %v5247, 2147483648
  %v5249 = vmul.f32 %v5248, 1.442695
  %v5250 = vpow.pop %v5249
  %v5251 = vadd.f32 %v5250, 1.0
  %v5252 = vrcp.pop %v5251
  %v5253 = vmul.f32 1.0, %v5252
  %v5254 = vtanh.pop %v5247
  %v5256 = vlaneseq
  %v5257 = vshrl.u32 %v5256, 7
  %v5258 = vsub.s32 0, %v5257
  %v5259 = vrot.slane %v5254, %v5258
  %v5260 = vlaneseq
  %v5261 = vshrl.u32 %v5260, 7
  %v5262 = vsub.s32 1, %v5261
  %v5263 = vrot.slane %v5254, %v5262
  %v5267 = vlaneseq
  %v5268 = vshrl.u32 %v5267, 7
  %v5269 = vsub.s32 0, %v5268
  %v5270 = vrot.slane %v5253, %v5269
  %v5271 = vlaneseq
  %v5272 = vshrl.u32 %v5271, 7
  %v5273 = vsub.s32 1, %v5272
  %v5274 = vrot.slane %v5253, %v5273
  %v5277 = vsel %vm821, %v5259, %v5270
  %v5278 = vsel %vm822, %v5263, %v5274
  %v5279 = vmul.f32 %v5277, %v5100
  %5281 = vrot.lane.b32.xlu0 %v5277, 64
  %v5282 = vpop.permute.xlu0 %5281
  %v5284 = vmul.f32 %v5277, %v5282
  %5286 = vrot.lane.b32.xlu0 %v5284, 32
  %v5287 = vpop.permute.xlu0 %5286
  %v5289 = vadd.f32 %v5279, %v5287
  %v5290 = vtanh.pop %v5289
  %5292 = vrot.lane.b32.xlu0 %v5290, 64
  %v5293 = vpop.permute.xlu0 %5292
  %v5295 = vmul.f32 %v5277, %v5293
  %v5296 = vmul.f32 %v5278, %v5117
  %5298 = vrot.lane.b32.xlu0 %v5278, 64
  %v5299 = vpop.permute.xlu0 %5298
  %v5301 = vmul.f32 %v5278, %v5299
  %5303 = vrot.lane.b32.xlu0 %v5301, 32
  %v5304 = vpop.permute.xlu0 %5303
  %v5306 = vadd.f32 %v5296, %v5304
  %v5307 = vtanh.pop %v5306
  %5309 = vrot.lane.b32.xlu0 %v5307, 64
  %v5310 = vpop.permute.xlu0 %5309
  %v5312 = vmul.f32 %v5278, %v5310
  %5314 = vrot.lane.b32.xlu0 %v5312, 32
  %v5315 = vpop.permute.xlu0 %5314
  %5317 = vst.msk [vmem:[#allocation3 + $0x16] sm:$0x1] %vm971, %v5315
  %5319 = vrot.lane.b32.xlu0 %v5295, 32
  %v5320 = vpop.permute.xlu0 %5319
  %5322 = vrot.lane.b32.xlu0 %v5312, 64
  %v5323 = vpop.permute.xlu0 %5322
  %v5325 = vsel %vm977, %v5320, %v5323
  %v5326 = vld [vmem:[%s5137] ss:$8 sm:$0x3]
  %v5327 = vld [vmem:[%s13] sm:$0xff]
  %v5328 = vld [vmem:[%s13 + $0x8] sm:$0xff]
  %v5329 = vld [vmem:[%s13 + $0x10] sm:$0xff]
  %v5330 = vld [vmem:[%s13 + $0x18] sm:$0xff]
  %v5331 = vld [vmem:[%s13 + $0x20] sm:$0xff]
  %v5332 = vld [vmem:[%s13 + $0x28] sm:$0xff]
  %v5333 = vld [vmem:[%s13 + $0x30] sm:$0xff]
  %v5334 = vld [vmem:[%s13 + $0x38] sm:$0xff]
  %v5335 = vld [vmem:[%s13 + $0x40] sm:$0xff]
  %v5336 = vld [vmem:[%s13 + $0x48] sm:$0xff]
  %v5337 = vld [vmem:[%s13 + $0x50] sm:$0xff]
  %v5338 = vld [vmem:[%s13 + $0x58] sm:$0xff]
  %v5339 = vld [vmem:[%s13 + $0x60] sm:$0xff]
  %v5340 = vld [vmem:[%s13 + $0x68] sm:$0xff]
  %v5341 = vld [vmem:[%s13 + $0x70] sm:$0xff]
  %v5342 = vld [vmem:[%s13 + $0x78] sm:$0xff]
  %v5344 = vsel %vm840, %v5325, 0
  %5346 = vmatprep.subr.mxu0 0.0
  %5347 = vmatpush1.msra.mxu0 0.0
  %5348 = vmatprep.subr.mxu0 0.0
  %5349 = vmatpush1.msra.mxu0 0.0
  %5350 = vmatprep.subr.mxu0 0.0
  %5351 = vmatpush1.msra.mxu0 0.0
  %5352 = vmatprep.subr.mxu0 0.0
  %5353 = vmatpush1.msra.mxu0 0.0
  %5354 = vmatprep.subr.mxu0 0.0
  %5355 = vmatpush1.msra.mxu0 0.0
  %5356 = vmatprep.subr.mxu0 0.0
  %5357 = vmatpush1.msra.mxu0 0.0
  %5358 = vmatprep.subr.mxu0 0.0
  %5359 = vmatpush1.msra.mxu0 0.0
  %5360 = vmatprep.subr.mxu0 0.0
  %5361 = vmatpush1.msra.mxu0 0.0
  %5362 = vmatprep.subr.mxu0 %v5342
  %5363 = vmatpush1.msra.mxu0 %v5341
  %5364 = vmatprep.subr.mxu0 %v5340
  %5365 = vmatpush1.msra.mxu0 %v5339
  %5366 = vmatprep.subr.mxu0 %v5338
  %5367 = vmatpush1.msra.mxu0 %v5337
  %5368 = vmatprep.subr.mxu0 %v5336
  %5369 = vmatpush1.msra.mxu0 %v5335
  %5370 = vmatprep.subr.mxu0 %v5334
  %5371 = vmatpush1.msra.mxu0 %v5333
  %5372 = vmatprep.subr.mxu0 %v5332
  %5373 = vmatpush1.msra.mxu0 %v5331
  %5374 = vmatprep.subr.mxu0 %v5330
  %5375 = vmatpush1.msra.mxu0 %v5329
  %5376 = vmatprep.subr.mxu0 %v5328
  %5377 = vmatpush1.msra.mxu0 %v5327
  %5378 = vmatprep.subr.mxu0 0.0
  %5379 = vmatpush2.msra.mxu0 0.0
  %5380 = vmatprep.subr.mxu0 0.0
  %5381 = vmatpush2.msra.mxu0 0.0
  %5382 = vmatprep.subr.mxu0 0.0
  %5383 = vmatpush2.msra.mxu0 0.0
  %5384 = vmatprep.subr.mxu0 0.0
  %5385 = vmatpush2.msra.mxu0 0.0
  %5386 = vmatprep.subr.mxu0 0.0
  %5387 = vmatpush2.msra.mxu0 0.0
  %5388 = vmatprep.subr.mxu0 0.0
  %5389 = vmatpush2.msra.mxu0 0.0
  %5390 = vmatprep.subr.mxu0 0.0
  %5391 = vmatpush2.msra.mxu0 0.0
  %5392 = vmatprep.subr.mxu0 0.0
  %5393 = vmatpush2.msra.mxu0 0.0
  %5394 = vmatprep.subr.mxu0 0.0
  %5395 = vmatpush2.msra.mxu0 0.0
  %5396 = vmatprep.subr.mxu0 0.0
  %5397 = vmatpush2.msra.mxu0 0.0
  %5398 = vmatprep.subr.mxu0 0.0
  %5399 = vmatpush2.msra.mxu0 0.0
  %5400 = vmatprep.subr.mxu0 0.0
  %5401 = vmatpush2.msra.mxu0 0.0
  %5402 = vmatprep.subr.mxu0 0.0
  %5403 = vmatpush2.msra.mxu0 0.0
  %5404 = vmatprep.subr.mxu0 0.0
  %5405 = vmatpush2.msra.mxu0 0.0
  %5406 = vmatprep.subr.mxu0 0.0
  %5407 = vmatpush2.msra.mxu0 0.0
  %5408 = vmatprep.subr.mxu0 0.0
  %5409 = vmatpush2.msra.mxu0 0.0
  %5410 = vmatprep.mubr.f32.mxu0 0.0
  %5411 = vmatmul.mubr.f32.gmra.mxu0 %v5344
  %v5412 = vpop.f32.mrf.mxu0
  %v5413 = vadd.f32 0.0, %v5412
  %v5414 = vpop.f32.mrf.mxu0
  %v5415 = vadd.f32 0.0, %v5414
  %5416 = vdwg.mxu0
  %v5419 = vcombine.low %v5413, %v5415
  %v5421 = vunpack.c.l.s4 1966171168
  %v5422 = vunpack.c.0.s8 %v5421
  %v5423 = vlaneseq
  %v5424 = vshrl.u32 %v5423, 7
  %v5425 = vsub.s32 %v5422, %v5424
  %v5426 = vrot.slane %v5419, %v5425
  %v5428 = vunpack.c.l.s4 1966171168
  %v5429 = vunpack.c.0.s8 %v5428
  %v5430 = vlaneseq
  %v5431 = vshrl.u32 %v5430, 7
  %v5432 = vsub.s32 %v5429, %v5431
  %v5433 = vrot.slane %v5426, %v5432
  %v5435 = vadd.f32 %v5326, %v5433
  %v5436 = vxor.u32 %v5435, 2147483648
  %v5437 = vmul.f32 %v5436, 1.442695
  %v5438 = vpow.pop %v5437
  %v5439 = vadd.f32 %v5438, 1.0
  %v5440 = vrcp.pop %v5439
  %v5441 = vmul.f32 1.0, %v5440
  %v5442 = vtanh.pop %v5435
  %v5444 = vlaneseq
  %v5445 = vshrl.u32 %v5444, 7
  %v5446 = vsub.s32 1, %v5445
  %v5447 = vrot.slane %v5442, %v5446
  %v5450 = vlaneseq
  %v5451 = vshrl.u32 %v5450, 7
  %v5452 = vsub.s32 1, %v5451
  %v5453 = vrot.slane %v5441, %v5452
  %v5455 = vsel %vm822, %v5447, %v5453
  %v5456 = vmul.f32 %v5455, %v5306
  %5458 = vrot.lane.b32.xlu0 %v5455, 64
  %v5459 = vpop.permute.xlu0 %5458
  %v5461 = vmul.f32 %v5455, %v5459
  %5463 = vrot.lane.b32.xlu0 %v5461, 32
  %v5464 = vpop.permute.xlu0 %5463
  %v5466 = vadd.f32 %v5456, %v5464
  %v5467 = vtanh.pop %v5466
  %5469 = vrot.lane.b32.xlu0 %v5467, 64
  %v5470 = vpop.permute.xlu0 %5469
  %v5472 = vmul.f32 %v5455, %v5470
  %5474 = vrot.lane.b32.xlu0 %v5472, 32
  %v5475 = vpop.permute.xlu0 %5474
  %5477 = vst.msk [vmem:[#allocation3 + $0x17] sm:$0x1] %vm971, %v5475
  %v5478 = vld [vmem:[#allocation3] sm:$0xff]
  %v5479 = vld [vmem:[#allocation3 + $0x8] sm:$0xff]
  %v5480 = vld [vmem:[#allocation3 + $0x10] sm:$0xff]
  %v5481 = vld [vmem:[%s15] sm:$0xff]
  %v5482 = vld [vmem:[%s15 + $0x8] sm:$0xff]
  %v5483 = vld [vmem:[%s15 + $0x10] sm:$0xff]
  %v5484 = vld [vmem:[%s15 + $0x18] sm:$0xff]
  %v5485 = vld [vmem:[%s16] sm:$0x1]
  %v5487 = vlaneseq
  %v5488 = vshrl.u32 %v5487, 7
  %v5489 = vsub.s32 0, %v5488
  %v5490 = vrot.slane %v5485, %v5489
  %v5493 = vsel %vm977, %v5478, 0
  %v5496 = vsel %vm977, %v5479, 0
  %v5499 = vsel %vm977, %v5480, 0
  %5501 = vmatprep.subr.mxu0 0.0
  %5502 = vmatpush1.msra.mxu0 0.0
  %5503 = vmatprep.subr.mxu0 0.0
  %5504 = vmatpush1.msra.mxu0 0.0
  %5505 = vmatprep.subr.mxu0 0.0
  %5506 = vmatpush1.msra.mxu0 0.0
  %5507 = vmatprep.subr.mxu0 0.0
  %5508 = vmatpush1.msra.mxu0 0.0
  %5509 = vmatprep.subr.mxu0 0.0
  %5510 = vmatpush1.msra.mxu0 0.0
  %5511 = vmatprep.subr.mxu0 0.0
  %5512 = vmatpush1.msra.mxu0 0.0
  %5513 = vmatprep.subr.mxu0 0.0
  %5514 = vmatpush1.msra.mxu0 0.0
  %5515 = vmatprep.subr.mxu0 0.0
  %5516 = vmatpush1.msra.mxu0 0.0
  %5517 = vmatprep.subr.mxu0 0.0
  %5518 = vmatpush1.msra.mxu0 0.0
  %5519 = vmatprep.subr.mxu0 0.0
  %5520 = vmatpush1.msra.mxu0 0.0
  %5521 = vmatprep.subr.mxu0 0.0
  %5522 = vmatpush1.msra.mxu0 0.0
  %5523 = vmatprep.subr.mxu0 0.0
  %5524 = vmatpush1.msra.mxu0 0.0
  %5525 = vmatprep.subr.mxu0 0.0
  %5526 = vmatpush1.msra.mxu0 %v5484
  %5527 = vmatprep.subr.mxu0 0.0
  %5528 = vmatpush1.msra.mxu0 %v5483
  %5529 = vmatprep.subr.mxu0 0.0
  %5530 = vmatpush1.msra.mxu0 %v5482
  %5531 = vmatprep.subr.mxu0 0.0
  %5532 = vmatpush1.msra.mxu0 %v5481
  %5533 = vmatprep.subr.mxu0 0.0
  %5534 = vmatpush2.msra.mxu0 0.0
  %5535 = vmatprep.subr.mxu0 0.0
  %5536 = vmatpush2.msra.mxu0 0.0
  %5537 = vmatprep.subr.mxu0 0.0
  %5538 = vmatpush2.msra.mxu0 0.0
  %5539 = vmatprep.subr.mxu0 0.0
  %5540 = vmatpush2.msra.mxu0 0.0
  %5541 = vmatprep.subr.mxu0 0.0
  %5542 = vmatpush2.msra.mxu0 0.0
  %5543 = vmatprep.subr.mxu0 0.0
  %5544 = vmatpush2.msra.mxu0 0.0
  %5545 = vmatprep.subr.mxu0 0.0
  %5546 = vmatpush2.msra.mxu0 0.0
  %5547 = vmatprep.subr.mxu0 0.0
  %5548 = vmatpush2.msra.mxu0 0.0
  %5549 = vmatprep.subr.mxu0 0.0
  %5550 = vmatpush2.msra.mxu0 0.0
  %5551 = vmatprep.subr.mxu0 0.0
  %5552 = vmatpush2.msra.mxu0 0.0
  %5553 = vmatprep.subr.mxu0 0.0
  %5554 = vmatpush2.msra.mxu0 0.0
  %5555 = vmatprep.subr.mxu0 0.0
  %5556 = vmatpush2.msra.mxu0 0.0
  %5557 = vmatprep.subr.mxu0 0.0
  %5558 = vmatpush2.msra.mxu0 0.0
  %5559 = vmatprep.subr.mxu0 0.0
  %5560 = vmatpush2.msra.mxu0 0.0
  %5561 = vmatprep.subr.mxu0 0.0
  %5562 = vmatpush2.msra.mxu0 0.0
  %5563 = vmatprep.subr.mxu0 0.0
  %5564 = vmatpush2.msra.mxu0 0.0
  %5565 = vmatprep.mubr.f32.mxu0 0.0
  %5566 = vmatmul.mubr.f32.gmra.mxu0 %v5493
  %v5567 = vpop.f32.mrf.mxu0
  %v5568 = vadd.f32 %v5490, %v5567
  %v5569 = vpop.f32.mrf.mxu0
  %5570 = vmatprep.mubr.f32.mxu0 0.0
  %5571 = vmatmul.mubr.f32.gmra.mxu0 %v5496
  %v5572 = vpop.f32.mrf.mxu0
  %v5573 = vadd.f32 %v5490, %v5572
  %v5574 = vpop.f32.mrf.mxu0
  %5575 = vmatprep.mubr.f32.mxu0 0.0
  %5576 = vmatmul.mubr.f32.gmra.mxu0 %v5499
  %v5577 = vpop.f32.mrf.mxu0
  %v5578 = vadd.f32 %v5490, %v5577
  %v5579 = vpop.f32.mrf.mxu0
  %5580 = vdwg.mxu0
  %v5581 = vmax.f32 %v5568, 0.0
  %v5582 = vmax.f32 %v5573, 0.0
  %v5583 = vmax.f32 %v5578, 0.0
  %v5584 = vld [vmem:[%s17] sm:$0x1]
  %v5586 = vlaneseq
  %v5587 = vshrl.u32 %v5586, 7
  %v5588 = vsub.s32 0, %v5587
  %v5589 = vrot.slane %v5584, %v5588
  %v5591 = vmul.f32 %v5581, %v5589
  %v5592 = vmul.f32 %v5582, %v5589
  %v5593 = vmul.f32 %v5583, %v5589
  %v5594 = vsel %vm94, %v5591, 0.0
  %5595 = vadd.xlane.f32.xlu0 %v5594
  %v5596 = vpop.xlane.xlu0 %5595
  %v5597 = vsel %vm94, %v5592, 0.0
  %5598 = vadd.xlane.f32.xlu0 %v5597
  %v5599 = vpop.xlane.xlu0 %5598
  %v5600 = vsel %vm94, %v5593, 0.0
  %5601 = vadd.xlane.f32.xlu0 %v5600
  %v5602 = vpop.xlane.xlu0 %5601
  %v5603 = vld [vmem:[#allocation4] sm:$0x1]
  %v5605 = vlaneseq
  %v5606 = vshrl.u32 %v5605, 7
  %v5607 = vsub.s32 0, %v5606
  %v5608 = vrot.slane %v5603, %v5607
  %v5610 = vadd.f32 %v5596, %v5608
  %v5611 = vadd.f32 %v5599, %v5608
  %v5612 = vadd.f32 %v5602, %v5608
  %vm5613 = vcmask 7168
  %5614 = vst.msk [vmem:[%s19] sm:$0xff] %vm5613, %v5610
  %5615 = vst.msk [vmem:[%s19 + $0x8] sm:$0xff] %vm5613, %v5611
  %5616 = vst.msk [vmem:[%s19 + $0x10] sm:$0xff] %vm5613, %v5612
  // Predicated region
  $region78: #{edge_gcn_lstm_forward.1} parent=0 // pred_check
    _
  $region79: #{edge_gcn_lstm_forward.1} parent=0 // pred_check_branch
    %5618 = sbr.rel (0) target = $region81
  $region80: #{edge_gcn_lstm_forward.1} parent=0 // pred_region
    _
  $region81: #{edge_gcn_lstm_forward.1} parent=0 // pred_fallthru
    _
  // Predicated region
  $region82: #{edge_gcn_lstm_forward.1} parent=0 // pred_check
    _
  $region83: #{edge_gcn_lstm_forward.1} parent=0 // pred_check_branch
    %5620 = sbr.rel (0) target = $region85
  $region84: #{edge_gcn_lstm_forward.1} parent=0 // pred_region
    _
  $region85: #{edge_gcn_lstm_forward.1} parent=0 // pred_fallthru
    _

</llo_original>
